<compile_context>
chip_gen: v7x
topology: tpu7x:2x2x1
jax: 0.10.0
libtpu: 0.0.40
codegen_flags: <defaults>
</compile_context>

<pallas_src>
import jax
import jax.numpy as jnp
import numpy as np
from jax.experimental import pallas as pl
from jax.experimental.pallas import tpu as pltpu

WINDOW_SIZE = 35      # fixed by the module (encoder always loops 35 steps)
NUM_CLASSES_IN = 31   # Seq2SeqModel default num_classes (embedding in-dim)
NUM_CLASSES_OUT = 2   # OneShotRNNDecoder default num_classes
UNITS = 32            # hidden size ("units")


def _seq2seq_kernel(x_ref, wfused_ref, bfused_ref, wh_ref, wdec_ref, bdec_ref,
                    o_ref):
    """One batch tile of the fused Seq2Seq forward.

    x_ref     : (TB, T, C)  batch-major input tile, f32
    wfused_ref: (C, U)      embedding folded into encoder x-projection
    bfused_ref: (1, U)      b_emb @ wx + b_enc
    wh_ref    : (U, U)      encoder hidden-state weight (transposed)
    wdec_ref  : (U, NO)     decoder weight (transposed)
    bdec_ref  : (1, NO)
    o_ref     : (TB, NO)
    """
    tb, t, c = x_ref.shape
    units = wh_ref.shape[0]

    # One large MXU matmul for every (batch, time) row: the whole
    # input-dependent part of the recurrence, hoisted out of the serial loop.
    x2d = x_ref[...].reshape(tb * t, c)
    u = (jnp.dot(x2d, wfused_ref[...], preferred_element_type=jnp.float32)
         + bfused_ref[...])                       # (TB*T, U), bias added once
    u = u.reshape(tb, t, units)

    wh = wh_ref[...]

    # Serial recurrence: only h @ wh remains per step.  T is static -> fully
    # unrolled, each u slice is a static (cheap) slice independent of h.
    h = jnp.zeros((tb, units), dtype=jnp.float32)
    for i in range(t):
        h = jnp.maximum(
            jnp.dot(h, wh, preferred_element_type=jnp.float32) + u[:, i, :],
            0.0)

    # Decoder fused into the same kernel; single store per batch tile.
    o_ref[...] = (jnp.dot(h, wdec_ref[...], preferred_element_type=jnp.float32)
                  + bdec_ref[...])


def _round_up(n, m):
    return ((n + m - 1) // m) * m


def seq2seq_forward(x_btc, fused_params, *, batch_tile=128):
    """x_btc: (B, WINDOW_SIZE, NUM_CLASSES_IN) f32 -> (B, NUM_CLASSES_OUT) f32."""
    wfused, bfused, wh, wdec, bdec = fused_params
    b, t, c = x_btc.shape
    units = wh.shape[0]
    n_out = wdec.shape[1]

    # Batch tile: multiple of 8 (sublane width), sized to stay well within the
    # scoped-VMEM defaults (v7x has only 64 MiB physical VMEM).
    tb = min(batch_tile, _round_up(b, 8))
    b_pad = _round_up(b, tb)
    if b_pad != b:
        x_btc = jnp.pad(x_btc, ((0, b_pad - b), (0, 0), (0, 0)))

    out = pl.pallas_call(
        _seq2seq_kernel,
        out_shape=jax.ShapeDtypeStruct((b_pad, n_out), jnp.float32),
        grid=(b_pad // tb,),
        in_specs=[
            pl.BlockSpec((tb, t, c), lambda i: (i, 0, 0)),       # x: batch tiled
            pl.BlockSpec((c, units), lambda i: (0, 0)),          # weights: whole
            pl.BlockSpec((1, units), lambda i: (0, 0)),
            pl.BlockSpec((units, units), lambda i: (0, 0)),
            pl.BlockSpec((units, n_out), lambda i: (0, 0)),
            pl.BlockSpec((1, n_out), lambda i: (0, 0)),
        ],
        out_specs=pl.BlockSpec((tb, n_out), lambda i: (i, 0)),
        compiler_params=pltpu.CompilerParams(
            dimension_semantics=("parallel",)),   # batch tiles -> both TCs (v7x)
    )(x_btc, wfused, bfused, wh, wdec, bdec)
    return out[:b]


def init_params(key, units=UNITS, num_classes=NUM_CLASSES_IN,
                num_out=NUM_CLASSES_OUT):
    """Deterministic nn.Linear-style init, PyTorch (out, in) layout."""
    ks = jax.random.split(key, 6)

    def lin(kw, kb, fan_in, fan_out):
        bound = 1.0 / np.sqrt(fan_in)
        w = jax.random.uniform(kw, (fan_out, fan_in), jnp.float32, -bound, bound)
        b = jax.random.uniform(kb, (fan_out,), jnp.float32, -bound, bound)
        return w, b

    w_emb, b_emb = lin(ks[0], ks[1], num_classes, units)   # (U, C)
    w_enc, b_enc = lin(ks[2], ks[3], 2 * units, units)     # (U, 2U)
    w_dec, b_dec = lin(ks[4], ks[5], units, num_out)       # (NO, U)
    return (w_emb, b_emb, w_enc, b_enc, w_dec, b_dec)


def fuse_params(torch_params, units=UNITS):
    """Fold the embedding into the encoder input projection (exact algebra)."""
    w_emb, b_emb, w_enc, b_enc, w_dec, b_dec = torch_params
    wemb = w_emb.T                    # (C, U)
    wx = w_enc[:, :units].T           # (U, U) acts on embedded x_t
    wh = w_enc[:, units:].T           # (U, U) acts on hidden state
    wfused = wemb @ wx                # (C, U)
    bfused = (b_emb @ wx + b_enc).reshape(1, -1)
    wdec = w_dec.T                    # (U, NO)
    bdec = b_dec.reshape(1, -1)
    return (wfused, bfused, wh, wdec, bdec)


def _reference(x_btc, torch_params, units=UNITS):
    """Pure-JAX reference mirroring the PyTorch forward exactly (unfused)."""
    w_emb, b_emb, w_enc, b_enc, w_dec, b_dec = torch_params
    emb = x_btc @ w_emb.T + b_emb                        # (B, T, U)
    h = jnp.zeros((x_btc.shape[0], units), jnp.float32)
    for i in range(WINDOW_SIZE):
        x_in = jnp.concatenate([emb[:, i, :], h], axis=1)
        h = jnp.maximum(x_in @ w_enc.T + b_enc, 0.0)
    return h @ w_dec.T + b_dec


if __name__ == "__main__":
    key = jax.random.PRNGKey(0)
    k_x, k_p = jax.random.split(key)

    batch = 2
    x = jax.random.normal(k_x, (batch, WINDOW_SIZE, NUM_CLASSES_IN),
                          dtype=jnp.float32)
    torch_params = init_params(k_p)
    fused = fuse_params(torch_params)

    out = seq2seq_forward(x, fused)
    out = jax.block_until_ready(out)

    ref = _reference(x, torch_params)
    assert out.shape == (batch, NUM_CLASSES_OUT)
    assert np.allclose(np.asarray(out), np.asarray(ref), rtol=1e-3, atol=1e-3)

    print("KERNEL_OK")
</pallas_src>

<mosaic_0001>
module attributes {stable_mosaic.version = 11 : i64} {
  func.func @_seq2seq_kernel(%arg0: i32, %arg1: memref<8x35x31xf32, #tpu.memory_space<vmem>>, %arg2: memref<31x32xf32, #tpu.memory_space<vmem>>, %arg3: memref<1x32xf32, #tpu.memory_space<vmem>>, %arg4: memref<32x32xf32, #tpu.memory_space<vmem>>, %arg5: memref<32x2xf32, #tpu.memory_space<vmem>>, %arg6: memref<1x2xf32, #tpu.memory_space<vmem>>, %arg7: memref<8x2xf32, #tpu.memory_space<vmem>>) attributes {dimension_semantics = [#tpu.dimension_semantics<parallel>], iteration_bounds = array<i64: 1>, scalar_prefetch = 0 : i64, scratch_operands = 0 : i64, tpu.core_type = #tpu.core_type<tc>, window_params = [{transform_indices = @transform_0, window_bounds = array<i64: 8, 35, 31>}, {pipeline_mode = #tpu.pipeline_mode<synchronous>, transform_indices = @transform_1, window_bounds = array<i64: 31, 32>}, {pipeline_mode = #tpu.pipeline_mode<synchronous>, transform_indices = @transform_2, window_bounds = array<i64: 1, 32>}, {pipeline_mode = #tpu.pipeline_mode<synchronous>, transform_indices = @transform_3, window_bounds = array<i64: 32, 32>}, {pipeline_mode = #tpu.pipeline_mode<synchronous>, transform_indices = @transform_4, window_bounds = array<i64: 32, 2>}, {pipeline_mode = #tpu.pipeline_mode<synchronous>, transform_indices = @transform_5, window_bounds = array<i64: 1, 2>}, {transform_indices = @transform_6, window_bounds = array<i64: 8, 2>}]} {
    %c0 = arith.constant 0 : index
    %c0_0 = arith.constant 0 : index
    %c0_1 = arith.constant 0 : index
    %0 = vector.load %arg1[%c0, %c0_0, %c0_1] : memref<8x35x31xf32, #tpu.memory_space<vmem>>, vector<8x35x31xf32>
    %1 = vector.shape_cast %0 : vector<8x35x31xf32> to vector<280x31xf32>
    %c0_2 = arith.constant 0 : index
    %c0_3 = arith.constant 0 : index
    %2 = vector.load %arg2[%c0_2, %c0_3] : memref<31x32xf32, #tpu.memory_space<vmem>>, vector<31x32xf32>
    %cst = arith.constant dense<0.000000e+00> : vector<280x32xf32>
    %3 = tpu.matmul %1, %2, %cst {dimension_numbers = #tpu.dot_dimension_numbers<[1], [0], [0], [1], [0, 0, 1, 1], [], []>} : vector<280x31xf32>, vector<31x32xf32>, vector<280x32xf32> -> vector<280x32xf32>
    %c0_4 = arith.constant 0 : index
    %c0_5 = arith.constant 0 : index
    %4 = vector.load %arg3[%c0_4, %c0_5] : memref<1x32xf32, #tpu.memory_space<vmem>>, vector<1x32xf32>
    %5 = vector.broadcast %4 : vector<1x32xf32> to vector<280x32xf32>
    %6 = arith.addf %3, %5 : vector<280x32xf32>
    %7 = vector.shape_cast %6 : vector<280x32xf32> to vector<8x35x32xf32>
    %c0_6 = arith.constant 0 : index
    %c0_7 = arith.constant 0 : index
    %8 = vector.load %arg4[%c0_6, %c0_7] : memref<32x32xf32, #tpu.memory_space<vmem>>, vector<32x32xf32>
    %cst_8 = arith.constant 0.000000e+00 : f32
    %9 = vector.broadcast %cst_8 : f32 to vector<8x32xf32>
    %cst_9 = arith.constant dense<0.000000e+00> : vector<8x32xf32>
    %10 = tpu.matmul %9, %8, %cst_9 {dimension_numbers = #tpu.dot_dimension_numbers<[1], [0], [0], [1], [0, 0, 1, 1], [], []>} : vector<8x32xf32>, vector<32x32xf32>, vector<8x32xf32> -> vector<8x32xf32>
    %11 = vector.extract_strided_slice %7 {offsets = [0, 0, 0], sizes = [8, 1, 32], strides = [1, 1, 1]} : vector<8x35x32xf32> to vector<8x1x32xf32>
    %12 = vector.shape_cast %11 : vector<8x1x32xf32> to vector<8x32xf32>
    %13 = arith.addf %10, %12 : vector<8x32xf32>
    %cst_10 = arith.constant 0.000000e+00 : f32
    %14 = vector.broadcast %cst_10 : f32 to vector<8x32xf32>
    %15 = arith.maximumf %13, %14 : vector<8x32xf32>
    %cst_11 = arith.constant dense<0.000000e+00> : vector<8x32xf32>
    %16 = tpu.matmul %15, %8, %cst_11 {dimension_numbers = #tpu.dot_dimension_numbers<[1], [0], [0], [1], [0, 0, 1, 1], [], []>} : vector<8x32xf32>, vector<32x32xf32>, vector<8x32xf32> -> vector<8x32xf32>
    %17 = vector.extract_strided_slice %7 {offsets = [0, 1, 0], sizes = [8, 1, 32], strides = [1, 1, 1]} : vector<8x35x32xf32> to vector<8x1x32xf32>
    %18 = vector.shape_cast %17 : vector<8x1x32xf32> to vector<8x32xf32>
    %19 = arith.addf %16, %18 : vector<8x32xf32>
    %cst_12 = arith.constant 0.000000e+00 : f32
    %20 = vector.broadcast %cst_12 : f32 to vector<8x32xf32>
    %21 = arith.maximumf %19, %20 : vector<8x32xf32>
    %cst_13 = arith.constant dense<0.000000e+00> : vector<8x32xf32>
    %22 = tpu.matmul %21, %8, %cst_13 {dimension_numbers = #tpu.dot_dimension_numbers<[1], [0], [0], [1], [0, 0, 1, 1], [], []>} : vector<8x32xf32>, vector<32x32xf32>, vector<8x32xf32> -> vector<8x32xf32>
    %23 = vector.extract_strided_slice %7 {offsets = [0, 2, 0], sizes = [8, 1, 32], strides = [1, 1, 1]} : vector<8x35x32xf32> to vector<8x1x32xf32>
    %24 = vector.shape_cast %23 : vector<8x1x32xf32> to vector<8x32xf32>
    %25 = arith.addf %22, %24 : vector<8x32xf32>
    %cst_14 = arith.constant 0.000000e+00 : f32
    %26 = vector.broadcast %cst_14 : f32 to vector<8x32xf32>
    %27 = arith.maximumf %25, %26 : vector<8x32xf32>
    %cst_15 = arith.constant dense<0.000000e+00> : vector<8x32xf32>
    %28 = tpu.matmul %27, %8, %cst_15 {dimension_numbers = #tpu.dot_dimension_numbers<[1], [0], [0], [1], [0, 0, 1, 1], [], []>} : vector<8x32xf32>, vector<32x32xf32>, vector<8x32xf32> -> vector<8x32xf32>
    %29 = vector.extract_strided_slice %7 {offsets = [0, 3, 0], sizes = [8, 1, 32], strides = [1, 1, 1]} : vector<8x35x32xf32> to vector<8x1x32xf32>
    %30 = vector.shape_cast %29 : vector<8x1x32xf32> to vector<8x32xf32>
    %31 = arith.addf %28, %30 : vector<8x32xf32>
    %cst_16 = arith.constant 0.000000e+00 : f32
    %32 = vector.broadcast %cst_16 : f32 to vector<8x32xf32>
    %33 = arith.maximumf %31, %32 : vector<8x32xf32>
    %cst_17 = arith.constant dense<0.000000e+00> : vector<8x32xf32>
    %34 = tpu.matmul %33, %8, %cst_17 {dimension_numbers = #tpu.dot_dimension_numbers<[1], [0], [0], [1], [0, 0, 1, 1], [], []>} : vector<8x32xf32>, vector<32x32xf32>, vector<8x32xf32> -> vector<8x32xf32>
    %35 = vector.extract_strided_slice %7 {offsets = [0, 4, 0], sizes = [8, 1, 32], strides = [1, 1, 1]} : vector<8x35x32xf32> to vector<8x1x32xf32>
    %36 = vector.shape_cast %35 : vector<8x1x32xf32> to vector<8x32xf32>
    %37 = arith.addf %34, %36 : vector<8x32xf32>
    %cst_18 = arith.constant 0.000000e+00 : f32
    %38 = vector.broadcast %cst_18 : f32 to vector<8x32xf32>
    %39 = arith.maximumf %37, %38 : vector<8x32xf32>
    %cst_19 = arith.constant dense<0.000000e+00> : vector<8x32xf32>
    %40 = tpu.matmul %39, %8, %cst_19 {dimension_numbers = #tpu.dot_dimension_numbers<[1], [0], [0], [1], [0, 0, 1, 1], [], []>} : vector<8x32xf32>, vector<32x32xf32>, vector<8x32xf32> -> vector<8x32xf32>
    %41 = vector.extract_strided_slice %7 {offsets = [0, 5, 0], sizes = [8, 1, 32], strides = [1, 1, 1]} : vector<8x35x32xf32> to vector<8x1x32xf32>
    %42 = vector.shape_cast %41 : vector<8x1x32xf32> to vector<8x32xf32>
    %43 = arith.addf %40, %42 : vector<8x32xf32>
    %cst_20 = arith.constant 0.000000e+00 : f32
    %44 = vector.broadcast %cst_20 : f32 to vector<8x32xf32>
    %45 = arith.maximumf %43, %44 : vector<8x32xf32>
    %cst_21 = arith.constant dense<0.000000e+00> : vector<8x32xf32>
    %46 = tpu.matmul %45, %8, %cst_21 {dimension_numbers = #tpu.dot_dimension_numbers<[1], [0], [0], [1], [0, 0, 1, 1], [], []>} : vector<8x32xf32>, vector<32x32xf32>, vector<8x32xf32> -> vector<8x32xf32>
    %47 = vector.extract_strided_slice %7 {offsets = [0, 6, 0], sizes = [8, 1, 32], strides = [1, 1, 1]} : vector<8x35x32xf32> to vector<8x1x32xf32>
    %48 = vector.shape_cast %47 : vector<8x1x32xf32> to vector<8x32xf32>
    %49 = arith.addf %46, %48 : vector<8x32xf32>
    %cst_22 = arith.constant 0.000000e+00 : f32
    %50 = vector.broadcast %cst_22 : f32 to vector<8x32xf32>
    %51 = arith.maximumf %49, %50 : vector<8x32xf32>
    %cst_23 = arith.constant dense<0.000000e+00> : vector<8x32xf32>
    %52 = tpu.matmul %51, %8, %cst_23 {dimension_numbers = #tpu.dot_dimension_numbers<[1], [0], [0], [1], [0, 0, 1, 1], [], []>} : vector<8x32xf32>, vector<32x32xf32>, vector<8x32xf32> -> vector<8x32xf32>
    %53 = vector.extract_strided_slice %7 {offsets = [0, 7, 0], sizes = [8, 1, 32], strides = [1, 1, 1]} : vector<8x35x32xf32> to vector<8x1x32xf32>
    %54 = vector.shape_cast %53 : vector<8x1x32xf32> to vector<8x32xf32>
    %55 = arith.addf %52, %54 : vector<8x32xf32>
    %cst_24 = arith.constant 0.000000e+00 : f32
    %56 = vector.broadcast %cst_24 : f32 to vector<8x32xf32>
    %57 = arith.maximumf %55, %56 : vector<8x32xf32>
    %cst_25 = arith.constant dense<0.000000e+00> : vector<8x32xf32>
    %58 = tpu.matmul %57, %8, %cst_25 {dimension_numbers = #tpu.dot_dimension_numbers<[1], [0], [0], [1], [0, 0, 1, 1], [], []>} : vector<8x32xf32>, vector<32x32xf32>, vector<8x32xf32> -> vector<8x32xf32>
    %59 = vector.extract_strided_slice %7 {offsets = [0, 8, 0], sizes = [8, 1, 32], strides = [1, 1, 1]} : vector<8x35x32xf32> to vector<8x1x32xf32>
    %60 = vector.shape_cast %59 : vector<8x1x32xf32> to vector<8x32xf32>
    %61 = arith.addf %58, %60 : vector<8x32xf32>
    %cst_26 = arith.constant 0.000000e+00 : f32
    %62 = vector.broadcast %cst_26 : f32 to vector<8x32xf32>
    %63 = arith.maximumf %61, %62 : vector<8x32xf32>
    %cst_27 = arith.constant dense<0.000000e+00> : vector<8x32xf32>
    %64 = tpu.matmul %63, %8, %cst_27 {dimension_numbers = #tpu.dot_dimension_numbers<[1], [0], [0], [1], [0, 0, 1, 1], [], []>} : vector<8x32xf32>, vector<32x32xf32>, vector<8x32xf32> -> vector<8x32xf32>
    %65 = vector.extract_strided_slice %7 {offsets = [0, 9, 0], sizes = [8, 1, 32], strides = [1, 1, 1]} : vector<8x35x32xf32> to vector<8x1x32xf32>
    %66 = vector.shape_cast %65 : vector<8x1x32xf32> to vector<8x32xf32>
    %67 = arith.addf %64, %66 : vector<8x32xf32>
    %cst_28 = arith.constant 0.000000e+00 : f32
    %68 = vector.broadcast %cst_28 : f32 to vector<8x32xf32>
    %69 = arith.maximumf %67, %68 : vector<8x32xf32>
    %cst_29 = arith.constant dense<0.000000e+00> : vector<8x32xf32>
    %70 = tpu.matmul %69, %8, %cst_29 {dimension_numbers = #tpu.dot_dimension_numbers<[1], [0], [0], [1], [0, 0, 1, 1], [], []>} : vector<8x32xf32>, vector<32x32xf32>, vector<8x32xf32> -> vector<8x32xf32>
    %71 = vector.extract_strided_slice %7 {offsets = [0, 10, 0], sizes = [8, 1, 32], strides = [1, 1, 1]} : vector<8x35x32xf32> to vector<8x1x32xf32>
    %72 = vector.shape_cast %71 : vector<8x1x32xf32> to vector<8x32xf32>
    %73 = arith.addf %70, %72 : vector<8x32xf32>
    %cst_30 = arith.constant 0.000000e+00 : f32
    %74 = vector.broadcast %cst_30 : f32 to vector<8x32xf32>
    %75 = arith.maximumf %73, %74 : vector<8x32xf32>
    %cst_31 = arith.constant dense<0.000000e+00> : vector<8x32xf32>
    %76 = tpu.matmul %75, %8, %cst_31 {dimension_numbers = #tpu.dot_dimension_numbers<[1], [0], [0], [1], [0, 0, 1, 1], [], []>} : vector<8x32xf32>, vector<32x32xf32>, vector<8x32xf32> -> vector<8x32xf32>
    %77 = vector.extract_strided_slice %7 {offsets = [0, 11, 0], sizes = [8, 1, 32], strides = [1, 1, 1]} : vector<8x35x32xf32> to vector<8x1x32xf32>
    %78 = vector.shape_cast %77 : vector<8x1x32xf32> to vector<8x32xf32>
    %79 = arith.addf %76, %78 : vector<8x32xf32>
    %cst_32 = arith.constant 0.000000e+00 : f32
    %80 = vector.broadcast %cst_32 : f32 to vector<8x32xf32>
    %81 = arith.maximumf %79, %80 : vector<8x32xf32>
    %cst_33 = arith.constant dense<0.000000e+00> : vector<8x32xf32>
    %82 = tpu.matmul %81, %8, %cst_33 {dimension_numbers = #tpu.dot_dimension_numbers<[1], [0], [0], [1], [0, 0, 1, 1], [], []>} : vector<8x32xf32>, vector<32x32xf32>, vector<8x32xf32> -> vector<8x32xf32>
    %83 = vector.extract_strided_slice %7 {offsets = [0, 12, 0], sizes = [8, 1, 32], strides = [1, 1, 1]} : vector<8x35x32xf32> to vector<8x1x32xf32>
    %84 = vector.shape_cast %83 : vector<8x1x32xf32> to vector<8x32xf32>
    %85 = arith.addf %82, %84 : vector<8x32xf32>
    %cst_34 = arith.constant 0.000000e+00 : f32
    %86 = vector.broadcast %cst_34 : f32 to vector<8x32xf32>
    %87 = arith.maximumf %85, %86 : vector<8x32xf32>
    %cst_35 = arith.constant dense<0.000000e+00> : vector<8x32xf32>
    %88 = tpu.matmul %87, %8, %cst_35 {dimension_numbers = #tpu.dot_dimension_numbers<[1], [0], [0], [1], [0, 0, 1, 1], [], []>} : vector<8x32xf32>, vector<32x32xf32>, vector<8x32xf32> -> vector<8x32xf32>
    %89 = vector.extract_strided_slice %7 {offsets = [0, 13, 0], sizes = [8, 1, 32], strides = [1, 1, 1]} : vector<8x35x32xf32> to vector<8x1x32xf32>
    %90 = vector.shape_cast %89 : vector<8x1x32xf32> to vector<8x32xf32>
    %91 = arith.addf %88, %90 : vector<8x32xf32>
    %cst_36 = arith.constant 0.000000e+00 : f32
    %92 = vector.broadcast %cst_36 : f32 to vector<8x32xf32>
    %93 = arith.maximumf %91, %92 : vector<8x32xf32>
    %cst_37 = arith.constant dense<0.000000e+00> : vector<8x32xf32>
    %94 = tpu.matmul %93, %8, %cst_37 {dimension_numbers = #tpu.dot_dimension_numbers<[1], [0], [0], [1], [0, 0, 1, 1], [], []>} : vector<8x32xf32>, vector<32x32xf32>, vector<8x32xf32> -> vector<8x32xf32>
    %95 = vector.extract_strided_slice %7 {offsets = [0, 14, 0], sizes = [8, 1, 32], strides = [1, 1, 1]} : vector<8x35x32xf32> to vector<8x1x32xf32>
    %96 = vector.shape_cast %95 : vector<8x1x32xf32> to vector<8x32xf32>
    %97 = arith.addf %94, %96 : vector<8x32xf32>
    %cst_38 = arith.constant 0.000000e+00 : f32
    %98 = vector.broadcast %cst_38 : f32 to vector<8x32xf32>
    %99 = arith.maximumf %97, %98 : vector<8x32xf32>
    %cst_39 = arith.constant dense<0.000000e+00> : vector<8x32xf32>
    %100 = tpu.matmul %99, %8, %cst_39 {dimension_numbers = #tpu.dot_dimension_numbers<[1], [0], [0], [1], [0, 0, 1, 1], [], []>} : vector<8x32xf32>, vector<32x32xf32>, vector<8x32xf32> -> vector<8x32xf32>
    %101 = vector.extract_strided_slice %7 {offsets = [0, 15, 0], sizes = [8, 1, 32], strides = [1, 1, 1]} : vector<8x35x32xf32> to vector<8x1x32xf32>
    %102 = vector.shape_cast %101 : vector<8x1x32xf32> to vector<8x32xf32>
    %103 = arith.addf %100, %102 : vector<8x32xf32>
    %cst_40 = arith.constant 0.000000e+00 : f32
    %104 = vector.broadcast %cst_40 : f32 to vector<8x32xf32>
    %105 = arith.maximumf %103, %104 : vector<8x32xf32>
    %cst_41 = arith.constant dense<0.000000e+00> : vector<8x32xf32>
    %106 = tpu.matmul %105, %8, %cst_41 {dimension_numbers = #tpu.dot_dimension_numbers<[1], [0], [0], [1], [0, 0, 1, 1], [], []>} : vector<8x32xf32>, vector<32x32xf32>, vector<8x32xf32> -> vector<8x32xf32>
    %107 = vector.extract_strided_slice %7 {offsets = [0, 16, 0], sizes = [8, 1, 32], strides = [1, 1, 1]} : vector<8x35x32xf32> to vector<8x1x32xf32>
    %108 = vector.shape_cast %107 : vector<8x1x32xf32> to vector<8x32xf32>
    %109 = arith.addf %106, %108 : vector<8x32xf32>
    %cst_42 = arith.constant 0.000000e+00 : f32
    %110 = vector.broadcast %cst_42 : f32 to vector<8x32xf32>
    %111 = arith.maximumf %109, %110 : vector<8x32xf32>
    %cst_43 = arith.constant dense<0.000000e+00> : vector<8x32xf32>
    %112 = tpu.matmul %111, %8, %cst_43 {dimension_numbers = #tpu.dot_dimension_numbers<[1], [0], [0], [1], [0, 0, 1, 1], [], []>} : vector<8x32xf32>, vector<32x32xf32>, vector<8x32xf32> -> vector<8x32xf32>
    %113 = vector.extract_strided_slice %7 {offsets = [0, 17, 0], sizes = [8, 1, 32], strides = [1, 1, 1]} : vector<8x35x32xf32> to vector<8x1x32xf32>
    %114 = vector.shape_cast %113 : vector<8x1x32xf32> to vector<8x32xf32>
    %115 = arith.addf %112, %114 : vector<8x32xf32>
    %cst_44 = arith.constant 0.000000e+00 : f32
    %116 = vector.broadcast %cst_44 : f32 to vector<8x32xf32>
    %117 = arith.maximumf %115, %116 : vector<8x32xf32>
    %cst_45 = arith.constant dense<0.000000e+00> : vector<8x32xf32>
    %118 = tpu.matmul %117, %8, %cst_45 {dimension_numbers = #tpu.dot_dimension_numbers<[1], [0], [0], [1], [0, 0, 1, 1], [], []>} : vector<8x32xf32>, vector<32x32xf32>, vector<8x32xf32> -> vector<8x32xf32>
    %119 = vector.extract_strided_slice %7 {offsets = [0, 18, 0], sizes = [8, 1, 32], strides = [1, 1, 1]} : vector<8x35x32xf32> to vector<8x1x32xf32>
    %120 = vector.shape_cast %119 : vector<8x1x32xf32> to vector<8x32xf32>
    %121 = arith.addf %118, %120 : vector<8x32xf32>
    %cst_46 = arith.constant 0.000000e+00 : f32
    %122 = vector.broadcast %cst_46 : f32 to vector<8x32xf32>
    %123 = arith.maximumf %121, %122 : vector<8x32xf32>
    %cst_47 = arith.constant dense<0.000000e+00> : vector<8x32xf32>
    %124 = tpu.matmul %123, %8, %cst_47 {dimension_numbers = #tpu.dot_dimension_numbers<[1], [0], [0], [1], [0, 0, 1, 1], [], []>} : vector<8x32xf32>, vector<32x32xf32>, vector<8x32xf32> -> vector<8x32xf32>
    %125 = vector.extract_strided_slice %7 {offsets = [0, 19, 0], sizes = [8, 1, 32], strides = [1, 1, 1]} : vector<8x35x32xf32> to vector<8x1x32xf32>
    %126 = vector.shape_cast %125 : vector<8x1x32xf32> to vector<8x32xf32>
    %127 = arith.addf %124, %126 : vector<8x32xf32>
    %cst_48 = arith.constant 0.000000e+00 : f32
    %128 = vector.broadcast %cst_48 : f32 to vector<8x32xf32>
    %129 = arith.maximumf %127, %128 : vector<8x32xf32>
    %cst_49 = arith.constant dense<0.000000e+00> : vector<8x32xf32>
    %130 = tpu.matmul %129, %8, %cst_49 {dimension_numbers = #tpu.dot_dimension_numbers<[1], [0], [0], [1], [0, 0, 1, 1], [], []>} : vector<8x32xf32>, vector<32x32xf32>, vector<8x32xf32> -> vector<8x32xf32>
    %131 = vector.extract_strided_slice %7 {offsets = [0, 20, 0], sizes = [8, 1, 32], strides = [1, 1, 1]} : vector<8x35x32xf32> to vector<8x1x32xf32>
    %132 = vector.shape_cast %131 : vector<8x1x32xf32> to vector<8x32xf32>
    %133 = arith.addf %130, %132 : vector<8x32xf32>
    %cst_50 = arith.constant 0.000000e+00 : f32
    %134 = vector.broadcast %cst_50 : f32 to vector<8x32xf32>
    %135 = arith.maximumf %133, %134 : vector<8x32xf32>
    %cst_51 = arith.constant dense<0.000000e+00> : vector<8x32xf32>
    %136 = tpu.matmul %135, %8, %cst_51 {dimension_numbers = #tpu.dot_dimension_numbers<[1], [0], [0], [1], [0, 0, 1, 1], [], []>} : vector<8x32xf32>, vector<32x32xf32>, vector<8x32xf32> -> vector<8x32xf32>
    %137 = vector.extract_strided_slice %7 {offsets = [0, 21, 0], sizes = [8, 1, 32], strides = [1, 1, 1]} : vector<8x35x32xf32> to vector<8x1x32xf32>
    %138 = vector.shape_cast %137 : vector<8x1x32xf32> to vector<8x32xf32>
    %139 = arith.addf %136, %138 : vector<8x32xf32>
    %cst_52 = arith.constant 0.000000e+00 : f32
    %140 = vector.broadcast %cst_52 : f32 to vector<8x32xf32>
    %141 = arith.maximumf %139, %140 : vector<8x32xf32>
    %cst_53 = arith.constant dense<0.000000e+00> : vector<8x32xf32>
    %142 = tpu.matmul %141, %8, %cst_53 {dimension_numbers = #tpu.dot_dimension_numbers<[1], [0], [0], [1], [0, 0, 1, 1], [], []>} : vector<8x32xf32>, vector<32x32xf32>, vector<8x32xf32> -> vector<8x32xf32>
    %143 = vector.extract_strided_slice %7 {offsets = [0, 22, 0], sizes = [8, 1, 32], strides = [1, 1, 1]} : vector<8x35x32xf32> to vector<8x1x32xf32>
    %144 = vector.shape_cast %143 : vector<8x1x32xf32> to vector<8x32xf32>
    %145 = arith.addf %142, %144 : vector<8x32xf32>
    %cst_54 = arith.constant 0.000000e+00 : f32
    %146 = vector.broadcast %cst_54 : f32 to vector<8x32xf32>
    %147 = arith.maximumf %145, %146 : vector<8x32xf32>
    %cst_55 = arith.constant dense<0.000000e+00> : vector<8x32xf32>
    %148 = tpu.matmul %147, %8, %cst_55 {dimension_numbers = #tpu.dot_dimension_numbers<[1], [0], [0], [1], [0, 0, 1, 1], [], []>} : vector<8x32xf32>, vector<32x32xf32>, vector<8x32xf32> -> vector<8x32xf32>
    %149 = vector.extract_strided_slice %7 {offsets = [0, 23, 0], sizes = [8, 1, 32], strides = [1, 1, 1]} : vector<8x35x32xf32> to vector<8x1x32xf32>
    %150 = vector.shape_cast %149 : vector<8x1x32xf32> to vector<8x32xf32>
    %151 = arith.addf %148, %150 : vector<8x32xf32>
    %cst_56 = arith.constant 0.000000e+00 : f32
    %152 = vector.broadcast %cst_56 : f32 to vector<8x32xf32>
    %153 = arith.maximumf %151, %152 : vector<8x32xf32>
    %cst_57 = arith.constant dense<0.000000e+00> : vector<8x32xf32>
    %154 = tpu.matmul %153, %8, %cst_57 {dimension_numbers = #tpu.dot_dimension_numbers<[1], [0], [0], [1], [0, 0, 1, 1], [], []>} : vector<8x32xf32>, vector<32x32xf32>, vector<8x32xf32> -> vector<8x32xf32>
    %155 = vector.extract_strided_slice %7 {offsets = [0, 24, 0], sizes = [8, 1, 32], strides = [1, 1, 1]} : vector<8x35x32xf32> to vector<8x1x32xf32>
    %156 = vector.shape_cast %155 : vector<8x1x32xf32> to vector<8x32xf32>
    %157 = arith.addf %154, %156 : vector<8x32xf32>
    %cst_58 = arith.constant 0.000000e+00 : f32
    %158 = vector.broadcast %cst_58 : f32 to vector<8x32xf32>
    %159 = arith.maximumf %157, %158 : vector<8x32xf32>
    %cst_59 = arith.constant dense<0.000000e+00> : vector<8x32xf32>
    %160 = tpu.matmul %159, %8, %cst_59 {dimension_numbers = #tpu.dot_dimension_numbers<[1], [0], [0], [1], [0, 0, 1, 1], [], []>} : vector<8x32xf32>, vector<32x32xf32>, vector<8x32xf32> -> vector<8x32xf32>
    %161 = vector.extract_strided_slice %7 {offsets = [0, 25, 0], sizes = [8, 1, 32], strides = [1, 1, 1]} : vector<8x35x32xf32> to vector<8x1x32xf32>
    %162 = vector.shape_cast %161 : vector<8x1x32xf32> to vector<8x32xf32>
    %163 = arith.addf %160, %162 : vector<8x32xf32>
    %cst_60 = arith.constant 0.000000e+00 : f32
    %164 = vector.broadcast %cst_60 : f32 to vector<8x32xf32>
    %165 = arith.maximumf %163, %164 : vector<8x32xf32>
    %cst_61 = arith.constant dense<0.000000e+00> : vector<8x32xf32>
    %166 = tpu.matmul %165, %8, %cst_61 {dimension_numbers = #tpu.dot_dimension_numbers<[1], [0], [0], [1], [0, 0, 1, 1], [], []>} : vector<8x32xf32>, vector<32x32xf32>, vector<8x32xf32> -> vector<8x32xf32>
    %167 = vector.extract_strided_slice %7 {offsets = [0, 26, 0], sizes = [8, 1, 32], strides = [1, 1, 1]} : vector<8x35x32xf32> to vector<8x1x32xf32>
    %168 = vector.shape_cast %167 : vector<8x1x32xf32> to vector<8x32xf32>
    %169 = arith.addf %166, %168 : vector<8x32xf32>
    %cst_62 = arith.constant 0.000000e+00 : f32
    %170 = vector.broadcast %cst_62 : f32 to vector<8x32xf32>
    %171 = arith.maximumf %169, %170 : vector<8x32xf32>
    %cst_63 = arith.constant dense<0.000000e+00> : vector<8x32xf32>
    %172 = tpu.matmul %171, %8, %cst_63 {dimension_numbers = #tpu.dot_dimension_numbers<[1], [0], [0], [1], [0, 0, 1, 1], [], []>} : vector<8x32xf32>, vector<32x32xf32>, vector<8x32xf32> -> vector<8x32xf32>
    %173 = vector.extract_strided_slice %7 {offsets = [0, 27, 0], sizes = [8, 1, 32], strides = [1, 1, 1]} : vector<8x35x32xf32> to vector<8x1x32xf32>
    %174 = vector.shape_cast %173 : vector<8x1x32xf32> to vector<8x32xf32>
    %175 = arith.addf %172, %174 : vector<8x32xf32>
    %cst_64 = arith.constant 0.000000e+00 : f32
    %176 = vector.broadcast %cst_64 : f32 to vector<8x32xf32>
    %177 = arith.maximumf %175, %176 : vector<8x32xf32>
    %cst_65 = arith.constant dense<0.000000e+00> : vector<8x32xf32>
    %178 = tpu.matmul %177, %8, %cst_65 {dimension_numbers = #tpu.dot_dimension_numbers<[1], [0], [0], [1], [0, 0, 1, 1], [], []>} : vector<8x32xf32>, vector<32x32xf32>, vector<8x32xf32> -> vector<8x32xf32>
    %179 = vector.extract_strided_slice %7 {offsets = [0, 28, 0], sizes = [8, 1, 32], strides = [1, 1, 1]} : vector<8x35x32xf32> to vector<8x1x32xf32>
    %180 = vector.shape_cast %179 : vector<8x1x32xf32> to vector<8x32xf32>
    %181 = arith.addf %178, %180 : vector<8x32xf32>
    %cst_66 = arith.constant 0.000000e+00 : f32
    %182 = vector.broadcast %cst_66 : f32 to vector<8x32xf32>
    %183 = arith.maximumf %181, %182 : vector<8x32xf32>
    %cst_67 = arith.constant dense<0.000000e+00> : vector<8x32xf32>
    %184 = tpu.matmul %183, %8, %cst_67 {dimension_numbers = #tpu.dot_dimension_numbers<[1], [0], [0], [1], [0, 0, 1, 1], [], []>} : vector<8x32xf32>, vector<32x32xf32>, vector<8x32xf32> -> vector<8x32xf32>
    %185 = vector.extract_strided_slice %7 {offsets = [0, 29, 0], sizes = [8, 1, 32], strides = [1, 1, 1]} : vector<8x35x32xf32> to vector<8x1x32xf32>
    %186 = vector.shape_cast %185 : vector<8x1x32xf32> to vector<8x32xf32>
    %187 = arith.addf %184, %186 : vector<8x32xf32>
    %cst_68 = arith.constant 0.000000e+00 : f32
    %188 = vector.broadcast %cst_68 : f32 to vector<8x32xf32>
    %189 = arith.maximumf %187, %188 : vector<8x32xf32>
    %cst_69 = arith.constant dense<0.000000e+00> : vector<8x32xf32>
    %190 = tpu.matmul %189, %8, %cst_69 {dimension_numbers = #tpu.dot_dimension_numbers<[1], [0], [0], [1], [0, 0, 1, 1], [], []>} : vector<8x32xf32>, vector<32x32xf32>, vector<8x32xf32> -> vector<8x32xf32>
    %191 = vector.extract_strided_slice %7 {offsets = [0, 30, 0], sizes = [8, 1, 32], strides = [1, 1, 1]} : vector<8x35x32xf32> to vector<8x1x32xf32>
    %192 = vector.shape_cast %191 : vector<8x1x32xf32> to vector<8x32xf32>
    %193 = arith.addf %190, %192 : vector<8x32xf32>
    %cst_70 = arith.constant 0.000000e+00 : f32
    %194 = vector.broadcast %cst_70 : f32 to vector<8x32xf32>
    %195 = arith.maximumf %193, %194 : vector<8x32xf32>
    %cst_71 = arith.constant dense<0.000000e+00> : vector<8x32xf32>
    %196 = tpu.matmul %195, %8, %cst_71 {dimension_numbers = #tpu.dot_dimension_numbers<[1], [0], [0], [1], [0, 0, 1, 1], [], []>} : vector<8x32xf32>, vector<32x32xf32>, vector<8x32xf32> -> vector<8x32xf32>
    %197 = vector.extract_strided_slice %7 {offsets = [0, 31, 0], sizes = [8, 1, 32], strides = [1, 1, 1]} : vector<8x35x32xf32> to vector<8x1x32xf32>
    %198 = vector.shape_cast %197 : vector<8x1x32xf32> to vector<8x32xf32>
    %199 = arith.addf %196, %198 : vector<8x32xf32>
    %cst_72 = arith.constant 0.000000e+00 : f32
    %200 = vector.broadcast %cst_72 : f32 to vector<8x32xf32>
    %201 = arith.maximumf %199, %200 : vector<8x32xf32>
    %cst_73 = arith.constant dense<0.000000e+00> : vector<8x32xf32>
    %202 = tpu.matmul %201, %8, %cst_73 {dimension_numbers = #tpu.dot_dimension_numbers<[1], [0], [0], [1], [0, 0, 1, 1], [], []>} : vector<8x32xf32>, vector<32x32xf32>, vector<8x32xf32> -> vector<8x32xf32>
    %203 = vector.extract_strided_slice %7 {offsets = [0, 32, 0], sizes = [8, 1, 32], strides = [1, 1, 1]} : vector<8x35x32xf32> to vector<8x1x32xf32>
    %204 = vector.shape_cast %203 : vector<8x1x32xf32> to vector<8x32xf32>
    %205 = arith.addf %202, %204 : vector<8x32xf32>
    %cst_74 = arith.constant 0.000000e+00 : f32
    %206 = vector.broadcast %cst_74 : f32 to vector<8x32xf32>
    %207 = arith.maximumf %205, %206 : vector<8x32xf32>
    %cst_75 = arith.constant dense<0.000000e+00> : vector<8x32xf32>
    %208 = tpu.matmul %207, %8, %cst_75 {dimension_numbers = #tpu.dot_dimension_numbers<[1], [0], [0], [1], [0, 0, 1, 1], [], []>} : vector<8x32xf32>, vector<32x32xf32>, vector<8x32xf32> -> vector<8x32xf32>
    %209 = vector.extract_strided_slice %7 {offsets = [0, 33, 0], sizes = [8, 1, 32], strides = [1, 1, 1]} : vector<8x35x32xf32> to vector<8x1x32xf32>
    %210 = vector.shape_cast %209 : vector<8x1x32xf32> to vector<8x32xf32>
    %211 = arith.addf %208, %210 : vector<8x32xf32>
    %cst_76 = arith.constant 0.000000e+00 : f32
    %212 = vector.broadcast %cst_76 : f32 to vector<8x32xf32>
    %213 = arith.maximumf %211, %212 : vector<8x32xf32>
    %cst_77 = arith.constant dense<0.000000e+00> : vector<8x32xf32>
    %214 = tpu.matmul %213, %8, %cst_77 {dimension_numbers = #tpu.dot_dimension_numbers<[1], [0], [0], [1], [0, 0, 1, 1], [], []>} : vector<8x32xf32>, vector<32x32xf32>, vector<8x32xf32> -> vector<8x32xf32>
    %215 = vector.extract_strided_slice %7 {offsets = [0, 34, 0], sizes = [8, 1, 32], strides = [1, 1, 1]} : vector<8x35x32xf32> to vector<8x1x32xf32>
    %216 = vector.shape_cast %215 : vector<8x1x32xf32> to vector<8x32xf32>
    %217 = arith.addf %214, %216 : vector<8x32xf32>
    %cst_78 = arith.constant 0.000000e+00 : f32
    %218 = vector.broadcast %cst_78 : f32 to vector<8x32xf32>
    %219 = arith.maximumf %217, %218 : vector<8x32xf32>
    %c0_79 = arith.constant 0 : index
    %c0_80 = arith.constant 0 : index
    %220 = vector.load %arg5[%c0_79, %c0_80] : memref<32x2xf32, #tpu.memory_space<vmem>>, vector<32x2xf32>
    %cst_81 = arith.constant dense<0.000000e+00> : vector<8x2xf32>
    %221 = tpu.matmul %219, %220, %cst_81 {dimension_numbers = #tpu.dot_dimension_numbers<[1], [0], [0], [1], [0, 0, 1, 1], [], []>} : vector<8x32xf32>, vector<32x2xf32>, vector<8x2xf32> -> vector<8x2xf32>
    %c0_82 = arith.constant 0 : index
    %c0_83 = arith.constant 0 : index
    %222 = vector.load %arg6[%c0_82, %c0_83] : memref<1x2xf32, #tpu.memory_space<vmem>>, vector<1x2xf32>
    %223 = vector.broadcast %222 : vector<1x2xf32> to vector<8x2xf32>
    %224 = arith.addf %221, %223 : vector<8x2xf32>
    %c0_84 = arith.constant 0 : index
    %c0_85 = arith.constant 0 : index
    %225 = vector.load %arg7[%c0_84, %c0_85] : memref<8x2xf32, #tpu.memory_space<vmem>>, vector<8x2xf32>
    tpu.vector_store %arg7[%c0_84, %c0_85], %224 {strides = array<i32>} : memref<8x2xf32, #tpu.memory_space<vmem>>, vector<8x2xf32>,
    return
  }
  func.func @transform_0(%arg0: i32) -> (i32, i32, i32) {
    %c0_i32 = arith.constant 0 : i32
    %c0_i32_0 = arith.constant 0 : i32
    %c0_i32_1 = arith.constant 0 : i32
    return %arg0, %c0_i32, %c0_i32_0 : i32, i32, i32
  }
  func.func @transform_1(%arg0: i32) -> (i32, i32) {
    %c0_i32 = arith.constant 0 : i32
    %c0_i32_0 = arith.constant 0 : i32
    %c0_i32_1 = arith.constant 0 : i32
    return %c0_i32, %c0_i32_0 : i32, i32
  }
  func.func @transform_2(%arg0: i32) -> (i32, i32) {
    %c0_i32 = arith.constant 0 : i32
    %c0_i32_0 = arith.constant 0 : i32
    %c0_i32_1 = arith.constant 0 : i32
    return %c0_i32, %c0_i32_0 : i32, i32
  }
  func.func @transform_3(%arg0: i32) -> (i32, i32) {
    %c0_i32 = arith.constant 0 : i32
    %c0_i32_0 = arith.constant 0 : i32
    %c0_i32_1 = arith.constant 0 : i32
    return %c0_i32, %c0_i32_0 : i32, i32
  }
  func.func @transform_4(%arg0: i32) -> (i32, i32) {
    %c0_i32 = arith.constant 0 : i32
    %c0_i32_0 = arith.constant 0 : i32
    %c0_i32_1 = arith.constant 0 : i32
    return %c0_i32, %c0_i32_0 : i32, i32
  }
  func.func @transform_5(%arg0: i32) -> (i32, i32) {
    %c0_i32 = arith.constant 0 : i32
    %c0_i32_0 = arith.constant 0 : i32
    %c0_i32_1 = arith.constant 0 : i32
    return %c0_i32, %c0_i32_0 : i32, i32
  }
  func.func @transform_6(%arg0: i32) -> (i32, i32) {
    %c0_i32 = arith.constant 0 : i32
    %c0_i32_0 = arith.constant 0 : i32
    return %arg0, %c0_i32 : i32, i32
  }
}

</mosaic_0001>

<llo_original>
// kernel: tpu_custom_call.1
$region0: #{tpu_custom_call.1}
  #allocation0 [shape = 'u32[]', space=smem, size = 0x4, offset = 0x4, fixed_abs, tag = 'smem constant byte address 0x4 - core index']
  #allocation1 [shape = 'u32[144,128]{1,0:T(1,128)}', space=vmem, size = 0x12000, scoped, tag = 'internal scratch']
  %s0 = inlined_call_operand.vmem [shape: f32[8,35,31], index: 0, kind: input, shape index: {}]
  %s1 = inlined_call_operand.vmem [shape: f32[31,32], index: 1, kind: input, shape index: {}]
  %s2 = inlined_call_operand.vmem [shape: f32[1,32], index: 2, kind: input, shape index: {}]
  %s3 = inlined_call_operand.vmem [shape: f32[32,32], index: 3, kind: input, shape index: {}]
  %s4 = inlined_call_operand.vmem [shape: f32[32,2], index: 4, kind: input, shape index: {}]
  %s5 = inlined_call_operand.vmem [shape: f32[1,2], index: 5, kind: input, shape index: {}]
  %s6 = inlined_call_operand.vmem [shape: f32[8,2], index: 6, kind: output, shape index: {}]
  %s7 = sld [smem:[#allocation0]]
  $region34: #{tpu_custom_call.1} parent=0
    _
  %s9 = ssub.s32 1, %s7
  %s10 = scalar_select 0, %s9, %s7
  // Predicated region
  $region2: #{tpu_custom_call.1} parent=0 // pred_check
    _
  $region3: #{tpu_custom_call.1} parent=0 // pred_check_branch
    %12 = sbr.rel (0) target = $region5
  $region4: #{tpu_custom_call.1} parent=0 // pred_region
    _
  $region5: #{tpu_custom_call.1} parent=0 // pred_fallthru
    _
  // Predicated region
  $region6: #{tpu_custom_call.1} parent=0 // pred_check
    _
  $region7: #{tpu_custom_call.1} parent=0 // pred_check_branch
    %14 = sbr.rel (0) target = $region9
  $region8: #{tpu_custom_call.1} parent=0 // pred_region
    _
  $region9: #{tpu_custom_call.1} parent=0 // pred_fallthru
    _
  // Predicated region
  $region10: #{tpu_custom_call.1} parent=0 // pred_check
    _
  $region11: #{tpu_custom_call.1} parent=0 // pred_check_branch
    %16 = sbr.rel (0) target = $region13
  $region12: #{tpu_custom_call.1} parent=0 // pred_region
    _
  $region13: #{tpu_custom_call.1} parent=0 // pred_fallthru
    _
  // Predicated region
  $region14: #{tpu_custom_call.1} parent=0 // pred_check
    _
  $region15: #{tpu_custom_call.1} parent=0 // pred_check_branch
    %18 = sbr.rel (0) target = $region17
  $region16: #{tpu_custom_call.1} parent=0 // pred_region
    _
  $region17: #{tpu_custom_call.1} parent=0 // pred_fallthru
    _
  // Predicated region
  $region18: #{tpu_custom_call.1} parent=0 // pred_check
    _
  $region19: #{tpu_custom_call.1} parent=0 // pred_check_branch
    %20 = sbr.rel (0) target = $region21
  $region20: #{tpu_custom_call.1} parent=0 // pred_region
    _
  $region21: #{tpu_custom_call.1} parent=0 // pred_fallthru
    _
  // Predicated region
  $region22: #{tpu_custom_call.1} parent=0 // pred_check
    _
  $region23: #{tpu_custom_call.1} parent=0 // pred_check_branch
    %22 = sbr.rel (0) target = $region25
  $region24: #{tpu_custom_call.1} parent=0 // pred_region
    _
  $region25: #{tpu_custom_call.1} parent=0 // pred_fallthru
    _
  %v23 = vld [vmem:[%s0] sm:$0xff]
  %v24 = vld [vmem:[%s0 + $0x8] sm:$0xff]
  %v25 = vld [vmem:[%s0 + $0x10] sm:$0xff]
  %v26 = vld [vmem:[%s0 + $0x18] sm:$0xff]
  %v27 = vld [vmem:[%s0 + $0x20] sm:$0x7]
  %v28 = vld [vmem:[%s0 + $0x28] sm:$0xff]
  %v29 = vld [vmem:[%s0 + $0x30] sm:$0xff]
  %v30 = vld [vmem:[%s0 + $0x38] sm:$0xff]
  %v31 = vld [vmem:[%s0 + $0x40] sm:$0xff]
  %v32 = vld [vmem:[%s0 + $0x48] sm:$0x7]
  %v33 = vld [vmem:[%s0 + $0x50] sm:$0xff]
  %v34 = vld [vmem:[%s0 + $0x58] sm:$0xff]
  %v35 = vld [vmem:[%s0 + $0x60] sm:$0xff]
  %v36 = vld [vmem:[%s0 + $0x68] sm:$0xff]
  %v37 = vld [vmem:[%s0 + $0x70] sm:$0x7]
  %v38 = vld [vmem:[%s0 + $0x78] sm:$0xff]
  %v39 = vld [vmem:[%s0 + $0x80] sm:$0xff]
  %v40 = vld [vmem:[%s0 + $0x88] sm:$0xff]
  %v41 = vld [vmem:[%s0 + $0x90] sm:$0xff]
  %v42 = vld [vmem:[%s0 + $0x98] sm:$0x7]
  %v43 = vld [vmem:[%s0 + $0xa0] sm:$0xff]
  %v44 = vld [vmem:[%s0 + $0xa8] sm:$0xff]
  %v45 = vld [vmem:[%s0 + $0xb0] sm:$0xff]
  %v46 = vld [vmem:[%s0 + $0xb8] sm:$0xff]
  %v47 = vld [vmem:[%s0 + $0xc0] sm:$0x7]
  %v48 = vld [vmem:[%s0 + $0xc8] sm:$0xff]
  %v49 = vld [vmem:[%s0 + $0xd0] sm:$0xff]
  %v50 = vld [vmem:[%s0 + $0xd8] sm:$0xff]
  %v51 = vld [vmem:[%s0 + $0xe0] sm:$0xff]
  %v52 = vld [vmem:[%s0 + $0xe8] sm:$0x7]
  %v53 = vld [vmem:[%s0 + $0xf0] sm:$0xff]
  %v54 = vld [vmem:[%s0 + $0xf8] sm:$0xff]
  %v55 = vld [vmem:[%s0 + $0x100] sm:$0xff]
  %v56 = vld [vmem:[%s0 + $0x108] sm:$0xff]
  %v57 = vld [vmem:[%s0 + $0x110] sm:$0x7]
  %v58 = vld [vmem:[%s0 + $0x118] sm:$0xff]
  %v59 = vld [vmem:[%s0 + $0x120] sm:$0xff]
  %v60 = vld [vmem:[%s0 + $0x128] sm:$0xff]
  %v61 = vld [vmem:[%s0 + $0x130] sm:$0xff]
  %v62 = vld [vmem:[%s0 + $0x138] sm:$0x7]
  %v103 = vcombine.high %v23, %v23
  %v105 = vunpack.c.l.s4 1966171168
  %v106 = vunpack.c.0.s8 %v105
  %v107 = vlaneseq
  %v108 = vshrl.u32 %v107, 7
  %v109 = vsub.s32 %v106, %v108
  %v110 = vrot.slane %v23, %v109
  %v112 = vunpack.c.l.s4 1966171168
  %v113 = vunpack.c.0.s8 %v112
  %v114 = vlaneseq
  %v115 = vshrl.u32 %v114, 7
  %v116 = vsub.s32 %v113, %v115
  %v117 = vrot.slane %v103, %v116
  %v118 = vcombine.high %v110, %v110
  %v119 = vcombine.high %v117, %v117
  %v121 = vunpack.c.l.s4 1966171168
  %v122 = vunpack.c.0.s8 %v121
  %v123 = vlaneseq
  %v124 = vshrl.u32 %v123, 7
  %v125 = vsub.s32 %v122, %v124
  %v126 = vrot.slane %v110, %v125
  %v128 = vunpack.c.l.s4 1966171168
  %v129 = vunpack.c.0.s8 %v128
  %v130 = vlaneseq
  %v131 = vshrl.u32 %v130, 7
  %v132 = vsub.s32 %v129, %v131
  %v133 = vrot.slane %v117, %v132
  %v135 = vunpack.c.l.s4 1966171168
  %v136 = vunpack.c.0.s8 %v135
  %v137 = vlaneseq
  %v138 = vshrl.u32 %v137, 7
  %v139 = vsub.s32 %v136, %v138
  %v140 = vrot.slane %v118, %v139
  %v142 = vunpack.c.l.s4 1966171168
  %v143 = vunpack.c.0.s8 %v142
  %v144 = vlaneseq
  %v145 = vshrl.u32 %v144, 7
  %v146 = vsub.s32 %v143, %v145
  %v147 = vrot.slane %v119, %v146
  %v148 = vcombine.high %v126, %v126
  %v149 = vcombine.high %v133, %v133
  %v150 = vcombine.high %v140, %v140
  %v151 = vcombine.high %v147, %v147
  %v152 = vcombine.high %v24, %v24
  %v154 = vunpack.c.l.s4 1966171168
  %v155 = vunpack.c.0.s8 %v154
  %v156 = vlaneseq
  %v157 = vshrl.u32 %v156, 7
  %v158 = vsub.s32 %v155, %v157
  %v159 = vrot.slane %v24, %v158
  %v161 = vunpack.c.l.s4 1966171168
  %v162 = vunpack.c.0.s8 %v161
  %v163 = vlaneseq
  %v164 = vshrl.u32 %v163, 7
  %v165 = vsub.s32 %v162, %v164
  %v166 = vrot.slane %v152, %v165
  %v167 = vcombine.high %v159, %v159
  %v168 = vcombine.high %v166, %v166
  %v170 = vunpack.c.l.s4 1966171168
  %v171 = vunpack.c.0.s8 %v170
  %v172 = vlaneseq
  %v173 = vshrl.u32 %v172, 7
  %v174 = vsub.s32 %v171, %v173
  %v175 = vrot.slane %v159, %v174
  %v177 = vunpack.c.l.s4 1966171168
  %v178 = vunpack.c.0.s8 %v177
  %v179 = vlaneseq
  %v180 = vshrl.u32 %v179, 7
  %v181 = vsub.s32 %v178, %v180
  %v182 = vrot.slane %v166, %v181
  %v184 = vunpack.c.l.s4 1966171168
  %v185 = vunpack.c.0.s8 %v184
  %v186 = vlaneseq
  %v187 = vshrl.u32 %v186, 7
  %v188 = vsub.s32 %v185, %v187
  %v189 = vrot.slane %v167, %v188
  %v191 = vunpack.c.l.s4 1966171168
  %v192 = vunpack.c.0.s8 %v191
  %v193 = vlaneseq
  %v194 = vshrl.u32 %v193, 7
  %v195 = vsub.s32 %v192, %v194
  %v196 = vrot.slane %v168, %v195
  %v197 = vcombine.high %v175, %v175
  %v198 = vcombine.high %v182, %v182
  %v199 = vcombine.high %v189, %v189
  %v200 = vcombine.high %v196, %v196
  %v201 = vcombine.high %v25, %v25
  %v203 = vunpack.c.l.s4 1966171168
  %v204 = vunpack.c.0.s8 %v203
  %v205 = vlaneseq
  %v206 = vshrl.u32 %v205, 7
  %v207 = vsub.s32 %v204, %v206
  %v208 = vrot.slane %v25, %v207
  %v210 = vunpack.c.l.s4 1966171168
  %v211 = vunpack.c.0.s8 %v210
  %v212 = vlaneseq
  %v213 = vshrl.u32 %v212, 7
  %v214 = vsub.s32 %v211, %v213
  %v215 = vrot.slane %v201, %v214
  %v216 = vcombine.high %v208, %v208
  %v217 = vcombine.high %v215, %v215
  %v219 = vunpack.c.l.s4 1966171168
  %v220 = vunpack.c.0.s8 %v219
  %v221 = vlaneseq
  %v222 = vshrl.u32 %v221, 7
  %v223 = vsub.s32 %v220, %v222
  %v224 = vrot.slane %v208, %v223
  %v226 = vunpack.c.l.s4 1966171168
  %v227 = vunpack.c.0.s8 %v226
  %v228 = vlaneseq
  %v229 = vshrl.u32 %v228, 7
  %v230 = vsub.s32 %v227, %v229
  %v231 = vrot.slane %v215, %v230
  %v233 = vunpack.c.l.s4 1966171168
  %v234 = vunpack.c.0.s8 %v233
  %v235 = vlaneseq
  %v236 = vshrl.u32 %v235, 7
  %v237 = vsub.s32 %v234, %v236
  %v238 = vrot.slane %v216, %v237
  %v240 = vunpack.c.l.s4 1966171168
  %v241 = vunpack.c.0.s8 %v240
  %v242 = vlaneseq
  %v243 = vshrl.u32 %v242, 7
  %v244 = vsub.s32 %v241, %v243
  %v245 = vrot.slane %v217, %v244
  %v246 = vcombine.high %v224, %v224
  %v247 = vcombine.high %v231, %v231
  %v248 = vcombine.high %v238, %v238
  %v249 = vcombine.high %v245, %v245
  %v250 = vcombine.high %v26, %v26
  %v252 = vunpack.c.l.s4 1966171168
  %v253 = vunpack.c.0.s8 %v252
  %v254 = vlaneseq
  %v255 = vshrl.u32 %v254, 7
  %v256 = vsub.s32 %v253, %v255
  %v257 = vrot.slane %v26, %v256
  %v259 = vunpack.c.l.s4 1966171168
  %v260 = vunpack.c.0.s8 %v259
  %v261 = vlaneseq
  %v262 = vshrl.u32 %v261, 7
  %v263 = vsub.s32 %v260, %v262
  %v264 = vrot.slane %v250, %v263
  %v265 = vcombine.high %v257, %v257
  %v266 = vcombine.high %v264, %v264
  %v268 = vunpack.c.l.s4 1966171168
  %v269 = vunpack.c.0.s8 %v268
  %v270 = vlaneseq
  %v271 = vshrl.u32 %v270, 7
  %v272 = vsub.s32 %v269, %v271
  %v273 = vrot.slane %v257, %v272
  %v275 = vunpack.c.l.s4 1966171168
  %v276 = vunpack.c.0.s8 %v275
  %v277 = vlaneseq
  %v278 = vshrl.u32 %v277, 7
  %v279 = vsub.s32 %v276, %v278
  %v280 = vrot.slane %v264, %v279
  %v282 = vunpack.c.l.s4 1966171168
  %v283 = vunpack.c.0.s8 %v282
  %v284 = vlaneseq
  %v285 = vshrl.u32 %v284, 7
  %v286 = vsub.s32 %v283, %v285
  %v287 = vrot.slane %v265, %v286
  %v289 = vunpack.c.l.s4 1966171168
  %v290 = vunpack.c.0.s8 %v289
  %v291 = vlaneseq
  %v292 = vshrl.u32 %v291, 7
  %v293 = vsub.s32 %v290, %v292
  %v294 = vrot.slane %v266, %v293
  %v295 = vcombine.high %v273, %v273
  %v296 = vcombine.high %v280, %v280
  %v297 = vcombine.high %v287, %v287
  %v298 = vcombine.high %v294, %v294
  %v300 = vunpack.c.l.s4 1966171168
  %v301 = vunpack.c.0.s8 %v300
  %v302 = vlaneseq
  %v303 = vshrl.u32 %v302, 7
  %v304 = vsub.s32 %v301, %v303
  %v305 = vrot.slane %v27, %v304
  %v306 = vcombine.high %v305, %v305
  %v308 = vunpack.c.l.s4 1966171168
  %v309 = vunpack.c.0.s8 %v308
  %v310 = vlaneseq
  %v311 = vshrl.u32 %v310, 7
  %v312 = vsub.s32 %v309, %v311
  %v313 = vrot.slane %v305, %v312
  %v315 = vunpack.c.l.s4 1966171168
  %v316 = vunpack.c.0.s8 %v315
  %v317 = vlaneseq
  %v318 = vshrl.u32 %v317, 7
  %v319 = vsub.s32 %v316, %v318
  %v320 = vrot.slane %v306, %v319
  %v321 = vcombine.high %v313, %v313
  %v322 = vcombine.high %v28, %v28
  %v324 = vunpack.c.l.s4 1966171168
  %v325 = vunpack.c.0.s8 %v324
  %v326 = vlaneseq
  %v327 = vshrl.u32 %v326, 7
  %v328 = vsub.s32 %v325, %v327
  %v329 = vrot.slane %v28, %v328
  %v331 = vunpack.c.l.s4 1966171168
  %v332 = vunpack.c.0.s8 %v331
  %v333 = vlaneseq
  %v334 = vshrl.u32 %v333, 7
  %v335 = vsub.s32 %v332, %v334
  %v336 = vrot.slane %v322, %v335
  %v337 = vcombine.high %v329, %v329
  %v338 = vcombine.high %v336, %v336
  %v340 = vunpack.c.l.s4 1966171168
  %v341 = vunpack.c.0.s8 %v340
  %v342 = vlaneseq
  %v343 = vshrl.u32 %v342, 7
  %v344 = vsub.s32 %v341, %v343
  %v345 = vrot.slane %v329, %v344
  %v347 = vunpack.c.l.s4 1966171168
  %v348 = vunpack.c.0.s8 %v347
  %v349 = vlaneseq
  %v350 = vshrl.u32 %v349, 7
  %v351 = vsub.s32 %v348, %v350
  %v352 = vrot.slane %v336, %v351
  %v354 = vunpack.c.l.s4 1966171168
  %v355 = vunpack.c.0.s8 %v354
  %v356 = vlaneseq
  %v357 = vshrl.u32 %v356, 7
  %v358 = vsub.s32 %v355, %v357
  %v359 = vrot.slane %v337, %v358
  %v361 = vunpack.c.l.s4 1966171168
  %v362 = vunpack.c.0.s8 %v361
  %v363 = vlaneseq
  %v364 = vshrl.u32 %v363, 7
  %v365 = vsub.s32 %v362, %v364
  %v366 = vrot.slane %v338, %v365
  %v367 = vcombine.high %v345, %v345
  %v368 = vcombine.high %v352, %v352
  %v369 = vcombine.high %v359, %v359
  %v370 = vcombine.high %v366, %v366
  %v371 = vcombine.high %v29, %v29
  %v373 = vunpack.c.l.s4 1966171168
  %v374 = vunpack.c.0.s8 %v373
  %v375 = vlaneseq
  %v376 = vshrl.u32 %v375, 7
  %v377 = vsub.s32 %v374, %v376
  %v378 = vrot.slane %v29, %v377
  %v380 = vunpack.c.l.s4 1966171168
  %v381 = vunpack.c.0.s8 %v380
  %v382 = vlaneseq
  %v383 = vshrl.u32 %v382, 7
  %v384 = vsub.s32 %v381, %v383
  %v385 = vrot.slane %v371, %v384
  %v386 = vcombine.high %v378, %v378
  %v387 = vcombine.high %v385, %v385
  %v389 = vunpack.c.l.s4 1966171168
  %v390 = vunpack.c.0.s8 %v389
  %v391 = vlaneseq
  %v392 = vshrl.u32 %v391, 7
  %v393 = vsub.s32 %v390, %v392
  %v394 = vrot.slane %v378, %v393
  %v396 = vunpack.c.l.s4 1966171168
  %v397 = vunpack.c.0.s8 %v396
  %v398 = vlaneseq
  %v399 = vshrl.u32 %v398, 7
  %v400 = vsub.s32 %v397, %v399
  %v401 = vrot.slane %v385, %v400
  %v403 = vunpack.c.l.s4 1966171168
  %v404 = vunpack.c.0.s8 %v403
  %v405 = vlaneseq
  %v406 = vshrl.u32 %v405, 7
  %v407 = vsub.s32 %v404, %v406
  %v408 = vrot.slane %v386, %v407
  %v410 = vunpack.c.l.s4 1966171168
  %v411 = vunpack.c.0.s8 %v410
  %v412 = vlaneseq
  %v413 = vshrl.u32 %v412, 7
  %v414 = vsub.s32 %v411, %v413
  %v415 = vrot.slane %v387, %v414
  %v416 = vcombine.high %v394, %v394
  %v417 = vcombine.high %v401, %v401
  %v418 = vcombine.high %v408, %v408
  %v419 = vcombine.high %v415, %v415
  %v420 = vcombine.high %v30, %v30
  %v422 = vunpack.c.l.s4 1966171168
  %v423 = vunpack.c.0.s8 %v422
  %v424 = vlaneseq
  %v425 = vshrl.u32 %v424, 7
  %v426 = vsub.s32 %v423, %v425
  %v427 = vrot.slane %v30, %v426
  %v429 = vunpack.c.l.s4 1966171168
  %v430 = vunpack.c.0.s8 %v429
  %v431 = vlaneseq
  %v432 = vshrl.u32 %v431, 7
  %v433 = vsub.s32 %v430, %v432
  %v434 = vrot.slane %v420, %v433
  %v435 = vcombine.high %v427, %v427
  %v436 = vcombine.high %v434, %v434
  %v438 = vunpack.c.l.s4 1966171168
  %v439 = vunpack.c.0.s8 %v438
  %v440 = vlaneseq
  %v441 = vshrl.u32 %v440, 7
  %v442 = vsub.s32 %v439, %v441
  %v443 = vrot.slane %v427, %v442
  %v445 = vunpack.c.l.s4 1966171168
  %v446 = vunpack.c.0.s8 %v445
  %v447 = vlaneseq
  %v448 = vshrl.u32 %v447, 7
  %v449 = vsub.s32 %v446, %v448
  %v450 = vrot.slane %v434, %v449
  %v452 = vunpack.c.l.s4 1966171168
  %v453 = vunpack.c.0.s8 %v452
  %v454 = vlaneseq
  %v455 = vshrl.u32 %v454, 7
  %v456 = vsub.s32 %v453, %v455
  %v457 = vrot.slane %v435, %v456
  %v459 = vunpack.c.l.s4 1966171168
  %v460 = vunpack.c.0.s8 %v459
  %v461 = vlaneseq
  %v462 = vshrl.u32 %v461, 7
  %v463 = vsub.s32 %v460, %v462
  %v464 = vrot.slane %v436, %v463
  %v465 = vcombine.high %v443, %v443
  %v466 = vcombine.high %v450, %v450
  %v467 = vcombine.high %v457, %v457
  %v468 = vcombine.high %v464, %v464
  %v469 = vcombine.high %v31, %v31
  %v471 = vunpack.c.l.s4 1966171168
  %v472 = vunpack.c.0.s8 %v471
  %v473 = vlaneseq
  %v474 = vshrl.u32 %v473, 7
  %v475 = vsub.s32 %v472, %v474
  %v476 = vrot.slane %v31, %v475
  %v478 = vunpack.c.l.s4 1966171168
  %v479 = vunpack.c.0.s8 %v478
  %v480 = vlaneseq
  %v481 = vshrl.u32 %v480, 7
  %v482 = vsub.s32 %v479, %v481
  %v483 = vrot.slane %v469, %v482
  %v484 = vcombine.high %v476, %v476
  %v485 = vcombine.high %v483, %v483
  %v487 = vunpack.c.l.s4 1966171168
  %v488 = vunpack.c.0.s8 %v487
  %v489 = vlaneseq
  %v490 = vshrl.u32 %v489, 7
  %v491 = vsub.s32 %v488, %v490
  %v492 = vrot.slane %v476, %v491
  %v494 = vunpack.c.l.s4 1966171168
  %v495 = vunpack.c.0.s8 %v494
  %v496 = vlaneseq
  %v497 = vshrl.u32 %v496, 7
  %v498 = vsub.s32 %v495, %v497
  %v499 = vrot.slane %v483, %v498
  %v501 = vunpack.c.l.s4 1966171168
  %v502 = vunpack.c.0.s8 %v501
  %v503 = vlaneseq
  %v504 = vshrl.u32 %v503, 7
  %v505 = vsub.s32 %v502, %v504
  %v506 = vrot.slane %v484, %v505
  %v508 = vunpack.c.l.s4 1966171168
  %v509 = vunpack.c.0.s8 %v508
  %v510 = vlaneseq
  %v511 = vshrl.u32 %v510, 7
  %v512 = vsub.s32 %v509, %v511
  %v513 = vrot.slane %v485, %v512
  %v514 = vcombine.high %v492, %v492
  %v515 = vcombine.high %v499, %v499
  %v516 = vcombine.high %v506, %v506
  %v517 = vcombine.high %v513, %v513
  %v519 = vunpack.c.l.s4 1966171168
  %v520 = vunpack.c.0.s8 %v519
  %v521 = vlaneseq
  %v522 = vshrl.u32 %v521, 7
  %v523 = vsub.s32 %v520, %v522
  %v524 = vrot.slane %v32, %v523
  %v525 = vcombine.high %v524, %v524
  %v527 = vunpack.c.l.s4 1966171168
  %v528 = vunpack.c.0.s8 %v527
  %v529 = vlaneseq
  %v530 = vshrl.u32 %v529, 7
  %v531 = vsub.s32 %v528, %v530
  %v532 = vrot.slane %v524, %v531
  %v534 = vunpack.c.l.s4 1966171168
  %v535 = vunpack.c.0.s8 %v534
  %v536 = vlaneseq
  %v537 = vshrl.u32 %v536, 7
  %v538 = vsub.s32 %v535, %v537
  %v539 = vrot.slane %v525, %v538
  %v540 = vcombine.high %v532, %v532
  %v541 = vcombine.high %v33, %v33
  %v543 = vunpack.c.l.s4 1966171168
  %v544 = vunpack.c.0.s8 %v543
  %v545 = vlaneseq
  %v546 = vshrl.u32 %v545, 7
  %v547 = vsub.s32 %v544, %v546
  %v548 = vrot.slane %v33, %v547
  %v550 = vunpack.c.l.s4 1966171168
  %v551 = vunpack.c.0.s8 %v550
  %v552 = vlaneseq
  %v553 = vshrl.u32 %v552, 7
  %v554 = vsub.s32 %v551, %v553
  %v555 = vrot.slane %v541, %v554
  %v556 = vcombine.high %v548, %v548
  %v557 = vcombine.high %v555, %v555
  %v559 = vunpack.c.l.s4 1966171168
  %v560 = vunpack.c.0.s8 %v559
  %v561 = vlaneseq
  %v562 = vshrl.u32 %v561, 7
  %v563 = vsub.s32 %v560, %v562
  %v564 = vrot.slane %v548, %v563
  %v566 = vunpack.c.l.s4 1966171168
  %v567 = vunpack.c.0.s8 %v566
  %v568 = vlaneseq
  %v569 = vshrl.u32 %v568, 7
  %v570 = vsub.s32 %v567, %v569
  %v571 = vrot.slane %v555, %v570
  %v573 = vunpack.c.l.s4 1966171168
  %v574 = vunpack.c.0.s8 %v573
  %v575 = vlaneseq
  %v576 = vshrl.u32 %v575, 7
  %v577 = vsub.s32 %v574, %v576
  %v578 = vrot.slane %v556, %v577
  %v580 = vunpack.c.l.s4 1966171168
  %v581 = vunpack.c.0.s8 %v580
  %v582 = vlaneseq
  %v583 = vshrl.u32 %v582, 7
  %v584 = vsub.s32 %v581, %v583
  %v585 = vrot.slane %v557, %v584
  %v586 = vcombine.high %v564, %v564
  %v587 = vcombine.high %v571, %v571
  %v588 = vcombine.high %v578, %v578
  %v589 = vcombine.high %v585, %v585
  %v590 = vcombine.high %v34, %v34
  %v592 = vunpack.c.l.s4 1966171168
  %v593 = vunpack.c.0.s8 %v592
  %v594 = vlaneseq
  %v595 = vshrl.u32 %v594, 7
  %v596 = vsub.s32 %v593, %v595
  %v597 = vrot.slane %v34, %v596
  %v599 = vunpack.c.l.s4 1966171168
  %v600 = vunpack.c.0.s8 %v599
  %v601 = vlaneseq
  %v602 = vshrl.u32 %v601, 7
  %v603 = vsub.s32 %v600, %v602
  %v604 = vrot.slane %v590, %v603
  %v605 = vcombine.high %v597, %v597
  %v606 = vcombine.high %v604, %v604
  %v608 = vunpack.c.l.s4 1966171168
  %v609 = vunpack.c.0.s8 %v608
  %v610 = vlaneseq
  %v611 = vshrl.u32 %v610, 7
  %v612 = vsub.s32 %v609, %v611
  %v613 = vrot.slane %v597, %v612
  %v615 = vunpack.c.l.s4 1966171168
  %v616 = vunpack.c.0.s8 %v615
  %v617 = vlaneseq
  %v618 = vshrl.u32 %v617, 7
  %v619 = vsub.s32 %v616, %v618
  %v620 = vrot.slane %v604, %v619
  %v622 = vunpack.c.l.s4 1966171168
  %v623 = vunpack.c.0.s8 %v622
  %v624 = vlaneseq
  %v625 = vshrl.u32 %v624, 7
  %v626 = vsub.s32 %v623, %v625
  %v627 = vrot.slane %v605, %v626
  %v629 = vunpack.c.l.s4 1966171168
  %v630 = vunpack.c.0.s8 %v629
  %v631 = vlaneseq
  %v632 = vshrl.u32 %v631, 7
  %v633 = vsub.s32 %v630, %v632
  %v634 = vrot.slane %v606, %v633
  %v635 = vcombine.high %v613, %v613
  %v636 = vcombine.high %v620, %v620
  %v637 = vcombine.high %v627, %v627
  %v638 = vcombine.high %v634, %v634
  %v639 = vcombine.high %v35, %v35
  %v641 = vunpack.c.l.s4 1966171168
  %v642 = vunpack.c.0.s8 %v641
  %v643 = vlaneseq
  %v644 = vshrl.u32 %v643, 7
  %v645 = vsub.s32 %v642, %v644
  %v646 = vrot.slane %v35, %v645
  %v648 = vunpack.c.l.s4 1966171168
  %v649 = vunpack.c.0.s8 %v648
  %v650 = vlaneseq
  %v651 = vshrl.u32 %v650, 7
  %v652 = vsub.s32 %v649, %v651
  %v653 = vrot.slane %v639, %v652
  %v654 = vcombine.high %v646, %v646
  %v655 = vcombine.high %v653, %v653
  %v657 = vunpack.c.l.s4 1966171168
  %v658 = vunpack.c.0.s8 %v657
  %v659 = vlaneseq
  %v660 = vshrl.u32 %v659, 7
  %v661 = vsub.s32 %v658, %v660
  %v662 = vrot.slane %v646, %v661
  %v664 = vunpack.c.l.s4 1966171168
  %v665 = vunpack.c.0.s8 %v664
  %v666 = vlaneseq
  %v667 = vshrl.u32 %v666, 7
  %v668 = vsub.s32 %v665, %v667
  %v669 = vrot.slane %v653, %v668
  %v671 = vunpack.c.l.s4 1966171168
  %v672 = vunpack.c.0.s8 %v671
  %v673 = vlaneseq
  %v674 = vshrl.u32 %v673, 7
  %v675 = vsub.s32 %v672, %v674
  %v676 = vrot.slane %v654, %v675
  %v678 = vunpack.c.l.s4 1966171168
  %v679 = vunpack.c.0.s8 %v678
  %v680 = vlaneseq
  %v681 = vshrl.u32 %v680, 7
  %v682 = vsub.s32 %v679, %v681
  %v683 = vrot.slane %v655, %v682
  %v684 = vcombine.high %v662, %v662
  %v685 = vcombine.high %v669, %v669
  %v686 = vcombine.high %v676, %v676
  %v687 = vcombine.high %v683, %v683
  %v688 = vcombine.high %v36, %v36
  %v690 = vunpack.c.l.s4 1966171168
  %v691 = vunpack.c.0.s8 %v690
  %v692 = vlaneseq
  %v693 = vshrl.u32 %v692, 7
  %v694 = vsub.s32 %v691, %v693
  %v695 = vrot.slane %v36, %v694
  %v697 = vunpack.c.l.s4 1966171168
  %v698 = vunpack.c.0.s8 %v697
  %v699 = vlaneseq
  %v700 = vshrl.u32 %v699, 7
  %v701 = vsub.s32 %v698, %v700
  %v702 = vrot.slane %v688, %v701
  %v703 = vcombine.high %v695, %v695
  %v704 = vcombine.high %v702, %v702
  %v706 = vunpack.c.l.s4 1966171168
  %v707 = vunpack.c.0.s8 %v706
  %v708 = vlaneseq
  %v709 = vshrl.u32 %v708, 7
  %v710 = vsub.s32 %v707, %v709
  %v711 = vrot.slane %v695, %v710
  %v713 = vunpack.c.l.s4 1966171168
  %v714 = vunpack.c.0.s8 %v713
  %v715 = vlaneseq
  %v716 = vshrl.u32 %v715, 7
  %v717 = vsub.s32 %v714, %v716
  %v718 = vrot.slane %v702, %v717
  %v720 = vunpack.c.l.s4 1966171168
  %v721 = vunpack.c.0.s8 %v720
  %v722 = vlaneseq
  %v723 = vshrl.u32 %v722, 7
  %v724 = vsub.s32 %v721, %v723
  %v725 = vrot.slane %v703, %v724
  %v727 = vunpack.c.l.s4 1966171168
  %v728 = vunpack.c.0.s8 %v727
  %v729 = vlaneseq
  %v730 = vshrl.u32 %v729, 7
  %v731 = vsub.s32 %v728, %v730
  %v732 = vrot.slane %v704, %v731
  %v733 = vcombine.high %v711, %v711
  %v734 = vcombine.high %v718, %v718
  %v735 = vcombine.high %v725, %v725
  %v736 = vcombine.high %v732, %v732
  %v738 = vunpack.c.l.s4 1966171168
  %v739 = vunpack.c.0.s8 %v738
  %v740 = vlaneseq
  %v741 = vshrl.u32 %v740, 7
  %v742 = vsub.s32 %v739, %v741
  %v743 = vrot.slane %v37, %v742
  %v744 = vcombine.high %v743, %v743
  %v746 = vunpack.c.l.s4 1966171168
  %v747 = vunpack.c.0.s8 %v746
  %v748 = vlaneseq
  %v749 = vshrl.u32 %v748, 7
  %v750 = vsub.s32 %v747, %v749
  %v751 = vrot.slane %v743, %v750
  %v753 = vunpack.c.l.s4 1966171168
  %v754 = vunpack.c.0.s8 %v753
  %v755 = vlaneseq
  %v756 = vshrl.u32 %v755, 7
  %v757 = vsub.s32 %v754, %v756
  %v758 = vrot.slane %v744, %v757
  %v759 = vcombine.high %v751, %v751
  %v760 = vcombine.high %v38, %v38
  %v762 = vunpack.c.l.s4 1966171168
  %v763 = vunpack.c.0.s8 %v762
  %v764 = vlaneseq
  %v765 = vshrl.u32 %v764, 7
  %v766 = vsub.s32 %v763, %v765
  %v767 = vrot.slane %v38, %v766
  %v769 = vunpack.c.l.s4 1966171168
  %v770 = vunpack.c.0.s8 %v769
  %v771 = vlaneseq
  %v772 = vshrl.u32 %v771, 7
  %v773 = vsub.s32 %v770, %v772
  %v774 = vrot.slane %v760, %v773
  %v775 = vcombine.high %v767, %v767
  %v776 = vcombine.high %v774, %v774
  %v778 = vunpack.c.l.s4 1966171168
  %v779 = vunpack.c.0.s8 %v778
  %v780 = vlaneseq
  %v781 = vshrl.u32 %v780, 7
  %v782 = vsub.s32 %v779, %v781
  %v783 = vrot.slane %v767, %v782
  %v785 = vunpack.c.l.s4 1966171168
  %v786 = vunpack.c.0.s8 %v785
  %v787 = vlaneseq
  %v788 = vshrl.u32 %v787, 7
  %v789 = vsub.s32 %v786, %v788
  %v790 = vrot.slane %v774, %v789
  %v792 = vunpack.c.l.s4 1966171168
  %v793 = vunpack.c.0.s8 %v792
  %v794 = vlaneseq
  %v795 = vshrl.u32 %v794, 7
  %v796 = vsub.s32 %v793, %v795
  %v797 = vrot.slane %v775, %v796
  %v799 = vunpack.c.l.s4 1966171168
  %v800 = vunpack.c.0.s8 %v799
  %v801 = vlaneseq
  %v802 = vshrl.u32 %v801, 7
  %v803 = vsub.s32 %v800, %v802
  %v804 = vrot.slane %v776, %v803
  %v805 = vcombine.high %v783, %v783
  %v806 = vcombine.high %v790, %v790
  %v807 = vcombine.high %v797, %v797
  %v808 = vcombine.high %v804, %v804
  %v809 = vcombine.high %v39, %v39
  %v811 = vunpack.c.l.s4 1966171168
  %v812 = vunpack.c.0.s8 %v811
  %v813 = vlaneseq
  %v814 = vshrl.u32 %v813, 7
  %v815 = vsub.s32 %v812, %v814
  %v816 = vrot.slane %v39, %v815
  %v818 = vunpack.c.l.s4 1966171168
  %v819 = vunpack.c.0.s8 %v818
  %v820 = vlaneseq
  %v821 = vshrl.u32 %v820, 7
  %v822 = vsub.s32 %v819, %v821
  %v823 = vrot.slane %v809, %v822
  %v824 = vcombine.high %v816, %v816
  %v825 = vcombine.high %v823, %v823
  %v827 = vunpack.c.l.s4 1966171168
  %v828 = vunpack.c.0.s8 %v827
  %v829 = vlaneseq
  %v830 = vshrl.u32 %v829, 7
  %v831 = vsub.s32 %v828, %v830
  %v832 = vrot.slane %v816, %v831
  %v834 = vunpack.c.l.s4 1966171168
  %v835 = vunpack.c.0.s8 %v834
  %v836 = vlaneseq
  %v837 = vshrl.u32 %v836, 7
  %v838 = vsub.s32 %v835, %v837
  %v839 = vrot.slane %v823, %v838
  %v841 = vunpack.c.l.s4 1966171168
  %v842 = vunpack.c.0.s8 %v841
  %v843 = vlaneseq
  %v844 = vshrl.u32 %v843, 7
  %v845 = vsub.s32 %v842, %v844
  %v846 = vrot.slane %v824, %v845
  %v848 = vunpack.c.l.s4 1966171168
  %v849 = vunpack.c.0.s8 %v848
  %v850 = vlaneseq
  %v851 = vshrl.u32 %v850, 7
  %v852 = vsub.s32 %v849, %v851
  %v853 = vrot.slane %v825, %v852
  %v854 = vcombine.high %v832, %v832
  %v855 = vcombine.high %v839, %v839
  %v856 = vcombine.high %v846, %v846
  %v857 = vcombine.high %v853, %v853
  %v858 = vcombine.high %v40, %v40
  %v860 = vunpack.c.l.s4 1966171168
  %v861 = vunpack.c.0.s8 %v860
  %v862 = vlaneseq
  %v863 = vshrl.u32 %v862, 7
  %v864 = vsub.s32 %v861, %v863
  %v865 = vrot.slane %v40, %v864
  %v867 = vunpack.c.l.s4 1966171168
  %v868 = vunpack.c.0.s8 %v867
  %v869 = vlaneseq
  %v870 = vshrl.u32 %v869, 7
  %v871 = vsub.s32 %v868, %v870
  %v872 = vrot.slane %v858, %v871
  %v873 = vcombine.high %v865, %v865
  %v874 = vcombine.high %v872, %v872
  %v876 = vunpack.c.l.s4 1966171168
  %v877 = vunpack.c.0.s8 %v876
  %v878 = vlaneseq
  %v879 = vshrl.u32 %v878, 7
  %v880 = vsub.s32 %v877, %v879
  %v881 = vrot.slane %v865, %v880
  %v883 = vunpack.c.l.s4 1966171168
  %v884 = vunpack.c.0.s8 %v883
  %v885 = vlaneseq
  %v886 = vshrl.u32 %v885, 7
  %v887 = vsub.s32 %v884, %v886
  %v888 = vrot.slane %v872, %v887
  %v890 = vunpack.c.l.s4 1966171168
  %v891 = vunpack.c.0.s8 %v890
  %v892 = vlaneseq
  %v893 = vshrl.u32 %v892, 7
  %v894 = vsub.s32 %v891, %v893
  %v895 = vrot.slane %v873, %v894
  %v897 = vunpack.c.l.s4 1966171168
  %v898 = vunpack.c.0.s8 %v897
  %v899 = vlaneseq
  %v900 = vshrl.u32 %v899, 7
  %v901 = vsub.s32 %v898, %v900
  %v902 = vrot.slane %v874, %v901
  %v903 = vcombine.high %v881, %v881
  %v904 = vcombine.high %v888, %v888
  %v905 = vcombine.high %v895, %v895
  %v906 = vcombine.high %v902, %v902
  %v907 = vcombine.high %v41, %v41
  %v909 = vunpack.c.l.s4 1966171168
  %v910 = vunpack.c.0.s8 %v909
  %v911 = vlaneseq
  %v912 = vshrl.u32 %v911, 7
  %v913 = vsub.s32 %v910, %v912
  %v914 = vrot.slane %v41, %v913
  %v916 = vunpack.c.l.s4 1966171168
  %v917 = vunpack.c.0.s8 %v916
  %v918 = vlaneseq
  %v919 = vshrl.u32 %v918, 7
  %v920 = vsub.s32 %v917, %v919
  %v921 = vrot.slane %v907, %v920
  %v922 = vcombine.high %v914, %v914
  %v923 = vcombine.high %v921, %v921
  %v925 = vunpack.c.l.s4 1966171168
  %v926 = vunpack.c.0.s8 %v925
  %v927 = vlaneseq
  %v928 = vshrl.u32 %v927, 7
  %v929 = vsub.s32 %v926, %v928
  %v930 = vrot.slane %v914, %v929
  %v932 = vunpack.c.l.s4 1966171168
  %v933 = vunpack.c.0.s8 %v932
  %v934 = vlaneseq
  %v935 = vshrl.u32 %v934, 7
  %v936 = vsub.s32 %v933, %v935
  %v937 = vrot.slane %v921, %v936
  %v939 = vunpack.c.l.s4 1966171168
  %v940 = vunpack.c.0.s8 %v939
  %v941 = vlaneseq
  %v942 = vshrl.u32 %v941, 7
  %v943 = vsub.s32 %v940, %v942
  %v944 = vrot.slane %v922, %v943
  %v946 = vunpack.c.l.s4 1966171168
  %v947 = vunpack.c.0.s8 %v946
  %v948 = vlaneseq
  %v949 = vshrl.u32 %v948, 7
  %v950 = vsub.s32 %v947, %v949
  %v951 = vrot.slane %v923, %v950
  %v952 = vcombine.high %v930, %v930
  %v953 = vcombine.high %v937, %v937
  %v954 = vcombine.high %v944, %v944
  %v955 = vcombine.high %v951, %v951
  %v957 = vunpack.c.l.s4 1966171168
  %v958 = vunpack.c.0.s8 %v957
  %v959 = vlaneseq
  %v960 = vshrl.u32 %v959, 7
  %v961 = vsub.s32 %v958, %v960
  %v962 = vrot.slane %v42, %v961
  %v963 = vcombine.high %v962, %v962
  %v965 = vunpack.c.l.s4 1966171168
  %v966 = vunpack.c.0.s8 %v965
  %v967 = vlaneseq
  %v968 = vshrl.u32 %v967, 7
  %v969 = vsub.s32 %v966, %v968
  %v970 = vrot.slane %v962, %v969
  %v972 = vunpack.c.l.s4 1966171168
  %v973 = vunpack.c.0.s8 %v972
  %v974 = vlaneseq
  %v975 = vshrl.u32 %v974, 7
  %v976 = vsub.s32 %v973, %v975
  %v977 = vrot.slane %v963, %v976
  %v978 = vcombine.high %v970, %v970
  %v979 = vcombine.high %v43, %v43
  %v981 = vunpack.c.l.s4 1966171168
  %v982 = vunpack.c.0.s8 %v981
  %v983 = vlaneseq
  %v984 = vshrl.u32 %v983, 7
  %v985 = vsub.s32 %v982, %v984
  %v986 = vrot.slane %v43, %v985
  %v988 = vunpack.c.l.s4 1966171168
  %v989 = vunpack.c.0.s8 %v988
  %v990 = vlaneseq
  %v991 = vshrl.u32 %v990, 7
  %v992 = vsub.s32 %v989, %v991
  %v993 = vrot.slane %v979, %v992
  %v994 = vcombine.high %v986, %v986
  %v995 = vcombine.high %v993, %v993
  %v997 = vunpack.c.l.s4 1966171168
  %v998 = vunpack.c.0.s8 %v997
  %v999 = vlaneseq
  %v1000 = vshrl.u32 %v999, 7
  %v1001 = vsub.s32 %v998, %v1000
  %v1002 = vrot.slane %v986, %v1001
  %v1004 = vunpack.c.l.s4 1966171168
  %v1005 = vunpack.c.0.s8 %v1004
  %v1006 = vlaneseq
  %v1007 = vshrl.u32 %v1006, 7
  %v1008 = vsub.s32 %v1005, %v1007
  %v1009 = vrot.slane %v993, %v1008
  %v1011 = vunpack.c.l.s4 1966171168
  %v1012 = vunpack.c.0.s8 %v1011
  %v1013 = vlaneseq
  %v1014 = vshrl.u32 %v1013, 7
  %v1015 = vsub.s32 %v1012, %v1014
  %v1016 = vrot.slane %v994, %v1015
  %v1018 = vunpack.c.l.s4 1966171168
  %v1019 = vunpack.c.0.s8 %v1018
  %v1020 = vlaneseq
  %v1021 = vshrl.u32 %v1020, 7
  %v1022 = vsub.s32 %v1019, %v1021
  %v1023 = vrot.slane %v995, %v1022
  %v1024 = vcombine.high %v1002, %v1002
  %v1025 = vcombine.high %v1009, %v1009
  %v1026 = vcombine.high %v1016, %v1016
  %v1027 = vcombine.high %v1023, %v1023
  %v1028 = vcombine.high %v44, %v44
  %v1030 = vunpack.c.l.s4 1966171168
  %v1031 = vunpack.c.0.s8 %v1030
  %v1032 = vlaneseq
  %v1033 = vshrl.u32 %v1032, 7
  %v1034 = vsub.s32 %v1031, %v1033
  %v1035 = vrot.slane %v44, %v1034
  %v1037 = vunpack.c.l.s4 1966171168
  %v1038 = vunpack.c.0.s8 %v1037
  %v1039 = vlaneseq
  %v1040 = vshrl.u32 %v1039, 7
  %v1041 = vsub.s32 %v1038, %v1040
  %v1042 = vrot.slane %v1028, %v1041
  %v1043 = vcombine.high %v1035, %v1035
  %v1044 = vcombine.high %v1042, %v1042
  %v1046 = vunpack.c.l.s4 1966171168
  %v1047 = vunpack.c.0.s8 %v1046
  %v1048 = vlaneseq
  %v1049 = vshrl.u32 %v1048, 7
  %v1050 = vsub.s32 %v1047, %v1049
  %v1051 = vrot.slane %v1035, %v1050
  %v1053 = vunpack.c.l.s4 1966171168
  %v1054 = vunpack.c.0.s8 %v1053
  %v1055 = vlaneseq
  %v1056 = vshrl.u32 %v1055, 7
  %v1057 = vsub.s32 %v1054, %v1056
  %v1058 = vrot.slane %v1042, %v1057
  %v1060 = vunpack.c.l.s4 1966171168
  %v1061 = vunpack.c.0.s8 %v1060
  %v1062 = vlaneseq
  %v1063 = vshrl.u32 %v1062, 7
  %v1064 = vsub.s32 %v1061, %v1063
  %v1065 = vrot.slane %v1043, %v1064
  %v1067 = vunpack.c.l.s4 1966171168
  %v1068 = vunpack.c.0.s8 %v1067
  %v1069 = vlaneseq
  %v1070 = vshrl.u32 %v1069, 7
  %v1071 = vsub.s32 %v1068, %v1070
  %v1072 = vrot.slane %v1044, %v1071
  %v1073 = vcombine.high %v1051, %v1051
  %v1074 = vcombine.high %v1058, %v1058
  %v1075 = vcombine.high %v1065, %v1065
  %v1076 = vcombine.high %v1072, %v1072
  %v1077 = vcombine.high %v45, %v45
  %v1079 = vunpack.c.l.s4 1966171168
  %v1080 = vunpack.c.0.s8 %v1079
  %v1081 = vlaneseq
  %v1082 = vshrl.u32 %v1081, 7
  %v1083 = vsub.s32 %v1080, %v1082
  %v1084 = vrot.slane %v45, %v1083
  %v1086 = vunpack.c.l.s4 1966171168
  %v1087 = vunpack.c.0.s8 %v1086
  %v1088 = vlaneseq
  %v1089 = vshrl.u32 %v1088, 7
  %v1090 = vsub.s32 %v1087, %v1089
  %v1091 = vrot.slane %v1077, %v1090
  %v1092 = vcombine.high %v1084, %v1084
  %v1093 = vcombine.high %v1091, %v1091
  %v1095 = vunpack.c.l.s4 1966171168
  %v1096 = vunpack.c.0.s8 %v1095
  %v1097 = vlaneseq
  %v1098 = vshrl.u32 %v1097, 7
  %v1099 = vsub.s32 %v1096, %v1098
  %v1100 = vrot.slane %v1084, %v1099
  %v1102 = vunpack.c.l.s4 1966171168
  %v1103 = vunpack.c.0.s8 %v1102
  %v1104 = vlaneseq
  %v1105 = vshrl.u32 %v1104, 7
  %v1106 = vsub.s32 %v1103, %v1105
  %v1107 = vrot.slane %v1091, %v1106
  %v1109 = vunpack.c.l.s4 1966171168
  %v1110 = vunpack.c.0.s8 %v1109
  %v1111 = vlaneseq
  %v1112 = vshrl.u32 %v1111, 7
  %v1113 = vsub.s32 %v1110, %v1112
  %v1114 = vrot.slane %v1092, %v1113
  %v1116 = vunpack.c.l.s4 1966171168
  %v1117 = vunpack.c.0.s8 %v1116
  %v1118 = vlaneseq
  %v1119 = vshrl.u32 %v1118, 7
  %v1120 = vsub.s32 %v1117, %v1119
  %v1121 = vrot.slane %v1093, %v1120
  %v1122 = vcombine.high %v1100, %v1100
  %v1123 = vcombine.high %v1107, %v1107
  %v1124 = vcombine.high %v1114, %v1114
  %v1125 = vcombine.high %v1121, %v1121
  %v1126 = vcombine.high %v46, %v46
  %v1128 = vunpack.c.l.s4 1966171168
  %v1129 = vunpack.c.0.s8 %v1128
  %v1130 = vlaneseq
  %v1131 = vshrl.u32 %v1130, 7
  %v1132 = vsub.s32 %v1129, %v1131
  %v1133 = vrot.slane %v46, %v1132
  %v1135 = vunpack.c.l.s4 1966171168
  %v1136 = vunpack.c.0.s8 %v1135
  %v1137 = vlaneseq
  %v1138 = vshrl.u32 %v1137, 7
  %v1139 = vsub.s32 %v1136, %v1138
  %v1140 = vrot.slane %v1126, %v1139
  %v1141 = vcombine.high %v1133, %v1133
  %v1142 = vcombine.high %v1140, %v1140
  %v1144 = vunpack.c.l.s4 1966171168
  %v1145 = vunpack.c.0.s8 %v1144
  %v1146 = vlaneseq
  %v1147 = vshrl.u32 %v1146, 7
  %v1148 = vsub.s32 %v1145, %v1147
  %v1149 = vrot.slane %v1133, %v1148
  %v1151 = vunpack.c.l.s4 1966171168
  %v1152 = vunpack.c.0.s8 %v1151
  %v1153 = vlaneseq
  %v1154 = vshrl.u32 %v1153, 7
  %v1155 = vsub.s32 %v1152, %v1154
  %v1156 = vrot.slane %v1140, %v1155
  %v1158 = vunpack.c.l.s4 1966171168
  %v1159 = vunpack.c.0.s8 %v1158
  %v1160 = vlaneseq
  %v1161 = vshrl.u32 %v1160, 7
  %v1162 = vsub.s32 %v1159, %v1161
  %v1163 = vrot.slane %v1141, %v1162
  %v1165 = vunpack.c.l.s4 1966171168
  %v1166 = vunpack.c.0.s8 %v1165
  %v1167 = vlaneseq
  %v1168 = vshrl.u32 %v1167, 7
  %v1169 = vsub.s32 %v1166, %v1168
  %v1170 = vrot.slane %v1142, %v1169
  %v1171 = vcombine.high %v1149, %v1149
  %v1172 = vcombine.high %v1156, %v1156
  %v1173 = vcombine.high %v1163, %v1163
  %v1174 = vcombine.high %v1170, %v1170
  %v1176 = vunpack.c.l.s4 1966171168
  %v1177 = vunpack.c.0.s8 %v1176
  %v1178 = vlaneseq
  %v1179 = vshrl.u32 %v1178, 7
  %v1180 = vsub.s32 %v1177, %v1179
  %v1181 = vrot.slane %v47, %v1180
  %v1182 = vcombine.high %v1181, %v1181
  %v1184 = vunpack.c.l.s4 1966171168
  %v1185 = vunpack.c.0.s8 %v1184
  %v1186 = vlaneseq
  %v1187 = vshrl.u32 %v1186, 7
  %v1188 = vsub.s32 %v1185, %v1187
  %v1189 = vrot.slane %v1181, %v1188
  %v1191 = vunpack.c.l.s4 1966171168
  %v1192 = vunpack.c.0.s8 %v1191
  %v1193 = vlaneseq
  %v1194 = vshrl.u32 %v1193, 7
  %v1195 = vsub.s32 %v1192, %v1194
  %v1196 = vrot.slane %v1182, %v1195
  %v1197 = vcombine.high %v1189, %v1189
  %v1198 = vcombine.high %v48, %v48
  %v1200 = vunpack.c.l.s4 1966171168
  %v1201 = vunpack.c.0.s8 %v1200
  %v1202 = vlaneseq
  %v1203 = vshrl.u32 %v1202, 7
  %v1204 = vsub.s32 %v1201, %v1203
  %v1205 = vrot.slane %v48, %v1204
  %v1207 = vunpack.c.l.s4 1966171168
  %v1208 = vunpack.c.0.s8 %v1207
  %v1209 = vlaneseq
  %v1210 = vshrl.u32 %v1209, 7
  %v1211 = vsub.s32 %v1208, %v1210
  %v1212 = vrot.slane %v1198, %v1211
  %v1213 = vcombine.high %v1205, %v1205
  %v1214 = vcombine.high %v1212, %v1212
  %v1216 = vunpack.c.l.s4 1966171168
  %v1217 = vunpack.c.0.s8 %v1216
  %v1218 = vlaneseq
  %v1219 = vshrl.u32 %v1218, 7
  %v1220 = vsub.s32 %v1217, %v1219
  %v1221 = vrot.slane %v1205, %v1220
  %v1223 = vunpack.c.l.s4 1966171168
  %v1224 = vunpack.c.0.s8 %v1223
  %v1225 = vlaneseq
  %v1226 = vshrl.u32 %v1225, 7
  %v1227 = vsub.s32 %v1224, %v1226
  %v1228 = vrot.slane %v1212, %v1227
  %v1230 = vunpack.c.l.s4 1966171168
  %v1231 = vunpack.c.0.s8 %v1230
  %v1232 = vlaneseq
  %v1233 = vshrl.u32 %v1232, 7
  %v1234 = vsub.s32 %v1231, %v1233
  %v1235 = vrot.slane %v1213, %v1234
  %v1237 = vunpack.c.l.s4 1966171168
  %v1238 = vunpack.c.0.s8 %v1237
  %v1239 = vlaneseq
  %v1240 = vshrl.u32 %v1239, 7
  %v1241 = vsub.s32 %v1238, %v1240
  %v1242 = vrot.slane %v1214, %v1241
  %v1243 = vcombine.high %v1221, %v1221
  %v1244 = vcombine.high %v1228, %v1228
  %v1245 = vcombine.high %v1235, %v1235
  %v1246 = vcombine.high %v1242, %v1242
  %v1247 = vcombine.high %v49, %v49
  %v1249 = vunpack.c.l.s4 1966171168
  %v1250 = vunpack.c.0.s8 %v1249
  %v1251 = vlaneseq
  %v1252 = vshrl.u32 %v1251, 7
  %v1253 = vsub.s32 %v1250, %v1252
  %v1254 = vrot.slane %v49, %v1253
  %v1256 = vunpack.c.l.s4 1966171168
  %v1257 = vunpack.c.0.s8 %v1256
  %v1258 = vlaneseq
  %v1259 = vshrl.u32 %v1258, 7
  %v1260 = vsub.s32 %v1257, %v1259
  %v1261 = vrot.slane %v1247, %v1260
  %v1262 = vcombine.high %v1254, %v1254
  %v1263 = vcombine.high %v1261, %v1261
  %v1265 = vunpack.c.l.s4 1966171168
  %v1266 = vunpack.c.0.s8 %v1265
  %v1267 = vlaneseq
  %v1268 = vshrl.u32 %v1267, 7
  %v1269 = vsub.s32 %v1266, %v1268
  %v1270 = vrot.slane %v1254, %v1269
  %v1272 = vunpack.c.l.s4 1966171168
  %v1273 = vunpack.c.0.s8 %v1272
  %v1274 = vlaneseq
  %v1275 = vshrl.u32 %v1274, 7
  %v1276 = vsub.s32 %v1273, %v1275
  %v1277 = vrot.slane %v1261, %v1276
  %v1279 = vunpack.c.l.s4 1966171168
  %v1280 = vunpack.c.0.s8 %v1279
  %v1281 = vlaneseq
  %v1282 = vshrl.u32 %v1281, 7
  %v1283 = vsub.s32 %v1280, %v1282
  %v1284 = vrot.slane %v1262, %v1283
  %v1286 = vunpack.c.l.s4 1966171168
  %v1287 = vunpack.c.0.s8 %v1286
  %v1288 = vlaneseq
  %v1289 = vshrl.u32 %v1288, 7
  %v1290 = vsub.s32 %v1287, %v1289
  %v1291 = vrot.slane %v1263, %v1290
  %v1292 = vcombine.high %v1270, %v1270
  %v1293 = vcombine.high %v1277, %v1277
  %v1294 = vcombine.high %v1284, %v1284
  %v1295 = vcombine.high %v1291, %v1291
  %v1296 = vcombine.high %v50, %v50
  %v1298 = vunpack.c.l.s4 1966171168
  %v1299 = vunpack.c.0.s8 %v1298
  %v1300 = vlaneseq
  %v1301 = vshrl.u32 %v1300, 7
  %v1302 = vsub.s32 %v1299, %v1301
  %v1303 = vrot.slane %v50, %v1302
  %v1305 = vunpack.c.l.s4 1966171168
  %v1306 = vunpack.c.0.s8 %v1305
  %v1307 = vlaneseq
  %v1308 = vshrl.u32 %v1307, 7
  %v1309 = vsub.s32 %v1306, %v1308
  %v1310 = vrot.slane %v1296, %v1309
  %v1311 = vcombine.high %v1303, %v1303
  %v1312 = vcombine.high %v1310, %v1310
  %v1314 = vunpack.c.l.s4 1966171168
  %v1315 = vunpack.c.0.s8 %v1314
  %v1316 = vlaneseq
  %v1317 = vshrl.u32 %v1316, 7
  %v1318 = vsub.s32 %v1315, %v1317
  %v1319 = vrot.slane %v1303, %v1318
  %v1321 = vunpack.c.l.s4 1966171168
  %v1322 = vunpack.c.0.s8 %v1321
  %v1323 = vlaneseq
  %v1324 = vshrl.u32 %v1323, 7
  %v1325 = vsub.s32 %v1322, %v1324
  %v1326 = vrot.slane %v1310, %v1325
  %v1328 = vunpack.c.l.s4 1966171168
  %v1329 = vunpack.c.0.s8 %v1328
  %v1330 = vlaneseq
  %v1331 = vshrl.u32 %v1330, 7
  %v1332 = vsub.s32 %v1329, %v1331
  %v1333 = vrot.slane %v1311, %v1332
  %v1335 = vunpack.c.l.s4 1966171168
  %v1336 = vunpack.c.0.s8 %v1335
  %v1337 = vlaneseq
  %v1338 = vshrl.u32 %v1337, 7
  %v1339 = vsub.s32 %v1336, %v1338
  %v1340 = vrot.slane %v1312, %v1339
  %v1341 = vcombine.high %v1319, %v1319
  %v1342 = vcombine.high %v1326, %v1326
  %v1343 = vcombine.high %v1333, %v1333
  %v1344 = vcombine.high %v1340, %v1340
  %v1345 = vcombine.high %v51, %v51
  %v1347 = vunpack.c.l.s4 1966171168
  %v1348 = vunpack.c.0.s8 %v1347
  %v1349 = vlaneseq
  %v1350 = vshrl.u32 %v1349, 7
  %v1351 = vsub.s32 %v1348, %v1350
  %v1352 = vrot.slane %v51, %v1351
  %v1354 = vunpack.c.l.s4 1966171168
  %v1355 = vunpack.c.0.s8 %v1354
  %v1356 = vlaneseq
  %v1357 = vshrl.u32 %v1356, 7
  %v1358 = vsub.s32 %v1355, %v1357
  %v1359 = vrot.slane %v1345, %v1358
  %v1360 = vcombine.high %v1352, %v1352
  %v1361 = vcombine.high %v1359, %v1359
  %v1363 = vunpack.c.l.s4 1966171168
  %v1364 = vunpack.c.0.s8 %v1363
  %v1365 = vlaneseq
  %v1366 = vshrl.u32 %v1365, 7
  %v1367 = vsub.s32 %v1364, %v1366
  %v1368 = vrot.slane %v1352, %v1367
  %v1370 = vunpack.c.l.s4 1966171168
  %v1371 = vunpack.c.0.s8 %v1370
  %v1372 = vlaneseq
  %v1373 = vshrl.u32 %v1372, 7
  %v1374 = vsub.s32 %v1371, %v1373
  %v1375 = vrot.slane %v1359, %v1374
  %v1377 = vunpack.c.l.s4 1966171168
  %v1378 = vunpack.c.0.s8 %v1377
  %v1379 = vlaneseq
  %v1380 = vshrl.u32 %v1379, 7
  %v1381 = vsub.s32 %v1378, %v1380
  %v1382 = vrot.slane %v1360, %v1381
  %v1384 = vunpack.c.l.s4 1966171168
  %v1385 = vunpack.c.0.s8 %v1384
  %v1386 = vlaneseq
  %v1387 = vshrl.u32 %v1386, 7
  %v1388 = vsub.s32 %v1385, %v1387
  %v1389 = vrot.slane %v1361, %v1388
  %v1390 = vcombine.high %v1368, %v1368
  %v1391 = vcombine.high %v1375, %v1375
  %v1392 = vcombine.high %v1382, %v1382
  %v1393 = vcombine.high %v1389, %v1389
  %v1395 = vunpack.c.l.s4 1966171168
  %v1396 = vunpack.c.0.s8 %v1395
  %v1397 = vlaneseq
  %v1398 = vshrl.u32 %v1397, 7
  %v1399 = vsub.s32 %v1396, %v1398
  %v1400 = vrot.slane %v52, %v1399
  %v1401 = vcombine.high %v1400, %v1400
  %v1403 = vunpack.c.l.s4 1966171168
  %v1404 = vunpack.c.0.s8 %v1403
  %v1405 = vlaneseq
  %v1406 = vshrl.u32 %v1405, 7
  %v1407 = vsub.s32 %v1404, %v1406
  %v1408 = vrot.slane %v1400, %v1407
  %v1410 = vunpack.c.l.s4 1966171168
  %v1411 = vunpack.c.0.s8 %v1410
  %v1412 = vlaneseq
  %v1413 = vshrl.u32 %v1412, 7
  %v1414 = vsub.s32 %v1411, %v1413
  %v1415 = vrot.slane %v1401, %v1414
  %v1416 = vcombine.high %v1408, %v1408
  %v1417 = vcombine.high %v53, %v53
  %v1419 = vunpack.c.l.s4 1966171168
  %v1420 = vunpack.c.0.s8 %v1419
  %v1421 = vlaneseq
  %v1422 = vshrl.u32 %v1421, 7
  %v1423 = vsub.s32 %v1420, %v1422
  %v1424 = vrot.slane %v53, %v1423
  %v1426 = vunpack.c.l.s4 1966171168
  %v1427 = vunpack.c.0.s8 %v1426
  %v1428 = vlaneseq
  %v1429 = vshrl.u32 %v1428, 7
  %v1430 = vsub.s32 %v1427, %v1429
  %v1431 = vrot.slane %v1417, %v1430
  %v1432 = vcombine.high %v1424, %v1424
  %v1433 = vcombine.high %v1431, %v1431
  %v1435 = vunpack.c.l.s4 1966171168
  %v1436 = vunpack.c.0.s8 %v1435
  %v1437 = vlaneseq
  %v1438 = vshrl.u32 %v1437, 7
  %v1439 = vsub.s32 %v1436, %v1438
  %v1440 = vrot.slane %v1424, %v1439
  %v1442 = vunpack.c.l.s4 1966171168
  %v1443 = vunpack.c.0.s8 %v1442
  %v1444 = vlaneseq
  %v1445 = vshrl.u32 %v1444, 7
  %v1446 = vsub.s32 %v1443, %v1445
  %v1447 = vrot.slane %v1431, %v1446
  %v1449 = vunpack.c.l.s4 1966171168
  %v1450 = vunpack.c.0.s8 %v1449
  %v1451 = vlaneseq
  %v1452 = vshrl.u32 %v1451, 7
  %v1453 = vsub.s32 %v1450, %v1452
  %v1454 = vrot.slane %v1432, %v1453
  %v1456 = vunpack.c.l.s4 1966171168
  %v1457 = vunpack.c.0.s8 %v1456
  %v1458 = vlaneseq
  %v1459 = vshrl.u32 %v1458, 7
  %v1460 = vsub.s32 %v1457, %v1459
  %v1461 = vrot.slane %v1433, %v1460
  %v1462 = vcombine.high %v1440, %v1440
  %v1463 = vcombine.high %v1447, %v1447
  %v1464 = vcombine.high %v1454, %v1454
  %v1465 = vcombine.high %v1461, %v1461
  %v1466 = vcombine.high %v54, %v54
  %v1468 = vunpack.c.l.s4 1966171168
  %v1469 = vunpack.c.0.s8 %v1468
  %v1470 = vlaneseq
  %v1471 = vshrl.u32 %v1470, 7
  %v1472 = vsub.s32 %v1469, %v1471
  %v1473 = vrot.slane %v54, %v1472
  %v1475 = vunpack.c.l.s4 1966171168
  %v1476 = vunpack.c.0.s8 %v1475
  %v1477 = vlaneseq
  %v1478 = vshrl.u32 %v1477, 7
  %v1479 = vsub.s32 %v1476, %v1478
  %v1480 = vrot.slane %v1466, %v1479
  %v1481 = vcombine.high %v1473, %v1473
  %v1482 = vcombine.high %v1480, %v1480
  %v1484 = vunpack.c.l.s4 1966171168
  %v1485 = vunpack.c.0.s8 %v1484
  %v1486 = vlaneseq
  %v1487 = vshrl.u32 %v1486, 7
  %v1488 = vsub.s32 %v1485, %v1487
  %v1489 = vrot.slane %v1473, %v1488
  %v1491 = vunpack.c.l.s4 1966171168
  %v1492 = vunpack.c.0.s8 %v1491
  %v1493 = vlaneseq
  %v1494 = vshrl.u32 %v1493, 7
  %v1495 = vsub.s32 %v1492, %v1494
  %v1496 = vrot.slane %v1480, %v1495
  %v1498 = vunpack.c.l.s4 1966171168
  %v1499 = vunpack.c.0.s8 %v1498
  %v1500 = vlaneseq
  %v1501 = vshrl.u32 %v1500, 7
  %v1502 = vsub.s32 %v1499, %v1501
  %v1503 = vrot.slane %v1481, %v1502
  %v1505 = vunpack.c.l.s4 1966171168
  %v1506 = vunpack.c.0.s8 %v1505
  %v1507 = vlaneseq
  %v1508 = vshrl.u32 %v1507, 7
  %v1509 = vsub.s32 %v1506, %v1508
  %v1510 = vrot.slane %v1482, %v1509
  %v1511 = vcombine.high %v1489, %v1489
  %v1512 = vcombine.high %v1496, %v1496
  %v1513 = vcombine.high %v1503, %v1503
  %v1514 = vcombine.high %v1510, %v1510
  %v1515 = vcombine.high %v55, %v55
  %v1517 = vunpack.c.l.s4 1966171168
  %v1518 = vunpack.c.0.s8 %v1517
  %v1519 = vlaneseq
  %v1520 = vshrl.u32 %v1519, 7
  %v1521 = vsub.s32 %v1518, %v1520
  %v1522 = vrot.slane %v55, %v1521
  %v1524 = vunpack.c.l.s4 1966171168
  %v1525 = vunpack.c.0.s8 %v1524
  %v1526 = vlaneseq
  %v1527 = vshrl.u32 %v1526, 7
  %v1528 = vsub.s32 %v1525, %v1527
  %v1529 = vrot.slane %v1515, %v1528
  %v1530 = vcombine.high %v1522, %v1522
  %v1531 = vcombine.high %v1529, %v1529
  %v1533 = vunpack.c.l.s4 1966171168
  %v1534 = vunpack.c.0.s8 %v1533
  %v1535 = vlaneseq
  %v1536 = vshrl.u32 %v1535, 7
  %v1537 = vsub.s32 %v1534, %v1536
  %v1538 = vrot.slane %v1522, %v1537
  %v1540 = vunpack.c.l.s4 1966171168
  %v1541 = vunpack.c.0.s8 %v1540
  %v1542 = vlaneseq
  %v1543 = vshrl.u32 %v1542, 7
  %v1544 = vsub.s32 %v1541, %v1543
  %v1545 = vrot.slane %v1529, %v1544
  %v1547 = vunpack.c.l.s4 1966171168
  %v1548 = vunpack.c.0.s8 %v1547
  %v1549 = vlaneseq
  %v1550 = vshrl.u32 %v1549, 7
  %v1551 = vsub.s32 %v1548, %v1550
  %v1552 = vrot.slane %v1530, %v1551
  %v1554 = vunpack.c.l.s4 1966171168
  %v1555 = vunpack.c.0.s8 %v1554
  %v1556 = vlaneseq
  %v1557 = vshrl.u32 %v1556, 7
  %v1558 = vsub.s32 %v1555, %v1557
  %v1559 = vrot.slane %v1531, %v1558
  %v1560 = vcombine.high %v1538, %v1538
  %v1561 = vcombine.high %v1545, %v1545
  %v1562 = vcombine.high %v1552, %v1552
  %v1563 = vcombine.high %v1559, %v1559
  %v1564 = vcombine.high %v56, %v56
  %v1566 = vunpack.c.l.s4 1966171168
  %v1567 = vunpack.c.0.s8 %v1566
  %v1568 = vlaneseq
  %v1569 = vshrl.u32 %v1568, 7
  %v1570 = vsub.s32 %v1567, %v1569
  %v1571 = vrot.slane %v56, %v1570
  %v1573 = vunpack.c.l.s4 1966171168
  %v1574 = vunpack.c.0.s8 %v1573
  %v1575 = vlaneseq
  %v1576 = vshrl.u32 %v1575, 7
  %v1577 = vsub.s32 %v1574, %v1576
  %v1578 = vrot.slane %v1564, %v1577
  %v1579 = vcombine.high %v1571, %v1571
  %v1580 = vcombine.high %v1578, %v1578
  %v1582 = vunpack.c.l.s4 1966171168
  %v1583 = vunpack.c.0.s8 %v1582
  %v1584 = vlaneseq
  %v1585 = vshrl.u32 %v1584, 7
  %v1586 = vsub.s32 %v1583, %v1585
  %v1587 = vrot.slane %v1571, %v1586
  %v1589 = vunpack.c.l.s4 1966171168
  %v1590 = vunpack.c.0.s8 %v1589
  %v1591 = vlaneseq
  %v1592 = vshrl.u32 %v1591, 7
  %v1593 = vsub.s32 %v1590, %v1592
  %v1594 = vrot.slane %v1578, %v1593
  %v1596 = vunpack.c.l.s4 1966171168
  %v1597 = vunpack.c.0.s8 %v1596
  %v1598 = vlaneseq
  %v1599 = vshrl.u32 %v1598, 7
  %v1600 = vsub.s32 %v1597, %v1599
  %v1601 = vrot.slane %v1579, %v1600
  %v1603 = vunpack.c.l.s4 1966171168
  %v1604 = vunpack.c.0.s8 %v1603
  %v1605 = vlaneseq
  %v1606 = vshrl.u32 %v1605, 7
  %v1607 = vsub.s32 %v1604, %v1606
  %v1608 = vrot.slane %v1580, %v1607
  %v1609 = vcombine.high %v1587, %v1587
  %v1610 = vcombine.high %v1594, %v1594
  %v1611 = vcombine.high %v1601, %v1601
  %v1612 = vcombine.high %v1608, %v1608
  %v1614 = vunpack.c.l.s4 1966171168
  %v1615 = vunpack.c.0.s8 %v1614
  %v1616 = vlaneseq
  %v1617 = vshrl.u32 %v1616, 7
  %v1618 = vsub.s32 %v1615, %v1617
  %v1619 = vrot.slane %v57, %v1618
  %v1620 = vcombine.high %v1619, %v1619
  %v1622 = vunpack.c.l.s4 1966171168
  %v1623 = vunpack.c.0.s8 %v1622
  %v1624 = vlaneseq
  %v1625 = vshrl.u32 %v1624, 7
  %v1626 = vsub.s32 %v1623, %v1625
  %v1627 = vrot.slane %v1619, %v1626
  %v1629 = vunpack.c.l.s4 1966171168
  %v1630 = vunpack.c.0.s8 %v1629
  %v1631 = vlaneseq
  %v1632 = vshrl.u32 %v1631, 7
  %v1633 = vsub.s32 %v1630, %v1632
  %v1634 = vrot.slane %v1620, %v1633
  %v1635 = vcombine.high %v1627, %v1627
  %v1636 = vcombine.high %v58, %v58
  %v1638 = vunpack.c.l.s4 1966171168
  %v1639 = vunpack.c.0.s8 %v1638
  %v1640 = vlaneseq
  %v1641 = vshrl.u32 %v1640, 7
  %v1642 = vsub.s32 %v1639, %v1641
  %v1643 = vrot.slane %v58, %v1642
  %v1645 = vunpack.c.l.s4 1966171168
  %v1646 = vunpack.c.0.s8 %v1645
  %v1647 = vlaneseq
  %v1648 = vshrl.u32 %v1647, 7
  %v1649 = vsub.s32 %v1646, %v1648
  %v1650 = vrot.slane %v1636, %v1649
  %v1651 = vcombine.high %v1643, %v1643
  %v1652 = vcombine.high %v1650, %v1650
  %v1654 = vunpack.c.l.s4 1966171168
  %v1655 = vunpack.c.0.s8 %v1654
  %v1656 = vlaneseq
  %v1657 = vshrl.u32 %v1656, 7
  %v1658 = vsub.s32 %v1655, %v1657
  %v1659 = vrot.slane %v1643, %v1658
  %v1661 = vunpack.c.l.s4 1966171168
  %v1662 = vunpack.c.0.s8 %v1661
  %v1663 = vlaneseq
  %v1664 = vshrl.u32 %v1663, 7
  %v1665 = vsub.s32 %v1662, %v1664
  %v1666 = vrot.slane %v1650, %v1665
  %v1668 = vunpack.c.l.s4 1966171168
  %v1669 = vunpack.c.0.s8 %v1668
  %v1670 = vlaneseq
  %v1671 = vshrl.u32 %v1670, 7
  %v1672 = vsub.s32 %v1669, %v1671
  %v1673 = vrot.slane %v1651, %v1672
  %v1675 = vunpack.c.l.s4 1966171168
  %v1676 = vunpack.c.0.s8 %v1675
  %v1677 = vlaneseq
  %v1678 = vshrl.u32 %v1677, 7
  %v1679 = vsub.s32 %v1676, %v1678
  %v1680 = vrot.slane %v1652, %v1679
  %v1681 = vcombine.high %v1659, %v1659
  %v1682 = vcombine.high %v1666, %v1666
  %v1683 = vcombine.high %v1673, %v1673
  %v1684 = vcombine.high %v1680, %v1680
  %v1685 = vcombine.high %v59, %v59
  %v1687 = vunpack.c.l.s4 1966171168
  %v1688 = vunpack.c.0.s8 %v1687
  %v1689 = vlaneseq
  %v1690 = vshrl.u32 %v1689, 7
  %v1691 = vsub.s32 %v1688, %v1690
  %v1692 = vrot.slane %v59, %v1691
  %v1694 = vunpack.c.l.s4 1966171168
  %v1695 = vunpack.c.0.s8 %v1694
  %v1696 = vlaneseq
  %v1697 = vshrl.u32 %v1696, 7
  %v1698 = vsub.s32 %v1695, %v1697
  %v1699 = vrot.slane %v1685, %v1698
  %v1700 = vcombine.high %v1692, %v1692
  %v1701 = vcombine.high %v1699, %v1699
  %v1703 = vunpack.c.l.s4 1966171168
  %v1704 = vunpack.c.0.s8 %v1703
  %v1705 = vlaneseq
  %v1706 = vshrl.u32 %v1705, 7
  %v1707 = vsub.s32 %v1704, %v1706
  %v1708 = vrot.slane %v1692, %v1707
  %v1710 = vunpack.c.l.s4 1966171168
  %v1711 = vunpack.c.0.s8 %v1710
  %v1712 = vlaneseq
  %v1713 = vshrl.u32 %v1712, 7
  %v1714 = vsub.s32 %v1711, %v1713
  %v1715 = vrot.slane %v1699, %v1714
  %v1717 = vunpack.c.l.s4 1966171168
  %v1718 = vunpack.c.0.s8 %v1717
  %v1719 = vlaneseq
  %v1720 = vshrl.u32 %v1719, 7
  %v1721 = vsub.s32 %v1718, %v1720
  %v1722 = vrot.slane %v1700, %v1721
  %v1724 = vunpack.c.l.s4 1966171168
  %v1725 = vunpack.c.0.s8 %v1724
  %v1726 = vlaneseq
  %v1727 = vshrl.u32 %v1726, 7
  %v1728 = vsub.s32 %v1725, %v1727
  %v1729 = vrot.slane %v1701, %v1728
  %v1730 = vcombine.high %v1708, %v1708
  %v1731 = vcombine.high %v1715, %v1715
  %v1732 = vcombine.high %v1722, %v1722
  %v1733 = vcombine.high %v1729, %v1729
  %v1734 = vcombine.high %v60, %v60
  %v1736 = vunpack.c.l.s4 1966171168
  %v1737 = vunpack.c.0.s8 %v1736
  %v1738 = vlaneseq
  %v1739 = vshrl.u32 %v1738, 7
  %v1740 = vsub.s32 %v1737, %v1739
  %v1741 = vrot.slane %v60, %v1740
  %v1743 = vunpack.c.l.s4 1966171168
  %v1744 = vunpack.c.0.s8 %v1743
  %v1745 = vlaneseq
  %v1746 = vshrl.u32 %v1745, 7
  %v1747 = vsub.s32 %v1744, %v1746
  %v1748 = vrot.slane %v1734, %v1747
  %v1749 = vcombine.high %v1741, %v1741
  %v1750 = vcombine.high %v1748, %v1748
  %v1752 = vunpack.c.l.s4 1966171168
  %v1753 = vunpack.c.0.s8 %v1752
  %v1754 = vlaneseq
  %v1755 = vshrl.u32 %v1754, 7
  %v1756 = vsub.s32 %v1753, %v1755
  %v1757 = vrot.slane %v1741, %v1756
  %v1759 = vunpack.c.l.s4 1966171168
  %v1760 = vunpack.c.0.s8 %v1759
  %v1761 = vlaneseq
  %v1762 = vshrl.u32 %v1761, 7
  %v1763 = vsub.s32 %v1760, %v1762
  %v1764 = vrot.slane %v1748, %v1763
  %v1766 = vunpack.c.l.s4 1966171168
  %v1767 = vunpack.c.0.s8 %v1766
  %v1768 = vlaneseq
  %v1769 = vshrl.u32 %v1768, 7
  %v1770 = vsub.s32 %v1767, %v1769
  %v1771 = vrot.slane %v1749, %v1770
  %v1773 = vunpack.c.l.s4 1966171168
  %v1774 = vunpack.c.0.s8 %v1773
  %v1775 = vlaneseq
  %v1776 = vshrl.u32 %v1775, 7
  %v1777 = vsub.s32 %v1774, %v1776
  %v1778 = vrot.slane %v1750, %v1777
  %v1779 = vcombine.high %v1757, %v1757
  %v1780 = vcombine.high %v1764, %v1764
  %v1781 = vcombine.high %v1771, %v1771
  %v1782 = vcombine.high %v1778, %v1778
  %v1783 = vcombine.high %v61, %v61
  %v1785 = vunpack.c.l.s4 1966171168
  %v1786 = vunpack.c.0.s8 %v1785
  %v1787 = vlaneseq
  %v1788 = vshrl.u32 %v1787, 7
  %v1789 = vsub.s32 %v1786, %v1788
  %v1790 = vrot.slane %v61, %v1789
  %v1792 = vunpack.c.l.s4 1966171168
  %v1793 = vunpack.c.0.s8 %v1792
  %v1794 = vlaneseq
  %v1795 = vshrl.u32 %v1794, 7
  %v1796 = vsub.s32 %v1793, %v1795
  %v1797 = vrot.slane %v1783, %v1796
  %v1798 = vcombine.high %v1790, %v1790
  %v1799 = vcombine.high %v1797, %v1797
  %v1801 = vunpack.c.l.s4 1966171168
  %v1802 = vunpack.c.0.s8 %v1801
  %v1803 = vlaneseq
  %v1804 = vshrl.u32 %v1803, 7
  %v1805 = vsub.s32 %v1802, %v1804
  %v1806 = vrot.slane %v1790, %v1805
  %v1808 = vunpack.c.l.s4 1966171168
  %v1809 = vunpack.c.0.s8 %v1808
  %v1810 = vlaneseq
  %v1811 = vshrl.u32 %v1810, 7
  %v1812 = vsub.s32 %v1809, %v1811
  %v1813 = vrot.slane %v1797, %v1812
  %v1815 = vunpack.c.l.s4 1966171168
  %v1816 = vunpack.c.0.s8 %v1815
  %v1817 = vlaneseq
  %v1818 = vshrl.u32 %v1817, 7
  %v1819 = vsub.s32 %v1816, %v1818
  %v1820 = vrot.slane %v1798, %v1819
  %v1822 = vunpack.c.l.s4 1966171168
  %v1823 = vunpack.c.0.s8 %v1822
  %v1824 = vlaneseq
  %v1825 = vshrl.u32 %v1824, 7
  %v1826 = vsub.s32 %v1823, %v1825
  %v1827 = vrot.slane %v1799, %v1826
  %v1828 = vcombine.high %v1806, %v1806
  %v1829 = vcombine.high %v1813, %v1813
  %v1830 = vcombine.high %v1820, %v1820
  %v1831 = vcombine.high %v1827, %v1827
  %v1833 = vunpack.c.l.s4 1966171168
  %v1834 = vunpack.c.0.s8 %v1833
  %v1835 = vlaneseq
  %v1836 = vshrl.u32 %v1835, 7
  %v1837 = vsub.s32 %v1834, %v1836
  %v1838 = vrot.slane %v62, %v1837
  %v1839 = vcombine.high %v1838, %v1838
  %v1841 = vunpack.c.l.s4 1966171168
  %v1842 = vunpack.c.0.s8 %v1841
  %v1843 = vlaneseq
  %v1844 = vshrl.u32 %v1843, 7
  %v1845 = vsub.s32 %v1842, %v1844
  %v1846 = vrot.slane %v1838, %v1845
  %v1848 = vunpack.c.l.s4 1966171168
  %v1849 = vunpack.c.0.s8 %v1848
  %v1850 = vlaneseq
  %v1851 = vshrl.u32 %v1850, 7
  %v1852 = vsub.s32 %v1849, %v1851
  %v1853 = vrot.slane %v1839, %v1852
  %v1854 = vcombine.high %v1846, %v1846
  %v1855 = vld [vmem:[%s1] sm:$0xff]
  %v1856 = vld [vmem:[%s1 + $0x8] sm:$0xff]
  %v1857 = vld [vmem:[%s1 + $0x10] sm:$0xff]
  %v1858 = vld [vmem:[%s1 + $0x18] sm:$0x7f]
  %v1859 = vld [vmem:[%s2] sm:$0x1]
  %v1861 = vlaneseq
  %v1862 = vshrl.u32 %v1861, 7
  %v1863 = vsub.s32 0, %v1862
  %v1864 = vrot.slane %v1859, %v1863
  %v1866 = vcombine.low %v126, %v140
  %v1867 = vcombine.low %v148, %v150
  %v1868 = vcombine.low %v133, %v147
  %v1869 = vcombine.low %v149, %v151
  %v1871 = vunpack.c.l.s4 1966171168
  %v1872 = vunpack.c.0.s8 %v1871
  %v1873 = vlaneseq
  %v1874 = vshrl.u32 %v1873, 7
  %v1875 = vsub.s32 %v1872, %v1874
  %v1876 = vrot.slane %v1866, %v1875
  %v1878 = vunpack.c.l.s4 1966171168
  %v1879 = vunpack.c.0.s8 %v1878
  %v1880 = vlaneseq
  %v1881 = vshrl.u32 %v1880, 7
  %v1882 = vsub.s32 %v1879, %v1881
  %v1883 = vrot.slane %v1867, %v1882
  %v1885 = vunpack.c.l.s4 1966171168
  %v1886 = vunpack.c.0.s8 %v1885
  %v1887 = vlaneseq
  %v1888 = vshrl.u32 %v1887, 7
  %v1889 = vsub.s32 %v1886, %v1888
  %v1890 = vrot.slane %v1868, %v1889
  %v1892 = vunpack.c.l.s4 1966171168
  %v1893 = vunpack.c.0.s8 %v1892
  %v1894 = vlaneseq
  %v1895 = vshrl.u32 %v1894, 7
  %v1896 = vsub.s32 %v1893, %v1895
  %v1897 = vrot.slane %v1869, %v1896
  %v1898 = vcombine.low %v1876, %v1883
  %v1899 = vcombine.low %v1890, %v1897
  %v1901 = vunpack.c.l.s4 1966171168
  %v1902 = vunpack.c.0.s8 %v1901
  %v1903 = vlaneseq
  %v1904 = vshrl.u32 %v1903, 7
  %v1905 = vsub.s32 %v1902, %v1904
  %v1906 = vrot.slane %v1898, %v1905
  %v1908 = vunpack.c.l.s4 1966171168
  %v1909 = vunpack.c.0.s8 %v1908
  %v1910 = vlaneseq
  %v1911 = vshrl.u32 %v1910, 7
  %v1912 = vsub.s32 %v1909, %v1911
  %v1913 = vrot.slane %v1899, %v1912
  %v1914 = vcombine.low %v1906, %v1913
  %v1915 = vcombine.low %v175, %v189
  %v1916 = vcombine.low %v197, %v199
  %v1917 = vcombine.low %v182, %v196
  %v1918 = vcombine.low %v198, %v200
  %v1920 = vunpack.c.l.s4 1966171168
  %v1921 = vunpack.c.0.s8 %v1920
  %v1922 = vlaneseq
  %v1923 = vshrl.u32 %v1922, 7
  %v1924 = vsub.s32 %v1921, %v1923
  %v1925 = vrot.slane %v1915, %v1924
  %v1927 = vunpack.c.l.s4 1966171168
  %v1928 = vunpack.c.0.s8 %v1927
  %v1929 = vlaneseq
  %v1930 = vshrl.u32 %v1929, 7
  %v1931 = vsub.s32 %v1928, %v1930
  %v1932 = vrot.slane %v1916, %v1931
  %v1934 = vunpack.c.l.s4 1966171168
  %v1935 = vunpack.c.0.s8 %v1934
  %v1936 = vlaneseq
  %v1937 = vshrl.u32 %v1936, 7
  %v1938 = vsub.s32 %v1935, %v1937
  %v1939 = vrot.slane %v1917, %v1938
  %v1941 = vunpack.c.l.s4 1966171168
  %v1942 = vunpack.c.0.s8 %v1941
  %v1943 = vlaneseq
  %v1944 = vshrl.u32 %v1943, 7
  %v1945 = vsub.s32 %v1942, %v1944
  %v1946 = vrot.slane %v1918, %v1945
  %v1947 = vcombine.low %v1925, %v1932
  %v1948 = vcombine.low %v1939, %v1946
  %v1950 = vunpack.c.l.s4 1966171168
  %v1951 = vunpack.c.0.s8 %v1950
  %v1952 = vlaneseq
  %v1953 = vshrl.u32 %v1952, 7
  %v1954 = vsub.s32 %v1951, %v1953
  %v1955 = vrot.slane %v1947, %v1954
  %v1957 = vunpack.c.l.s4 1966171168
  %v1958 = vunpack.c.0.s8 %v1957
  %v1959 = vlaneseq
  %v1960 = vshrl.u32 %v1959, 7
  %v1961 = vsub.s32 %v1958, %v1960
  %v1962 = vrot.slane %v1948, %v1961
  %v1963 = vcombine.low %v1955, %v1962
  %v1964 = vcombine.low %v224, %v238
  %v1965 = vcombine.low %v246, %v248
  %v1966 = vcombine.low %v231, %v245
  %v1967 = vcombine.low %v247, %v249
  %v1969 = vunpack.c.l.s4 1966171168
  %v1970 = vunpack.c.0.s8 %v1969
  %v1971 = vlaneseq
  %v1972 = vshrl.u32 %v1971, 7
  %v1973 = vsub.s32 %v1970, %v1972
  %v1974 = vrot.slane %v1964, %v1973
  %v1976 = vunpack.c.l.s4 1966171168
  %v1977 = vunpack.c.0.s8 %v1976
  %v1978 = vlaneseq
  %v1979 = vshrl.u32 %v1978, 7
  %v1980 = vsub.s32 %v1977, %v1979
  %v1981 = vrot.slane %v1965, %v1980
  %v1983 = vunpack.c.l.s4 1966171168
  %v1984 = vunpack.c.0.s8 %v1983
  %v1985 = vlaneseq
  %v1986 = vshrl.u32 %v1985, 7
  %v1987 = vsub.s32 %v1984, %v1986
  %v1988 = vrot.slane %v1966, %v1987
  %v1990 = vunpack.c.l.s4 1966171168
  %v1991 = vunpack.c.0.s8 %v1990
  %v1992 = vlaneseq
  %v1993 = vshrl.u32 %v1992, 7
  %v1994 = vsub.s32 %v1991, %v1993
  %v1995 = vrot.slane %v1967, %v1994
  %v1996 = vcombine.low %v1974, %v1981
  %v1997 = vcombine.low %v1988, %v1995
  %v1999 = vunpack.c.l.s4 1966171168
  %v2000 = vunpack.c.0.s8 %v1999
  %v2001 = vlaneseq
  %v2002 = vshrl.u32 %v2001, 7
  %v2003 = vsub.s32 %v2000, %v2002
  %v2004 = vrot.slane %v1996, %v2003
  %v2006 = vunpack.c.l.s4 1966171168
  %v2007 = vunpack.c.0.s8 %v2006
  %v2008 = vlaneseq
  %v2009 = vshrl.u32 %v2008, 7
  %v2010 = vsub.s32 %v2007, %v2009
  %v2011 = vrot.slane %v1997, %v2010
  %v2012 = vcombine.low %v2004, %v2011
  %v2013 = vcombine.low %v273, %v287
  %v2014 = vcombine.low %v295, %v297
  %v2015 = vcombine.low %v280, %v294
  %v2016 = vcombine.low %v296, %v298
  %v2018 = vunpack.c.l.s4 1966171168
  %v2019 = vunpack.c.0.s8 %v2018
  %v2020 = vlaneseq
  %v2021 = vshrl.u32 %v2020, 7
  %v2022 = vsub.s32 %v2019, %v2021
  %v2023 = vrot.slane %v2013, %v2022
  %v2025 = vunpack.c.l.s4 1966171168
  %v2026 = vunpack.c.0.s8 %v2025
  %v2027 = vlaneseq
  %v2028 = vshrl.u32 %v2027, 7
  %v2029 = vsub.s32 %v2026, %v2028
  %v2030 = vrot.slane %v2014, %v2029
  %v2032 = vunpack.c.l.s4 1966171168
  %v2033 = vunpack.c.0.s8 %v2032
  %v2034 = vlaneseq
  %v2035 = vshrl.u32 %v2034, 7
  %v2036 = vsub.s32 %v2033, %v2035
  %v2037 = vrot.slane %v2015, %v2036
  %v2039 = vunpack.c.l.s4 1966171168
  %v2040 = vunpack.c.0.s8 %v2039
  %v2041 = vlaneseq
  %v2042 = vshrl.u32 %v2041, 7
  %v2043 = vsub.s32 %v2040, %v2042
  %v2044 = vrot.slane %v2016, %v2043
  %v2045 = vcombine.low %v2023, %v2030
  %v2046 = vcombine.low %v2037, %v2044
  %v2048 = vunpack.c.l.s4 1966171168
  %v2049 = vunpack.c.0.s8 %v2048
  %v2050 = vlaneseq
  %v2051 = vshrl.u32 %v2050, 7
  %v2052 = vsub.s32 %v2049, %v2051
  %v2053 = vrot.slane %v2045, %v2052
  %v2055 = vunpack.c.l.s4 1966171168
  %v2056 = vunpack.c.0.s8 %v2055
  %v2057 = vlaneseq
  %v2058 = vshrl.u32 %v2057, 7
  %v2059 = vsub.s32 %v2056, %v2058
  %v2060 = vrot.slane %v2046, %v2059
  %v2061 = vcombine.low %v2053, %v2060
  %v2062 = vcombine.low %v313, %v320
  %v2063 = vcombine.low %v321, %v345
  %v2064 = vcombine.low %v359, %v367
  %v2065 = vcombine.low %v369, %v352
  %v2067 = vunpack.c.l.s4 1966171168
  %v2068 = vunpack.c.0.s8 %v2067
  %v2069 = vlaneseq
  %v2070 = vshrl.u32 %v2069, 7
  %v2071 = vsub.s32 %v2068, %v2070
  %v2072 = vrot.slane %v2062, %v2071
  %v2074 = vunpack.c.l.s4 1966171168
  %v2075 = vunpack.c.0.s8 %v2074
  %v2076 = vlaneseq
  %v2077 = vshrl.u32 %v2076, 7
  %v2078 = vsub.s32 %v2075, %v2077
  %v2079 = vrot.slane %v2063, %v2078
  %v2081 = vunpack.c.l.s4 1966171168
  %v2082 = vunpack.c.0.s8 %v2081
  %v2083 = vlaneseq
  %v2084 = vshrl.u32 %v2083, 7
  %v2085 = vsub.s32 %v2082, %v2084
  %v2086 = vrot.slane %v2064, %v2085
  %v2088 = vunpack.c.l.s4 1966171168
  %v2089 = vunpack.c.0.s8 %v2088
  %v2090 = vlaneseq
  %v2091 = vshrl.u32 %v2090, 7
  %v2092 = vsub.s32 %v2089, %v2091
  %v2093 = vrot.slane %v2065, %v2092
  %v2094 = vcombine.low %v2072, %v2079
  %v2095 = vcombine.low %v2086, %v2093
  %v2097 = vunpack.c.l.s4 1966171168
  %v2098 = vunpack.c.0.s8 %v2097
  %v2099 = vlaneseq
  %v2100 = vshrl.u32 %v2099, 7
  %v2101 = vsub.s32 %v2098, %v2100
  %v2102 = vrot.slane %v2094, %v2101
  %v2104 = vunpack.c.l.s4 1966171168
  %v2105 = vunpack.c.0.s8 %v2104
  %v2106 = vlaneseq
  %v2107 = vshrl.u32 %v2106, 7
  %v2108 = vsub.s32 %v2105, %v2107
  %v2109 = vrot.slane %v2095, %v2108
  %v2110 = vcombine.low %v2102, %v2109
  %v2111 = vcombine.low %v366, %v368
  %v2112 = vcombine.low %v370, %v394
  %v2113 = vcombine.low %v408, %v416
  %v2114 = vcombine.low %v418, %v401
  %v2116 = vunpack.c.l.s4 1966171168
  %v2117 = vunpack.c.0.s8 %v2116
  %v2118 = vlaneseq
  %v2119 = vshrl.u32 %v2118, 7
  %v2120 = vsub.s32 %v2117, %v2119
  %v2121 = vrot.slane %v2111, %v2120
  %v2123 = vunpack.c.l.s4 1966171168
  %v2124 = vunpack.c.0.s8 %v2123
  %v2125 = vlaneseq
  %v2126 = vshrl.u32 %v2125, 7
  %v2127 = vsub.s32 %v2124, %v2126
  %v2128 = vrot.slane %v2112, %v2127
  %v2130 = vunpack.c.l.s4 1966171168
  %v2131 = vunpack.c.0.s8 %v2130
  %v2132 = vlaneseq
  %v2133 = vshrl.u32 %v2132, 7
  %v2134 = vsub.s32 %v2131, %v2133
  %v2135 = vrot.slane %v2113, %v2134
  %v2137 = vunpack.c.l.s4 1966171168
  %v2138 = vunpack.c.0.s8 %v2137
  %v2139 = vlaneseq
  %v2140 = vshrl.u32 %v2139, 7
  %v2141 = vsub.s32 %v2138, %v2140
  %v2142 = vrot.slane %v2114, %v2141
  %v2143 = vcombine.low %v2121, %v2128
  %v2144 = vcombine.low %v2135, %v2142
  %v2146 = vunpack.c.l.s4 1966171168
  %v2147 = vunpack.c.0.s8 %v2146
  %v2148 = vlaneseq
  %v2149 = vshrl.u32 %v2148, 7
  %v2150 = vsub.s32 %v2147, %v2149
  %v2151 = vrot.slane %v2143, %v2150
  %v2153 = vunpack.c.l.s4 1966171168
  %v2154 = vunpack.c.0.s8 %v2153
  %v2155 = vlaneseq
  %v2156 = vshrl.u32 %v2155, 7
  %v2157 = vsub.s32 %v2154, %v2156
  %v2158 = vrot.slane %v2144, %v2157
  %v2159 = vcombine.low %v2151, %v2158
  %v2160 = vcombine.low %v415, %v417
  %v2161 = vcombine.low %v419, %v443
  %v2162 = vcombine.low %v457, %v465
  %v2163 = vcombine.low %v467, %v450
  %v2165 = vunpack.c.l.s4 1966171168
  %v2166 = vunpack.c.0.s8 %v2165
  %v2167 = vlaneseq
  %v2168 = vshrl.u32 %v2167, 7
  %v2169 = vsub.s32 %v2166, %v2168
  %v2170 = vrot.slane %v2160, %v2169
  %v2172 = vunpack.c.l.s4 1966171168
  %v2173 = vunpack.c.0.s8 %v2172
  %v2174 = vlaneseq
  %v2175 = vshrl.u32 %v2174, 7
  %v2176 = vsub.s32 %v2173, %v2175
  %v2177 = vrot.slane %v2161, %v2176
  %v2179 = vunpack.c.l.s4 1966171168
  %v2180 = vunpack.c.0.s8 %v2179
  %v2181 = vlaneseq
  %v2182 = vshrl.u32 %v2181, 7
  %v2183 = vsub.s32 %v2180, %v2182
  %v2184 = vrot.slane %v2162, %v2183
  %v2186 = vunpack.c.l.s4 1966171168
  %v2187 = vunpack.c.0.s8 %v2186
  %v2188 = vlaneseq
  %v2189 = vshrl.u32 %v2188, 7
  %v2190 = vsub.s32 %v2187, %v2189
  %v2191 = vrot.slane %v2163, %v2190
  %v2192 = vcombine.low %v2170, %v2177
  %v2193 = vcombine.low %v2184, %v2191
  %v2195 = vunpack.c.l.s4 1966171168
  %v2196 = vunpack.c.0.s8 %v2195
  %v2197 = vlaneseq
  %v2198 = vshrl.u32 %v2197, 7
  %v2199 = vsub.s32 %v2196, %v2198
  %v2200 = vrot.slane %v2192, %v2199
  %v2202 = vunpack.c.l.s4 1966171168
  %v2203 = vunpack.c.0.s8 %v2202
  %v2204 = vlaneseq
  %v2205 = vshrl.u32 %v2204, 7
  %v2206 = vsub.s32 %v2203, %v2205
  %v2207 = vrot.slane %v2193, %v2206
  %v2208 = vcombine.low %v2200, %v2207
  %v2209 = vcombine.low %v464, %v466
  %v2210 = vcombine.low %v468, %v492
  %v2211 = vcombine.low %v506, %v514
  %v2212 = vcombine.low %v516, %v499
  %v2214 = vunpack.c.l.s4 1966171168
  %v2215 = vunpack.c.0.s8 %v2214
  %v2216 = vlaneseq
  %v2217 = vshrl.u32 %v2216, 7
  %v2218 = vsub.s32 %v2215, %v2217
  %v2219 = vrot.slane %v2209, %v2218
  %v2221 = vunpack.c.l.s4 1966171168
  %v2222 = vunpack.c.0.s8 %v2221
  %v2223 = vlaneseq
  %v2224 = vshrl.u32 %v2223, 7
  %v2225 = vsub.s32 %v2222, %v2224
  %v2226 = vrot.slane %v2210, %v2225
  %v2228 = vunpack.c.l.s4 1966171168
  %v2229 = vunpack.c.0.s8 %v2228
  %v2230 = vlaneseq
  %v2231 = vshrl.u32 %v2230, 7
  %v2232 = vsub.s32 %v2229, %v2231
  %v2233 = vrot.slane %v2211, %v2232
  %v2235 = vunpack.c.l.s4 1966171168
  %v2236 = vunpack.c.0.s8 %v2235
  %v2237 = vlaneseq
  %v2238 = vshrl.u32 %v2237, 7
  %v2239 = vsub.s32 %v2236, %v2238
  %v2240 = vrot.slane %v2212, %v2239
  %v2241 = vcombine.low %v2219, %v2226
  %v2242 = vcombine.low %v2233, %v2240
  %v2244 = vunpack.c.l.s4 1966171168
  %v2245 = vunpack.c.0.s8 %v2244
  %v2246 = vlaneseq
  %v2247 = vshrl.u32 %v2246, 7
  %v2248 = vsub.s32 %v2245, %v2247
  %v2249 = vrot.slane %v2241, %v2248
  %v2251 = vunpack.c.l.s4 1966171168
  %v2252 = vunpack.c.0.s8 %v2251
  %v2253 = vlaneseq
  %v2254 = vshrl.u32 %v2253, 7
  %v2255 = vsub.s32 %v2252, %v2254
  %v2256 = vrot.slane %v2242, %v2255
  %v2257 = vcombine.low %v2249, %v2256
  %v2258 = vcombine.low %v513, %v515
  %v2259 = vcombine.low %v517, %v532
  %v2260 = vcombine.low %v539, %v540
  %v2261 = vcombine.low %v564, %v578
  %v2263 = vunpack.c.l.s4 1966171168
  %v2264 = vunpack.c.0.s8 %v2263
  %v2265 = vlaneseq
  %v2266 = vshrl.u32 %v2265, 7
  %v2267 = vsub.s32 %v2264, %v2266
  %v2268 = vrot.slane %v2258, %v2267
  %v2270 = vunpack.c.l.s4 1966171168
  %v2271 = vunpack.c.0.s8 %v2270
  %v2272 = vlaneseq
  %v2273 = vshrl.u32 %v2272, 7
  %v2274 = vsub.s32 %v2271, %v2273
  %v2275 = vrot.slane %v2259, %v2274
  %v2277 = vunpack.c.l.s4 1966171168
  %v2278 = vunpack.c.0.s8 %v2277
  %v2279 = vlaneseq
  %v2280 = vshrl.u32 %v2279, 7
  %v2281 = vsub.s32 %v2278, %v2280
  %v2282 = vrot.slane %v2260, %v2281
  %v2284 = vunpack.c.l.s4 1966171168
  %v2285 = vunpack.c.0.s8 %v2284
  %v2286 = vlaneseq
  %v2287 = vshrl.u32 %v2286, 7
  %v2288 = vsub.s32 %v2285, %v2287
  %v2289 = vrot.slane %v2261, %v2288
  %v2290 = vcombine.low %v2268, %v2275
  %v2291 = vcombine.low %v2282, %v2289
  %v2293 = vunpack.c.l.s4 1966171168
  %v2294 = vunpack.c.0.s8 %v2293
  %v2295 = vlaneseq
  %v2296 = vshrl.u32 %v2295, 7
  %v2297 = vsub.s32 %v2294, %v2296
  %v2298 = vrot.slane %v2290, %v2297
  %v2300 = vunpack.c.l.s4 1966171168
  %v2301 = vunpack.c.0.s8 %v2300
  %v2302 = vlaneseq
  %v2303 = vshrl.u32 %v2302, 7
  %v2304 = vsub.s32 %v2301, %v2303
  %v2305 = vrot.slane %v2291, %v2304
  %v2306 = vcombine.low %v2298, %v2305
  %v2307 = vcombine.low %v586, %v588
  %v2308 = vcombine.low %v571, %v585
  %v2309 = vcombine.low %v587, %v589
  %v2310 = vcombine.low %v613, %v627
  %v2312 = vunpack.c.l.s4 1966171168
  %v2313 = vunpack.c.0.s8 %v2312
  %v2314 = vlaneseq
  %v2315 = vshrl.u32 %v2314, 7
  %v2316 = vsub.s32 %v2313, %v2315
  %v2317 = vrot.slane %v2307, %v2316
  %v2319 = vunpack.c.l.s4 1966171168
  %v2320 = vunpack.c.0.s8 %v2319
  %v2321 = vlaneseq
  %v2322 = vshrl.u32 %v2321, 7
  %v2323 = vsub.s32 %v2320, %v2322
  %v2324 = vrot.slane %v2308, %v2323
  %v2326 = vunpack.c.l.s4 1966171168
  %v2327 = vunpack.c.0.s8 %v2326
  %v2328 = vlaneseq
  %v2329 = vshrl.u32 %v2328, 7
  %v2330 = vsub.s32 %v2327, %v2329
  %v2331 = vrot.slane %v2309, %v2330
  %v2333 = vunpack.c.l.s4 1966171168
  %v2334 = vunpack.c.0.s8 %v2333
  %v2335 = vlaneseq
  %v2336 = vshrl.u32 %v2335, 7
  %v2337 = vsub.s32 %v2334, %v2336
  %v2338 = vrot.slane %v2310, %v2337
  %v2339 = vcombine.low %v2317, %v2324
  %v2340 = vcombine.low %v2331, %v2338
  %v2342 = vunpack.c.l.s4 1966171168
  %v2343 = vunpack.c.0.s8 %v2342
  %v2344 = vlaneseq
  %v2345 = vshrl.u32 %v2344, 7
  %v2346 = vsub.s32 %v2343, %v2345
  %v2347 = vrot.slane %v2339, %v2346
  %v2349 = vunpack.c.l.s4 1966171168
  %v2350 = vunpack.c.0.s8 %v2349
  %v2351 = vlaneseq
  %v2352 = vshrl.u32 %v2351, 7
  %v2353 = vsub.s32 %v2350, %v2352
  %v2354 = vrot.slane %v2340, %v2353
  %v2355 = vcombine.low %v2347, %v2354
  %v2356 = vcombine.low %v635, %v637
  %v2357 = vcombine.low %v620, %v634
  %v2358 = vcombine.low %v636, %v638
  %v2359 = vcombine.low %v662, %v676
  %v2361 = vunpack.c.l.s4 1966171168
  %v2362 = vunpack.c.0.s8 %v2361
  %v2363 = vlaneseq
  %v2364 = vshrl.u32 %v2363, 7
  %v2365 = vsub.s32 %v2362, %v2364
  %v2366 = vrot.slane %v2356, %v2365
  %v2368 = vunpack.c.l.s4 1966171168
  %v2369 = vunpack.c.0.s8 %v2368
  %v2370 = vlaneseq
  %v2371 = vshrl.u32 %v2370, 7
  %v2372 = vsub.s32 %v2369, %v2371
  %v2373 = vrot.slane %v2357, %v2372
  %v2375 = vunpack.c.l.s4 1966171168
  %v2376 = vunpack.c.0.s8 %v2375
  %v2377 = vlaneseq
  %v2378 = vshrl.u32 %v2377, 7
  %v2379 = vsub.s32 %v2376, %v2378
  %v2380 = vrot.slane %v2358, %v2379
  %v2382 = vunpack.c.l.s4 1966171168
  %v2383 = vunpack.c.0.s8 %v2382
  %v2384 = vlaneseq
  %v2385 = vshrl.u32 %v2384, 7
  %v2386 = vsub.s32 %v2383, %v2385
  %v2387 = vrot.slane %v2359, %v2386
  %v2388 = vcombine.low %v2366, %v2373
  %v2389 = vcombine.low %v2380, %v2387
  %v2391 = vunpack.c.l.s4 1966171168
  %v2392 = vunpack.c.0.s8 %v2391
  %v2393 = vlaneseq
  %v2394 = vshrl.u32 %v2393, 7
  %v2395 = vsub.s32 %v2392, %v2394
  %v2396 = vrot.slane %v2388, %v2395
  %v2398 = vunpack.c.l.s4 1966171168
  %v2399 = vunpack.c.0.s8 %v2398
  %v2400 = vlaneseq
  %v2401 = vshrl.u32 %v2400, 7
  %v2402 = vsub.s32 %v2399, %v2401
  %v2403 = vrot.slane %v2389, %v2402
  %v2404 = vcombine.low %v2396, %v2403
  %v2405 = vcombine.low %v684, %v686
  %v2406 = vcombine.low %v669, %v683
  %v2407 = vcombine.low %v685, %v687
  %v2408 = vcombine.low %v711, %v725
  %v2410 = vunpack.c.l.s4 1966171168
  %v2411 = vunpack.c.0.s8 %v2410
  %v2412 = vlaneseq
  %v2413 = vshrl.u32 %v2412, 7
  %v2414 = vsub.s32 %v2411, %v2413
  %v2415 = vrot.slane %v2405, %v2414
  %v2417 = vunpack.c.l.s4 1966171168
  %v2418 = vunpack.c.0.s8 %v2417
  %v2419 = vlaneseq
  %v2420 = vshrl.u32 %v2419, 7
  %v2421 = vsub.s32 %v2418, %v2420
  %v2422 = vrot.slane %v2406, %v2421
  %v2424 = vunpack.c.l.s4 1966171168
  %v2425 = vunpack.c.0.s8 %v2424
  %v2426 = vlaneseq
  %v2427 = vshrl.u32 %v2426, 7
  %v2428 = vsub.s32 %v2425, %v2427
  %v2429 = vrot.slane %v2407, %v2428
  %v2431 = vunpack.c.l.s4 1966171168
  %v2432 = vunpack.c.0.s8 %v2431
  %v2433 = vlaneseq
  %v2434 = vshrl.u32 %v2433, 7
  %v2435 = vsub.s32 %v2432, %v2434
  %v2436 = vrot.slane %v2408, %v2435
  %v2437 = vcombine.low %v2415, %v2422
  %v2438 = vcombine.low %v2429, %v2436
  %v2440 = vunpack.c.l.s4 1966171168
  %v2441 = vunpack.c.0.s8 %v2440
  %v2442 = vlaneseq
  %v2443 = vshrl.u32 %v2442, 7
  %v2444 = vsub.s32 %v2441, %v2443
  %v2445 = vrot.slane %v2437, %v2444
  %v2447 = vunpack.c.l.s4 1966171168
  %v2448 = vunpack.c.0.s8 %v2447
  %v2449 = vlaneseq
  %v2450 = vshrl.u32 %v2449, 7
  %v2451 = vsub.s32 %v2448, %v2450
  %v2452 = vrot.slane %v2438, %v2451
  %v2453 = vcombine.low %v2445, %v2452
  %v2454 = vcombine.low %v733, %v735
  %v2455 = vcombine.low %v718, %v732
  %v2456 = vcombine.low %v734, %v736
  %v2457 = vcombine.low %v751, %v758
  %v2459 = vunpack.c.l.s4 1966171168
  %v2460 = vunpack.c.0.s8 %v2459
  %v2461 = vlaneseq
  %v2462 = vshrl.u32 %v2461, 7
  %v2463 = vsub.s32 %v2460, %v2462
  %v2464 = vrot.slane %v2454, %v2463
  %v2466 = vunpack.c.l.s4 1966171168
  %v2467 = vunpack.c.0.s8 %v2466
  %v2468 = vlaneseq
  %v2469 = vshrl.u32 %v2468, 7
  %v2470 = vsub.s32 %v2467, %v2469
  %v2471 = vrot.slane %v2455, %v2470
  %v2473 = vunpack.c.l.s4 1966171168
  %v2474 = vunpack.c.0.s8 %v2473
  %v2475 = vlaneseq
  %v2476 = vshrl.u32 %v2475, 7
  %v2477 = vsub.s32 %v2474, %v2476
  %v2478 = vrot.slane %v2456, %v2477
  %v2480 = vunpack.c.l.s4 1966171168
  %v2481 = vunpack.c.0.s8 %v2480
  %v2482 = vlaneseq
  %v2483 = vshrl.u32 %v2482, 7
  %v2484 = vsub.s32 %v2481, %v2483
  %v2485 = vrot.slane %v2457, %v2484
  %v2486 = vcombine.low %v2464, %v2471
  %v2487 = vcombine.low %v2478, %v2485
  %v2489 = vunpack.c.l.s4 1966171168
  %v2490 = vunpack.c.0.s8 %v2489
  %v2491 = vlaneseq
  %v2492 = vshrl.u32 %v2491, 7
  %v2493 = vsub.s32 %v2490, %v2492
  %v2494 = vrot.slane %v2486, %v2493
  %v2496 = vunpack.c.l.s4 1966171168
  %v2497 = vunpack.c.0.s8 %v2496
  %v2498 = vlaneseq
  %v2499 = vshrl.u32 %v2498, 7
  %v2500 = vsub.s32 %v2497, %v2499
  %v2501 = vrot.slane %v2487, %v2500
  %v2502 = vcombine.low %v2494, %v2501
  %v2503 = vcombine.low %v759, %v783
  %v2504 = vcombine.low %v797, %v805
  %v2505 = vcombine.low %v807, %v790
  %v2506 = vcombine.low %v804, %v806
  %v2508 = vunpack.c.l.s4 1966171168
  %v2509 = vunpack.c.0.s8 %v2508
  %v2510 = vlaneseq
  %v2511 = vshrl.u32 %v2510, 7
  %v2512 = vsub.s32 %v2509, %v2511
  %v2513 = vrot.slane %v2503, %v2512
  %v2515 = vunpack.c.l.s4 1966171168
  %v2516 = vunpack.c.0.s8 %v2515
  %v2517 = vlaneseq
  %v2518 = vshrl.u32 %v2517, 7
  %v2519 = vsub.s32 %v2516, %v2518
  %v2520 = vrot.slane %v2504, %v2519
  %v2522 = vunpack.c.l.s4 1966171168
  %v2523 = vunpack.c.0.s8 %v2522
  %v2524 = vlaneseq
  %v2525 = vshrl.u32 %v2524, 7
  %v2526 = vsub.s32 %v2523, %v2525
  %v2527 = vrot.slane %v2505, %v2526
  %v2529 = vunpack.c.l.s4 1966171168
  %v2530 = vunpack.c.0.s8 %v2529
  %v2531 = vlaneseq
  %v2532 = vshrl.u32 %v2531, 7
  %v2533 = vsub.s32 %v2530, %v2532
  %v2534 = vrot.slane %v2506, %v2533
  %v2535 = vcombine.low %v2513, %v2520
  %v2536 = vcombine.low %v2527, %v2534
  %v2538 = vunpack.c.l.s4 1966171168
  %v2539 = vunpack.c.0.s8 %v2538
  %v2540 = vlaneseq
  %v2541 = vshrl.u32 %v2540, 7
  %v2542 = vsub.s32 %v2539, %v2541
  %v2543 = vrot.slane %v2535, %v2542
  %v2545 = vunpack.c.l.s4 1966171168
  %v2546 = vunpack.c.0.s8 %v2545
  %v2547 = vlaneseq
  %v2548 = vshrl.u32 %v2547, 7
  %v2549 = vsub.s32 %v2546, %v2548
  %v2550 = vrot.slane %v2536, %v2549
  %v2551 = vcombine.low %v2543, %v2550
  %v2552 = vcombine.low %v808, %v832
  %v2553 = vcombine.low %v846, %v854
  %v2554 = vcombine.low %v856, %v839
  %v2555 = vcombine.low %v853, %v855
  %v2557 = vunpack.c.l.s4 1966171168
  %v2558 = vunpack.c.0.s8 %v2557
  %v2559 = vlaneseq
  %v2560 = vshrl.u32 %v2559, 7
  %v2561 = vsub.s32 %v2558, %v2560
  %v2562 = vrot.slane %v2552, %v2561
  %v2564 = vunpack.c.l.s4 1966171168
  %v2565 = vunpack.c.0.s8 %v2564
  %v2566 = vlaneseq
  %v2567 = vshrl.u32 %v2566, 7
  %v2568 = vsub.s32 %v2565, %v2567
  %v2569 = vrot.slane %v2553, %v2568
  %v2571 = vunpack.c.l.s4 1966171168
  %v2572 = vunpack.c.0.s8 %v2571
  %v2573 = vlaneseq
  %v2574 = vshrl.u32 %v2573, 7
  %v2575 = vsub.s32 %v2572, %v2574
  %v2576 = vrot.slane %v2554, %v2575
  %v2578 = vunpack.c.l.s4 1966171168
  %v2579 = vunpack.c.0.s8 %v2578
  %v2580 = vlaneseq
  %v2581 = vshrl.u32 %v2580, 7
  %v2582 = vsub.s32 %v2579, %v2581
  %v2583 = vrot.slane %v2555, %v2582
  %v2584 = vcombine.low %v2562, %v2569
  %v2585 = vcombine.low %v2576, %v2583
  %v2587 = vunpack.c.l.s4 1966171168
  %v2588 = vunpack.c.0.s8 %v2587
  %v2589 = vlaneseq
  %v2590 = vshrl.u32 %v2589, 7
  %v2591 = vsub.s32 %v2588, %v2590
  %v2592 = vrot.slane %v2584, %v2591
  %v2594 = vunpack.c.l.s4 1966171168
  %v2595 = vunpack.c.0.s8 %v2594
  %v2596 = vlaneseq
  %v2597 = vshrl.u32 %v2596, 7
  %v2598 = vsub.s32 %v2595, %v2597
  %v2599 = vrot.slane %v2585, %v2598
  %v2600 = vcombine.low %v2592, %v2599
  %v2601 = vcombine.low %v857, %v881
  %v2602 = vcombine.low %v895, %v903
  %v2603 = vcombine.low %v905, %v888
  %v2604 = vcombine.low %v902, %v904
  %v2606 = vunpack.c.l.s4 1966171168
  %v2607 = vunpack.c.0.s8 %v2606
  %v2608 = vlaneseq
  %v2609 = vshrl.u32 %v2608, 7
  %v2610 = vsub.s32 %v2607, %v2609
  %v2611 = vrot.slane %v2601, %v2610
  %v2613 = vunpack.c.l.s4 1966171168
  %v2614 = vunpack.c.0.s8 %v2613
  %v2615 = vlaneseq
  %v2616 = vshrl.u32 %v2615, 7
  %v2617 = vsub.s32 %v2614, %v2616
  %v2618 = vrot.slane %v2602, %v2617
  %v2620 = vunpack.c.l.s4 1966171168
  %v2621 = vunpack.c.0.s8 %v2620
  %v2622 = vlaneseq
  %v2623 = vshrl.u32 %v2622, 7
  %v2624 = vsub.s32 %v2621, %v2623
  %v2625 = vrot.slane %v2603, %v2624
  %v2627 = vunpack.c.l.s4 1966171168
  %v2628 = vunpack.c.0.s8 %v2627
  %v2629 = vlaneseq
  %v2630 = vshrl.u32 %v2629, 7
  %v2631 = vsub.s32 %v2628, %v2630
  %v2632 = vrot.slane %v2604, %v2631
  %v2633 = vcombine.low %v2611, %v2618
  %v2634 = vcombine.low %v2625, %v2632
  %v2636 = vunpack.c.l.s4 1966171168
  %v2637 = vunpack.c.0.s8 %v2636
  %v2638 = vlaneseq
  %v2639 = vshrl.u32 %v2638, 7
  %v2640 = vsub.s32 %v2637, %v2639
  %v2641 = vrot.slane %v2633, %v2640
  %v2643 = vunpack.c.l.s4 1966171168
  %v2644 = vunpack.c.0.s8 %v2643
  %v2645 = vlaneseq
  %v2646 = vshrl.u32 %v2645, 7
  %v2647 = vsub.s32 %v2644, %v2646
  %v2648 = vrot.slane %v2634, %v2647
  %v2649 = vcombine.low %v2641, %v2648
  %v2650 = vcombine.low %v906, %v930
  %v2651 = vcombine.low %v944, %v952
  %v2652 = vcombine.low %v954, %v937
  %v2653 = vcombine.low %v951, %v953
  %v2655 = vunpack.c.l.s4 1966171168
  %v2656 = vunpack.c.0.s8 %v2655
  %v2657 = vlaneseq
  %v2658 = vshrl.u32 %v2657, 7
  %v2659 = vsub.s32 %v2656, %v2658
  %v2660 = vrot.slane %v2650, %v2659
  %v2662 = vunpack.c.l.s4 1966171168
  %v2663 = vunpack.c.0.s8 %v2662
  %v2664 = vlaneseq
  %v2665 = vshrl.u32 %v2664, 7
  %v2666 = vsub.s32 %v2663, %v2665
  %v2667 = vrot.slane %v2651, %v2666
  %v2669 = vunpack.c.l.s4 1966171168
  %v2670 = vunpack.c.0.s8 %v2669
  %v2671 = vlaneseq
  %v2672 = vshrl.u32 %v2671, 7
  %v2673 = vsub.s32 %v2670, %v2672
  %v2674 = vrot.slane %v2652, %v2673
  %v2676 = vunpack.c.l.s4 1966171168
  %v2677 = vunpack.c.0.s8 %v2676
  %v2678 = vlaneseq
  %v2679 = vshrl.u32 %v2678, 7
  %v2680 = vsub.s32 %v2677, %v2679
  %v2681 = vrot.slane %v2653, %v2680
  %v2682 = vcombine.low %v2660, %v2667
  %v2683 = vcombine.low %v2674, %v2681
  %v2685 = vunpack.c.l.s4 1966171168
  %v2686 = vunpack.c.0.s8 %v2685
  %v2687 = vlaneseq
  %v2688 = vshrl.u32 %v2687, 7
  %v2689 = vsub.s32 %v2686, %v2688
  %v2690 = vrot.slane %v2682, %v2689
  %v2692 = vunpack.c.l.s4 1966171168
  %v2693 = vunpack.c.0.s8 %v2692
  %v2694 = vlaneseq
  %v2695 = vshrl.u32 %v2694, 7
  %v2696 = vsub.s32 %v2693, %v2695
  %v2697 = vrot.slane %v2683, %v2696
  %v2698 = vcombine.low %v2690, %v2697
  %v2699 = vcombine.low %v955, %v970
  %v2700 = vcombine.low %v977, %v978
  %v2701 = vcombine.low %v1002, %v1016
  %v2702 = vcombine.low %v1024, %v1026
  %v2704 = vunpack.c.l.s4 1966171168
  %v2705 = vunpack.c.0.s8 %v2704
  %v2706 = vlaneseq
  %v2707 = vshrl.u32 %v2706, 7
  %v2708 = vsub.s32 %v2705, %v2707
  %v2709 = vrot.slane %v2699, %v2708
  %v2711 = vunpack.c.l.s4 1966171168
  %v2712 = vunpack.c.0.s8 %v2711
  %v2713 = vlaneseq
  %v2714 = vshrl.u32 %v2713, 7
  %v2715 = vsub.s32 %v2712, %v2714
  %v2716 = vrot.slane %v2700, %v2715
  %v2718 = vunpack.c.l.s4 1966171168
  %v2719 = vunpack.c.0.s8 %v2718
  %v2720 = vlaneseq
  %v2721 = vshrl.u32 %v2720, 7
  %v2722 = vsub.s32 %v2719, %v2721
  %v2723 = vrot.slane %v2701, %v2722
  %v2725 = vunpack.c.l.s4 1966171168
  %v2726 = vunpack.c.0.s8 %v2725
  %v2727 = vlaneseq
  %v2728 = vshrl.u32 %v2727, 7
  %v2729 = vsub.s32 %v2726, %v2728
  %v2730 = vrot.slane %v2702, %v2729
  %v2731 = vcombine.low %v2709, %v2716
  %v2732 = vcombine.low %v2723, %v2730
  %v2734 = vunpack.c.l.s4 1966171168
  %v2735 = vunpack.c.0.s8 %v2734
  %v2736 = vlaneseq
  %v2737 = vshrl.u32 %v2736, 7
  %v2738 = vsub.s32 %v2735, %v2737
  %v2739 = vrot.slane %v2731, %v2738
  %v2741 = vunpack.c.l.s4 1966171168
  %v2742 = vunpack.c.0.s8 %v2741
  %v2743 = vlaneseq
  %v2744 = vshrl.u32 %v2743, 7
  %v2745 = vsub.s32 %v2742, %v2744
  %v2746 = vrot.slane %v2732, %v2745
  %v2747 = vcombine.low %v2739, %v2746
  %v2748 = vcombine.low %v1009, %v1023
  %v2749 = vcombine.low %v1025, %v1027
  %v2750 = vcombine.low %v1051, %v1065
  %v2751 = vcombine.low %v1073, %v1075
  %v2753 = vunpack.c.l.s4 1966171168
  %v2754 = vunpack.c.0.s8 %v2753
  %v2755 = vlaneseq
  %v2756 = vshrl.u32 %v2755, 7
  %v2757 = vsub.s32 %v2754, %v2756
  %v2758 = vrot.slane %v2748, %v2757
  %v2760 = vunpack.c.l.s4 1966171168
  %v2761 = vunpack.c.0.s8 %v2760
  %v2762 = vlaneseq
  %v2763 = vshrl.u32 %v2762, 7
  %v2764 = vsub.s32 %v2761, %v2763
  %v2765 = vrot.slane %v2749, %v2764
  %v2767 = vunpack.c.l.s4 1966171168
  %v2768 = vunpack.c.0.s8 %v2767
  %v2769 = vlaneseq
  %v2770 = vshrl.u32 %v2769, 7
  %v2771 = vsub.s32 %v2768, %v2770
  %v2772 = vrot.slane %v2750, %v2771
  %v2774 = vunpack.c.l.s4 1966171168
  %v2775 = vunpack.c.0.s8 %v2774
  %v2776 = vlaneseq
  %v2777 = vshrl.u32 %v2776, 7
  %v2778 = vsub.s32 %v2775, %v2777
  %v2779 = vrot.slane %v2751, %v2778
  %v2780 = vcombine.low %v2758, %v2765
  %v2781 = vcombine.low %v2772, %v2779
  %v2783 = vunpack.c.l.s4 1966171168
  %v2784 = vunpack.c.0.s8 %v2783
  %v2785 = vlaneseq
  %v2786 = vshrl.u32 %v2785, 7
  %v2787 = vsub.s32 %v2784, %v2786
  %v2788 = vrot.slane %v2780, %v2787
  %v2790 = vunpack.c.l.s4 1966171168
  %v2791 = vunpack.c.0.s8 %v2790
  %v2792 = vlaneseq
  %v2793 = vshrl.u32 %v2792, 7
  %v2794 = vsub.s32 %v2791, %v2793
  %v2795 = vrot.slane %v2781, %v2794
  %v2796 = vcombine.low %v2788, %v2795
  %v2797 = vcombine.low %v1058, %v1072
  %v2798 = vcombine.low %v1074, %v1076
  %v2799 = vcombine.low %v1100, %v1114
  %v2800 = vcombine.low %v1122, %v1124
  %v2802 = vunpack.c.l.s4 1966171168
  %v2803 = vunpack.c.0.s8 %v2802
  %v2804 = vlaneseq
  %v2805 = vshrl.u32 %v2804, 7
  %v2806 = vsub.s32 %v2803, %v2805
  %v2807 = vrot.slane %v2797, %v2806
  %v2809 = vunpack.c.l.s4 1966171168
  %v2810 = vunpack.c.0.s8 %v2809
  %v2811 = vlaneseq
  %v2812 = vshrl.u32 %v2811, 7
  %v2813 = vsub.s32 %v2810, %v2812
  %v2814 = vrot.slane %v2798, %v2813
  %v2816 = vunpack.c.l.s4 1966171168
  %v2817 = vunpack.c.0.s8 %v2816
  %v2818 = vlaneseq
  %v2819 = vshrl.u32 %v2818, 7
  %v2820 = vsub.s32 %v2817, %v2819
  %v2821 = vrot.slane %v2799, %v2820
  %v2823 = vunpack.c.l.s4 1966171168
  %v2824 = vunpack.c.0.s8 %v2823
  %v2825 = vlaneseq
  %v2826 = vshrl.u32 %v2825, 7
  %v2827 = vsub.s32 %v2824, %v2826
  %v2828 = vrot.slane %v2800, %v2827
  %v2829 = vcombine.low %v2807, %v2814
  %v2830 = vcombine.low %v2821, %v2828
  %v2832 = vunpack.c.l.s4 1966171168
  %v2833 = vunpack.c.0.s8 %v2832
  %v2834 = vlaneseq
  %v2835 = vshrl.u32 %v2834, 7
  %v2836 = vsub.s32 %v2833, %v2835
  %v2837 = vrot.slane %v2829, %v2836
  %v2839 = vunpack.c.l.s4 1966171168
  %v2840 = vunpack.c.0.s8 %v2839
  %v2841 = vlaneseq
  %v2842 = vshrl.u32 %v2841, 7
  %v2843 = vsub.s32 %v2840, %v2842
  %v2844 = vrot.slane %v2830, %v2843
  %v2845 = vcombine.low %v2837, %v2844
  %v2846 = vcombine.low %v1107, %v1121
  %v2847 = vcombine.low %v1123, %v1125
  %v2848 = vcombine.low %v1149, %v1163
  %v2849 = vcombine.low %v1171, %v1173
  %v2851 = vunpack.c.l.s4 1966171168
  %v2852 = vunpack.c.0.s8 %v2851
  %v2853 = vlaneseq
  %v2854 = vshrl.u32 %v2853, 7
  %v2855 = vsub.s32 %v2852, %v2854
  %v2856 = vrot.slane %v2846, %v2855
  %v2858 = vunpack.c.l.s4 1966171168
  %v2859 = vunpack.c.0.s8 %v2858
  %v2860 = vlaneseq
  %v2861 = vshrl.u32 %v2860, 7
  %v2862 = vsub.s32 %v2859, %v2861
  %v2863 = vrot.slane %v2847, %v2862
  %v2865 = vunpack.c.l.s4 1966171168
  %v2866 = vunpack.c.0.s8 %v2865
  %v2867 = vlaneseq
  %v2868 = vshrl.u32 %v2867, 7
  %v2869 = vsub.s32 %v2866, %v2868
  %v2870 = vrot.slane %v2848, %v2869
  %v2872 = vunpack.c.l.s4 1966171168
  %v2873 = vunpack.c.0.s8 %v2872
  %v2874 = vlaneseq
  %v2875 = vshrl.u32 %v2874, 7
  %v2876 = vsub.s32 %v2873, %v2875
  %v2877 = vrot.slane %v2849, %v2876
  %v2878 = vcombine.low %v2856, %v2863
  %v2879 = vcombine.low %v2870, %v2877
  %v2881 = vunpack.c.l.s4 1966171168
  %v2882 = vunpack.c.0.s8 %v2881
  %v2883 = vlaneseq
  %v2884 = vshrl.u32 %v2883, 7
  %v2885 = vsub.s32 %v2882, %v2884
  %v2886 = vrot.slane %v2878, %v2885
  %v2888 = vunpack.c.l.s4 1966171168
  %v2889 = vunpack.c.0.s8 %v2888
  %v2890 = vlaneseq
  %v2891 = vshrl.u32 %v2890, 7
  %v2892 = vsub.s32 %v2889, %v2891
  %v2893 = vrot.slane %v2879, %v2892
  %v2894 = vcombine.low %v2886, %v2893
  %v2895 = vcombine.low %v1156, %v1170
  %v2896 = vcombine.low %v1172, %v1174
  %v2897 = vcombine.low %v1189, %v1196
  %v2898 = vcombine.low %v1197, %v1221
  %v2900 = vunpack.c.l.s4 1966171168
  %v2901 = vunpack.c.0.s8 %v2900
  %v2902 = vlaneseq
  %v2903 = vshrl.u32 %v2902, 7
  %v2904 = vsub.s32 %v2901, %v2903
  %v2905 = vrot.slane %v2895, %v2904
  %v2907 = vunpack.c.l.s4 1966171168
  %v2908 = vunpack.c.0.s8 %v2907
  %v2909 = vlaneseq
  %v2910 = vshrl.u32 %v2909, 7
  %v2911 = vsub.s32 %v2908, %v2910
  %v2912 = vrot.slane %v2896, %v2911
  %v2914 = vunpack.c.l.s4 1966171168
  %v2915 = vunpack.c.0.s8 %v2914
  %v2916 = vlaneseq
  %v2917 = vshrl.u32 %v2916, 7
  %v2918 = vsub.s32 %v2915, %v2917
  %v2919 = vrot.slane %v2897, %v2918
  %v2921 = vunpack.c.l.s4 1966171168
  %v2922 = vunpack.c.0.s8 %v2921
  %v2923 = vlaneseq
  %v2924 = vshrl.u32 %v2923, 7
  %v2925 = vsub.s32 %v2922, %v2924
  %v2926 = vrot.slane %v2898, %v2925
  %v2927 = vcombine.low %v2905, %v2912
  %v2928 = vcombine.low %v2919, %v2926
  %v2930 = vunpack.c.l.s4 1966171168
  %v2931 = vunpack.c.0.s8 %v2930
  %v2932 = vlaneseq
  %v2933 = vshrl.u32 %v2932, 7
  %v2934 = vsub.s32 %v2931, %v2933
  %v2935 = vrot.slane %v2927, %v2934
  %v2937 = vunpack.c.l.s4 1966171168
  %v2938 = vunpack.c.0.s8 %v2937
  %v2939 = vlaneseq
  %v2940 = vshrl.u32 %v2939, 7
  %v2941 = vsub.s32 %v2938, %v2940
  %v2942 = vrot.slane %v2928, %v2941
  %v2943 = vcombine.low %v2935, %v2942
  %v2944 = vcombine.low %v1235, %v1243
  %v2945 = vcombine.low %v1245, %v1228
  %v2946 = vcombine.low %v1242, %v1244
  %v2947 = vcombine.low %v1246, %v1270
  %v2949 = vunpack.c.l.s4 1966171168
  %v2950 = vunpack.c.0.s8 %v2949
  %v2951 = vlaneseq
  %v2952 = vshrl.u32 %v2951, 7
  %v2953 = vsub.s32 %v2950, %v2952
  %v2954 = vrot.slane %v2944, %v2953
  %v2956 = vunpack.c.l.s4 1966171168
  %v2957 = vunpack.c.0.s8 %v2956
  %v2958 = vlaneseq
  %v2959 = vshrl.u32 %v2958, 7
  %v2960 = vsub.s32 %v2957, %v2959
  %v2961 = vrot.slane %v2945, %v2960
  %v2963 = vunpack.c.l.s4 1966171168
  %v2964 = vunpack.c.0.s8 %v2963
  %v2965 = vlaneseq
  %v2966 = vshrl.u32 %v2965, 7
  %v2967 = vsub.s32 %v2964, %v2966
  %v2968 = vrot.slane %v2946, %v2967
  %v2970 = vunpack.c.l.s4 1966171168
  %v2971 = vunpack.c.0.s8 %v2970
  %v2972 = vlaneseq
  %v2973 = vshrl.u32 %v2972, 7
  %v2974 = vsub.s32 %v2971, %v2973
  %v2975 = vrot.slane %v2947, %v2974
  %v2976 = vcombine.low %v2954, %v2961
  %v2977 = vcombine.low %v2968, %v2975
  %v2979 = vunpack.c.l.s4 1966171168
  %v2980 = vunpack.c.0.s8 %v2979
  %v2981 = vlaneseq
  %v2982 = vshrl.u32 %v2981, 7
  %v2983 = vsub.s32 %v2980, %v2982
  %v2984 = vrot.slane %v2976, %v2983
  %v2986 = vunpack.c.l.s4 1966171168
  %v2987 = vunpack.c.0.s8 %v2986
  %v2988 = vlaneseq
  %v2989 = vshrl.u32 %v2988, 7
  %v2990 = vsub.s32 %v2987, %v2989
  %v2991 = vrot.slane %v2977, %v2990
  %v2992 = vcombine.low %v2984, %v2991
  %v2993 = vcombine.low %v1284, %v1292
  %v2994 = vcombine.low %v1294, %v1277
  %v2995 = vcombine.low %v1291, %v1293
  %v2996 = vcombine.low %v1295, %v1319
  %v2998 = vunpack.c.l.s4 1966171168
  %v2999 = vunpack.c.0.s8 %v2998
  %v3000 = vlaneseq
  %v3001 = vshrl.u32 %v3000, 7
  %v3002 = vsub.s32 %v2999, %v3001
  %v3003 = vrot.slane %v2993, %v3002
  %v3005 = vunpack.c.l.s4 1966171168
  %v3006 = vunpack.c.0.s8 %v3005
  %v3007 = vlaneseq
  %v3008 = vshrl.u32 %v3007, 7
  %v3009 = vsub.s32 %v3006, %v3008
  %v3010 = vrot.slane %v2994, %v3009
  %v3012 = vunpack.c.l.s4 1966171168
  %v3013 = vunpack.c.0.s8 %v3012
  %v3014 = vlaneseq
  %v3015 = vshrl.u32 %v3014, 7
  %v3016 = vsub.s32 %v3013, %v3015
  %v3017 = vrot.slane %v2995, %v3016
  %v3019 = vunpack.c.l.s4 1966171168
  %v3020 = vunpack.c.0.s8 %v3019
  %v3021 = vlaneseq
  %v3022 = vshrl.u32 %v3021, 7
  %v3023 = vsub.s32 %v3020, %v3022
  %v3024 = vrot.slane %v2996, %v3023
  %v3025 = vcombine.low %v3003, %v3010
  %v3026 = vcombine.low %v3017, %v3024
  %v3028 = vunpack.c.l.s4 1966171168
  %v3029 = vunpack.c.0.s8 %v3028
  %v3030 = vlaneseq
  %v3031 = vshrl.u32 %v3030, 7
  %v3032 = vsub.s32 %v3029, %v3031
  %v3033 = vrot.slane %v3025, %v3032
  %v3035 = vunpack.c.l.s4 1966171168
  %v3036 = vunpack.c.0.s8 %v3035
  %v3037 = vlaneseq
  %v3038 = vshrl.u32 %v3037, 7
  %v3039 = vsub.s32 %v3036, %v3038
  %v3040 = vrot.slane %v3026, %v3039
  %v3041 = vcombine.low %v3033, %v3040
  %v3042 = vcombine.low %v1333, %v1341
  %v3043 = vcombine.low %v1343, %v1326
  %v3044 = vcombine.low %v1340, %v1342
  %v3045 = vcombine.low %v1344, %v1368
  %v3047 = vunpack.c.l.s4 1966171168
  %v3048 = vunpack.c.0.s8 %v3047
  %v3049 = vlaneseq
  %v3050 = vshrl.u32 %v3049, 7
  %v3051 = vsub.s32 %v3048, %v3050
  %v3052 = vrot.slane %v3042, %v3051
  %v3054 = vunpack.c.l.s4 1966171168
  %v3055 = vunpack.c.0.s8 %v3054
  %v3056 = vlaneseq
  %v3057 = vshrl.u32 %v3056, 7
  %v3058 = vsub.s32 %v3055, %v3057
  %v3059 = vrot.slane %v3043, %v3058
  %v3061 = vunpack.c.l.s4 1966171168
  %v3062 = vunpack.c.0.s8 %v3061
  %v3063 = vlaneseq
  %v3064 = vshrl.u32 %v3063, 7
  %v3065 = vsub.s32 %v3062, %v3064
  %v3066 = vrot.slane %v3044, %v3065
  %v3068 = vunpack.c.l.s4 1966171168
  %v3069 = vunpack.c.0.s8 %v3068
  %v3070 = vlaneseq
  %v3071 = vshrl.u32 %v3070, 7
  %v3072 = vsub.s32 %v3069, %v3071
  %v3073 = vrot.slane %v3045, %v3072
  %v3074 = vcombine.low %v3052, %v3059
  %v3075 = vcombine.low %v3066, %v3073
  %v3077 = vunpack.c.l.s4 1966171168
  %v3078 = vunpack.c.0.s8 %v3077
  %v3079 = vlaneseq
  %v3080 = vshrl.u32 %v3079, 7
  %v3081 = vsub.s32 %v3078, %v3080
  %v3082 = vrot.slane %v3074, %v3081
  %v3084 = vunpack.c.l.s4 1966171168
  %v3085 = vunpack.c.0.s8 %v3084
  %v3086 = vlaneseq
  %v3087 = vshrl.u32 %v3086, 7
  %v3088 = vsub.s32 %v3085, %v3087
  %v3089 = vrot.slane %v3075, %v3088
  %v3090 = vcombine.low %v3082, %v3089
  %v3091 = vcombine.low %v1382, %v1390
  %v3092 = vcombine.low %v1392, %v1375
  %v3093 = vcombine.low %v1389, %v1391
  %v3094 = vcombine.low %v1393, %v1408
  %v3096 = vunpack.c.l.s4 1966171168
  %v3097 = vunpack.c.0.s8 %v3096
  %v3098 = vlaneseq
  %v3099 = vshrl.u32 %v3098, 7
  %v3100 = vsub.s32 %v3097, %v3099
  %v3101 = vrot.slane %v3091, %v3100
  %v3103 = vunpack.c.l.s4 1966171168
  %v3104 = vunpack.c.0.s8 %v3103
  %v3105 = vlaneseq
  %v3106 = vshrl.u32 %v3105, 7
  %v3107 = vsub.s32 %v3104, %v3106
  %v3108 = vrot.slane %v3092, %v3107
  %v3110 = vunpack.c.l.s4 1966171168
  %v3111 = vunpack.c.0.s8 %v3110
  %v3112 = vlaneseq
  %v3113 = vshrl.u32 %v3112, 7
  %v3114 = vsub.s32 %v3111, %v3113
  %v3115 = vrot.slane %v3093, %v3114
  %v3117 = vunpack.c.l.s4 1966171168
  %v3118 = vunpack.c.0.s8 %v3117
  %v3119 = vlaneseq
  %v3120 = vshrl.u32 %v3119, 7
  %v3121 = vsub.s32 %v3118, %v3120
  %v3122 = vrot.slane %v3094, %v3121
  %v3123 = vcombine.low %v3101, %v3108
  %v3124 = vcombine.low %v3115, %v3122
  %v3126 = vunpack.c.l.s4 1966171168
  %v3127 = vunpack.c.0.s8 %v3126
  %v3128 = vlaneseq
  %v3129 = vshrl.u32 %v3128, 7
  %v3130 = vsub.s32 %v3127, %v3129
  %v3131 = vrot.slane %v3123, %v3130
  %v3133 = vunpack.c.l.s4 1966171168
  %v3134 = vunpack.c.0.s8 %v3133
  %v3135 = vlaneseq
  %v3136 = vshrl.u32 %v3135, 7
  %v3137 = vsub.s32 %v3134, %v3136
  %v3138 = vrot.slane %v3124, %v3137
  %v3139 = vcombine.low %v3131, %v3138
  %v3140 = vcombine.low %v1415, %v1416
  %v3141 = vcombine.low %v1440, %v1454
  %v3142 = vcombine.low %v1462, %v1464
  %v3143 = vcombine.low %v1447, %v1461
  %v3145 = vunpack.c.l.s4 1966171168
  %v3146 = vunpack.c.0.s8 %v3145
  %v3147 = vlaneseq
  %v3148 = vshrl.u32 %v3147, 7
  %v3149 = vsub.s32 %v3146, %v3148
  %v3150 = vrot.slane %v3140, %v3149
  %v3152 = vunpack.c.l.s4 1966171168
  %v3153 = vunpack.c.0.s8 %v3152
  %v3154 = vlaneseq
  %v3155 = vshrl.u32 %v3154, 7
  %v3156 = vsub.s32 %v3153, %v3155
  %v3157 = vrot.slane %v3141, %v3156
  %v3159 = vunpack.c.l.s4 1966171168
  %v3160 = vunpack.c.0.s8 %v3159
  %v3161 = vlaneseq
  %v3162 = vshrl.u32 %v3161, 7
  %v3163 = vsub.s32 %v3160, %v3162
  %v3164 = vrot.slane %v3142, %v3163
  %v3166 = vunpack.c.l.s4 1966171168
  %v3167 = vunpack.c.0.s8 %v3166
  %v3168 = vlaneseq
  %v3169 = vshrl.u32 %v3168, 7
  %v3170 = vsub.s32 %v3167, %v3169
  %v3171 = vrot.slane %v3143, %v3170
  %v3172 = vcombine.low %v3150, %v3157
  %v3173 = vcombine.low %v3164, %v3171
  %v3175 = vunpack.c.l.s4 1966171168
  %v3176 = vunpack.c.0.s8 %v3175
  %v3177 = vlaneseq
  %v3178 = vshrl.u32 %v3177, 7
  %v3179 = vsub.s32 %v3176, %v3178
  %v3180 = vrot.slane %v3172, %v3179
  %v3182 = vunpack.c.l.s4 1966171168
  %v3183 = vunpack.c.0.s8 %v3182
  %v3184 = vlaneseq
  %v3185 = vshrl.u32 %v3184, 7
  %v3186 = vsub.s32 %v3183, %v3185
  %v3187 = vrot.slane %v3173, %v3186
  %v3188 = vcombine.low %v3180, %v3187
  %v3189 = vcombine.low %v1463, %v1465
  %v3190 = vcombine.low %v1489, %v1503
  %v3191 = vcombine.low %v1511, %v1513
  %v3192 = vcombine.low %v1496, %v1510
  %v3194 = vunpack.c.l.s4 1966171168
  %v3195 = vunpack.c.0.s8 %v3194
  %v3196 = vlaneseq
  %v3197 = vshrl.u32 %v3196, 7
  %v3198 = vsub.s32 %v3195, %v3197
  %v3199 = vrot.slane %v3189, %v3198
  %v3201 = vunpack.c.l.s4 1966171168
  %v3202 = vunpack.c.0.s8 %v3201
  %v3203 = vlaneseq
  %v3204 = vshrl.u32 %v3203, 7
  %v3205 = vsub.s32 %v3202, %v3204
  %v3206 = vrot.slane %v3190, %v3205
  %v3208 = vunpack.c.l.s4 1966171168
  %v3209 = vunpack.c.0.s8 %v3208
  %v3210 = vlaneseq
  %v3211 = vshrl.u32 %v3210, 7
  %v3212 = vsub.s32 %v3209, %v3211
  %v3213 = vrot.slane %v3191, %v3212
  %v3215 = vunpack.c.l.s4 1966171168
  %v3216 = vunpack.c.0.s8 %v3215
  %v3217 = vlaneseq
  %v3218 = vshrl.u32 %v3217, 7
  %v3219 = vsub.s32 %v3216, %v3218
  %v3220 = vrot.slane %v3192, %v3219
  %v3221 = vcombine.low %v3199, %v3206
  %v3222 = vcombine.low %v3213, %v3220
  %v3224 = vunpack.c.l.s4 1966171168
  %v3225 = vunpack.c.0.s8 %v3224
  %v3226 = vlaneseq
  %v3227 = vshrl.u32 %v3226, 7
  %v3228 = vsub.s32 %v3225, %v3227
  %v3229 = vrot.slane %v3221, %v3228
  %v3231 = vunpack.c.l.s4 1966171168
  %v3232 = vunpack.c.0.s8 %v3231
  %v3233 = vlaneseq
  %v3234 = vshrl.u32 %v3233, 7
  %v3235 = vsub.s32 %v3232, %v3234
  %v3236 = vrot.slane %v3222, %v3235
  %v3237 = vcombine.low %v3229, %v3236
  %v3238 = vcombine.low %v1512, %v1514
  %v3239 = vcombine.low %v1538, %v1552
  %v3240 = vcombine.low %v1560, %v1562
  %v3241 = vcombine.low %v1545, %v1559
  %v3243 = vunpack.c.l.s4 1966171168
  %v3244 = vunpack.c.0.s8 %v3243
  %v3245 = vlaneseq
  %v3246 = vshrl.u32 %v3245, 7
  %v3247 = vsub.s32 %v3244, %v3246
  %v3248 = vrot.slane %v3238, %v3247
  %v3250 = vunpack.c.l.s4 1966171168
  %v3251 = vunpack.c.0.s8 %v3250
  %v3252 = vlaneseq
  %v3253 = vshrl.u32 %v3252, 7
  %v3254 = vsub.s32 %v3251, %v3253
  %v3255 = vrot.slane %v3239, %v3254
  %v3257 = vunpack.c.l.s4 1966171168
  %v3258 = vunpack.c.0.s8 %v3257
  %v3259 = vlaneseq
  %v3260 = vshrl.u32 %v3259, 7
  %v3261 = vsub.s32 %v3258, %v3260
  %v3262 = vrot.slane %v3240, %v3261
  %v3264 = vunpack.c.l.s4 1966171168
  %v3265 = vunpack.c.0.s8 %v3264
  %v3266 = vlaneseq
  %v3267 = vshrl.u32 %v3266, 7
  %v3268 = vsub.s32 %v3265, %v3267
  %v3269 = vrot.slane %v3241, %v3268
  %v3270 = vcombine.low %v3248, %v3255
  %v3271 = vcombine.low %v3262, %v3269
  %v3273 = vunpack.c.l.s4 1966171168
  %v3274 = vunpack.c.0.s8 %v3273
  %v3275 = vlaneseq
  %v3276 = vshrl.u32 %v3275, 7
  %v3277 = vsub.s32 %v3274, %v3276
  %v3278 = vrot.slane %v3270, %v3277
  %v3280 = vunpack.c.l.s4 1966171168
  %v3281 = vunpack.c.0.s8 %v3280
  %v3282 = vlaneseq
  %v3283 = vshrl.u32 %v3282, 7
  %v3284 = vsub.s32 %v3281, %v3283
  %v3285 = vrot.slane %v3271, %v3284
  %v3286 = vcombine.low %v3278, %v3285
  %v3287 = vcombine.low %v1561, %v1563
  %v3288 = vcombine.low %v1587, %v1601
  %v3289 = vcombine.low %v1609, %v1611
  %v3290 = vcombine.low %v1594, %v1608
  %v3292 = vunpack.c.l.s4 1966171168
  %v3293 = vunpack.c.0.s8 %v3292
  %v3294 = vlaneseq
  %v3295 = vshrl.u32 %v3294, 7
  %v3296 = vsub.s32 %v3293, %v3295
  %v3297 = vrot.slane %v3287, %v3296
  %v3299 = vunpack.c.l.s4 1966171168
  %v3300 = vunpack.c.0.s8 %v3299
  %v3301 = vlaneseq
  %v3302 = vshrl.u32 %v3301, 7
  %v3303 = vsub.s32 %v3300, %v3302
  %v3304 = vrot.slane %v3288, %v3303
  %v3306 = vunpack.c.l.s4 1966171168
  %v3307 = vunpack.c.0.s8 %v3306
  %v3308 = vlaneseq
  %v3309 = vshrl.u32 %v3308, 7
  %v3310 = vsub.s32 %v3307, %v3309
  %v3311 = vrot.slane %v3289, %v3310
  %v3313 = vunpack.c.l.s4 1966171168
  %v3314 = vunpack.c.0.s8 %v3313
  %v3315 = vlaneseq
  %v3316 = vshrl.u32 %v3315, 7
  %v3317 = vsub.s32 %v3314, %v3316
  %v3318 = vrot.slane %v3290, %v3317
  %v3319 = vcombine.low %v3297, %v3304
  %v3320 = vcombine.low %v3311, %v3318
  %v3322 = vunpack.c.l.s4 1966171168
  %v3323 = vunpack.c.0.s8 %v3322
  %v3324 = vlaneseq
  %v3325 = vshrl.u32 %v3324, 7
  %v3326 = vsub.s32 %v3323, %v3325
  %v3327 = vrot.slane %v3319, %v3326
  %v3329 = vunpack.c.l.s4 1966171168
  %v3330 = vunpack.c.0.s8 %v3329
  %v3331 = vlaneseq
  %v3332 = vshrl.u32 %v3331, 7
  %v3333 = vsub.s32 %v3330, %v3332
  %v3334 = vrot.slane %v3320, %v3333
  %v3335 = vcombine.low %v3327, %v3334
  %v3336 = vcombine.low %v1610, %v1612
  %v3337 = vcombine.low %v1627, %v1634
  %v3338 = vcombine.low %v1635, %v1659
  %v3339 = vcombine.low %v1673, %v1681
  %v3341 = vunpack.c.l.s4 1966171168
  %v3342 = vunpack.c.0.s8 %v3341
  %v3343 = vlaneseq
  %v3344 = vshrl.u32 %v3343, 7
  %v3345 = vsub.s32 %v3342, %v3344
  %v3346 = vrot.slane %v3336, %v3345
  %v3348 = vunpack.c.l.s4 1966171168
  %v3349 = vunpack.c.0.s8 %v3348
  %v3350 = vlaneseq
  %v3351 = vshrl.u32 %v3350, 7
  %v3352 = vsub.s32 %v3349, %v3351
  %v3353 = vrot.slane %v3337, %v3352
  %v3355 = vunpack.c.l.s4 1966171168
  %v3356 = vunpack.c.0.s8 %v3355
  %v3357 = vlaneseq
  %v3358 = vshrl.u32 %v3357, 7
  %v3359 = vsub.s32 %v3356, %v3358
  %v3360 = vrot.slane %v3338, %v3359
  %v3362 = vunpack.c.l.s4 1966171168
  %v3363 = vunpack.c.0.s8 %v3362
  %v3364 = vlaneseq
  %v3365 = vshrl.u32 %v3364, 7
  %v3366 = vsub.s32 %v3363, %v3365
  %v3367 = vrot.slane %v3339, %v3366
  %v3368 = vcombine.low %v3346, %v3353
  %v3369 = vcombine.low %v3360, %v3367
  %v3371 = vunpack.c.l.s4 1966171168
  %v3372 = vunpack.c.0.s8 %v3371
  %v3373 = vlaneseq
  %v3374 = vshrl.u32 %v3373, 7
  %v3375 = vsub.s32 %v3372, %v3374
  %v3376 = vrot.slane %v3368, %v3375
  %v3378 = vunpack.c.l.s4 1966171168
  %v3379 = vunpack.c.0.s8 %v3378
  %v3380 = vlaneseq
  %v3381 = vshrl.u32 %v3380, 7
  %v3382 = vsub.s32 %v3379, %v3381
  %v3383 = vrot.slane %v3369, %v3382
  %v3384 = vcombine.low %v3376, %v3383
  %v3385 = vcombine.low %v1683, %v1666
  %v3386 = vcombine.low %v1680, %v1682
  %v3387 = vcombine.low %v1684, %v1708
  %v3388 = vcombine.low %v1722, %v1730
  %v3390 = vunpack.c.l.s4 1966171168
  %v3391 = vunpack.c.0.s8 %v3390
  %v3392 = vlaneseq
  %v3393 = vshrl.u32 %v3392, 7
  %v3394 = vsub.s32 %v3391, %v3393
  %v3395 = vrot.slane %v3385, %v3394
  %v3397 = vunpack.c.l.s4 1966171168
  %v3398 = vunpack.c.0.s8 %v3397
  %v3399 = vlaneseq
  %v3400 = vshrl.u32 %v3399, 7
  %v3401 = vsub.s32 %v3398, %v3400
  %v3402 = vrot.slane %v3386, %v3401
  %v3404 = vunpack.c.l.s4 1966171168
  %v3405 = vunpack.c.0.s8 %v3404
  %v3406 = vlaneseq
  %v3407 = vshrl.u32 %v3406, 7
  %v3408 = vsub.s32 %v3405, %v3407
  %v3409 = vrot.slane %v3387, %v3408
  %v3411 = vunpack.c.l.s4 1966171168
  %v3412 = vunpack.c.0.s8 %v3411
  %v3413 = vlaneseq
  %v3414 = vshrl.u32 %v3413, 7
  %v3415 = vsub.s32 %v3412, %v3414
  %v3416 = vrot.slane %v3388, %v3415
  %v3417 = vcombine.low %v3395, %v3402
  %v3418 = vcombine.low %v3409, %v3416
  %v3420 = vunpack.c.l.s4 1966171168
  %v3421 = vunpack.c.0.s8 %v3420
  %v3422 = vlaneseq
  %v3423 = vshrl.u32 %v3422, 7
  %v3424 = vsub.s32 %v3421, %v3423
  %v3425 = vrot.slane %v3417, %v3424
  %v3427 = vunpack.c.l.s4 1966171168
  %v3428 = vunpack.c.0.s8 %v3427
  %v3429 = vlaneseq
  %v3430 = vshrl.u32 %v3429, 7
  %v3431 = vsub.s32 %v3428, %v3430
  %v3432 = vrot.slane %v3418, %v3431
  %v3433 = vcombine.low %v3425, %v3432
  %v3434 = vcombine.low %v1732, %v1715
  %v3435 = vcombine.low %v1729, %v1731
  %v3436 = vcombine.low %v1733, %v1757
  %v3437 = vcombine.low %v1771, %v1779
  %v3439 = vunpack.c.l.s4 1966171168
  %v3440 = vunpack.c.0.s8 %v3439
  %v3441 = vlaneseq
  %v3442 = vshrl.u32 %v3441, 7
  %v3443 = vsub.s32 %v3440, %v3442
  %v3444 = vrot.slane %v3434, %v3443
  %v3446 = vunpack.c.l.s4 1966171168
  %v3447 = vunpack.c.0.s8 %v3446
  %v3448 = vlaneseq
  %v3449 = vshrl.u32 %v3448, 7
  %v3450 = vsub.s32 %v3447, %v3449
  %v3451 = vrot.slane %v3435, %v3450
  %v3453 = vunpack.c.l.s4 1966171168
  %v3454 = vunpack.c.0.s8 %v3453
  %v3455 = vlaneseq
  %v3456 = vshrl.u32 %v3455, 7
  %v3457 = vsub.s32 %v3454, %v3456
  %v3458 = vrot.slane %v3436, %v3457
  %v3460 = vunpack.c.l.s4 1966171168
  %v3461 = vunpack.c.0.s8 %v3460
  %v3462 = vlaneseq
  %v3463 = vshrl.u32 %v3462, 7
  %v3464 = vsub.s32 %v3461, %v3463
  %v3465 = vrot.slane %v3437, %v3464
  %v3466 = vcombine.low %v3444, %v3451
  %v3467 = vcombine.low %v3458, %v3465
  %v3469 = vunpack.c.l.s4 1966171168
  %v3470 = vunpack.c.0.s8 %v3469
  %v3471 = vlaneseq
  %v3472 = vshrl.u32 %v3471, 7
  %v3473 = vsub.s32 %v3470, %v3472
  %v3474 = vrot.slane %v3466, %v3473
  %v3476 = vunpack.c.l.s4 1966171168
  %v3477 = vunpack.c.0.s8 %v3476
  %v3478 = vlaneseq
  %v3479 = vshrl.u32 %v3478, 7
  %v3480 = vsub.s32 %v3477, %v3479
  %v3481 = vrot.slane %v3467, %v3480
  %v3482 = vcombine.low %v3474, %v3481
  %v3483 = vcombine.low %v1781, %v1764
  %v3484 = vcombine.low %v1778, %v1780
  %v3485 = vcombine.low %v1782, %v1806
  %v3486 = vcombine.low %v1820, %v1828
  %v3488 = vunpack.c.l.s4 1966171168
  %v3489 = vunpack.c.0.s8 %v3488
  %v3490 = vlaneseq
  %v3491 = vshrl.u32 %v3490, 7
  %v3492 = vsub.s32 %v3489, %v3491
  %v3493 = vrot.slane %v3483, %v3492
  %v3495 = vunpack.c.l.s4 1966171168
  %v3496 = vunpack.c.0.s8 %v3495
  %v3497 = vlaneseq
  %v3498 = vshrl.u32 %v3497, 7
  %v3499 = vsub.s32 %v3496, %v3498
  %v3500 = vrot.slane %v3484, %v3499
  %v3502 = vunpack.c.l.s4 1966171168
  %v3503 = vunpack.c.0.s8 %v3502
  %v3504 = vlaneseq
  %v3505 = vshrl.u32 %v3504, 7
  %v3506 = vsub.s32 %v3503, %v3505
  %v3507 = vrot.slane %v3485, %v3506
  %v3509 = vunpack.c.l.s4 1966171168
  %v3510 = vunpack.c.0.s8 %v3509
  %v3511 = vlaneseq
  %v3512 = vshrl.u32 %v3511, 7
  %v3513 = vsub.s32 %v3510, %v3512
  %v3514 = vrot.slane %v3486, %v3513
  %v3515 = vcombine.low %v3493, %v3500
  %v3516 = vcombine.low %v3507, %v3514
  %v3518 = vunpack.c.l.s4 1966171168
  %v3519 = vunpack.c.0.s8 %v3518
  %v3520 = vlaneseq
  %v3521 = vshrl.u32 %v3520, 7
  %v3522 = vsub.s32 %v3519, %v3521
  %v3523 = vrot.slane %v3515, %v3522
  %v3525 = vunpack.c.l.s4 1966171168
  %v3526 = vunpack.c.0.s8 %v3525
  %v3527 = vlaneseq
  %v3528 = vshrl.u32 %v3527, 7
  %v3529 = vsub.s32 %v3526, %v3528
  %v3530 = vrot.slane %v3516, %v3529
  %v3531 = vcombine.low %v3523, %v3530
  %v3532 = vcombine.low %v1830, %v1813
  %v3533 = vcombine.low %v1827, %v1829
  %v3534 = vcombine.low %v1831, %v1846
  %v3535 = vcombine.low %v1853, %v1854
  %v3537 = vunpack.c.l.s4 1966171168
  %v3538 = vunpack.c.0.s8 %v3537
  %v3539 = vlaneseq
  %v3540 = vshrl.u32 %v3539, 7
  %v3541 = vsub.s32 %v3538, %v3540
  %v3542 = vrot.slane %v3532, %v3541
  %v3544 = vunpack.c.l.s4 1966171168
  %v3545 = vunpack.c.0.s8 %v3544
  %v3546 = vlaneseq
  %v3547 = vshrl.u32 %v3546, 7
  %v3548 = vsub.s32 %v3545, %v3547
  %v3549 = vrot.slane %v3533, %v3548
  %v3551 = vunpack.c.l.s4 1966171168
  %v3552 = vunpack.c.0.s8 %v3551
  %v3553 = vlaneseq
  %v3554 = vshrl.u32 %v3553, 7
  %v3555 = vsub.s32 %v3552, %v3554
  %v3556 = vrot.slane %v3534, %v3555
  %v3558 = vunpack.c.l.s4 1966171168
  %v3559 = vunpack.c.0.s8 %v3558
  %v3560 = vlaneseq
  %v3561 = vshrl.u32 %v3560, 7
  %v3562 = vsub.s32 %v3559, %v3561
  %v3563 = vrot.slane %v3535, %v3562
  %v3564 = vcombine.low %v3542, %v3549
  %v3565 = vcombine.low %v3556, %v3563
  %v3567 = vunpack.c.l.s4 1966171168
  %v3568 = vunpack.c.0.s8 %v3567
  %v3569 = vlaneseq
  %v3570 = vshrl.u32 %v3569, 7
  %v3571 = vsub.s32 %v3568, %v3570
  %v3572 = vrot.slane %v3564, %v3571
  %v3574 = vunpack.c.l.s4 1966171168
  %v3575 = vunpack.c.0.s8 %v3574
  %v3576 = vlaneseq
  %v3577 = vshrl.u32 %v3576, 7
  %v3578 = vsub.s32 %v3575, %v3577
  %v3579 = vrot.slane %v3565, %v3578
  %v3580 = vcombine.low %v3572, %v3579
  %vm3581 = vcmask 252928
  %v3582 = vsel %vm3581, %v1914, 0
  %v3584 = vsel %vm3581, %v1963, 0
  %v3586 = vsel %vm3581, %v2012, 0
  %v3588 = vsel %vm3581, %v2061, 0
  %v3590 = vsel %vm3581, %v2110, 0
  %v3592 = vsel %vm3581, %v2159, 0
  %v3594 = vsel %vm3581, %v2208, 0
  %v3596 = vsel %vm3581, %v2257, 0
  %v3598 = vsel %vm3581, %v2306, 0
  %v3600 = vsel %vm3581, %v2355, 0
  %v3602 = vsel %vm3581, %v2404, 0
  %v3604 = vsel %vm3581, %v2453, 0
  %v3606 = vsel %vm3581, %v2502, 0
  %v3608 = vsel %vm3581, %v2551, 0
  %v3610 = vsel %vm3581, %v2600, 0
  %v3612 = vsel %vm3581, %v2649, 0
  %v3614 = vsel %vm3581, %v2698, 0
  %v3616 = vsel %vm3581, %v2747, 0
  %v3618 = vsel %vm3581, %v2796, 0
  %v3620 = vsel %vm3581, %v2845, 0
  %v3622 = vsel %vm3581, %v2894, 0
  %v3624 = vsel %vm3581, %v2943, 0
  %v3626 = vsel %vm3581, %v2992, 0
  %v3628 = vsel %vm3581, %v3041, 0
  %v3630 = vsel %vm3581, %v3090, 0
  %v3632 = vsel %vm3581, %v3139, 0
  %v3634 = vsel %vm3581, %v3188, 0
  %v3636 = vsel %vm3581, %v3237, 0
  %v3638 = vsel %vm3581, %v3286, 0
  %v3640 = vsel %vm3581, %v3335, 0
  %v3642 = vsel %vm3581, %v3384, 0
  %v3644 = vsel %vm3581, %v3433, 0
  %v3646 = vsel %vm3581, %v3482, 0
  %v3648 = vsel %vm3581, %v3531, 0
  %v3650 = vsel %vm3581, %v3580, 0
  %vm3652 = vcmask 1046528
  %v3654 = vsel %vm3652, %v1858, 0
  %3656 = vmatprep.subr.mxu0 0.0
  %3657 = vmatpush1.msra.mxu0 %v1855
  %3658 = vmatprep.subr.mxu0 0.0
  %3659 = vmatpush1.msra.mxu0 %v1856
  %3660 = vmatprep.subr.mxu0 0.0
  %3661 = vmatpush1.msra.mxu0 %v1857
  %3662 = vmatprep.subr.mxu0 0.0
  %3663 = vmatpush1.msra.mxu0 %v3654
  %3664 = vmatprep.subr.mxu0 0.0
  %3665 = vmatpush1.msra.mxu0 0.0
  %3666 = vmatprep.subr.mxu0 0.0
  %3667 = vmatpush1.msra.mxu0 0.0
  %3668 = vmatprep.subr.mxu0 0.0
  %3669 = vmatpush1.msra.mxu0 0.0
  %3670 = vmatprep.subr.mxu0 0.0
  %3671 = vmatpush1.msra.mxu0 0.0
  %3672 = vmatprep.subr.mxu0 0.0
  %3673 = vmatpush1.msra.mxu0 0.0
  %3674 = vmatprep.subr.mxu0 0.0
  %3675 = vmatpush1.msra.mxu0 0.0
  %3676 = vmatprep.subr.mxu0 0.0
  %3677 = vmatpush1.msra.mxu0 0.0
  %3678 = vmatprep.subr.mxu0 0.0
  %3679 = vmatpush1.msra.mxu0 0.0
  %3680 = vmatprep.subr.mxu0 0.0
  %3681 = vmatpush1.msra.mxu0 0.0
  %3682 = vmatprep.subr.mxu0 0.0
  %3683 = vmatpush1.msra.mxu0 0.0
  %3684 = vmatprep.subr.mxu0 0.0
  %3685 = vmatpush1.msra.mxu0 0.0
  %3686 = vmatprep.subr.mxu0 0.0
  %3687 = vmatpush1.msra.mxu0 0.0
  %3688 = vmatprep.subr.mxu0 0.0
  %3689 = vmatpush1.msra.mxu0 0.0
  %3690 = vmatprep.subr.mxu0 0.0
  %3691 = vmatpush1.msra.mxu0 0.0
  %3692 = vmatprep.subr.mxu0 0.0
  %3693 = vmatpush1.msra.mxu0 0.0
  %3694 = vmatprep.subr.mxu0 0.0
  %3695 = vmatpush1.msra.mxu0 0.0
  %3696 = vmatprep.subr.mxu0 0.0
  %3697 = vmatpush1.msra.mxu0 0.0
  %3698 = vmatprep.subr.mxu0 0.0
  %3699 = vmatpush1.msra.mxu0 0.0
  %3700 = vmatprep.subr.mxu0 0.0
  %3701 = vmatpush1.msra.mxu0 0.0
  %3702 = vmatprep.subr.mxu0 0.0
  %3703 = vmatpush1.msra.mxu0 0.0
  %3704 = vmatprep.subr.mxu0 0.0
  %3705 = vmatpush1.msra.mxu0 0.0
  %3706 = vmatprep.subr.mxu0 0.0
  %3707 = vmatpush1.msra.mxu0 0.0
  %3708 = vmatprep.subr.mxu0 0.0
  %3709 = vmatpush1.msra.mxu0 0.0
  %3710 = vmatprep.subr.mxu0 0.0
  %3711 = vmatpush1.msra.mxu0 0.0
  %3712 = vmatprep.subr.mxu0 0.0
  %3713 = vmatpush1.msra.mxu0 0.0
  %3714 = vmatprep.subr.mxu0 0.0
  %3715 = vmatpush1.msra.mxu0 0.0
  %3716 = vmatprep.subr.mxu0 0.0
  %3717 = vmatpush1.msra.mxu0 0.0
  %3718 = vmatprep.subr.mxu0 0.0
  %3719 = vmatpush1.msra.mxu0 0.0
  %3720 = vmatprep.mubr.f32.mxu0 0.0
  %3721 = vmatmul.mubr.f32.gmra.mrb[0].mxu0 %v3582
  %v3722 = vpop.f32.mrb[0].mxu0
  %v3723 = vadd.f32 %v1864, %v3722
  %v3724 = vpop.f32.mrb[0].mxu0
  %3725 = vmatprep.mubr.f32.mxu0 0.0
  %3726 = vmatmul.mubr.f32.gmra.mrb[0].mxu0 %v3584
  %v3727 = vpop.f32.mrb[0].mxu0
  %v3728 = vadd.f32 %v1864, %v3727
  %v3729 = vpop.f32.mrb[0].mxu0
  %3730 = vmatprep.mubr.f32.mxu0 0.0
  %3731 = vmatmul.mubr.f32.gmra.mrb[0].mxu0 %v3586
  %v3732 = vpop.f32.mrb[0].mxu0
  %v3733 = vadd.f32 %v1864, %v3732
  %v3734 = vpop.f32.mrb[0].mxu0
  %3735 = vmatprep.mubr.f32.mxu0 0.0
  %3736 = vmatmul.mubr.f32.gmra.mrb[0].mxu0 %v3588
  %v3737 = vpop.f32.mrb[0].mxu0
  %v3738 = vadd.f32 %v1864, %v3737
  %v3739 = vpop.f32.mrb[0].mxu0
  %3740 = vmatprep.mubr.f32.mxu0 0.0
  %3741 = vmatmul.mubr.f32.gmra.mrb[0].mxu0 %v3590
  %v3742 = vpop.f32.mrb[0].mxu0
  %v3743 = vadd.f32 %v1864, %v3742
  %v3744 = vpop.f32.mrb[0].mxu0
  %3745 = vmatprep.mubr.f32.mxu0 0.0
  %3746 = vmatmul.mubr.f32.gmra.mrb[0].mxu0 %v3592
  %v3747 = vpop.f32.mrb[0].mxu0
  %v3748 = vadd.f32 %v1864, %v3747
  %v3749 = vpop.f32.mrb[0].mxu0
  %3750 = vmatprep.mubr.f32.mxu0 0.0
  %3751 = vmatmul.mubr.f32.gmra.mrb[0].mxu0 %v3594
  %v3752 = vpop.f32.mrb[0].mxu0
  %v3753 = vadd.f32 %v1864, %v3752
  %v3754 = vpop.f32.mrb[0].mxu0
  %3755 = vmatprep.mubr.f32.mxu0 0.0
  %3756 = vmatmul.mubr.f32.gmra.mrb[0].mxu0 %v3596
  %v3757 = vpop.f32.mrb[0].mxu0
  %v3758 = vadd.f32 %v1864, %v3757
  %v3759 = vpop.f32.mrb[0].mxu0
  %3760 = vmatprep.mubr.f32.mxu0 0.0
  %3761 = vmatmul.mubr.f32.gmra.mrb[0].mxu0 %v3598
  %v3762 = vpop.f32.mrb[0].mxu0
  %v3763 = vadd.f32 %v1864, %v3762
  %v3764 = vpop.f32.mrb[0].mxu0
  %3765 = vmatprep.mubr.f32.mxu0 0.0
  %3766 = vmatmul.mubr.f32.gmra.mrb[0].mxu0 %v3600
  %v3767 = vpop.f32.mrb[0].mxu0
  %v3768 = vadd.f32 %v1864, %v3767
  %v3769 = vpop.f32.mrb[0].mxu0
  %3770 = vmatprep.mubr.f32.mxu0 0.0
  %3771 = vmatmul.mubr.f32.gmra.mrb[0].mxu0 %v3602
  %v3772 = vpop.f32.mrb[0].mxu0
  %v3773 = vadd.f32 %v1864, %v3772
  %v3774 = vpop.f32.mrb[0].mxu0
  %3775 = vmatprep.mubr.f32.mxu0 0.0
  %3776 = vmatmul.mubr.f32.gmra.mrb[0].mxu0 %v3604
  %v3777 = vpop.f32.mrb[0].mxu0
  %v3778 = vadd.f32 %v1864, %v3777
  %v3779 = vpop.f32.mrb[0].mxu0
  %3780 = vmatprep.mubr.f32.mxu0 0.0
  %3781 = vmatmul.mubr.f32.gmra.mrb[0].mxu0 %v3606
  %v3782 = vpop.f32.mrb[0].mxu0
  %v3783 = vadd.f32 %v1864, %v3782
  %v3784 = vpop.f32.mrb[0].mxu0
  %3785 = vmatprep.mubr.f32.mxu0 0.0
  %3786 = vmatmul.mubr.f32.gmra.mrb[0].mxu0 %v3608
  %v3787 = vpop.f32.mrb[0].mxu0
  %v3788 = vadd.f32 %v1864, %v3787
  %v3789 = vpop.f32.mrb[0].mxu0
  %3790 = vmatprep.mubr.f32.mxu0 0.0
  %3791 = vmatmul.mubr.f32.gmra.mrb[0].mxu0 %v3610
  %v3792 = vpop.f32.mrb[0].mxu0
  %v3793 = vadd.f32 %v1864, %v3792
  %v3794 = vpop.f32.mrb[0].mxu0
  %3795 = vmatprep.mubr.f32.mxu0 0.0
  %3796 = vmatmul.mubr.f32.gmra.mrb[0].mxu0 %v3612
  %v3797 = vpop.f32.mrb[0].mxu0
  %v3798 = vadd.f32 %v1864, %v3797
  %v3799 = vpop.f32.mrb[0].mxu0
  %3800 = vmatprep.mubr.f32.mxu0 0.0
  %3801 = vmatmul.mubr.f32.gmra.mrb[0].mxu0 %v3614
  %v3802 = vpop.f32.mrb[0].mxu0
  %v3803 = vadd.f32 %v1864, %v3802
  %v3804 = vpop.f32.mrb[0].mxu0
  %3805 = vmatprep.mubr.f32.mxu0 0.0
  %3806 = vmatmul.mubr.f32.gmra.mrb[0].mxu0 %v3616
  %v3807 = vpop.f32.mrb[0].mxu0
  %v3808 = vadd.f32 %v1864, %v3807
  %v3809 = vpop.f32.mrb[0].mxu0
  %3810 = vmatprep.mubr.f32.mxu0 0.0
  %3811 = vmatmul.mubr.f32.gmra.mrb[0].mxu0 %v3618
  %v3812 = vpop.f32.mrb[0].mxu0
  %v3813 = vadd.f32 %v1864, %v3812
  %v3814 = vpop.f32.mrb[0].mxu0
  %3815 = vmatprep.mubr.f32.mxu0 0.0
  %3816 = vmatmul.mubr.f32.gmra.mrb[0].mxu0 %v3620
  %v3817 = vpop.f32.mrb[0].mxu0
  %v3818 = vadd.f32 %v1864, %v3817
  %v3819 = vpop.f32.mrb[0].mxu0
  %3820 = vmatprep.mubr.f32.mxu0 0.0
  %3821 = vmatmul.mubr.f32.gmra.mrb[0].mxu0 %v3622
  %v3822 = vpop.f32.mrb[0].mxu0
  %v3823 = vadd.f32 %v1864, %v3822
  %v3824 = vpop.f32.mrb[0].mxu0
  %3825 = vmatprep.mubr.f32.mxu0 0.0
  %3826 = vmatmul.mubr.f32.gmra.mrb[0].mxu0 %v3624
  %v3827 = vpop.f32.mrb[0].mxu0
  %v3828 = vadd.f32 %v1864, %v3827
  %v3829 = vpop.f32.mrb[0].mxu0
  %3830 = vmatprep.mubr.f32.mxu0 0.0
  %3831 = vmatmul.mubr.f32.gmra.mrb[0].mxu0 %v3626
  %v3832 = vpop.f32.mrb[0].mxu0
  %v3833 = vadd.f32 %v1864, %v3832
  %v3834 = vpop.f32.mrb[0].mxu0
  %3835 = vmatprep.mubr.f32.mxu0 0.0
  %3836 = vmatmul.mubr.f32.gmra.mrb[0].mxu0 %v3628
  %v3837 = vpop.f32.mrb[0].mxu0
  %v3838 = vadd.f32 %v1864, %v3837
  %v3839 = vpop.f32.mrb[0].mxu0
  %3840 = vmatprep.mubr.f32.mxu0 0.0
  %3841 = vmatmul.mubr.f32.gmra.mrb[0].mxu0 %v3630
  %v3842 = vpop.f32.mrb[0].mxu0
  %v3843 = vadd.f32 %v1864, %v3842
  %v3844 = vpop.f32.mrb[0].mxu0
  %3845 = vmatprep.mubr.f32.mxu0 0.0
  %3846 = vmatmul.mubr.f32.gmra.mrb[0].mxu0 %v3632
  %v3847 = vpop.f32.mrb[0].mxu0
  %v3848 = vadd.f32 %v1864, %v3847
  %v3849 = vpop.f32.mrb[0].mxu0
  %3850 = vmatprep.mubr.f32.mxu0 0.0
  %3851 = vmatmul.mubr.f32.gmra.mrb[0].mxu0 %v3634
  %v3852 = vpop.f32.mrb[0].mxu0
  %v3853 = vadd.f32 %v1864, %v3852
  %v3854 = vpop.f32.mrb[0].mxu0
  %3855 = vmatprep.mubr.f32.mxu0 0.0
  %3856 = vmatmul.mubr.f32.gmra.mrb[0].mxu0 %v3636
  %v3857 = vpop.f32.mrb[0].mxu0
  %v3858 = vadd.f32 %v1864, %v3857
  %v3859 = vpop.f32.mrb[0].mxu0
  %3860 = vmatprep.mubr.f32.mxu0 0.0
  %3861 = vmatmul.mubr.f32.gmra.mrb[0].mxu0 %v3638
  %v3862 = vpop.f32.mrb[0].mxu0
  %v3863 = vadd.f32 %v1864, %v3862
  %v3864 = vpop.f32.mrb[0].mxu0
  %3865 = vmatprep.mubr.f32.mxu0 0.0
  %3866 = vmatmul.mubr.f32.gmra.mrb[0].mxu0 %v3640
  %v3867 = vpop.f32.mrb[0].mxu0
  %v3868 = vadd.f32 %v1864, %v3867
  %v3869 = vpop.f32.mrb[0].mxu0
  %3870 = vmatprep.mubr.f32.mxu0 0.0
  %3871 = vmatmul.mubr.f32.gmra.mrb[0].mxu0 %v3642
  %v3872 = vpop.f32.mrb[0].mxu0
  %v3873 = vadd.f32 %v1864, %v3872
  %v3874 = vpop.f32.mrb[0].mxu0
  %3875 = vmatprep.mubr.f32.mxu0 0.0
  %3876 = vmatmul.mubr.f32.gmra.mrb[0].mxu0 %v3644
  %v3877 = vpop.f32.mrb[0].mxu0
  %v3878 = vadd.f32 %v1864, %v3877
  %v3879 = vpop.f32.mrb[0].mxu0
  %3880 = vmatprep.mubr.f32.mxu0 0.0
  %3881 = vmatmul.mubr.f32.gmra.mrb[0].mxu0 %v3646
  %v3882 = vpop.f32.mrb[0].mxu0
  %v3883 = vadd.f32 %v1864, %v3882
  %v3884 = vpop.f32.mrb[0].mxu0
  %3885 = vmatprep.mubr.f32.mxu0 0.0
  %3886 = vmatmul.mubr.f32.gmra.mrb[0].mxu0 %v3648
  %v3887 = vpop.f32.mrb[0].mxu0
  %v3888 = vadd.f32 %v1864, %v3887
  %v3889 = vpop.f32.mrb[0].mxu0
  %3890 = vmatprep.mubr.f32.mxu0 0.0
  %3891 = vmatmul.mubr.f32.gmra.mrb[0].mxu0 %v3650
  %v3892 = vpop.f32.mrb[0].mxu0
  %v3893 = vadd.f32 %v1864, %v3892
  %v3894 = vpop.f32.mrb[0].mxu0
  %3895 = vdwg.mxu0
  %v3931 = vcombine.high %v3723, %v3723
  %v3933 = vunpack.c.l.s4 1966171168
  %v3934 = vunpack.c.0.s8 %v3933
  %v3935 = vlaneseq
  %v3936 = vshrl.u32 %v3935, 7
  %v3937 = vsub.s32 %v3934, %v3936
  %v3938 = vrot.slane %v3723, %v3937
  %v3940 = vunpack.c.l.s4 1966171168
  %v3941 = vunpack.c.0.s8 %v3940
  %v3942 = vlaneseq
  %v3943 = vshrl.u32 %v3942, 7
  %v3944 = vsub.s32 %v3941, %v3943
  %v3945 = vrot.slane %v3931, %v3944
  %v3946 = vcombine.high %v3938, %v3938
  %v3947 = vcombine.high %v3945, %v3945
  %v3949 = vunpack.c.l.s4 1966171168
  %v3950 = vunpack.c.0.s8 %v3949
  %v3951 = vlaneseq
  %v3952 = vshrl.u32 %v3951, 7
  %v3953 = vsub.s32 %v3950, %v3952
  %v3954 = vrot.slane %v3938, %v3953
  %v3956 = vunpack.c.l.s4 1966171168
  %v3957 = vunpack.c.0.s8 %v3956
  %v3958 = vlaneseq
  %v3959 = vshrl.u32 %v3958, 7
  %v3960 = vsub.s32 %v3957, %v3959
  %v3961 = vrot.slane %v3945, %v3960
  %v3963 = vunpack.c.l.s4 1966171168
  %v3964 = vunpack.c.0.s8 %v3963
  %v3965 = vlaneseq
  %v3966 = vshrl.u32 %v3965, 7
  %v3967 = vsub.s32 %v3964, %v3966
  %v3968 = vrot.slane %v3946, %v3967
  %v3970 = vunpack.c.l.s4 1966171168
  %v3971 = vunpack.c.0.s8 %v3970
  %v3972 = vlaneseq
  %v3973 = vshrl.u32 %v3972, 7
  %v3974 = vsub.s32 %v3971, %v3973
  %v3975 = vrot.slane %v3947, %v3974
  %v3976 = vcombine.high %v3954, %v3954
  %v3977 = vcombine.high %v3961, %v3961
  %v3978 = vcombine.high %v3968, %v3968
  %v3979 = vcombine.high %v3975, %v3975
  %v3980 = vcombine.high %v3728, %v3728
  %v3982 = vunpack.c.l.s4 1966171168
  %v3983 = vunpack.c.0.s8 %v3982
  %v3984 = vlaneseq
  %v3985 = vshrl.u32 %v3984, 7
  %v3986 = vsub.s32 %v3983, %v3985
  %v3987 = vrot.slane %v3728, %v3986
  %v3989 = vunpack.c.l.s4 1966171168
  %v3990 = vunpack.c.0.s8 %v3989
  %v3991 = vlaneseq
  %v3992 = vshrl.u32 %v3991, 7
  %v3993 = vsub.s32 %v3990, %v3992
  %v3994 = vrot.slane %v3980, %v3993
  %v3995 = vcombine.high %v3987, %v3987
  %v3996 = vcombine.high %v3994, %v3994
  %v3998 = vunpack.c.l.s4 1966171168
  %v3999 = vunpack.c.0.s8 %v3998
  %v4000 = vlaneseq
  %v4001 = vshrl.u32 %v4000, 7
  %v4002 = vsub.s32 %v3999, %v4001
  %v4003 = vrot.slane %v3987, %v4002
  %v4005 = vunpack.c.l.s4 1966171168
  %v4006 = vunpack.c.0.s8 %v4005
  %v4007 = vlaneseq
  %v4008 = vshrl.u32 %v4007, 7
  %v4009 = vsub.s32 %v4006, %v4008
  %v4010 = vrot.slane %v3994, %v4009
  %v4012 = vunpack.c.l.s4 1966171168
  %v4013 = vunpack.c.0.s8 %v4012
  %v4014 = vlaneseq
  %v4015 = vshrl.u32 %v4014, 7
  %v4016 = vsub.s32 %v4013, %v4015
  %v4017 = vrot.slane %v3995, %v4016
  %v4019 = vunpack.c.l.s4 1966171168
  %v4020 = vunpack.c.0.s8 %v4019
  %v4021 = vlaneseq
  %v4022 = vshrl.u32 %v4021, 7
  %v4023 = vsub.s32 %v4020, %v4022
  %v4024 = vrot.slane %v3996, %v4023
  %v4025 = vcombine.high %v4003, %v4003
  %v4026 = vcombine.high %v4010, %v4010
  %v4027 = vcombine.high %v4017, %v4017
  %v4028 = vcombine.high %v4024, %v4024
  %v4029 = vcombine.high %v3733, %v3733
  %v4031 = vunpack.c.l.s4 1966171168
  %v4032 = vunpack.c.0.s8 %v4031
  %v4033 = vlaneseq
  %v4034 = vshrl.u32 %v4033, 7
  %v4035 = vsub.s32 %v4032, %v4034
  %v4036 = vrot.slane %v3733, %v4035
  %v4038 = vunpack.c.l.s4 1966171168
  %v4039 = vunpack.c.0.s8 %v4038
  %v4040 = vlaneseq
  %v4041 = vshrl.u32 %v4040, 7
  %v4042 = vsub.s32 %v4039, %v4041
  %v4043 = vrot.slane %v4029, %v4042
  %v4044 = vcombine.high %v4036, %v4036
  %v4045 = vcombine.high %v4043, %v4043
  %v4047 = vunpack.c.l.s4 1966171168
  %v4048 = vunpack.c.0.s8 %v4047
  %v4049 = vlaneseq
  %v4050 = vshrl.u32 %v4049, 7
  %v4051 = vsub.s32 %v4048, %v4050
  %v4052 = vrot.slane %v4036, %v4051
  %v4054 = vunpack.c.l.s4 1966171168
  %v4055 = vunpack.c.0.s8 %v4054
  %v4056 = vlaneseq
  %v4057 = vshrl.u32 %v4056, 7
  %v4058 = vsub.s32 %v4055, %v4057
  %v4059 = vrot.slane %v4043, %v4058
  %v4061 = vunpack.c.l.s4 1966171168
  %v4062 = vunpack.c.0.s8 %v4061
  %v4063 = vlaneseq
  %v4064 = vshrl.u32 %v4063, 7
  %v4065 = vsub.s32 %v4062, %v4064
  %v4066 = vrot.slane %v4044, %v4065
  %v4068 = vunpack.c.l.s4 1966171168
  %v4069 = vunpack.c.0.s8 %v4068
  %v4070 = vlaneseq
  %v4071 = vshrl.u32 %v4070, 7
  %v4072 = vsub.s32 %v4069, %v4071
  %v4073 = vrot.slane %v4045, %v4072
  %v4074 = vcombine.high %v4052, %v4052
  %v4075 = vcombine.high %v4059, %v4059
  %v4076 = vcombine.high %v4066, %v4066
  %v4077 = vcombine.high %v4073, %v4073
  %v4078 = vcombine.high %v3738, %v3738
  %v4080 = vunpack.c.l.s4 1966171168
  %v4081 = vunpack.c.0.s8 %v4080
  %v4082 = vlaneseq
  %v4083 = vshrl.u32 %v4082, 7
  %v4084 = vsub.s32 %v4081, %v4083
  %v4085 = vrot.slane %v3738, %v4084
  %v4087 = vunpack.c.l.s4 1966171168
  %v4088 = vunpack.c.0.s8 %v4087
  %v4089 = vlaneseq
  %v4090 = vshrl.u32 %v4089, 7
  %v4091 = vsub.s32 %v4088, %v4090
  %v4092 = vrot.slane %v4078, %v4091
  %v4093 = vcombine.high %v4085, %v4085
  %v4094 = vcombine.high %v4092, %v4092
  %v4096 = vunpack.c.l.s4 1966171168
  %v4097 = vunpack.c.0.s8 %v4096
  %v4098 = vlaneseq
  %v4099 = vshrl.u32 %v4098, 7
  %v4100 = vsub.s32 %v4097, %v4099
  %v4101 = vrot.slane %v4085, %v4100
  %v4103 = vunpack.c.l.s4 1966171168
  %v4104 = vunpack.c.0.s8 %v4103
  %v4105 = vlaneseq
  %v4106 = vshrl.u32 %v4105, 7
  %v4107 = vsub.s32 %v4104, %v4106
  %v4108 = vrot.slane %v4092, %v4107
  %v4110 = vunpack.c.l.s4 1966171168
  %v4111 = vunpack.c.0.s8 %v4110
  %v4112 = vlaneseq
  %v4113 = vshrl.u32 %v4112, 7
  %v4114 = vsub.s32 %v4111, %v4113
  %v4115 = vrot.slane %v4093, %v4114
  %v4117 = vunpack.c.l.s4 1966171168
  %v4118 = vunpack.c.0.s8 %v4117
  %v4119 = vlaneseq
  %v4120 = vshrl.u32 %v4119, 7
  %v4121 = vsub.s32 %v4118, %v4120
  %v4122 = vrot.slane %v4094, %v4121
  %v4123 = vcombine.high %v4101, %v4101
  %v4124 = vcombine.high %v4108, %v4108
  %v4125 = vcombine.high %v4115, %v4115
  %v4126 = vcombine.high %v4122, %v4122
  %v4127 = vcombine.high %v3743, %v3743
  %v4129 = vunpack.c.l.s4 1966171168
  %v4130 = vunpack.c.0.s8 %v4129
  %v4131 = vlaneseq
  %v4132 = vshrl.u32 %v4131, 7
  %v4133 = vsub.s32 %v4130, %v4132
  %v4134 = vrot.slane %v3743, %v4133
  %v4136 = vunpack.c.l.s4 1966171168
  %v4137 = vunpack.c.0.s8 %v4136
  %v4138 = vlaneseq
  %v4139 = vshrl.u32 %v4138, 7
  %v4140 = vsub.s32 %v4137, %v4139
  %v4141 = vrot.slane %v4127, %v4140
  %v4142 = vcombine.high %v4134, %v4134
  %v4143 = vcombine.high %v4141, %v4141
  %v4145 = vunpack.c.l.s4 1966171168
  %v4146 = vunpack.c.0.s8 %v4145
  %v4147 = vlaneseq
  %v4148 = vshrl.u32 %v4147, 7
  %v4149 = vsub.s32 %v4146, %v4148
  %v4150 = vrot.slane %v4134, %v4149
  %v4152 = vunpack.c.l.s4 1966171168
  %v4153 = vunpack.c.0.s8 %v4152
  %v4154 = vlaneseq
  %v4155 = vshrl.u32 %v4154, 7
  %v4156 = vsub.s32 %v4153, %v4155
  %v4157 = vrot.slane %v4141, %v4156
  %v4159 = vunpack.c.l.s4 1966171168
  %v4160 = vunpack.c.0.s8 %v4159
  %v4161 = vlaneseq
  %v4162 = vshrl.u32 %v4161, 7
  %v4163 = vsub.s32 %v4160, %v4162
  %v4164 = vrot.slane %v4142, %v4163
  %v4166 = vunpack.c.l.s4 1966171168
  %v4167 = vunpack.c.0.s8 %v4166
  %v4168 = vlaneseq
  %v4169 = vshrl.u32 %v4168, 7
  %v4170 = vsub.s32 %v4167, %v4169
  %v4171 = vrot.slane %v4143, %v4170
  %v4172 = vcombine.high %v4150, %v4150
  %v4173 = vcombine.high %v4157, %v4157
  %v4174 = vcombine.high %v4164, %v4164
  %v4175 = vcombine.high %v4171, %v4171
  %v4176 = vcombine.high %v3748, %v3748
  %v4178 = vunpack.c.l.s4 1966171168
  %v4179 = vunpack.c.0.s8 %v4178
  %v4180 = vlaneseq
  %v4181 = vshrl.u32 %v4180, 7
  %v4182 = vsub.s32 %v4179, %v4181
  %v4183 = vrot.slane %v3748, %v4182
  %v4185 = vunpack.c.l.s4 1966171168
  %v4186 = vunpack.c.0.s8 %v4185
  %v4187 = vlaneseq
  %v4188 = vshrl.u32 %v4187, 7
  %v4189 = vsub.s32 %v4186, %v4188
  %v4190 = vrot.slane %v4176, %v4189
  %v4191 = vcombine.high %v4183, %v4183
  %v4192 = vcombine.high %v4190, %v4190
  %v4194 = vunpack.c.l.s4 1966171168
  %v4195 = vunpack.c.0.s8 %v4194
  %v4196 = vlaneseq
  %v4197 = vshrl.u32 %v4196, 7
  %v4198 = vsub.s32 %v4195, %v4197
  %v4199 = vrot.slane %v4183, %v4198
  %v4201 = vunpack.c.l.s4 1966171168
  %v4202 = vunpack.c.0.s8 %v4201
  %v4203 = vlaneseq
  %v4204 = vshrl.u32 %v4203, 7
  %v4205 = vsub.s32 %v4202, %v4204
  %v4206 = vrot.slane %v4190, %v4205
  %v4208 = vunpack.c.l.s4 1966171168
  %v4209 = vunpack.c.0.s8 %v4208
  %v4210 = vlaneseq
  %v4211 = vshrl.u32 %v4210, 7
  %v4212 = vsub.s32 %v4209, %v4211
  %v4213 = vrot.slane %v4191, %v4212
  %v4215 = vunpack.c.l.s4 1966171168
  %v4216 = vunpack.c.0.s8 %v4215
  %v4217 = vlaneseq
  %v4218 = vshrl.u32 %v4217, 7
  %v4219 = vsub.s32 %v4216, %v4218
  %v4220 = vrot.slane %v4192, %v4219
  %v4221 = vcombine.high %v4199, %v4199
  %v4222 = vcombine.high %v4206, %v4206
  %v4223 = vcombine.high %v4213, %v4213
  %v4224 = vcombine.high %v4220, %v4220
  %v4225 = vcombine.high %v3753, %v3753
  %v4227 = vunpack.c.l.s4 1966171168
  %v4228 = vunpack.c.0.s8 %v4227
  %v4229 = vlaneseq
  %v4230 = vshrl.u32 %v4229, 7
  %v4231 = vsub.s32 %v4228, %v4230
  %v4232 = vrot.slane %v3753, %v4231
  %v4234 = vunpack.c.l.s4 1966171168
  %v4235 = vunpack.c.0.s8 %v4234
  %v4236 = vlaneseq
  %v4237 = vshrl.u32 %v4236, 7
  %v4238 = vsub.s32 %v4235, %v4237
  %v4239 = vrot.slane %v4225, %v4238
  %v4240 = vcombine.high %v4232, %v4232
  %v4241 = vcombine.high %v4239, %v4239
  %v4243 = vunpack.c.l.s4 1966171168
  %v4244 = vunpack.c.0.s8 %v4243
  %v4245 = vlaneseq
  %v4246 = vshrl.u32 %v4245, 7
  %v4247 = vsub.s32 %v4244, %v4246
  %v4248 = vrot.slane %v4232, %v4247
  %v4250 = vunpack.c.l.s4 1966171168
  %v4251 = vunpack.c.0.s8 %v4250
  %v4252 = vlaneseq
  %v4253 = vshrl.u32 %v4252, 7
  %v4254 = vsub.s32 %v4251, %v4253
  %v4255 = vrot.slane %v4239, %v4254
  %v4257 = vunpack.c.l.s4 1966171168
  %v4258 = vunpack.c.0.s8 %v4257
  %v4259 = vlaneseq
  %v4260 = vshrl.u32 %v4259, 7
  %v4261 = vsub.s32 %v4258, %v4260
  %v4262 = vrot.slane %v4240, %v4261
  %v4264 = vunpack.c.l.s4 1966171168
  %v4265 = vunpack.c.0.s8 %v4264
  %v4266 = vlaneseq
  %v4267 = vshrl.u32 %v4266, 7
  %v4268 = vsub.s32 %v4265, %v4267
  %v4269 = vrot.slane %v4241, %v4268
  %v4270 = vcombine.high %v4248, %v4248
  %v4271 = vcombine.high %v4255, %v4255
  %v4272 = vcombine.high %v4262, %v4262
  %v4273 = vcombine.high %v4269, %v4269
  %v4274 = vcombine.high %v3758, %v3758
  %v4276 = vunpack.c.l.s4 1966171168
  %v4277 = vunpack.c.0.s8 %v4276
  %v4278 = vlaneseq
  %v4279 = vshrl.u32 %v4278, 7
  %v4280 = vsub.s32 %v4277, %v4279
  %v4281 = vrot.slane %v3758, %v4280
  %v4283 = vunpack.c.l.s4 1966171168
  %v4284 = vunpack.c.0.s8 %v4283
  %v4285 = vlaneseq
  %v4286 = vshrl.u32 %v4285, 7
  %v4287 = vsub.s32 %v4284, %v4286
  %v4288 = vrot.slane %v4274, %v4287
  %v4289 = vcombine.high %v4281, %v4281
  %v4290 = vcombine.high %v4288, %v4288
  %v4292 = vunpack.c.l.s4 1966171168
  %v4293 = vunpack.c.0.s8 %v4292
  %v4294 = vlaneseq
  %v4295 = vshrl.u32 %v4294, 7
  %v4296 = vsub.s32 %v4293, %v4295
  %v4297 = vrot.slane %v4281, %v4296
  %v4299 = vunpack.c.l.s4 1966171168
  %v4300 = vunpack.c.0.s8 %v4299
  %v4301 = vlaneseq
  %v4302 = vshrl.u32 %v4301, 7
  %v4303 = vsub.s32 %v4300, %v4302
  %v4304 = vrot.slane %v4288, %v4303
  %v4306 = vunpack.c.l.s4 1966171168
  %v4307 = vunpack.c.0.s8 %v4306
  %v4308 = vlaneseq
  %v4309 = vshrl.u32 %v4308, 7
  %v4310 = vsub.s32 %v4307, %v4309
  %v4311 = vrot.slane %v4289, %v4310
  %v4313 = vunpack.c.l.s4 1966171168
  %v4314 = vunpack.c.0.s8 %v4313
  %v4315 = vlaneseq
  %v4316 = vshrl.u32 %v4315, 7
  %v4317 = vsub.s32 %v4314, %v4316
  %v4318 = vrot.slane %v4290, %v4317
  %v4319 = vcombine.high %v4297, %v4297
  %v4320 = vcombine.high %v4304, %v4304
  %v4321 = vcombine.high %v4311, %v4311
  %v4322 = vcombine.high %v4318, %v4318
  %v4323 = vcombine.high %v3763, %v3763
  %v4325 = vunpack.c.l.s4 1966171168
  %v4326 = vunpack.c.0.s8 %v4325
  %v4327 = vlaneseq
  %v4328 = vshrl.u32 %v4327, 7
  %v4329 = vsub.s32 %v4326, %v4328
  %v4330 = vrot.slane %v3763, %v4329
  %v4332 = vunpack.c.l.s4 1966171168
  %v4333 = vunpack.c.0.s8 %v4332
  %v4334 = vlaneseq
  %v4335 = vshrl.u32 %v4334, 7
  %v4336 = vsub.s32 %v4333, %v4335
  %v4337 = vrot.slane %v4323, %v4336
  %v4338 = vcombine.high %v4330, %v4330
  %v4339 = vcombine.high %v4337, %v4337
  %v4341 = vunpack.c.l.s4 1966171168
  %v4342 = vunpack.c.0.s8 %v4341
  %v4343 = vlaneseq
  %v4344 = vshrl.u32 %v4343, 7
  %v4345 = vsub.s32 %v4342, %v4344
  %v4346 = vrot.slane %v4330, %v4345
  %v4348 = vunpack.c.l.s4 1966171168
  %v4349 = vunpack.c.0.s8 %v4348
  %v4350 = vlaneseq
  %v4351 = vshrl.u32 %v4350, 7
  %v4352 = vsub.s32 %v4349, %v4351
  %v4353 = vrot.slane %v4337, %v4352
  %v4355 = vunpack.c.l.s4 1966171168
  %v4356 = vunpack.c.0.s8 %v4355
  %v4357 = vlaneseq
  %v4358 = vshrl.u32 %v4357, 7
  %v4359 = vsub.s32 %v4356, %v4358
  %v4360 = vrot.slane %v4338, %v4359
  %v4362 = vunpack.c.l.s4 1966171168
  %v4363 = vunpack.c.0.s8 %v4362
  %v4364 = vlaneseq
  %v4365 = vshrl.u32 %v4364, 7
  %v4366 = vsub.s32 %v4363, %v4365
  %v4367 = vrot.slane %v4339, %v4366
  %v4368 = vcombine.high %v4346, %v4346
  %v4369 = vcombine.high %v4353, %v4353
  %v4370 = vcombine.high %v4360, %v4360
  %v4371 = vcombine.high %v4367, %v4367
  %v4372 = vcombine.high %v3768, %v3768
  %v4374 = vunpack.c.l.s4 1966171168
  %v4375 = vunpack.c.0.s8 %v4374
  %v4376 = vlaneseq
  %v4377 = vshrl.u32 %v4376, 7
  %v4378 = vsub.s32 %v4375, %v4377
  %v4379 = vrot.slane %v3768, %v4378
  %v4381 = vunpack.c.l.s4 1966171168
  %v4382 = vunpack.c.0.s8 %v4381
  %v4383 = vlaneseq
  %v4384 = vshrl.u32 %v4383, 7
  %v4385 = vsub.s32 %v4382, %v4384
  %v4386 = vrot.slane %v4372, %v4385
  %v4387 = vcombine.high %v4379, %v4379
  %v4388 = vcombine.high %v4386, %v4386
  %v4390 = vunpack.c.l.s4 1966171168
  %v4391 = vunpack.c.0.s8 %v4390
  %v4392 = vlaneseq
  %v4393 = vshrl.u32 %v4392, 7
  %v4394 = vsub.s32 %v4391, %v4393
  %v4395 = vrot.slane %v4379, %v4394
  %v4397 = vunpack.c.l.s4 1966171168
  %v4398 = vunpack.c.0.s8 %v4397
  %v4399 = vlaneseq
  %v4400 = vshrl.u32 %v4399, 7
  %v4401 = vsub.s32 %v4398, %v4400
  %v4402 = vrot.slane %v4386, %v4401
  %v4404 = vunpack.c.l.s4 1966171168
  %v4405 = vunpack.c.0.s8 %v4404
  %v4406 = vlaneseq
  %v4407 = vshrl.u32 %v4406, 7
  %v4408 = vsub.s32 %v4405, %v4407
  %v4409 = vrot.slane %v4387, %v4408
  %v4411 = vunpack.c.l.s4 1966171168
  %v4412 = vunpack.c.0.s8 %v4411
  %v4413 = vlaneseq
  %v4414 = vshrl.u32 %v4413, 7
  %v4415 = vsub.s32 %v4412, %v4414
  %v4416 = vrot.slane %v4388, %v4415
  %v4417 = vcombine.high %v4395, %v4395
  %v4418 = vcombine.high %v4402, %v4402
  %v4419 = vcombine.high %v4409, %v4409
  %v4420 = vcombine.high %v4416, %v4416
  %v4421 = vcombine.high %v3773, %v3773
  %v4423 = vunpack.c.l.s4 1966171168
  %v4424 = vunpack.c.0.s8 %v4423
  %v4425 = vlaneseq
  %v4426 = vshrl.u32 %v4425, 7
  %v4427 = vsub.s32 %v4424, %v4426
  %v4428 = vrot.slane %v3773, %v4427
  %v4430 = vunpack.c.l.s4 1966171168
  %v4431 = vunpack.c.0.s8 %v4430
  %v4432 = vlaneseq
  %v4433 = vshrl.u32 %v4432, 7
  %v4434 = vsub.s32 %v4431, %v4433
  %v4435 = vrot.slane %v4421, %v4434
  %v4436 = vcombine.high %v4428, %v4428
  %v4437 = vcombine.high %v4435, %v4435
  %v4439 = vunpack.c.l.s4 1966171168
  %v4440 = vunpack.c.0.s8 %v4439
  %v4441 = vlaneseq
  %v4442 = vshrl.u32 %v4441, 7
  %v4443 = vsub.s32 %v4440, %v4442
  %v4444 = vrot.slane %v4428, %v4443
  %v4446 = vunpack.c.l.s4 1966171168
  %v4447 = vunpack.c.0.s8 %v4446
  %v4448 = vlaneseq
  %v4449 = vshrl.u32 %v4448, 7
  %v4450 = vsub.s32 %v4447, %v4449
  %v4451 = vrot.slane %v4435, %v4450
  %v4453 = vunpack.c.l.s4 1966171168
  %v4454 = vunpack.c.0.s8 %v4453
  %v4455 = vlaneseq
  %v4456 = vshrl.u32 %v4455, 7
  %v4457 = vsub.s32 %v4454, %v4456
  %v4458 = vrot.slane %v4436, %v4457
  %v4460 = vunpack.c.l.s4 1966171168
  %v4461 = vunpack.c.0.s8 %v4460
  %v4462 = vlaneseq
  %v4463 = vshrl.u32 %v4462, 7
  %v4464 = vsub.s32 %v4461, %v4463
  %v4465 = vrot.slane %v4437, %v4464
  %v4466 = vcombine.high %v4444, %v4444
  %v4467 = vcombine.high %v4451, %v4451
  %v4468 = vcombine.high %v4458, %v4458
  %v4469 = vcombine.high %v4465, %v4465
  %v4470 = vcombine.high %v3778, %v3778
  %v4472 = vunpack.c.l.s4 1966171168
  %v4473 = vunpack.c.0.s8 %v4472
  %v4474 = vlaneseq
  %v4475 = vshrl.u32 %v4474, 7
  %v4476 = vsub.s32 %v4473, %v4475
  %v4477 = vrot.slane %v3778, %v4476
  %v4479 = vunpack.c.l.s4 1966171168
  %v4480 = vunpack.c.0.s8 %v4479
  %v4481 = vlaneseq
  %v4482 = vshrl.u32 %v4481, 7
  %v4483 = vsub.s32 %v4480, %v4482
  %v4484 = vrot.slane %v4470, %v4483
  %v4485 = vcombine.high %v4477, %v4477
  %v4486 = vcombine.high %v4484, %v4484
  %v4488 = vunpack.c.l.s4 1966171168
  %v4489 = vunpack.c.0.s8 %v4488
  %v4490 = vlaneseq
  %v4491 = vshrl.u32 %v4490, 7
  %v4492 = vsub.s32 %v4489, %v4491
  %v4493 = vrot.slane %v4477, %v4492
  %v4495 = vunpack.c.l.s4 1966171168
  %v4496 = vunpack.c.0.s8 %v4495
  %v4497 = vlaneseq
  %v4498 = vshrl.u32 %v4497, 7
  %v4499 = vsub.s32 %v4496, %v4498
  %v4500 = vrot.slane %v4484, %v4499
  %v4502 = vunpack.c.l.s4 1966171168
  %v4503 = vunpack.c.0.s8 %v4502
  %v4504 = vlaneseq
  %v4505 = vshrl.u32 %v4504, 7
  %v4506 = vsub.s32 %v4503, %v4505
  %v4507 = vrot.slane %v4485, %v4506
  %v4509 = vunpack.c.l.s4 1966171168
  %v4510 = vunpack.c.0.s8 %v4509
  %v4511 = vlaneseq
  %v4512 = vshrl.u32 %v4511, 7
  %v4513 = vsub.s32 %v4510, %v4512
  %v4514 = vrot.slane %v4486, %v4513
  %v4515 = vcombine.high %v4493, %v4493
  %v4516 = vcombine.high %v4500, %v4500
  %v4517 = vcombine.high %v4507, %v4507
  %v4518 = vcombine.high %v4514, %v4514
  %v4519 = vcombine.high %v3783, %v3783
  %v4521 = vunpack.c.l.s4 1966171168
  %v4522 = vunpack.c.0.s8 %v4521
  %v4523 = vlaneseq
  %v4524 = vshrl.u32 %v4523, 7
  %v4525 = vsub.s32 %v4522, %v4524
  %v4526 = vrot.slane %v3783, %v4525
  %v4528 = vunpack.c.l.s4 1966171168
  %v4529 = vunpack.c.0.s8 %v4528
  %v4530 = vlaneseq
  %v4531 = vshrl.u32 %v4530, 7
  %v4532 = vsub.s32 %v4529, %v4531
  %v4533 = vrot.slane %v4519, %v4532
  %v4534 = vcombine.high %v4526, %v4526
  %v4535 = vcombine.high %v4533, %v4533
  %v4537 = vunpack.c.l.s4 1966171168
  %v4538 = vunpack.c.0.s8 %v4537
  %v4539 = vlaneseq
  %v4540 = vshrl.u32 %v4539, 7
  %v4541 = vsub.s32 %v4538, %v4540
  %v4542 = vrot.slane %v4526, %v4541
  %v4544 = vunpack.c.l.s4 1966171168
  %v4545 = vunpack.c.0.s8 %v4544
  %v4546 = vlaneseq
  %v4547 = vshrl.u32 %v4546, 7
  %v4548 = vsub.s32 %v4545, %v4547
  %v4549 = vrot.slane %v4533, %v4548
  %v4551 = vunpack.c.l.s4 1966171168
  %v4552 = vunpack.c.0.s8 %v4551
  %v4553 = vlaneseq
  %v4554 = vshrl.u32 %v4553, 7
  %v4555 = vsub.s32 %v4552, %v4554
  %v4556 = vrot.slane %v4534, %v4555
  %v4558 = vunpack.c.l.s4 1966171168
  %v4559 = vunpack.c.0.s8 %v4558
  %v4560 = vlaneseq
  %v4561 = vshrl.u32 %v4560, 7
  %v4562 = vsub.s32 %v4559, %v4561
  %v4563 = vrot.slane %v4535, %v4562
  %v4564 = vcombine.high %v4542, %v4542
  %v4565 = vcombine.high %v4549, %v4549
  %v4566 = vcombine.high %v4556, %v4556
  %v4567 = vcombine.high %v4563, %v4563
  %v4568 = vcombine.high %v3788, %v3788
  %v4570 = vunpack.c.l.s4 1966171168
  %v4571 = vunpack.c.0.s8 %v4570
  %v4572 = vlaneseq
  %v4573 = vshrl.u32 %v4572, 7
  %v4574 = vsub.s32 %v4571, %v4573
  %v4575 = vrot.slane %v3788, %v4574
  %v4577 = vunpack.c.l.s4 1966171168
  %v4578 = vunpack.c.0.s8 %v4577
  %v4579 = vlaneseq
  %v4580 = vshrl.u32 %v4579, 7
  %v4581 = vsub.s32 %v4578, %v4580
  %v4582 = vrot.slane %v4568, %v4581
  %v4583 = vcombine.high %v4575, %v4575
  %v4584 = vcombine.high %v4582, %v4582
  %v4586 = vunpack.c.l.s4 1966171168
  %v4587 = vunpack.c.0.s8 %v4586
  %v4588 = vlaneseq
  %v4589 = vshrl.u32 %v4588, 7
  %v4590 = vsub.s32 %v4587, %v4589
  %v4591 = vrot.slane %v4575, %v4590
  %v4593 = vunpack.c.l.s4 1966171168
  %v4594 = vunpack.c.0.s8 %v4593
  %v4595 = vlaneseq
  %v4596 = vshrl.u32 %v4595, 7
  %v4597 = vsub.s32 %v4594, %v4596
  %v4598 = vrot.slane %v4582, %v4597
  %v4600 = vunpack.c.l.s4 1966171168
  %v4601 = vunpack.c.0.s8 %v4600
  %v4602 = vlaneseq
  %v4603 = vshrl.u32 %v4602, 7
  %v4604 = vsub.s32 %v4601, %v4603
  %v4605 = vrot.slane %v4583, %v4604
  %v4607 = vunpack.c.l.s4 1966171168
  %v4608 = vunpack.c.0.s8 %v4607
  %v4609 = vlaneseq
  %v4610 = vshrl.u32 %v4609, 7
  %v4611 = vsub.s32 %v4608, %v4610
  %v4612 = vrot.slane %v4584, %v4611
  %v4613 = vcombine.high %v4591, %v4591
  %v4614 = vcombine.high %v4598, %v4598
  %v4615 = vcombine.high %v4605, %v4605
  %v4616 = vcombine.high %v4612, %v4612
  %v4617 = vcombine.high %v3793, %v3793
  %v4619 = vunpack.c.l.s4 1966171168
  %v4620 = vunpack.c.0.s8 %v4619
  %v4621 = vlaneseq
  %v4622 = vshrl.u32 %v4621, 7
  %v4623 = vsub.s32 %v4620, %v4622
  %v4624 = vrot.slane %v3793, %v4623
  %v4626 = vunpack.c.l.s4 1966171168
  %v4627 = vunpack.c.0.s8 %v4626
  %v4628 = vlaneseq
  %v4629 = vshrl.u32 %v4628, 7
  %v4630 = vsub.s32 %v4627, %v4629
  %v4631 = vrot.slane %v4617, %v4630
  %v4632 = vcombine.high %v4624, %v4624
  %v4633 = vcombine.high %v4631, %v4631
  %v4635 = vunpack.c.l.s4 1966171168
  %v4636 = vunpack.c.0.s8 %v4635
  %v4637 = vlaneseq
  %v4638 = vshrl.u32 %v4637, 7
  %v4639 = vsub.s32 %v4636, %v4638
  %v4640 = vrot.slane %v4624, %v4639
  %v4642 = vunpack.c.l.s4 1966171168
  %v4643 = vunpack.c.0.s8 %v4642
  %v4644 = vlaneseq
  %v4645 = vshrl.u32 %v4644, 7
  %v4646 = vsub.s32 %v4643, %v4645
  %v4647 = vrot.slane %v4631, %v4646
  %v4649 = vunpack.c.l.s4 1966171168
  %v4650 = vunpack.c.0.s8 %v4649
  %v4651 = vlaneseq
  %v4652 = vshrl.u32 %v4651, 7
  %v4653 = vsub.s32 %v4650, %v4652
  %v4654 = vrot.slane %v4632, %v4653
  %v4656 = vunpack.c.l.s4 1966171168
  %v4657 = vunpack.c.0.s8 %v4656
  %v4658 = vlaneseq
  %v4659 = vshrl.u32 %v4658, 7
  %v4660 = vsub.s32 %v4657, %v4659
  %v4661 = vrot.slane %v4633, %v4660
  %v4662 = vcombine.high %v4640, %v4640
  %v4663 = vcombine.high %v4647, %v4647
  %v4664 = vcombine.high %v4654, %v4654
  %v4665 = vcombine.high %v4661, %v4661
  %v4666 = vcombine.high %v3798, %v3798
  %v4668 = vunpack.c.l.s4 1966171168
  %v4669 = vunpack.c.0.s8 %v4668
  %v4670 = vlaneseq
  %v4671 = vshrl.u32 %v4670, 7
  %v4672 = vsub.s32 %v4669, %v4671
  %v4673 = vrot.slane %v3798, %v4672
  %v4675 = vunpack.c.l.s4 1966171168
  %v4676 = vunpack.c.0.s8 %v4675
  %v4677 = vlaneseq
  %v4678 = vshrl.u32 %v4677, 7
  %v4679 = vsub.s32 %v4676, %v4678
  %v4680 = vrot.slane %v4666, %v4679
  %v4681 = vcombine.high %v4673, %v4673
  %v4682 = vcombine.high %v4680, %v4680
  %v4684 = vunpack.c.l.s4 1966171168
  %v4685 = vunpack.c.0.s8 %v4684
  %v4686 = vlaneseq
  %v4687 = vshrl.u32 %v4686, 7
  %v4688 = vsub.s32 %v4685, %v4687
  %v4689 = vrot.slane %v4673, %v4688
  %v4691 = vunpack.c.l.s4 1966171168
  %v4692 = vunpack.c.0.s8 %v4691
  %v4693 = vlaneseq
  %v4694 = vshrl.u32 %v4693, 7
  %v4695 = vsub.s32 %v4692, %v4694
  %v4696 = vrot.slane %v4680, %v4695
  %v4698 = vunpack.c.l.s4 1966171168
  %v4699 = vunpack.c.0.s8 %v4698
  %v4700 = vlaneseq
  %v4701 = vshrl.u32 %v4700, 7
  %v4702 = vsub.s32 %v4699, %v4701
  %v4703 = vrot.slane %v4681, %v4702
  %v4705 = vunpack.c.l.s4 1966171168
  %v4706 = vunpack.c.0.s8 %v4705
  %v4707 = vlaneseq
  %v4708 = vshrl.u32 %v4707, 7
  %v4709 = vsub.s32 %v4706, %v4708
  %v4710 = vrot.slane %v4682, %v4709
  %v4711 = vcombine.high %v4689, %v4689
  %v4712 = vcombine.high %v4696, %v4696
  %v4713 = vcombine.high %v4703, %v4703
  %v4714 = vcombine.high %v4710, %v4710
  %v4715 = vcombine.high %v3803, %v3803
  %v4717 = vunpack.c.l.s4 1966171168
  %v4718 = vunpack.c.0.s8 %v4717
  %v4719 = vlaneseq
  %v4720 = vshrl.u32 %v4719, 7
  %v4721 = vsub.s32 %v4718, %v4720
  %v4722 = vrot.slane %v3803, %v4721
  %v4724 = vunpack.c.l.s4 1966171168
  %v4725 = vunpack.c.0.s8 %v4724
  %v4726 = vlaneseq
  %v4727 = vshrl.u32 %v4726, 7
  %v4728 = vsub.s32 %v4725, %v4727
  %v4729 = vrot.slane %v4715, %v4728
  %v4730 = vcombine.high %v4722, %v4722
  %v4731 = vcombine.high %v4729, %v4729
  %v4733 = vunpack.c.l.s4 1966171168
  %v4734 = vunpack.c.0.s8 %v4733
  %v4735 = vlaneseq
  %v4736 = vshrl.u32 %v4735, 7
  %v4737 = vsub.s32 %v4734, %v4736
  %v4738 = vrot.slane %v4722, %v4737
  %v4740 = vunpack.c.l.s4 1966171168
  %v4741 = vunpack.c.0.s8 %v4740
  %v4742 = vlaneseq
  %v4743 = vshrl.u32 %v4742, 7
  %v4744 = vsub.s32 %v4741, %v4743
  %v4745 = vrot.slane %v4729, %v4744
  %v4747 = vunpack.c.l.s4 1966171168
  %v4748 = vunpack.c.0.s8 %v4747
  %v4749 = vlaneseq
  %v4750 = vshrl.u32 %v4749, 7
  %v4751 = vsub.s32 %v4748, %v4750
  %v4752 = vrot.slane %v4730, %v4751
  %v4754 = vunpack.c.l.s4 1966171168
  %v4755 = vunpack.c.0.s8 %v4754
  %v4756 = vlaneseq
  %v4757 = vshrl.u32 %v4756, 7
  %v4758 = vsub.s32 %v4755, %v4757
  %v4759 = vrot.slane %v4731, %v4758
  %v4760 = vcombine.high %v4738, %v4738
  %v4761 = vcombine.high %v4745, %v4745
  %v4762 = vcombine.high %v4752, %v4752
  %v4763 = vcombine.high %v4759, %v4759
  %v4764 = vcombine.high %v3808, %v3808
  %v4766 = vunpack.c.l.s4 1966171168
  %v4767 = vunpack.c.0.s8 %v4766
  %v4768 = vlaneseq
  %v4769 = vshrl.u32 %v4768, 7
  %v4770 = vsub.s32 %v4767, %v4769
  %v4771 = vrot.slane %v3808, %v4770
  %v4773 = vunpack.c.l.s4 1966171168
  %v4774 = vunpack.c.0.s8 %v4773
  %v4775 = vlaneseq
  %v4776 = vshrl.u32 %v4775, 7
  %v4777 = vsub.s32 %v4774, %v4776
  %v4778 = vrot.slane %v4764, %v4777
  %v4779 = vcombine.high %v4771, %v4771
  %v4780 = vcombine.high %v4778, %v4778
  %v4782 = vunpack.c.l.s4 1966171168
  %v4783 = vunpack.c.0.s8 %v4782
  %v4784 = vlaneseq
  %v4785 = vshrl.u32 %v4784, 7
  %v4786 = vsub.s32 %v4783, %v4785
  %v4787 = vrot.slane %v4771, %v4786
  %v4789 = vunpack.c.l.s4 1966171168
  %v4790 = vunpack.c.0.s8 %v4789
  %v4791 = vlaneseq
  %v4792 = vshrl.u32 %v4791, 7
  %v4793 = vsub.s32 %v4790, %v4792
  %v4794 = vrot.slane %v4778, %v4793
  %v4796 = vunpack.c.l.s4 1966171168
  %v4797 = vunpack.c.0.s8 %v4796
  %v4798 = vlaneseq
  %v4799 = vshrl.u32 %v4798, 7
  %v4800 = vsub.s32 %v4797, %v4799
  %v4801 = vrot.slane %v4779, %v4800
  %v4803 = vunpack.c.l.s4 1966171168
  %v4804 = vunpack.c.0.s8 %v4803
  %v4805 = vlaneseq
  %v4806 = vshrl.u32 %v4805, 7
  %v4807 = vsub.s32 %v4804, %v4806
  %v4808 = vrot.slane %v4780, %v4807
  %v4809 = vcombine.high %v4787, %v4787
  %v4810 = vcombine.high %v4794, %v4794
  %v4811 = vcombine.high %v4801, %v4801
  %v4812 = vcombine.high %v4808, %v4808
  %v4813 = vcombine.high %v3813, %v3813
  %v4815 = vunpack.c.l.s4 1966171168
  %v4816 = vunpack.c.0.s8 %v4815
  %v4817 = vlaneseq
  %v4818 = vshrl.u32 %v4817, 7
  %v4819 = vsub.s32 %v4816, %v4818
  %v4820 = vrot.slane %v3813, %v4819
  %v4822 = vunpack.c.l.s4 1966171168
  %v4823 = vunpack.c.0.s8 %v4822
  %v4824 = vlaneseq
  %v4825 = vshrl.u32 %v4824, 7
  %v4826 = vsub.s32 %v4823, %v4825
  %v4827 = vrot.slane %v4813, %v4826
  %v4828 = vcombine.high %v4820, %v4820
  %v4829 = vcombine.high %v4827, %v4827
  %v4831 = vunpack.c.l.s4 1966171168
  %v4832 = vunpack.c.0.s8 %v4831
  %v4833 = vlaneseq
  %v4834 = vshrl.u32 %v4833, 7
  %v4835 = vsub.s32 %v4832, %v4834
  %v4836 = vrot.slane %v4820, %v4835
  %v4838 = vunpack.c.l.s4 1966171168
  %v4839 = vunpack.c.0.s8 %v4838
  %v4840 = vlaneseq
  %v4841 = vshrl.u32 %v4840, 7
  %v4842 = vsub.s32 %v4839, %v4841
  %v4843 = vrot.slane %v4827, %v4842
  %v4845 = vunpack.c.l.s4 1966171168
  %v4846 = vunpack.c.0.s8 %v4845
  %v4847 = vlaneseq
  %v4848 = vshrl.u32 %v4847, 7
  %v4849 = vsub.s32 %v4846, %v4848
  %v4850 = vrot.slane %v4828, %v4849
  %v4852 = vunpack.c.l.s4 1966171168
  %v4853 = vunpack.c.0.s8 %v4852
  %v4854 = vlaneseq
  %v4855 = vshrl.u32 %v4854, 7
  %v4856 = vsub.s32 %v4853, %v4855
  %v4857 = vrot.slane %v4829, %v4856
  %v4858 = vcombine.high %v4836, %v4836
  %v4859 = vcombine.high %v4843, %v4843
  %v4860 = vcombine.high %v4850, %v4850
  %v4861 = vcombine.high %v4857, %v4857
  %v4862 = vcombine.high %v3818, %v3818
  %v4864 = vunpack.c.l.s4 1966171168
  %v4865 = vunpack.c.0.s8 %v4864
  %v4866 = vlaneseq
  %v4867 = vshrl.u32 %v4866, 7
  %v4868 = vsub.s32 %v4865, %v4867
  %v4869 = vrot.slane %v3818, %v4868
  %v4871 = vunpack.c.l.s4 1966171168
  %v4872 = vunpack.c.0.s8 %v4871
  %v4873 = vlaneseq
  %v4874 = vshrl.u32 %v4873, 7
  %v4875 = vsub.s32 %v4872, %v4874
  %v4876 = vrot.slane %v4862, %v4875
  %v4877 = vcombine.high %v4869, %v4869
  %v4878 = vcombine.high %v4876, %v4876
  %v4880 = vunpack.c.l.s4 1966171168
  %v4881 = vunpack.c.0.s8 %v4880
  %v4882 = vlaneseq
  %v4883 = vshrl.u32 %v4882, 7
  %v4884 = vsub.s32 %v4881, %v4883
  %v4885 = vrot.slane %v4869, %v4884
  %v4887 = vunpack.c.l.s4 1966171168
  %v4888 = vunpack.c.0.s8 %v4887
  %v4889 = vlaneseq
  %v4890 = vshrl.u32 %v4889, 7
  %v4891 = vsub.s32 %v4888, %v4890
  %v4892 = vrot.slane %v4876, %v4891
  %v4894 = vunpack.c.l.s4 1966171168
  %v4895 = vunpack.c.0.s8 %v4894
  %v4896 = vlaneseq
  %v4897 = vshrl.u32 %v4896, 7
  %v4898 = vsub.s32 %v4895, %v4897
  %v4899 = vrot.slane %v4877, %v4898
  %v4901 = vunpack.c.l.s4 1966171168
  %v4902 = vunpack.c.0.s8 %v4901
  %v4903 = vlaneseq
  %v4904 = vshrl.u32 %v4903, 7
  %v4905 = vsub.s32 %v4902, %v4904
  %v4906 = vrot.slane %v4878, %v4905
  %v4907 = vcombine.high %v4885, %v4885
  %v4908 = vcombine.high %v4892, %v4892
  %v4909 = vcombine.high %v4899, %v4899
  %v4910 = vcombine.high %v4906, %v4906
  %v4911 = vcombine.high %v3823, %v3823
  %v4913 = vunpack.c.l.s4 1966171168
  %v4914 = vunpack.c.0.s8 %v4913
  %v4915 = vlaneseq
  %v4916 = vshrl.u32 %v4915, 7
  %v4917 = vsub.s32 %v4914, %v4916
  %v4918 = vrot.slane %v3823, %v4917
  %v4920 = vunpack.c.l.s4 1966171168
  %v4921 = vunpack.c.0.s8 %v4920
  %v4922 = vlaneseq
  %v4923 = vshrl.u32 %v4922, 7
  %v4924 = vsub.s32 %v4921, %v4923
  %v4925 = vrot.slane %v4911, %v4924
  %v4926 = vcombine.high %v4918, %v4918
  %v4927 = vcombine.high %v4925, %v4925
  %v4929 = vunpack.c.l.s4 1966171168
  %v4930 = vunpack.c.0.s8 %v4929
  %v4931 = vlaneseq
  %v4932 = vshrl.u32 %v4931, 7
  %v4933 = vsub.s32 %v4930, %v4932
  %v4934 = vrot.slane %v4918, %v4933
  %v4936 = vunpack.c.l.s4 1966171168
  %v4937 = vunpack.c.0.s8 %v4936
  %v4938 = vlaneseq
  %v4939 = vshrl.u32 %v4938, 7
  %v4940 = vsub.s32 %v4937, %v4939
  %v4941 = vrot.slane %v4925, %v4940
  %v4943 = vunpack.c.l.s4 1966171168
  %v4944 = vunpack.c.0.s8 %v4943
  %v4945 = vlaneseq
  %v4946 = vshrl.u32 %v4945, 7
  %v4947 = vsub.s32 %v4944, %v4946
  %v4948 = vrot.slane %v4926, %v4947
  %v4950 = vunpack.c.l.s4 1966171168
  %v4951 = vunpack.c.0.s8 %v4950
  %v4952 = vlaneseq
  %v4953 = vshrl.u32 %v4952, 7
  %v4954 = vsub.s32 %v4951, %v4953
  %v4955 = vrot.slane %v4927, %v4954
  %v4956 = vcombine.high %v4934, %v4934
  %v4957 = vcombine.high %v4941, %v4941
  %v4958 = vcombine.high %v4948, %v4948
  %v4959 = vcombine.high %v4955, %v4955
  %v4960 = vcombine.high %v3828, %v3828
  %v4962 = vunpack.c.l.s4 1966171168
  %v4963 = vunpack.c.0.s8 %v4962
  %v4964 = vlaneseq
  %v4965 = vshrl.u32 %v4964, 7
  %v4966 = vsub.s32 %v4963, %v4965
  %v4967 = vrot.slane %v3828, %v4966
  %v4969 = vunpack.c.l.s4 1966171168
  %v4970 = vunpack.c.0.s8 %v4969
  %v4971 = vlaneseq
  %v4972 = vshrl.u32 %v4971, 7
  %v4973 = vsub.s32 %v4970, %v4972
  %v4974 = vrot.slane %v4960, %v4973
  %v4975 = vcombine.high %v4967, %v4967
  %v4976 = vcombine.high %v4974, %v4974
  %v4978 = vunpack.c.l.s4 1966171168
  %v4979 = vunpack.c.0.s8 %v4978
  %v4980 = vlaneseq
  %v4981 = vshrl.u32 %v4980, 7
  %v4982 = vsub.s32 %v4979, %v4981
  %v4983 = vrot.slane %v4967, %v4982
  %v4985 = vunpack.c.l.s4 1966171168
  %v4986 = vunpack.c.0.s8 %v4985
  %v4987 = vlaneseq
  %v4988 = vshrl.u32 %v4987, 7
  %v4989 = vsub.s32 %v4986, %v4988
  %v4990 = vrot.slane %v4974, %v4989
  %v4992 = vunpack.c.l.s4 1966171168
  %v4993 = vunpack.c.0.s8 %v4992
  %v4994 = vlaneseq
  %v4995 = vshrl.u32 %v4994, 7
  %v4996 = vsub.s32 %v4993, %v4995
  %v4997 = vrot.slane %v4975, %v4996
  %v4999 = vunpack.c.l.s4 1966171168
  %v5000 = vunpack.c.0.s8 %v4999
  %v5001 = vlaneseq
  %v5002 = vshrl.u32 %v5001, 7
  %v5003 = vsub.s32 %v5000, %v5002
  %v5004 = vrot.slane %v4976, %v5003
  %v5005 = vcombine.high %v4983, %v4983
  %v5006 = vcombine.high %v4990, %v4990
  %v5007 = vcombine.high %v4997, %v4997
  %v5008 = vcombine.high %v5004, %v5004
  %v5009 = vcombine.high %v3833, %v3833
  %v5011 = vunpack.c.l.s4 1966171168
  %v5012 = vunpack.c.0.s8 %v5011
  %v5013 = vlaneseq
  %v5014 = vshrl.u32 %v5013, 7
  %v5015 = vsub.s32 %v5012, %v5014
  %v5016 = vrot.slane %v3833, %v5015
  %v5018 = vunpack.c.l.s4 1966171168
  %v5019 = vunpack.c.0.s8 %v5018
  %v5020 = vlaneseq
  %v5021 = vshrl.u32 %v5020, 7
  %v5022 = vsub.s32 %v5019, %v5021
  %v5023 = vrot.slane %v5009, %v5022
  %v5024 = vcombine.high %v5016, %v5016
  %v5025 = vcombine.high %v5023, %v5023
  %v5027 = vunpack.c.l.s4 1966171168
  %v5028 = vunpack.c.0.s8 %v5027
  %v5029 = vlaneseq
  %v5030 = vshrl.u32 %v5029, 7
  %v5031 = vsub.s32 %v5028, %v5030
  %v5032 = vrot.slane %v5016, %v5031
  %v5034 = vunpack.c.l.s4 1966171168
  %v5035 = vunpack.c.0.s8 %v5034
  %v5036 = vlaneseq
  %v5037 = vshrl.u32 %v5036, 7
  %v5038 = vsub.s32 %v5035, %v5037
  %v5039 = vrot.slane %v5023, %v5038
  %v5041 = vunpack.c.l.s4 1966171168
  %v5042 = vunpack.c.0.s8 %v5041
  %v5043 = vlaneseq
  %v5044 = vshrl.u32 %v5043, 7
  %v5045 = vsub.s32 %v5042, %v5044
  %v5046 = vrot.slane %v5024, %v5045
  %v5048 = vunpack.c.l.s4 1966171168
  %v5049 = vunpack.c.0.s8 %v5048
  %v5050 = vlaneseq
  %v5051 = vshrl.u32 %v5050, 7
  %v5052 = vsub.s32 %v5049, %v5051
  %v5053 = vrot.slane %v5025, %v5052
  %v5054 = vcombine.high %v5032, %v5032
  %v5055 = vcombine.high %v5039, %v5039
  %v5056 = vcombine.high %v5046, %v5046
  %v5057 = vcombine.high %v5053, %v5053
  %v5058 = vcombine.high %v3838, %v3838
  %v5060 = vunpack.c.l.s4 1966171168
  %v5061 = vunpack.c.0.s8 %v5060
  %v5062 = vlaneseq
  %v5063 = vshrl.u32 %v5062, 7
  %v5064 = vsub.s32 %v5061, %v5063
  %v5065 = vrot.slane %v3838, %v5064
  %v5067 = vunpack.c.l.s4 1966171168
  %v5068 = vunpack.c.0.s8 %v5067
  %v5069 = vlaneseq
  %v5070 = vshrl.u32 %v5069, 7
  %v5071 = vsub.s32 %v5068, %v5070
  %v5072 = vrot.slane %v5058, %v5071
  %v5073 = vcombine.high %v5065, %v5065
  %v5074 = vcombine.high %v5072, %v5072
  %v5076 = vunpack.c.l.s4 1966171168
  %v5077 = vunpack.c.0.s8 %v5076
  %v5078 = vlaneseq
  %v5079 = vshrl.u32 %v5078, 7
  %v5080 = vsub.s32 %v5077, %v5079
  %v5081 = vrot.slane %v5065, %v5080
  %v5083 = vunpack.c.l.s4 1966171168
  %v5084 = vunpack.c.0.s8 %v5083
  %v5085 = vlaneseq
  %v5086 = vshrl.u32 %v5085, 7
  %v5087 = vsub.s32 %v5084, %v5086
  %v5088 = vrot.slane %v5072, %v5087
  %v5090 = vunpack.c.l.s4 1966171168
  %v5091 = vunpack.c.0.s8 %v5090
  %v5092 = vlaneseq
  %v5093 = vshrl.u32 %v5092, 7
  %v5094 = vsub.s32 %v5091, %v5093
  %v5095 = vrot.slane %v5073, %v5094
  %v5097 = vunpack.c.l.s4 1966171168
  %v5098 = vunpack.c.0.s8 %v5097
  %v5099 = vlaneseq
  %v5100 = vshrl.u32 %v5099, 7
  %v5101 = vsub.s32 %v5098, %v5100
  %v5102 = vrot.slane %v5074, %v5101
  %v5103 = vcombine.high %v5081, %v5081
  %v5104 = vcombine.high %v5088, %v5088
  %v5105 = vcombine.high %v5095, %v5095
  %v5106 = vcombine.high %v5102, %v5102
  %v5107 = vcombine.high %v3843, %v3843
  %v5109 = vunpack.c.l.s4 1966171168
  %v5110 = vunpack.c.0.s8 %v5109
  %v5111 = vlaneseq
  %v5112 = vshrl.u32 %v5111, 7
  %v5113 = vsub.s32 %v5110, %v5112
  %v5114 = vrot.slane %v3843, %v5113
  %v5116 = vunpack.c.l.s4 1966171168
  %v5117 = vunpack.c.0.s8 %v5116
  %v5118 = vlaneseq
  %v5119 = vshrl.u32 %v5118, 7
  %v5120 = vsub.s32 %v5117, %v5119
  %v5121 = vrot.slane %v5107, %v5120
  %v5122 = vcombine.high %v5114, %v5114
  %v5123 = vcombine.high %v5121, %v5121
  %v5125 = vunpack.c.l.s4 1966171168
  %v5126 = vunpack.c.0.s8 %v5125
  %v5127 = vlaneseq
  %v5128 = vshrl.u32 %v5127, 7
  %v5129 = vsub.s32 %v5126, %v5128
  %v5130 = vrot.slane %v5114, %v5129
  %v5132 = vunpack.c.l.s4 1966171168
  %v5133 = vunpack.c.0.s8 %v5132
  %v5134 = vlaneseq
  %v5135 = vshrl.u32 %v5134, 7
  %v5136 = vsub.s32 %v5133, %v5135
  %v5137 = vrot.slane %v5121, %v5136
  %v5139 = vunpack.c.l.s4 1966171168
  %v5140 = vunpack.c.0.s8 %v5139
  %v5141 = vlaneseq
  %v5142 = vshrl.u32 %v5141, 7
  %v5143 = vsub.s32 %v5140, %v5142
  %v5144 = vrot.slane %v5122, %v5143
  %v5146 = vunpack.c.l.s4 1966171168
  %v5147 = vunpack.c.0.s8 %v5146
  %v5148 = vlaneseq
  %v5149 = vshrl.u32 %v5148, 7
  %v5150 = vsub.s32 %v5147, %v5149
  %v5151 = vrot.slane %v5123, %v5150
  %v5152 = vcombine.high %v5130, %v5130
  %v5153 = vcombine.high %v5137, %v5137
  %v5154 = vcombine.high %v5144, %v5144
  %v5155 = vcombine.high %v5151, %v5151
  %v5156 = vcombine.high %v3848, %v3848
  %v5158 = vunpack.c.l.s4 1966171168
  %v5159 = vunpack.c.0.s8 %v5158
  %v5160 = vlaneseq
  %v5161 = vshrl.u32 %v5160, 7
  %v5162 = vsub.s32 %v5159, %v5161
  %v5163 = vrot.slane %v3848, %v5162
  %v5165 = vunpack.c.l.s4 1966171168
  %v5166 = vunpack.c.0.s8 %v5165
  %v5167 = vlaneseq
  %v5168 = vshrl.u32 %v5167, 7
  %v5169 = vsub.s32 %v5166, %v5168
  %v5170 = vrot.slane %v5156, %v5169
  %v5171 = vcombine.high %v5163, %v5163
  %v5172 = vcombine.high %v5170, %v5170
  %v5174 = vunpack.c.l.s4 1966171168
  %v5175 = vunpack.c.0.s8 %v5174
  %v5176 = vlaneseq
  %v5177 = vshrl.u32 %v5176, 7
  %v5178 = vsub.s32 %v5175, %v5177
  %v5179 = vrot.slane %v5163, %v5178
  %v5181 = vunpack.c.l.s4 1966171168
  %v5182 = vunpack.c.0.s8 %v5181
  %v5183 = vlaneseq
  %v5184 = vshrl.u32 %v5183, 7
  %v5185 = vsub.s32 %v5182, %v5184
  %v5186 = vrot.slane %v5170, %v5185
  %v5188 = vunpack.c.l.s4 1966171168
  %v5189 = vunpack.c.0.s8 %v5188
  %v5190 = vlaneseq
  %v5191 = vshrl.u32 %v5190, 7
  %v5192 = vsub.s32 %v5189, %v5191
  %v5193 = vrot.slane %v5171, %v5192
  %v5195 = vunpack.c.l.s4 1966171168
  %v5196 = vunpack.c.0.s8 %v5195
  %v5197 = vlaneseq
  %v5198 = vshrl.u32 %v5197, 7
  %v5199 = vsub.s32 %v5196, %v5198
  %v5200 = vrot.slane %v5172, %v5199
  %v5201 = vcombine.high %v5179, %v5179
  %v5202 = vcombine.high %v5186, %v5186
  %v5203 = vcombine.high %v5193, %v5193
  %v5204 = vcombine.high %v5200, %v5200
  %v5205 = vcombine.high %v3853, %v3853
  %v5207 = vunpack.c.l.s4 1966171168
  %v5208 = vunpack.c.0.s8 %v5207
  %v5209 = vlaneseq
  %v5210 = vshrl.u32 %v5209, 7
  %v5211 = vsub.s32 %v5208, %v5210
  %v5212 = vrot.slane %v3853, %v5211
  %v5214 = vunpack.c.l.s4 1966171168
  %v5215 = vunpack.c.0.s8 %v5214
  %v5216 = vlaneseq
  %v5217 = vshrl.u32 %v5216, 7
  %v5218 = vsub.s32 %v5215, %v5217
  %v5219 = vrot.slane %v5205, %v5218
  %v5220 = vcombine.high %v5212, %v5212
  %v5221 = vcombine.high %v5219, %v5219
  %v5223 = vunpack.c.l.s4 1966171168
  %v5224 = vunpack.c.0.s8 %v5223
  %v5225 = vlaneseq
  %v5226 = vshrl.u32 %v5225, 7
  %v5227 = vsub.s32 %v5224, %v5226
  %v5228 = vrot.slane %v5212, %v5227
  %v5230 = vunpack.c.l.s4 1966171168
  %v5231 = vunpack.c.0.s8 %v5230
  %v5232 = vlaneseq
  %v5233 = vshrl.u32 %v5232, 7
  %v5234 = vsub.s32 %v5231, %v5233
  %v5235 = vrot.slane %v5219, %v5234
  %v5237 = vunpack.c.l.s4 1966171168
  %v5238 = vunpack.c.0.s8 %v5237
  %v5239 = vlaneseq
  %v5240 = vshrl.u32 %v5239, 7
  %v5241 = vsub.s32 %v5238, %v5240
  %v5242 = vrot.slane %v5220, %v5241
  %v5244 = vunpack.c.l.s4 1966171168
  %v5245 = vunpack.c.0.s8 %v5244
  %v5246 = vlaneseq
  %v5247 = vshrl.u32 %v5246, 7
  %v5248 = vsub.s32 %v5245, %v5247
  %v5249 = vrot.slane %v5221, %v5248
  %v5250 = vcombine.high %v5228, %v5228
  %v5251 = vcombine.high %v5235, %v5235
  %v5252 = vcombine.high %v5242, %v5242
  %v5253 = vcombine.high %v5249, %v5249
  %v5254 = vcombine.high %v3858, %v3858
  %v5256 = vunpack.c.l.s4 1966171168
  %v5257 = vunpack.c.0.s8 %v5256
  %v5258 = vlaneseq
  %v5259 = vshrl.u32 %v5258, 7
  %v5260 = vsub.s32 %v5257, %v5259
  %v5261 = vrot.slane %v3858, %v5260
  %v5263 = vunpack.c.l.s4 1966171168
  %v5264 = vunpack.c.0.s8 %v5263
  %v5265 = vlaneseq
  %v5266 = vshrl.u32 %v5265, 7
  %v5267 = vsub.s32 %v5264, %v5266
  %v5268 = vrot.slane %v5254, %v5267
  %v5269 = vcombine.high %v5261, %v5261
  %v5270 = vcombine.high %v5268, %v5268
  %v5272 = vunpack.c.l.s4 1966171168
  %v5273 = vunpack.c.0.s8 %v5272
  %v5274 = vlaneseq
  %v5275 = vshrl.u32 %v5274, 7
  %v5276 = vsub.s32 %v5273, %v5275
  %v5277 = vrot.slane %v5261, %v5276
  %v5279 = vunpack.c.l.s4 1966171168
  %v5280 = vunpack.c.0.s8 %v5279
  %v5281 = vlaneseq
  %v5282 = vshrl.u32 %v5281, 7
  %v5283 = vsub.s32 %v5280, %v5282
  %v5284 = vrot.slane %v5268, %v5283
  %v5286 = vunpack.c.l.s4 1966171168
  %v5287 = vunpack.c.0.s8 %v5286
  %v5288 = vlaneseq
  %v5289 = vshrl.u32 %v5288, 7
  %v5290 = vsub.s32 %v5287, %v5289
  %v5291 = vrot.slane %v5269, %v5290
  %v5293 = vunpack.c.l.s4 1966171168
  %v5294 = vunpack.c.0.s8 %v5293
  %v5295 = vlaneseq
  %v5296 = vshrl.u32 %v5295, 7
  %v5297 = vsub.s32 %v5294, %v5296
  %v5298 = vrot.slane %v5270, %v5297
  %v5299 = vcombine.high %v5277, %v5277
  %v5300 = vcombine.high %v5284, %v5284
  %v5301 = vcombine.high %v5291, %v5291
  %v5302 = vcombine.high %v5298, %v5298
  %v5303 = vcombine.high %v3863, %v3863
  %v5305 = vunpack.c.l.s4 1966171168
  %v5306 = vunpack.c.0.s8 %v5305
  %v5307 = vlaneseq
  %v5308 = vshrl.u32 %v5307, 7
  %v5309 = vsub.s32 %v5306, %v5308
  %v5310 = vrot.slane %v3863, %v5309
  %v5312 = vunpack.c.l.s4 1966171168
  %v5313 = vunpack.c.0.s8 %v5312
  %v5314 = vlaneseq
  %v5315 = vshrl.u32 %v5314, 7
  %v5316 = vsub.s32 %v5313, %v5315
  %v5317 = vrot.slane %v5303, %v5316
  %v5318 = vcombine.high %v5310, %v5310
  %v5319 = vcombine.high %v5317, %v5317
  %v5321 = vunpack.c.l.s4 1966171168
  %v5322 = vunpack.c.0.s8 %v5321
  %v5323 = vlaneseq
  %v5324 = vshrl.u32 %v5323, 7
  %v5325 = vsub.s32 %v5322, %v5324
  %v5326 = vrot.slane %v5310, %v5325
  %v5328 = vunpack.c.l.s4 1966171168
  %v5329 = vunpack.c.0.s8 %v5328
  %v5330 = vlaneseq
  %v5331 = vshrl.u32 %v5330, 7
  %v5332 = vsub.s32 %v5329, %v5331
  %v5333 = vrot.slane %v5317, %v5332
  %v5335 = vunpack.c.l.s4 1966171168
  %v5336 = vunpack.c.0.s8 %v5335
  %v5337 = vlaneseq
  %v5338 = vshrl.u32 %v5337, 7
  %v5339 = vsub.s32 %v5336, %v5338
  %v5340 = vrot.slane %v5318, %v5339
  %v5342 = vunpack.c.l.s4 1966171168
  %v5343 = vunpack.c.0.s8 %v5342
  %v5344 = vlaneseq
  %v5345 = vshrl.u32 %v5344, 7
  %v5346 = vsub.s32 %v5343, %v5345
  %v5347 = vrot.slane %v5319, %v5346
  %v5348 = vcombine.high %v5326, %v5326
  %v5349 = vcombine.high %v5333, %v5333
  %v5350 = vcombine.high %v5340, %v5340
  %v5351 = vcombine.high %v5347, %v5347
  %v5352 = vcombine.high %v3868, %v3868
  %v5354 = vunpack.c.l.s4 1966171168
  %v5355 = vunpack.c.0.s8 %v5354
  %v5356 = vlaneseq
  %v5357 = vshrl.u32 %v5356, 7
  %v5358 = vsub.s32 %v5355, %v5357
  %v5359 = vrot.slane %v3868, %v5358
  %v5361 = vunpack.c.l.s4 1966171168
  %v5362 = vunpack.c.0.s8 %v5361
  %v5363 = vlaneseq
  %v5364 = vshrl.u32 %v5363, 7
  %v5365 = vsub.s32 %v5362, %v5364
  %v5366 = vrot.slane %v5352, %v5365
  %v5367 = vcombine.high %v5359, %v5359
  %v5368 = vcombine.high %v5366, %v5366
  %v5370 = vunpack.c.l.s4 1966171168
  %v5371 = vunpack.c.0.s8 %v5370
  %v5372 = vlaneseq
  %v5373 = vshrl.u32 %v5372, 7
  %v5374 = vsub.s32 %v5371, %v5373
  %v5375 = vrot.slane %v5359, %v5374
  %v5377 = vunpack.c.l.s4 1966171168
  %v5378 = vunpack.c.0.s8 %v5377
  %v5379 = vlaneseq
  %v5380 = vshrl.u32 %v5379, 7
  %v5381 = vsub.s32 %v5378, %v5380
  %v5382 = vrot.slane %v5366, %v5381
  %v5384 = vunpack.c.l.s4 1966171168
  %v5385 = vunpack.c.0.s8 %v5384
  %v5386 = vlaneseq
  %v5387 = vshrl.u32 %v5386, 7
  %v5388 = vsub.s32 %v5385, %v5387
  %v5389 = vrot.slane %v5367, %v5388
  %v5391 = vunpack.c.l.s4 1966171168
  %v5392 = vunpack.c.0.s8 %v5391
  %v5393 = vlaneseq
  %v5394 = vshrl.u32 %v5393, 7
  %v5395 = vsub.s32 %v5392, %v5394
  %v5396 = vrot.slane %v5368, %v5395
  %v5397 = vcombine.high %v5375, %v5375
  %v5398 = vcombine.high %v5382, %v5382
  %v5399 = vcombine.high %v5389, %v5389
  %v5400 = vcombine.high %v5396, %v5396
  %v5401 = vcombine.high %v3873, %v3873
  %v5403 = vunpack.c.l.s4 1966171168
  %v5404 = vunpack.c.0.s8 %v5403
  %v5405 = vlaneseq
  %v5406 = vshrl.u32 %v5405, 7
  %v5407 = vsub.s32 %v5404, %v5406
  %v5408 = vrot.slane %v3873, %v5407
  %v5410 = vunpack.c.l.s4 1966171168
  %v5411 = vunpack.c.0.s8 %v5410
  %v5412 = vlaneseq
  %v5413 = vshrl.u32 %v5412, 7
  %v5414 = vsub.s32 %v5411, %v5413
  %v5415 = vrot.slane %v5401, %v5414
  %v5416 = vcombine.high %v5408, %v5408
  %v5417 = vcombine.high %v5415, %v5415
  %v5419 = vunpack.c.l.s4 1966171168
  %v5420 = vunpack.c.0.s8 %v5419
  %v5421 = vlaneseq
  %v5422 = vshrl.u32 %v5421, 7
  %v5423 = vsub.s32 %v5420, %v5422
  %v5424 = vrot.slane %v5408, %v5423
  %v5426 = vunpack.c.l.s4 1966171168
  %v5427 = vunpack.c.0.s8 %v5426
  %v5428 = vlaneseq
  %v5429 = vshrl.u32 %v5428, 7
  %v5430 = vsub.s32 %v5427, %v5429
  %v5431 = vrot.slane %v5415, %v5430
  %v5433 = vunpack.c.l.s4 1966171168
  %v5434 = vunpack.c.0.s8 %v5433
  %v5435 = vlaneseq
  %v5436 = vshrl.u32 %v5435, 7
  %v5437 = vsub.s32 %v5434, %v5436
  %v5438 = vrot.slane %v5416, %v5437
  %v5440 = vunpack.c.l.s4 1966171168
  %v5441 = vunpack.c.0.s8 %v5440
  %v5442 = vlaneseq
  %v5443 = vshrl.u32 %v5442, 7
  %v5444 = vsub.s32 %v5441, %v5443
  %v5445 = vrot.slane %v5417, %v5444
  %v5446 = vcombine.high %v5424, %v5424
  %v5447 = vcombine.high %v5431, %v5431
  %v5448 = vcombine.high %v5438, %v5438
  %v5449 = vcombine.high %v5445, %v5445
  %v5450 = vcombine.high %v3878, %v3878
  %v5452 = vunpack.c.l.s4 1966171168
  %v5453 = vunpack.c.0.s8 %v5452
  %v5454 = vlaneseq
  %v5455 = vshrl.u32 %v5454, 7
  %v5456 = vsub.s32 %v5453, %v5455
  %v5457 = vrot.slane %v3878, %v5456
  %v5459 = vunpack.c.l.s4 1966171168
  %v5460 = vunpack.c.0.s8 %v5459
  %v5461 = vlaneseq
  %v5462 = vshrl.u32 %v5461, 7
  %v5463 = vsub.s32 %v5460, %v5462
  %v5464 = vrot.slane %v5450, %v5463
  %v5465 = vcombine.high %v5457, %v5457
  %v5466 = vcombine.high %v5464, %v5464
  %v5468 = vunpack.c.l.s4 1966171168
  %v5469 = vunpack.c.0.s8 %v5468
  %v5470 = vlaneseq
  %v5471 = vshrl.u32 %v5470, 7
  %v5472 = vsub.s32 %v5469, %v5471
  %v5473 = vrot.slane %v5457, %v5472
  %v5475 = vunpack.c.l.s4 1966171168
  %v5476 = vunpack.c.0.s8 %v5475
  %v5477 = vlaneseq
  %v5478 = vshrl.u32 %v5477, 7
  %v5479 = vsub.s32 %v5476, %v5478
  %v5480 = vrot.slane %v5464, %v5479
  %v5482 = vunpack.c.l.s4 1966171168
  %v5483 = vunpack.c.0.s8 %v5482
  %v5484 = vlaneseq
  %v5485 = vshrl.u32 %v5484, 7
  %v5486 = vsub.s32 %v5483, %v5485
  %v5487 = vrot.slane %v5465, %v5486
  %v5489 = vunpack.c.l.s4 1966171168
  %v5490 = vunpack.c.0.s8 %v5489
  %v5491 = vlaneseq
  %v5492 = vshrl.u32 %v5491, 7
  %v5493 = vsub.s32 %v5490, %v5492
  %v5494 = vrot.slane %v5466, %v5493
  %v5495 = vcombine.high %v5473, %v5473
  %v5496 = vcombine.high %v5480, %v5480
  %v5497 = vcombine.high %v5487, %v5487
  %v5498 = vcombine.high %v5494, %v5494
  %v5499 = vcombine.high %v3883, %v3883
  %v5501 = vunpack.c.l.s4 1966171168
  %v5502 = vunpack.c.0.s8 %v5501
  %v5503 = vlaneseq
  %v5504 = vshrl.u32 %v5503, 7
  %v5505 = vsub.s32 %v5502, %v5504
  %v5506 = vrot.slane %v3883, %v5505
  %v5508 = vunpack.c.l.s4 1966171168
  %v5509 = vunpack.c.0.s8 %v5508
  %v5510 = vlaneseq
  %v5511 = vshrl.u32 %v5510, 7
  %v5512 = vsub.s32 %v5509, %v5511
  %v5513 = vrot.slane %v5499, %v5512
  %v5514 = vcombine.high %v5506, %v5506
  %v5515 = vcombine.high %v5513, %v5513
  %v5517 = vunpack.c.l.s4 1966171168
  %v5518 = vunpack.c.0.s8 %v5517
  %v5519 = vlaneseq
  %v5520 = vshrl.u32 %v5519, 7
  %v5521 = vsub.s32 %v5518, %v5520
  %v5522 = vrot.slane %v5506, %v5521
  %v5524 = vunpack.c.l.s4 1966171168
  %v5525 = vunpack.c.0.s8 %v5524
  %v5526 = vlaneseq
  %v5527 = vshrl.u32 %v5526, 7
  %v5528 = vsub.s32 %v5525, %v5527
  %v5529 = vrot.slane %v5513, %v5528
  %v5531 = vunpack.c.l.s4 1966171168
  %v5532 = vunpack.c.0.s8 %v5531
  %v5533 = vlaneseq
  %v5534 = vshrl.u32 %v5533, 7
  %v5535 = vsub.s32 %v5532, %v5534
  %v5536 = vrot.slane %v5514, %v5535
  %v5538 = vunpack.c.l.s4 1966171168
  %v5539 = vunpack.c.0.s8 %v5538
  %v5540 = vlaneseq
  %v5541 = vshrl.u32 %v5540, 7
  %v5542 = vsub.s32 %v5539, %v5541
  %v5543 = vrot.slane %v5515, %v5542
  %v5544 = vcombine.high %v5522, %v5522
  %v5545 = vcombine.high %v5529, %v5529
  %v5546 = vcombine.high %v5536, %v5536
  %v5547 = vcombine.high %v5543, %v5543
  %v5548 = vcombine.high %v3888, %v3888
  %v5550 = vunpack.c.l.s4 1966171168
  %v5551 = vunpack.c.0.s8 %v5550
  %v5552 = vlaneseq
  %v5553 = vshrl.u32 %v5552, 7
  %v5554 = vsub.s32 %v5551, %v5553
  %v5555 = vrot.slane %v3888, %v5554
  %v5557 = vunpack.c.l.s4 1966171168
  %v5558 = vunpack.c.0.s8 %v5557
  %v5559 = vlaneseq
  %v5560 = vshrl.u32 %v5559, 7
  %v5561 = vsub.s32 %v5558, %v5560
  %v5562 = vrot.slane %v5548, %v5561
  %v5563 = vcombine.high %v5555, %v5555
  %v5564 = vcombine.high %v5562, %v5562
  %v5566 = vunpack.c.l.s4 1966171168
  %v5567 = vunpack.c.0.s8 %v5566
  %v5568 = vlaneseq
  %v5569 = vshrl.u32 %v5568, 7
  %v5570 = vsub.s32 %v5567, %v5569
  %v5571 = vrot.slane %v5555, %v5570
  %v5573 = vunpack.c.l.s4 1966171168
  %v5574 = vunpack.c.0.s8 %v5573
  %v5575 = vlaneseq
  %v5576 = vshrl.u32 %v5575, 7
  %v5577 = vsub.s32 %v5574, %v5576
  %v5578 = vrot.slane %v5562, %v5577
  %v5580 = vunpack.c.l.s4 1966171168
  %v5581 = vunpack.c.0.s8 %v5580
  %v5582 = vlaneseq
  %v5583 = vshrl.u32 %v5582, 7
  %v5584 = vsub.s32 %v5581, %v5583
  %v5585 = vrot.slane %v5563, %v5584
  %v5587 = vunpack.c.l.s4 1966171168
  %v5588 = vunpack.c.0.s8 %v5587
  %v5589 = vlaneseq
  %v5590 = vshrl.u32 %v5589, 7
  %v5591 = vsub.s32 %v5588, %v5590
  %v5592 = vrot.slane %v5564, %v5591
  %v5593 = vcombine.high %v5571, %v5571
  %v5594 = vcombine.high %v5578, %v5578
  %v5595 = vcombine.high %v5585, %v5585
  %v5596 = vcombine.high %v5592, %v5592
  %v5597 = vcombine.high %v3893, %v3893
  %v5599 = vunpack.c.l.s4 1966171168
  %v5600 = vunpack.c.0.s8 %v5599
  %v5601 = vlaneseq
  %v5602 = vshrl.u32 %v5601, 7
  %v5603 = vsub.s32 %v5600, %v5602
  %v5604 = vrot.slane %v3893, %v5603
  %v5606 = vunpack.c.l.s4 1966171168
  %v5607 = vunpack.c.0.s8 %v5606
  %v5608 = vlaneseq
  %v5609 = vshrl.u32 %v5608, 7
  %v5610 = vsub.s32 %v5607, %v5609
  %v5611 = vrot.slane %v5597, %v5610
  %v5612 = vcombine.high %v5604, %v5604
  %v5613 = vcombine.high %v5611, %v5611
  %v5615 = vunpack.c.l.s4 1966171168
  %v5616 = vunpack.c.0.s8 %v5615
  %v5617 = vlaneseq
  %v5618 = vshrl.u32 %v5617, 7
  %v5619 = vsub.s32 %v5616, %v5618
  %v5620 = vrot.slane %v5604, %v5619
  %v5622 = vunpack.c.l.s4 1966171168
  %v5623 = vunpack.c.0.s8 %v5622
  %v5624 = vlaneseq
  %v5625 = vshrl.u32 %v5624, 7
  %v5626 = vsub.s32 %v5623, %v5625
  %v5627 = vrot.slane %v5611, %v5626
  %v5629 = vunpack.c.l.s4 1966171168
  %v5630 = vunpack.c.0.s8 %v5629
  %v5631 = vlaneseq
  %v5632 = vshrl.u32 %v5631, 7
  %v5633 = vsub.s32 %v5630, %v5632
  %v5634 = vrot.slane %v5612, %v5633
  %v5636 = vunpack.c.l.s4 1966171168
  %v5637 = vunpack.c.0.s8 %v5636
  %v5638 = vlaneseq
  %v5639 = vshrl.u32 %v5638, 7
  %v5640 = vsub.s32 %v5637, %v5639
  %v5641 = vrot.slane %v5613, %v5640
  %v5642 = vcombine.high %v5620, %v5620
  %v5643 = vcombine.high %v5627, %v5627
  %v5644 = vcombine.high %v5634, %v5634
  %v5645 = vcombine.high %v5641, %v5641
  %v5646 = vld [vmem:[%s3] sm:$0xff]
  %v5647 = vld [vmem:[%s3 + $0x8] sm:$0xff]
  %v5648 = vld [vmem:[%s3 + $0x10] sm:$0xff]
  %v5649 = vld [vmem:[%s3 + $0x18] sm:$0xff]
  %v5650 = vcombine.low %v3954, %v4174
  %v5651 = vcombine.low %v4369, %v4605
  %v5652 = vcombine.low %v4794, %v5008
  %v5653 = vcombine.low %v5250, %v5445
  %v5655 = vunpack.c.l.s4 1966171168
  %v5656 = vunpack.c.0.s8 %v5655
  %v5657 = vlaneseq
  %v5658 = vshrl.u32 %v5657, 7
  %v5659 = vsub.s32 %v5656, %v5658
  %v5660 = vrot.slane %v5650, %v5659
  %v5662 = vunpack.c.l.s4 1966171168
  %v5663 = vunpack.c.0.s8 %v5662
  %v5664 = vlaneseq
  %v5665 = vshrl.u32 %v5664, 7
  %v5666 = vsub.s32 %v5663, %v5665
  %v5667 = vrot.slane %v5651, %v5666
  %v5669 = vunpack.c.l.s4 1966171168
  %v5670 = vunpack.c.0.s8 %v5669
  %v5671 = vlaneseq
  %v5672 = vshrl.u32 %v5671, 7
  %v5673 = vsub.s32 %v5670, %v5672
  %v5674 = vrot.slane %v5652, %v5673
  %v5676 = vunpack.c.l.s4 1966171168
  %v5677 = vunpack.c.0.s8 %v5676
  %v5678 = vlaneseq
  %v5679 = vshrl.u32 %v5678, 7
  %v5680 = vsub.s32 %v5677, %v5679
  %v5681 = vrot.slane %v5653, %v5680
  %v5682 = vcombine.low %v5660, %v5667
  %v5683 = vcombine.low %v5674, %v5681
  %v5685 = vunpack.c.l.s4 1966171168
  %v5686 = vunpack.c.0.s8 %v5685
  %v5687 = vlaneseq
  %v5688 = vshrl.u32 %v5687, 7
  %v5689 = vsub.s32 %v5686, %v5688
  %v5690 = vrot.slane %v5682, %v5689
  %v5692 = vunpack.c.l.s4 1966171168
  %v5693 = vunpack.c.0.s8 %v5692
  %v5694 = vlaneseq
  %v5695 = vshrl.u32 %v5694, 7
  %v5696 = vsub.s32 %v5693, %v5695
  %v5697 = vrot.slane %v5683, %v5696
  %v5698 = vcombine.low %v5690, %v5697
  %vm5700 = vcmask 261120
  %v5702 = vsel %vm5700, 0.0, 0
  %5704 = vmatprep.subr.mxu0 0.0
  %5705 = vmatpush1.msra.mxu0 %v5646
  %5706 = vmatprep.subr.mxu0 0.0
  %5707 = vmatpush1.msra.mxu0 %v5647
  %5708 = vmatprep.subr.mxu0 0.0
  %5709 = vmatpush1.msra.mxu0 %v5648
  %5710 = vmatprep.subr.mxu0 0.0
  %5711 = vmatpush1.msra.mxu0 %v5649
  %5712 = vmatprep.subr.mxu0 0.0
  %5713 = vmatpush1.msra.mxu0 0.0
  %5714 = vmatprep.subr.mxu0 0.0
  %5715 = vmatpush1.msra.mxu0 0.0
  %5716 = vmatprep.subr.mxu0 0.0
  %5717 = vmatpush1.msra.mxu0 0.0
  %5718 = vmatprep.subr.mxu0 0.0
  %5719 = vmatpush1.msra.mxu0 0.0
  %5720 = vmatprep.subr.mxu0 0.0
  %5721 = vmatpush1.msra.mxu0 0.0
  %5722 = vmatprep.subr.mxu0 0.0
  %5723 = vmatpush1.msra.mxu0 0.0
  %5724 = vmatprep.subr.mxu0 0.0
  %5725 = vmatpush1.msra.mxu0 0.0
  %5726 = vmatprep.subr.mxu0 0.0
  %5727 = vmatpush1.msra.mxu0 0.0
  %5728 = vmatprep.subr.mxu0 0.0
  %5729 = vmatpush1.msra.mxu0 0.0
  %5730 = vmatprep.subr.mxu0 0.0
  %5731 = vmatpush1.msra.mxu0 0.0
  %5732 = vmatprep.subr.mxu0 0.0
  %5733 = vmatpush1.msra.mxu0 0.0
  %5734 = vmatprep.subr.mxu0 0.0
  %5735 = vmatpush1.msra.mxu0 0.0
  %5736 = vmatprep.subr.mxu0 0.0
  %5737 = vmatpush1.msra.mxu0 0.0
  %5738 = vmatprep.subr.mxu0 0.0
  %5739 = vmatpush1.msra.mxu0 0.0
  %5740 = vmatprep.subr.mxu0 0.0
  %5741 = vmatpush1.msra.mxu0 0.0
  %5742 = vmatprep.subr.mxu0 0.0
  %5743 = vmatpush1.msra.mxu0 0.0
  %5744 = vmatprep.subr.mxu0 0.0
  %5745 = vmatpush1.msra.mxu0 0.0
  %5746 = vmatprep.subr.mxu0 0.0
  %5747 = vmatpush1.msra.mxu0 0.0
  %5748 = vmatprep.subr.mxu0 0.0
  %5749 = vmatpush1.msra.mxu0 0.0
  %5750 = vmatprep.subr.mxu0 0.0
  %5751 = vmatpush1.msra.mxu0 0.0
  %5752 = vmatprep.subr.mxu0 0.0
  %5753 = vmatpush1.msra.mxu0 0.0
  %5754 = vmatprep.subr.mxu0 0.0
  %5755 = vmatpush1.msra.mxu0 0.0
  %5756 = vmatprep.subr.mxu0 0.0
  %5757 = vmatpush1.msra.mxu0 0.0
  %5758 = vmatprep.subr.mxu0 0.0
  %5759 = vmatpush1.msra.mxu0 0.0
  %5760 = vmatprep.subr.mxu0 0.0
  %5761 = vmatpush1.msra.mxu0 0.0
  %5762 = vmatprep.subr.mxu0 0.0
  %5763 = vmatpush1.msra.mxu0 0.0
  %5764 = vmatprep.subr.mxu0 0.0
  %5765 = vmatpush1.msra.mxu0 0.0
  %5766 = vmatprep.subr.mxu0 0.0
  %5767 = vmatpush1.msra.mxu0 0.0
  %5768 = vmatprep.mubr.f32.mxu0 0.0
  %5769 = vmatmul.mubr.f32.gmra.mrb[0].mxu0 %v5702
  %v5770 = vpop.f32.mrb[0].mxu0
  %v5771 = vadd.f32 %v5698, %v5770
  %v5772 = vpop.f32.mrb[0].mxu0
  %5773 = vdwg.mxu0
  %v5774 = vmax.f32 %v5771, 0.0
  %v5775 = vcombine.low %v3968, %v4157
  %v5776 = vcombine.low %v4371, %v4613
  %v5777 = vcombine.low %v4808, %v5032
  %v5778 = vcombine.low %v5252, %v5447
  %v5780 = vunpack.c.l.s4 1966171168
  %v5781 = vunpack.c.0.s8 %v5780
  %v5782 = vlaneseq
  %v5783 = vshrl.u32 %v5782, 7
  %v5784 = vsub.s32 %v5781, %v5783
  %v5785 = vrot.slane %v5775, %v5784
  %v5787 = vunpack.c.l.s4 1966171168
  %v5788 = vunpack.c.0.s8 %v5787
  %v5789 = vlaneseq
  %v5790 = vshrl.u32 %v5789, 7
  %v5791 = vsub.s32 %v5788, %v5790
  %v5792 = vrot.slane %v5776, %v5791
  %v5794 = vunpack.c.l.s4 1966171168
  %v5795 = vunpack.c.0.s8 %v5794
  %v5796 = vlaneseq
  %v5797 = vshrl.u32 %v5796, 7
  %v5798 = vsub.s32 %v5795, %v5797
  %v5799 = vrot.slane %v5777, %v5798
  %v5801 = vunpack.c.l.s4 1966171168
  %v5802 = vunpack.c.0.s8 %v5801
  %v5803 = vlaneseq
  %v5804 = vshrl.u32 %v5803, 7
  %v5805 = vsub.s32 %v5802, %v5804
  %v5806 = vrot.slane %v5778, %v5805
  %v5807 = vcombine.low %v5785, %v5792
  %v5808 = vcombine.low %v5799, %v5806
  %v5810 = vunpack.c.l.s4 1966171168
  %v5811 = vunpack.c.0.s8 %v5810
  %v5812 = vlaneseq
  %v5813 = vshrl.u32 %v5812, 7
  %v5814 = vsub.s32 %v5811, %v5813
  %v5815 = vrot.slane %v5807, %v5814
  %v5817 = vunpack.c.l.s4 1966171168
  %v5818 = vunpack.c.0.s8 %v5817
  %v5819 = vlaneseq
  %v5820 = vshrl.u32 %v5819, 7
  %v5821 = vsub.s32 %v5818, %v5820
  %v5822 = vrot.slane %v5808, %v5821
  %v5823 = vcombine.low %v5815, %v5822
  %v5826 = vsel %vm5700, %v5774, 0
  %5828 = vmatprep.subr.mxu0 0.0
  %5829 = vmatpush1.msra.mxu0 %v5646
  %5830 = vmatprep.subr.mxu0 0.0
  %5831 = vmatpush1.msra.mxu0 %v5647
  %5832 = vmatprep.subr.mxu0 0.0
  %5833 = vmatpush1.msra.mxu0 %v5648
  %5834 = vmatprep.subr.mxu0 0.0
  %5835 = vmatpush1.msra.mxu0 %v5649
  %5836 = vmatprep.subr.mxu0 0.0
  %5837 = vmatpush1.msra.mxu0 0.0
  %5838 = vmatprep.subr.mxu0 0.0
  %5839 = vmatpush1.msra.mxu0 0.0
  %5840 = vmatprep.subr.mxu0 0.0
  %5841 = vmatpush1.msra.mxu0 0.0
  %5842 = vmatprep.subr.mxu0 0.0
  %5843 = vmatpush1.msra.mxu0 0.0
  %5844 = vmatprep.subr.mxu0 0.0
  %5845 = vmatpush1.msra.mxu0 0.0
  %5846 = vmatprep.subr.mxu0 0.0
  %5847 = vmatpush1.msra.mxu0 0.0
  %5848 = vmatprep.subr.mxu0 0.0
  %5849 = vmatpush1.msra.mxu0 0.0
  %5850 = vmatprep.subr.mxu0 0.0
  %5851 = vmatpush1.msra.mxu0 0.0
  %5852 = vmatprep.subr.mxu0 0.0
  %5853 = vmatpush1.msra.mxu0 0.0
  %5854 = vmatprep.subr.mxu0 0.0
  %5855 = vmatpush1.msra.mxu0 0.0
  %5856 = vmatprep.subr.mxu0 0.0
  %5857 = vmatpush1.msra.mxu0 0.0
  %5858 = vmatprep.subr.mxu0 0.0
  %5859 = vmatpush1.msra.mxu0 0.0
  %5860 = vmatprep.subr.mxu0 0.0
  %5861 = vmatpush1.msra.mxu0 0.0
  %5862 = vmatprep.subr.mxu0 0.0
  %5863 = vmatpush1.msra.mxu0 0.0
  %5864 = vmatprep.subr.mxu0 0.0
  %5865 = vmatpush1.msra.mxu0 0.0
  %5866 = vmatprep.subr.mxu0 0.0
  %5867 = vmatpush1.msra.mxu0 0.0
  %5868 = vmatprep.subr.mxu0 0.0
  %5869 = vmatpush1.msra.mxu0 0.0
  %5870 = vmatprep.subr.mxu0 0.0
  %5871 = vmatpush1.msra.mxu0 0.0
  %5872 = vmatprep.subr.mxu0 0.0
  %5873 = vmatpush1.msra.mxu0 0.0
  %5874 = vmatprep.subr.mxu0 0.0
  %5875 = vmatpush1.msra.mxu0 0.0
  %5876 = vmatprep.subr.mxu0 0.0
  %5877 = vmatpush1.msra.mxu0 0.0
  %5878 = vmatprep.subr.mxu0 0.0
  %5879 = vmatpush1.msra.mxu0 0.0
  %5880 = vmatprep.subr.mxu0 0.0
  %5881 = vmatpush1.msra.mxu0 0.0
  %5882 = vmatprep.subr.mxu0 0.0
  %5883 = vmatpush1.msra.mxu0 0.0
  %5884 = vmatprep.subr.mxu0 0.0
  %5885 = vmatpush1.msra.mxu0 0.0
  %5886 = vmatprep.subr.mxu0 0.0
  %5887 = vmatpush1.msra.mxu0 0.0
  %5888 = vmatprep.subr.mxu0 0.0
  %5889 = vmatpush1.msra.mxu0 0.0
  %5890 = vmatprep.subr.mxu0 0.0
  %5891 = vmatpush1.msra.mxu0 0.0
  %5892 = vmatprep.mubr.f32.mxu0 0.0
  %5893 = vmatmul.mubr.f32.gmra.mrb[0].mxu0 %v5826
  %v5894 = vpop.f32.mrb[0].mxu0
  %v5895 = vadd.f32 %v5823, %v5894
  %v5896 = vpop.f32.mrb[0].mxu0
  %5897 = vdwg.mxu0
  %v5898 = vmax.f32 %v5895, 0.0
  %v5899 = vcombine.low %v3976, %v4171
  %v5900 = vcombine.low %v4395, %v4615
  %v5901 = vcombine.low %v4810, %v5046
  %v5902 = vcombine.low %v5235, %v5449
  %v5904 = vunpack.c.l.s4 1966171168
  %v5905 = vunpack.c.0.s8 %v5904
  %v5906 = vlaneseq
  %v5907 = vshrl.u32 %v5906, 7
  %v5908 = vsub.s32 %v5905, %v5907
  %v5909 = vrot.slane %v5899, %v5908
  %v5911 = vunpack.c.l.s4 1966171168
  %v5912 = vunpack.c.0.s8 %v5911
  %v5913 = vlaneseq
  %v5914 = vshrl.u32 %v5913, 7
  %v5915 = vsub.s32 %v5912, %v5914
  %v5916 = vrot.slane %v5900, %v5915
  %v5918 = vunpack.c.l.s4 1966171168
  %v5919 = vunpack.c.0.s8 %v5918
  %v5920 = vlaneseq
  %v5921 = vshrl.u32 %v5920, 7
  %v5922 = vsub.s32 %v5919, %v5921
  %v5923 = vrot.slane %v5901, %v5922
  %v5925 = vunpack.c.l.s4 1966171168
  %v5926 = vunpack.c.0.s8 %v5925
  %v5927 = vlaneseq
  %v5928 = vshrl.u32 %v5927, 7
  %v5929 = vsub.s32 %v5926, %v5928
  %v5930 = vrot.slane %v5902, %v5929
  %v5931 = vcombine.low %v5909, %v5916
  %v5932 = vcombine.low %v5923, %v5930
  %v5934 = vunpack.c.l.s4 1966171168
  %v5935 = vunpack.c.0.s8 %v5934
  %v5936 = vlaneseq
  %v5937 = vshrl.u32 %v5936, 7
  %v5938 = vsub.s32 %v5935, %v5937
  %v5939 = vrot.slane %v5931, %v5938
  %v5941 = vunpack.c.l.s4 1966171168
  %v5942 = vunpack.c.0.s8 %v5941
  %v5943 = vlaneseq
  %v5944 = vshrl.u32 %v5943, 7
  %v5945 = vsub.s32 %v5942, %v5944
  %v5946 = vrot.slane %v5932, %v5945
  %v5947 = vcombine.low %v5939, %v5946
  %v5950 = vsel %vm5700, %v5898, 0
  %5952 = vmatprep.subr.mxu0 0.0
  %5953 = vmatpush1.msra.mxu0 %v5646
  %5954 = vmatprep.subr.mxu0 0.0
  %5955 = vmatpush1.msra.mxu0 %v5647
  %5956 = vmatprep.subr.mxu0 0.0
  %5957 = vmatpush1.msra.mxu0 %v5648
  %5958 = vmatprep.subr.mxu0 0.0
  %5959 = vmatpush1.msra.mxu0 %v5649
  %5960 = vmatprep.subr.mxu0 0.0
  %5961 = vmatpush1.msra.mxu0 0.0
  %5962 = vmatprep.subr.mxu0 0.0
  %5963 = vmatpush1.msra.mxu0 0.0
  %5964 = vmatprep.subr.mxu0 0.0
  %5965 = vmatpush1.msra.mxu0 0.0
  %5966 = vmatprep.subr.mxu0 0.0
  %5967 = vmatpush1.msra.mxu0 0.0
  %5968 = vmatprep.subr.mxu0 0.0
  %5969 = vmatpush1.msra.mxu0 0.0
  %5970 = vmatprep.subr.mxu0 0.0
  %5971 = vmatpush1.msra.mxu0 0.0
  %5972 = vmatprep.subr.mxu0 0.0
  %5973 = vmatpush1.msra.mxu0 0.0
  %5974 = vmatprep.subr.mxu0 0.0
  %5975 = vmatpush1.msra.mxu0 0.0
  %5976 = vmatprep.subr.mxu0 0.0
  %5977 = vmatpush1.msra.mxu0 0.0
  %5978 = vmatprep.subr.mxu0 0.0
  %5979 = vmatpush1.msra.mxu0 0.0
  %5980 = vmatprep.subr.mxu0 0.0
  %5981 = vmatpush1.msra.mxu0 0.0
  %5982 = vmatprep.subr.mxu0 0.0
  %5983 = vmatpush1.msra.mxu0 0.0
  %5984 = vmatprep.subr.mxu0 0.0
  %5985 = vmatpush1.msra.mxu0 0.0
  %5986 = vmatprep.subr.mxu0 0.0
  %5987 = vmatpush1.msra.mxu0 0.0
  %5988 = vmatprep.subr.mxu0 0.0
  %5989 = vmatpush1.msra.mxu0 0.0
  %5990 = vmatprep.subr.mxu0 0.0
  %5991 = vmatpush1.msra.mxu0 0.0
  %5992 = vmatprep.subr.mxu0 0.0
  %5993 = vmatpush1.msra.mxu0 0.0
  %5994 = vmatprep.subr.mxu0 0.0
  %5995 = vmatpush1.msra.mxu0 0.0
  %5996 = vmatprep.subr.mxu0 0.0
  %5997 = vmatpush1.msra.mxu0 0.0
  %5998 = vmatprep.subr.mxu0 0.0
  %5999 = vmatpush1.msra.mxu0 0.0
  %6000 = vmatprep.subr.mxu0 0.0
  %6001 = vmatpush1.msra.mxu0 0.0
  %6002 = vmatprep.subr.mxu0 0.0
  %6003 = vmatpush1.msra.mxu0 0.0
  %6004 = vmatprep.subr.mxu0 0.0
  %6005 = vmatpush1.msra.mxu0 0.0
  %6006 = vmatprep.subr.mxu0 0.0
  %6007 = vmatpush1.msra.mxu0 0.0
  %6008 = vmatprep.subr.mxu0 0.0
  %6009 = vmatpush1.msra.mxu0 0.0
  %6010 = vmatprep.subr.mxu0 0.0
  %6011 = vmatpush1.msra.mxu0 0.0
  %6012 = vmatprep.subr.mxu0 0.0
  %6013 = vmatpush1.msra.mxu0 0.0
  %6014 = vmatprep.subr.mxu0 0.0
  %6015 = vmatpush1.msra.mxu0 0.0
  %6016 = vmatprep.mubr.f32.mxu0 0.0
  %6017 = vmatmul.mubr.f32.gmra.mrb[0].mxu0 %v5950
  %v6018 = vpop.f32.mrb[0].mxu0
  %v6019 = vadd.f32 %v5947, %v6018
  %v6020 = vpop.f32.mrb[0].mxu0
  %6021 = vdwg.mxu0
  %v6022 = vmax.f32 %v6019, 0.0
  %v6023 = vcombine.low %v3978, %v4173
  %v6024 = vcombine.low %v4409, %v4598
  %v6025 = vcombine.low %v4812, %v5054
  %v6026 = vcombine.low %v5249, %v5473
  %v6028 = vunpack.c.l.s4 1966171168
  %v6029 = vunpack.c.0.s8 %v6028
  %v6030 = vlaneseq
  %v6031 = vshrl.u32 %v6030, 7
  %v6032 = vsub.s32 %v6029, %v6031
  %v6033 = vrot.slane %v6023, %v6032
  %v6035 = vunpack.c.l.s4 1966171168
  %v6036 = vunpack.c.0.s8 %v6035
  %v6037 = vlaneseq
  %v6038 = vshrl.u32 %v6037, 7
  %v6039 = vsub.s32 %v6036, %v6038
  %v6040 = vrot.slane %v6024, %v6039
  %v6042 = vunpack.c.l.s4 1966171168
  %v6043 = vunpack.c.0.s8 %v6042
  %v6044 = vlaneseq
  %v6045 = vshrl.u32 %v6044, 7
  %v6046 = vsub.s32 %v6043, %v6045
  %v6047 = vrot.slane %v6025, %v6046
  %v6049 = vunpack.c.l.s4 1966171168
  %v6050 = vunpack.c.0.s8 %v6049
  %v6051 = vlaneseq
  %v6052 = vshrl.u32 %v6051, 7
  %v6053 = vsub.s32 %v6050, %v6052
  %v6054 = vrot.slane %v6026, %v6053
  %v6055 = vcombine.low %v6033, %v6040
  %v6056 = vcombine.low %v6047, %v6054
  %v6058 = vunpack.c.l.s4 1966171168
  %v6059 = vunpack.c.0.s8 %v6058
  %v6060 = vlaneseq
  %v6061 = vshrl.u32 %v6060, 7
  %v6062 = vsub.s32 %v6059, %v6061
  %v6063 = vrot.slane %v6055, %v6062
  %v6065 = vunpack.c.l.s4 1966171168
  %v6066 = vunpack.c.0.s8 %v6065
  %v6067 = vlaneseq
  %v6068 = vshrl.u32 %v6067, 7
  %v6069 = vsub.s32 %v6066, %v6068
  %v6070 = vrot.slane %v6056, %v6069
  %v6071 = vcombine.low %v6063, %v6070
  %v6074 = vsel %vm5700, %v6022, 0
  %6076 = vmatprep.subr.mxu0 0.0
  %6077 = vmatpush1.msra.mxu0 %v5646
  %6078 = vmatprep.subr.mxu0 0.0
  %6079 = vmatpush1.msra.mxu0 %v5647
  %6080 = vmatprep.subr.mxu0 0.0
  %6081 = vmatpush1.msra.mxu0 %v5648
  %6082 = vmatprep.subr.mxu0 0.0
  %6083 = vmatpush1.msra.mxu0 %v5649
  %6084 = vmatprep.subr.mxu0 0.0
  %6085 = vmatpush1.msra.mxu0 0.0
  %6086 = vmatprep.subr.mxu0 0.0
  %6087 = vmatpush1.msra.mxu0 0.0
  %6088 = vmatprep.subr.mxu0 0.0
  %6089 = vmatpush1.msra.mxu0 0.0
  %6090 = vmatprep.subr.mxu0 0.0
  %6091 = vmatpush1.msra.mxu0 0.0
  %6092 = vmatprep.subr.mxu0 0.0
  %6093 = vmatpush1.msra.mxu0 0.0
  %6094 = vmatprep.subr.mxu0 0.0
  %6095 = vmatpush1.msra.mxu0 0.0
  %6096 = vmatprep.subr.mxu0 0.0
  %6097 = vmatpush1.msra.mxu0 0.0
  %6098 = vmatprep.subr.mxu0 0.0
  %6099 = vmatpush1.msra.mxu0 0.0
  %6100 = vmatprep.subr.mxu0 0.0
  %6101 = vmatpush1.msra.mxu0 0.0
  %6102 = vmatprep.subr.mxu0 0.0
  %6103 = vmatpush1.msra.mxu0 0.0
  %6104 = vmatprep.subr.mxu0 0.0
  %6105 = vmatpush1.msra.mxu0 0.0
  %6106 = vmatprep.subr.mxu0 0.0
  %6107 = vmatpush1.msra.mxu0 0.0
  %6108 = vmatprep.subr.mxu0 0.0
  %6109 = vmatpush1.msra.mxu0 0.0
  %6110 = vmatprep.subr.mxu0 0.0
  %6111 = vmatpush1.msra.mxu0 0.0
  %6112 = vmatprep.subr.mxu0 0.0
  %6113 = vmatpush1.msra.mxu0 0.0
  %6114 = vmatprep.subr.mxu0 0.0
  %6115 = vmatpush1.msra.mxu0 0.0
  %6116 = vmatprep.subr.mxu0 0.0
  %6117 = vmatpush1.msra.mxu0 0.0
  %6118 = vmatprep.subr.mxu0 0.0
  %6119 = vmatpush1.msra.mxu0 0.0
  %6120 = vmatprep.subr.mxu0 0.0
  %6121 = vmatpush1.msra.mxu0 0.0
  %6122 = vmatprep.subr.mxu0 0.0
  %6123 = vmatpush1.msra.mxu0 0.0
  %6124 = vmatprep.subr.mxu0 0.0
  %6125 = vmatpush1.msra.mxu0 0.0
  %6126 = vmatprep.subr.mxu0 0.0
  %6127 = vmatpush1.msra.mxu0 0.0
  %6128 = vmatprep.subr.mxu0 0.0
  %6129 = vmatpush1.msra.mxu0 0.0
  %6130 = vmatprep.subr.mxu0 0.0
  %6131 = vmatpush1.msra.mxu0 0.0
  %6132 = vmatprep.subr.mxu0 0.0
  %6133 = vmatpush1.msra.mxu0 0.0
  %6134 = vmatprep.subr.mxu0 0.0
  %6135 = vmatpush1.msra.mxu0 0.0
  %6136 = vmatprep.subr.mxu0 0.0
  %6137 = vmatpush1.msra.mxu0 0.0
  %6138 = vmatprep.subr.mxu0 0.0
  %6139 = vmatpush1.msra.mxu0 0.0
  %6140 = vmatprep.mubr.f32.mxu0 0.0
  %6141 = vmatmul.mubr.f32.gmra.mrb[0].mxu0 %v6074
  %v6142 = vpop.f32.mrb[0].mxu0
  %v6143 = vadd.f32 %v6071, %v6142
  %v6144 = vpop.f32.mrb[0].mxu0
  %6145 = vdwg.mxu0
  %v6146 = vmax.f32 %v6143, 0.0
  %v6147 = vcombine.low %v3961, %v4175
  %v6148 = vcombine.low %v4417, %v4612
  %v6149 = vcombine.low %v4836, %v5056
  %v6150 = vcombine.low %v5251, %v5487
  %v6152 = vunpack.c.l.s4 1966171168
  %v6153 = vunpack.c.0.s8 %v6152
  %v6154 = vlaneseq
  %v6155 = vshrl.u32 %v6154, 7
  %v6156 = vsub.s32 %v6153, %v6155
  %v6157 = vrot.slane %v6147, %v6156
  %v6159 = vunpack.c.l.s4 1966171168
  %v6160 = vunpack.c.0.s8 %v6159
  %v6161 = vlaneseq
  %v6162 = vshrl.u32 %v6161, 7
  %v6163 = vsub.s32 %v6160, %v6162
  %v6164 = vrot.slane %v6148, %v6163
  %v6166 = vunpack.c.l.s4 1966171168
  %v6167 = vunpack.c.0.s8 %v6166
  %v6168 = vlaneseq
  %v6169 = vshrl.u32 %v6168, 7
  %v6170 = vsub.s32 %v6167, %v6169
  %v6171 = vrot.slane %v6149, %v6170
  %v6173 = vunpack.c.l.s4 1966171168
  %v6174 = vunpack.c.0.s8 %v6173
  %v6175 = vlaneseq
  %v6176 = vshrl.u32 %v6175, 7
  %v6177 = vsub.s32 %v6174, %v6176
  %v6178 = vrot.slane %v6150, %v6177
  %v6179 = vcombine.low %v6157, %v6164
  %v6180 = vcombine.low %v6171, %v6178
  %v6182 = vunpack.c.l.s4 1966171168
  %v6183 = vunpack.c.0.s8 %v6182
  %v6184 = vlaneseq
  %v6185 = vshrl.u32 %v6184, 7
  %v6186 = vsub.s32 %v6183, %v6185
  %v6187 = vrot.slane %v6179, %v6186
  %v6189 = vunpack.c.l.s4 1966171168
  %v6190 = vunpack.c.0.s8 %v6189
  %v6191 = vlaneseq
  %v6192 = vshrl.u32 %v6191, 7
  %v6193 = vsub.s32 %v6190, %v6192
  %v6194 = vrot.slane %v6180, %v6193
  %v6195 = vcombine.low %v6187, %v6194
  %v6198 = vsel %vm5700, %v6146, 0
  %6200 = vmatprep.subr.mxu0 0.0
  %6201 = vmatpush1.msra.mxu0 %v5646
  %6202 = vmatprep.subr.mxu0 0.0
  %6203 = vmatpush1.msra.mxu0 %v5647
  %6204 = vmatprep.subr.mxu0 0.0
  %6205 = vmatpush1.msra.mxu0 %v5648
  %6206 = vmatprep.subr.mxu0 0.0
  %6207 = vmatpush1.msra.mxu0 %v5649
  %6208 = vmatprep.subr.mxu0 0.0
  %6209 = vmatpush1.msra.mxu0 0.0
  %6210 = vmatprep.subr.mxu0 0.0
  %6211 = vmatpush1.msra.mxu0 0.0
  %6212 = vmatprep.subr.mxu0 0.0
  %6213 = vmatpush1.msra.mxu0 0.0
  %6214 = vmatprep.subr.mxu0 0.0
  %6215 = vmatpush1.msra.mxu0 0.0
  %6216 = vmatprep.subr.mxu0 0.0
  %6217 = vmatpush1.msra.mxu0 0.0
  %6218 = vmatprep.subr.mxu0 0.0
  %6219 = vmatpush1.msra.mxu0 0.0
  %6220 = vmatprep.subr.mxu0 0.0
  %6221 = vmatpush1.msra.mxu0 0.0
  %6222 = vmatprep.subr.mxu0 0.0
  %6223 = vmatpush1.msra.mxu0 0.0
  %6224 = vmatprep.subr.mxu0 0.0
  %6225 = vmatpush1.msra.mxu0 0.0
  %6226 = vmatprep.subr.mxu0 0.0
  %6227 = vmatpush1.msra.mxu0 0.0
  %6228 = vmatprep.subr.mxu0 0.0
  %6229 = vmatpush1.msra.mxu0 0.0
  %6230 = vmatprep.subr.mxu0 0.0
  %6231 = vmatpush1.msra.mxu0 0.0
  %6232 = vmatprep.subr.mxu0 0.0
  %6233 = vmatpush1.msra.mxu0 0.0
  %6234 = vmatprep.subr.mxu0 0.0
  %6235 = vmatpush1.msra.mxu0 0.0
  %6236 = vmatprep.subr.mxu0 0.0
  %6237 = vmatpush1.msra.mxu0 0.0
  %6238 = vmatprep.subr.mxu0 0.0
  %6239 = vmatpush1.msra.mxu0 0.0
  %6240 = vmatprep.subr.mxu0 0.0
  %6241 = vmatpush1.msra.mxu0 0.0
  %6242 = vmatprep.subr.mxu0 0.0
  %6243 = vmatpush1.msra.mxu0 0.0
  %6244 = vmatprep.subr.mxu0 0.0
  %6245 = vmatpush1.msra.mxu0 0.0
  %6246 = vmatprep.subr.mxu0 0.0
  %6247 = vmatpush1.msra.mxu0 0.0
  %6248 = vmatprep.subr.mxu0 0.0
  %6249 = vmatpush1.msra.mxu0 0.0
  %6250 = vmatprep.subr.mxu0 0.0
  %6251 = vmatpush1.msra.mxu0 0.0
  %6252 = vmatprep.subr.mxu0 0.0
  %6253 = vmatpush1.msra.mxu0 0.0
  %6254 = vmatprep.subr.mxu0 0.0
  %6255 = vmatpush1.msra.mxu0 0.0
  %6256 = vmatprep.subr.mxu0 0.0
  %6257 = vmatpush1.msra.mxu0 0.0
  %6258 = vmatprep.subr.mxu0 0.0
  %6259 = vmatpush1.msra.mxu0 0.0
  %6260 = vmatprep.subr.mxu0 0.0
  %6261 = vmatpush1.msra.mxu0 0.0
  %6262 = vmatprep.subr.mxu0 0.0
  %6263 = vmatpush1.msra.mxu0 0.0
  %6264 = vmatprep.mubr.f32.mxu0 0.0
  %6265 = vmatmul.mubr.f32.gmra.mrb[0].mxu0 %v6198
  %v6266 = vpop.f32.mrb[0].mxu0
  %v6267 = vadd.f32 %v6195, %v6266
  %v6268 = vpop.f32.mrb[0].mxu0
  %6269 = vdwg.mxu0
  %v6270 = vmax.f32 %v6267, 0.0
  %v6271 = vcombine.low %v3975, %v4199
  %v6272 = vcombine.low %v4419, %v4614
  %v6273 = vcombine.low %v4850, %v5039
  %v6274 = vcombine.low %v5253, %v5495
  %v6276 = vunpack.c.l.s4 1966171168
  %v6277 = vunpack.c.0.s8 %v6276
  %v6278 = vlaneseq
  %v6279 = vshrl.u32 %v6278, 7
  %v6280 = vsub.s32 %v6277, %v6279
  %v6281 = vrot.slane %v6271, %v6280
  %v6283 = vunpack.c.l.s4 1966171168
  %v6284 = vunpack.c.0.s8 %v6283
  %v6285 = vlaneseq
  %v6286 = vshrl.u32 %v6285, 7
  %v6287 = vsub.s32 %v6284, %v6286
  %v6288 = vrot.slane %v6272, %v6287
  %v6290 = vunpack.c.l.s4 1966171168
  %v6291 = vunpack.c.0.s8 %v6290
  %v6292 = vlaneseq
  %v6293 = vshrl.u32 %v6292, 7
  %v6294 = vsub.s32 %v6291, %v6293
  %v6295 = vrot.slane %v6273, %v6294
  %v6297 = vunpack.c.l.s4 1966171168
  %v6298 = vunpack.c.0.s8 %v6297
  %v6299 = vlaneseq
  %v6300 = vshrl.u32 %v6299, 7
  %v6301 = vsub.s32 %v6298, %v6300
  %v6302 = vrot.slane %v6274, %v6301
  %v6303 = vcombine.low %v6281, %v6288
  %v6304 = vcombine.low %v6295, %v6302
  %v6306 = vunpack.c.l.s4 1966171168
  %v6307 = vunpack.c.0.s8 %v6306
  %v6308 = vlaneseq
  %v6309 = vshrl.u32 %v6308, 7
  %v6310 = vsub.s32 %v6307, %v6309
  %v6311 = vrot.slane %v6303, %v6310
  %v6313 = vunpack.c.l.s4 1966171168
  %v6314 = vunpack.c.0.s8 %v6313
  %v6315 = vlaneseq
  %v6316 = vshrl.u32 %v6315, 7
  %v6317 = vsub.s32 %v6314, %v6316
  %v6318 = vrot.slane %v6304, %v6317
  %v6319 = vcombine.low %v6311, %v6318
  %v6322 = vsel %vm5700, %v6270, 0
  %6324 = vmatprep.subr.mxu0 0.0
  %6325 = vmatpush1.msra.mxu0 %v5646
  %6326 = vmatprep.subr.mxu0 0.0
  %6327 = vmatpush1.msra.mxu0 %v5647
  %6328 = vmatprep.subr.mxu0 0.0
  %6329 = vmatpush1.msra.mxu0 %v5648
  %6330 = vmatprep.subr.mxu0 0.0
  %6331 = vmatpush1.msra.mxu0 %v5649
  %6332 = vmatprep.subr.mxu0 0.0
  %6333 = vmatpush1.msra.mxu0 0.0
  %6334 = vmatprep.subr.mxu0 0.0
  %6335 = vmatpush1.msra.mxu0 0.0
  %6336 = vmatprep.subr.mxu0 0.0
  %6337 = vmatpush1.msra.mxu0 0.0
  %6338 = vmatprep.subr.mxu0 0.0
  %6339 = vmatpush1.msra.mxu0 0.0
  %6340 = vmatprep.subr.mxu0 0.0
  %6341 = vmatpush1.msra.mxu0 0.0
  %6342 = vmatprep.subr.mxu0 0.0
  %6343 = vmatpush1.msra.mxu0 0.0
  %6344 = vmatprep.subr.mxu0 0.0
  %6345 = vmatpush1.msra.mxu0 0.0
  %6346 = vmatprep.subr.mxu0 0.0
  %6347 = vmatpush1.msra.mxu0 0.0
  %6348 = vmatprep.subr.mxu0 0.0
  %6349 = vmatpush1.msra.mxu0 0.0
  %6350 = vmatprep.subr.mxu0 0.0
  %6351 = vmatpush1.msra.mxu0 0.0
  %6352 = vmatprep.subr.mxu0 0.0
  %6353 = vmatpush1.msra.mxu0 0.0
  %6354 = vmatprep.subr.mxu0 0.0
  %6355 = vmatpush1.msra.mxu0 0.0
  %6356 = vmatprep.subr.mxu0 0.0
  %6357 = vmatpush1.msra.mxu0 0.0
  %6358 = vmatprep.subr.mxu0 0.0
  %6359 = vmatpush1.msra.mxu0 0.0
  %6360 = vmatprep.subr.mxu0 0.0
  %6361 = vmatpush1.msra.mxu0 0.0
  %6362 = vmatprep.subr.mxu0 0.0
  %6363 = vmatpush1.msra.mxu0 0.0
  %6364 = vmatprep.subr.mxu0 0.0
  %6365 = vmatpush1.msra.mxu0 0.0
  %6366 = vmatprep.subr.mxu0 0.0
  %6367 = vmatpush1.msra.mxu0 0.0
  %6368 = vmatprep.subr.mxu0 0.0
  %6369 = vmatpush1.msra.mxu0 0.0
  %6370 = vmatprep.subr.mxu0 0.0
  %6371 = vmatpush1.msra.mxu0 0.0
  %6372 = vmatprep.subr.mxu0 0.0
  %6373 = vmatpush1.msra.mxu0 0.0
  %6374 = vmatprep.subr.mxu0 0.0
  %6375 = vmatpush1.msra.mxu0 0.0
  %6376 = vmatprep.subr.mxu0 0.0
  %6377 = vmatpush1.msra.mxu0 0.0
  %6378 = vmatprep.subr.mxu0 0.0
  %6379 = vmatpush1.msra.mxu0 0.0
  %6380 = vmatprep.subr.mxu0 0.0
  %6381 = vmatpush1.msra.mxu0 0.0
  %6382 = vmatprep.subr.mxu0 0.0
  %6383 = vmatpush1.msra.mxu0 0.0
  %6384 = vmatprep.subr.mxu0 0.0
  %6385 = vmatpush1.msra.mxu0 0.0
  %6386 = vmatprep.subr.mxu0 0.0
  %6387 = vmatpush1.msra.mxu0 0.0
  %6388 = vmatprep.mubr.f32.mxu0 0.0
  %6389 = vmatmul.mubr.f32.gmra.mrb[0].mxu0 %v6322
  %v6390 = vpop.f32.mrb[0].mxu0
  %v6391 = vadd.f32 %v6319, %v6390
  %v6392 = vpop.f32.mrb[0].mxu0
  %6393 = vdwg.mxu0
  %v6394 = vmax.f32 %v6391, 0.0
  %v6395 = vcombine.low %v3977, %v4213
  %v6396 = vcombine.low %v4402, %v4616
  %v6397 = vcombine.low %v4858, %v5053
  %v6398 = vcombine.low %v5277, %v5497
  %v6400 = vunpack.c.l.s4 1966171168
  %v6401 = vunpack.c.0.s8 %v6400
  %v6402 = vlaneseq
  %v6403 = vshrl.u32 %v6402, 7
  %v6404 = vsub.s32 %v6401, %v6403
  %v6405 = vrot.slane %v6395, %v6404
  %v6407 = vunpack.c.l.s4 1966171168
  %v6408 = vunpack.c.0.s8 %v6407
  %v6409 = vlaneseq
  %v6410 = vshrl.u32 %v6409, 7
  %v6411 = vsub.s32 %v6408, %v6410
  %v6412 = vrot.slane %v6396, %v6411
  %v6414 = vunpack.c.l.s4 1966171168
  %v6415 = vunpack.c.0.s8 %v6414
  %v6416 = vlaneseq
  %v6417 = vshrl.u32 %v6416, 7
  %v6418 = vsub.s32 %v6415, %v6417
  %v6419 = vrot.slane %v6397, %v6418
  %v6421 = vunpack.c.l.s4 1966171168
  %v6422 = vunpack.c.0.s8 %v6421
  %v6423 = vlaneseq
  %v6424 = vshrl.u32 %v6423, 7
  %v6425 = vsub.s32 %v6422, %v6424
  %v6426 = vrot.slane %v6398, %v6425
  %v6427 = vcombine.low %v6405, %v6412
  %v6428 = vcombine.low %v6419, %v6426
  %v6430 = vunpack.c.l.s4 1966171168
  %v6431 = vunpack.c.0.s8 %v6430
  %v6432 = vlaneseq
  %v6433 = vshrl.u32 %v6432, 7
  %v6434 = vsub.s32 %v6431, %v6433
  %v6435 = vrot.slane %v6427, %v6434
  %v6437 = vunpack.c.l.s4 1966171168
  %v6438 = vunpack.c.0.s8 %v6437
  %v6439 = vlaneseq
  %v6440 = vshrl.u32 %v6439, 7
  %v6441 = vsub.s32 %v6438, %v6440
  %v6442 = vrot.slane %v6428, %v6441
  %v6443 = vcombine.low %v6435, %v6442
  %v6446 = vsel %vm5700, %v6394, 0
  %6448 = vmatprep.subr.mxu0 0.0
  %6449 = vmatpush1.msra.mxu0 %v5646
  %6450 = vmatprep.subr.mxu0 0.0
  %6451 = vmatpush1.msra.mxu0 %v5647
  %6452 = vmatprep.subr.mxu0 0.0
  %6453 = vmatpush1.msra.mxu0 %v5648
  %6454 = vmatprep.subr.mxu0 0.0
  %6455 = vmatpush1.msra.mxu0 %v5649
  %6456 = vmatprep.subr.mxu0 0.0
  %6457 = vmatpush1.msra.mxu0 0.0
  %6458 = vmatprep.subr.mxu0 0.0
  %6459 = vmatpush1.msra.mxu0 0.0
  %6460 = vmatprep.subr.mxu0 0.0
  %6461 = vmatpush1.msra.mxu0 0.0
  %6462 = vmatprep.subr.mxu0 0.0
  %6463 = vmatpush1.msra.mxu0 0.0
  %6464 = vmatprep.subr.mxu0 0.0
  %6465 = vmatpush1.msra.mxu0 0.0
  %6466 = vmatprep.subr.mxu0 0.0
  %6467 = vmatpush1.msra.mxu0 0.0
  %6468 = vmatprep.subr.mxu0 0.0
  %6469 = vmatpush1.msra.mxu0 0.0
  %6470 = vmatprep.subr.mxu0 0.0
  %6471 = vmatpush1.msra.mxu0 0.0
  %6472 = vmatprep.subr.mxu0 0.0
  %6473 = vmatpush1.msra.mxu0 0.0
  %6474 = vmatprep.subr.mxu0 0.0
  %6475 = vmatpush1.msra.mxu0 0.0
  %6476 = vmatprep.subr.mxu0 0.0
  %6477 = vmatpush1.msra.mxu0 0.0
  %6478 = vmatprep.subr.mxu0 0.0
  %6479 = vmatpush1.msra.mxu0 0.0
  %6480 = vmatprep.subr.mxu0 0.0
  %6481 = vmatpush1.msra.mxu0 0.0
  %6482 = vmatprep.subr.mxu0 0.0
  %6483 = vmatpush1.msra.mxu0 0.0
  %6484 = vmatprep.subr.mxu0 0.0
  %6485 = vmatpush1.msra.mxu0 0.0
  %6486 = vmatprep.subr.mxu0 0.0
  %6487 = vmatpush1.msra.mxu0 0.0
  %6488 = vmatprep.subr.mxu0 0.0
  %6489 = vmatpush1.msra.mxu0 0.0
  %6490 = vmatprep.subr.mxu0 0.0
  %6491 = vmatpush1.msra.mxu0 0.0
  %6492 = vmatprep.subr.mxu0 0.0
  %6493 = vmatpush1.msra.mxu0 0.0
  %6494 = vmatprep.subr.mxu0 0.0
  %6495 = vmatpush1.msra.mxu0 0.0
  %6496 = vmatprep.subr.mxu0 0.0
  %6497 = vmatpush1.msra.mxu0 0.0
  %6498 = vmatprep.subr.mxu0 0.0
  %6499 = vmatpush1.msra.mxu0 0.0
  %6500 = vmatprep.subr.mxu0 0.0
  %6501 = vmatpush1.msra.mxu0 0.0
  %6502 = vmatprep.subr.mxu0 0.0
  %6503 = vmatpush1.msra.mxu0 0.0
  %6504 = vmatprep.subr.mxu0 0.0
  %6505 = vmatpush1.msra.mxu0 0.0
  %6506 = vmatprep.subr.mxu0 0.0
  %6507 = vmatpush1.msra.mxu0 0.0
  %6508 = vmatprep.subr.mxu0 0.0
  %6509 = vmatpush1.msra.mxu0 0.0
  %6510 = vmatprep.subr.mxu0 0.0
  %6511 = vmatpush1.msra.mxu0 0.0
  %6512 = vmatprep.mubr.f32.mxu0 0.0
  %6513 = vmatmul.mubr.f32.gmra.mrb[0].mxu0 %v6446
  %v6514 = vpop.f32.mrb[0].mxu0
  %v6515 = vadd.f32 %v6443, %v6514
  %v6516 = vpop.f32.mrb[0].mxu0
  %6517 = vdwg.mxu0
  %v6518 = vmax.f32 %v6515, 0.0
  %v6519 = vcombine.low %v3979, %v4221
  %v6520 = vcombine.low %v4416, %v4640
  %v6521 = vcombine.low %v4860, %v5055
  %v6522 = vcombine.low %v5291, %v5480
  %v6524 = vunpack.c.l.s4 1966171168
  %v6525 = vunpack.c.0.s8 %v6524
  %v6526 = vlaneseq
  %v6527 = vshrl.u32 %v6526, 7
  %v6528 = vsub.s32 %v6525, %v6527
  %v6529 = vrot.slane %v6519, %v6528
  %v6531 = vunpack.c.l.s4 1966171168
  %v6532 = vunpack.c.0.s8 %v6531
  %v6533 = vlaneseq
  %v6534 = vshrl.u32 %v6533, 7
  %v6535 = vsub.s32 %v6532, %v6534
  %v6536 = vrot.slane %v6520, %v6535
  %v6538 = vunpack.c.l.s4 1966171168
  %v6539 = vunpack.c.0.s8 %v6538
  %v6540 = vlaneseq
  %v6541 = vshrl.u32 %v6540, 7
  %v6542 = vsub.s32 %v6539, %v6541
  %v6543 = vrot.slane %v6521, %v6542
  %v6545 = vunpack.c.l.s4 1966171168
  %v6546 = vunpack.c.0.s8 %v6545
  %v6547 = vlaneseq
  %v6548 = vshrl.u32 %v6547, 7
  %v6549 = vsub.s32 %v6546, %v6548
  %v6550 = vrot.slane %v6522, %v6549
  %v6551 = vcombine.low %v6529, %v6536
  %v6552 = vcombine.low %v6543, %v6550
  %v6554 = vunpack.c.l.s4 1966171168
  %v6555 = vunpack.c.0.s8 %v6554
  %v6556 = vlaneseq
  %v6557 = vshrl.u32 %v6556, 7
  %v6558 = vsub.s32 %v6555, %v6557
  %v6559 = vrot.slane %v6551, %v6558
  %v6561 = vunpack.c.l.s4 1966171168
  %v6562 = vunpack.c.0.s8 %v6561
  %v6563 = vlaneseq
  %v6564 = vshrl.u32 %v6563, 7
  %v6565 = vsub.s32 %v6562, %v6564
  %v6566 = vrot.slane %v6552, %v6565
  %v6567 = vcombine.low %v6559, %v6566
  %v6570 = vsel %vm5700, %v6518, 0
  %6572 = vmatprep.subr.mxu0 0.0
  %6573 = vmatpush1.msra.mxu0 %v5646
  %6574 = vmatprep.subr.mxu0 0.0
  %6575 = vmatpush1.msra.mxu0 %v5647
  %6576 = vmatprep.subr.mxu0 0.0
  %6577 = vmatpush1.msra.mxu0 %v5648
  %6578 = vmatprep.subr.mxu0 0.0
  %6579 = vmatpush1.msra.mxu0 %v5649
  %6580 = vmatprep.subr.mxu0 0.0
  %6581 = vmatpush1.msra.mxu0 0.0
  %6582 = vmatprep.subr.mxu0 0.0
  %6583 = vmatpush1.msra.mxu0 0.0
  %6584 = vmatprep.subr.mxu0 0.0
  %6585 = vmatpush1.msra.mxu0 0.0
  %6586 = vmatprep.subr.mxu0 0.0
  %6587 = vmatpush1.msra.mxu0 0.0
  %6588 = vmatprep.subr.mxu0 0.0
  %6589 = vmatpush1.msra.mxu0 0.0
  %6590 = vmatprep.subr.mxu0 0.0
  %6591 = vmatpush1.msra.mxu0 0.0
  %6592 = vmatprep.subr.mxu0 0.0
  %6593 = vmatpush1.msra.mxu0 0.0
  %6594 = vmatprep.subr.mxu0 0.0
  %6595 = vmatpush1.msra.mxu0 0.0
  %6596 = vmatprep.subr.mxu0 0.0
  %6597 = vmatpush1.msra.mxu0 0.0
  %6598 = vmatprep.subr.mxu0 0.0
  %6599 = vmatpush1.msra.mxu0 0.0
  %6600 = vmatprep.subr.mxu0 0.0
  %6601 = vmatpush1.msra.mxu0 0.0
  %6602 = vmatprep.subr.mxu0 0.0
  %6603 = vmatpush1.msra.mxu0 0.0
  %6604 = vmatprep.subr.mxu0 0.0
  %6605 = vmatpush1.msra.mxu0 0.0
  %6606 = vmatprep.subr.mxu0 0.0
  %6607 = vmatpush1.msra.mxu0 0.0
  %6608 = vmatprep.subr.mxu0 0.0
  %6609 = vmatpush1.msra.mxu0 0.0
  %6610 = vmatprep.subr.mxu0 0.0
  %6611 = vmatpush1.msra.mxu0 0.0
  %6612 = vmatprep.subr.mxu0 0.0
  %6613 = vmatpush1.msra.mxu0 0.0
  %6614 = vmatprep.subr.mxu0 0.0
  %6615 = vmatpush1.msra.mxu0 0.0
  %6616 = vmatprep.subr.mxu0 0.0
  %6617 = vmatpush1.msra.mxu0 0.0
  %6618 = vmatprep.subr.mxu0 0.0
  %6619 = vmatpush1.msra.mxu0 0.0
  %6620 = vmatprep.subr.mxu0 0.0
  %6621 = vmatpush1.msra.mxu0 0.0
  %6622 = vmatprep.subr.mxu0 0.0
  %6623 = vmatpush1.msra.mxu0 0.0
  %6624 = vmatprep.subr.mxu0 0.0
  %6625 = vmatpush1.msra.mxu0 0.0
  %6626 = vmatprep.subr.mxu0 0.0
  %6627 = vmatpush1.msra.mxu0 0.0
  %6628 = vmatprep.subr.mxu0 0.0
  %6629 = vmatpush1.msra.mxu0 0.0
  %6630 = vmatprep.subr.mxu0 0.0
  %6631 = vmatpush1.msra.mxu0 0.0
  %6632 = vmatprep.subr.mxu0 0.0
  %6633 = vmatpush1.msra.mxu0 0.0
  %6634 = vmatprep.subr.mxu0 0.0
  %6635 = vmatpush1.msra.mxu0 0.0
  %6636 = vmatprep.mubr.f32.mxu0 0.0
  %6637 = vmatmul.mubr.f32.gmra.mrb[0].mxu0 %v6570
  %v6638 = vpop.f32.mrb[0].mxu0
  %v6639 = vadd.f32 %v6567, %v6638
  %v6640 = vpop.f32.mrb[0].mxu0
  %6641 = vdwg.mxu0
  %v6642 = vmax.f32 %v6639, 0.0
  %v6643 = vcombine.low %v4003, %v4223
  %v6644 = vcombine.low %v4418, %v4654
  %v6645 = vcombine.low %v4843, %v5057
  %v6646 = vcombine.low %v5299, %v5494
  %v6648 = vunpack.c.l.s4 1966171168
  %v6649 = vunpack.c.0.s8 %v6648
  %v6650 = vlaneseq
  %v6651 = vshrl.u32 %v6650, 7
  %v6652 = vsub.s32 %v6649, %v6651
  %v6653 = vrot.slane %v6643, %v6652
  %v6655 = vunpack.c.l.s4 1966171168
  %v6656 = vunpack.c.0.s8 %v6655
  %v6657 = vlaneseq
  %v6658 = vshrl.u32 %v6657, 7
  %v6659 = vsub.s32 %v6656, %v6658
  %v6660 = vrot.slane %v6644, %v6659
  %v6662 = vunpack.c.l.s4 1966171168
  %v6663 = vunpack.c.0.s8 %v6662
  %v6664 = vlaneseq
  %v6665 = vshrl.u32 %v6664, 7
  %v6666 = vsub.s32 %v6663, %v6665
  %v6667 = vrot.slane %v6645, %v6666
  %v6669 = vunpack.c.l.s4 1966171168
  %v6670 = vunpack.c.0.s8 %v6669
  %v6671 = vlaneseq
  %v6672 = vshrl.u32 %v6671, 7
  %v6673 = vsub.s32 %v6670, %v6672
  %v6674 = vrot.slane %v6646, %v6673
  %v6675 = vcombine.low %v6653, %v6660
  %v6676 = vcombine.low %v6667, %v6674
  %v6678 = vunpack.c.l.s4 1966171168
  %v6679 = vunpack.c.0.s8 %v6678
  %v6680 = vlaneseq
  %v6681 = vshrl.u32 %v6680, 7
  %v6682 = vsub.s32 %v6679, %v6681
  %v6683 = vrot.slane %v6675, %v6682
  %v6685 = vunpack.c.l.s4 1966171168
  %v6686 = vunpack.c.0.s8 %v6685
  %v6687 = vlaneseq
  %v6688 = vshrl.u32 %v6687, 7
  %v6689 = vsub.s32 %v6686, %v6688
  %v6690 = vrot.slane %v6676, %v6689
  %v6691 = vcombine.low %v6683, %v6690
  %v6694 = vsel %vm5700, %v6642, 0
  %6696 = vmatprep.subr.mxu0 0.0
  %6697 = vmatpush1.msra.mxu0 %v5646
  %6698 = vmatprep.subr.mxu0 0.0
  %6699 = vmatpush1.msra.mxu0 %v5647
  %6700 = vmatprep.subr.mxu0 0.0
  %6701 = vmatpush1.msra.mxu0 %v5648
  %6702 = vmatprep.subr.mxu0 0.0
  %6703 = vmatpush1.msra.mxu0 %v5649
  %6704 = vmatprep.subr.mxu0 0.0
  %6705 = vmatpush1.msra.mxu0 0.0
  %6706 = vmatprep.subr.mxu0 0.0
  %6707 = vmatpush1.msra.mxu0 0.0
  %6708 = vmatprep.subr.mxu0 0.0
  %6709 = vmatpush1.msra.mxu0 0.0
  %6710 = vmatprep.subr.mxu0 0.0
  %6711 = vmatpush1.msra.mxu0 0.0
  %6712 = vmatprep.subr.mxu0 0.0
  %6713 = vmatpush1.msra.mxu0 0.0
  %6714 = vmatprep.subr.mxu0 0.0
  %6715 = vmatpush1.msra.mxu0 0.0
  %6716 = vmatprep.subr.mxu0 0.0
  %6717 = vmatpush1.msra.mxu0 0.0
  %6718 = vmatprep.subr.mxu0 0.0
  %6719 = vmatpush1.msra.mxu0 0.0
  %6720 = vmatprep.subr.mxu0 0.0
  %6721 = vmatpush1.msra.mxu0 0.0
  %6722 = vmatprep.subr.mxu0 0.0
  %6723 = vmatpush1.msra.mxu0 0.0
  %6724 = vmatprep.subr.mxu0 0.0
  %6725 = vmatpush1.msra.mxu0 0.0
  %6726 = vmatprep.subr.mxu0 0.0
  %6727 = vmatpush1.msra.mxu0 0.0
  %6728 = vmatprep.subr.mxu0 0.0
  %6729 = vmatpush1.msra.mxu0 0.0
  %6730 = vmatprep.subr.mxu0 0.0
  %6731 = vmatpush1.msra.mxu0 0.0
  %6732 = vmatprep.subr.mxu0 0.0
  %6733 = vmatpush1.msra.mxu0 0.0
  %6734 = vmatprep.subr.mxu0 0.0
  %6735 = vmatpush1.msra.mxu0 0.0
  %6736 = vmatprep.subr.mxu0 0.0
  %6737 = vmatpush1.msra.mxu0 0.0
  %6738 = vmatprep.subr.mxu0 0.0
  %6739 = vmatpush1.msra.mxu0 0.0
  %6740 = vmatprep.subr.mxu0 0.0
  %6741 = vmatpush1.msra.mxu0 0.0
  %6742 = vmatprep.subr.mxu0 0.0
  %6743 = vmatpush1.msra.mxu0 0.0
  %6744 = vmatprep.subr.mxu0 0.0
  %6745 = vmatpush1.msra.mxu0 0.0
  %6746 = vmatprep.subr.mxu0 0.0
  %6747 = vmatpush1.msra.mxu0 0.0
  %6748 = vmatprep.subr.mxu0 0.0
  %6749 = vmatpush1.msra.mxu0 0.0
  %6750 = vmatprep.subr.mxu0 0.0
  %6751 = vmatpush1.msra.mxu0 0.0
  %6752 = vmatprep.subr.mxu0 0.0
  %6753 = vmatpush1.msra.mxu0 0.0
  %6754 = vmatprep.subr.mxu0 0.0
  %6755 = vmatpush1.msra.mxu0 0.0
  %6756 = vmatprep.subr.mxu0 0.0
  %6757 = vmatpush1.msra.mxu0 0.0
  %6758 = vmatprep.subr.mxu0 0.0
  %6759 = vmatpush1.msra.mxu0 0.0
  %6760 = vmatprep.mubr.f32.mxu0 0.0
  %6761 = vmatmul.mubr.f32.gmra.mrb[0].mxu0 %v6694
  %v6762 = vpop.f32.mrb[0].mxu0
  %v6763 = vadd.f32 %v6691, %v6762
  %v6764 = vpop.f32.mrb[0].mxu0
  %6765 = vdwg.mxu0
  %v6766 = vmax.f32 %v6763, 0.0
  %v6767 = vcombine.low %v4017, %v4206
  %v6768 = vcombine.low %v4420, %v4662
  %v6769 = vcombine.low %v4857, %v5081
  %v6770 = vcombine.low %v5301, %v5496
  %v6772 = vunpack.c.l.s4 1966171168
  %v6773 = vunpack.c.0.s8 %v6772
  %v6774 = vlaneseq
  %v6775 = vshrl.u32 %v6774, 7
  %v6776 = vsub.s32 %v6773, %v6775
  %v6777 = vrot.slane %v6767, %v6776
  %v6779 = vunpack.c.l.s4 1966171168
  %v6780 = vunpack.c.0.s8 %v6779
  %v6781 = vlaneseq
  %v6782 = vshrl.u32 %v6781, 7
  %v6783 = vsub.s32 %v6780, %v6782
  %v6784 = vrot.slane %v6768, %v6783
  %v6786 = vunpack.c.l.s4 1966171168
  %v6787 = vunpack.c.0.s8 %v6786
  %v6788 = vlaneseq
  %v6789 = vshrl.u32 %v6788, 7
  %v6790 = vsub.s32 %v6787, %v6789
  %v6791 = vrot.slane %v6769, %v6790
  %v6793 = vunpack.c.l.s4 1966171168
  %v6794 = vunpack.c.0.s8 %v6793
  %v6795 = vlaneseq
  %v6796 = vshrl.u32 %v6795, 7
  %v6797 = vsub.s32 %v6794, %v6796
  %v6798 = vrot.slane %v6770, %v6797
  %v6799 = vcombine.low %v6777, %v6784
  %v6800 = vcombine.low %v6791, %v6798
  %v6802 = vunpack.c.l.s4 1966171168
  %v6803 = vunpack.c.0.s8 %v6802
  %v6804 = vlaneseq
  %v6805 = vshrl.u32 %v6804, 7
  %v6806 = vsub.s32 %v6803, %v6805
  %v6807 = vrot.slane %v6799, %v6806
  %v6809 = vunpack.c.l.s4 1966171168
  %v6810 = vunpack.c.0.s8 %v6809
  %v6811 = vlaneseq
  %v6812 = vshrl.u32 %v6811, 7
  %v6813 = vsub.s32 %v6810, %v6812
  %v6814 = vrot.slane %v6800, %v6813
  %v6815 = vcombine.low %v6807, %v6814
  %v6818 = vsel %vm5700, %v6766, 0
  %6820 = vmatprep.subr.mxu0 0.0
  %6821 = vmatpush1.msra.mxu0 %v5646
  %6822 = vmatprep.subr.mxu0 0.0
  %6823 = vmatpush1.msra.mxu0 %v5647
  %6824 = vmatprep.subr.mxu0 0.0
  %6825 = vmatpush1.msra.mxu0 %v5648
  %6826 = vmatprep.subr.mxu0 0.0
  %6827 = vmatpush1.msra.mxu0 %v5649
  %6828 = vmatprep.subr.mxu0 0.0
  %6829 = vmatpush1.msra.mxu0 0.0
  %6830 = vmatprep.subr.mxu0 0.0
  %6831 = vmatpush1.msra.mxu0 0.0
  %6832 = vmatprep.subr.mxu0 0.0
  %6833 = vmatpush1.msra.mxu0 0.0
  %6834 = vmatprep.subr.mxu0 0.0
  %6835 = vmatpush1.msra.mxu0 0.0
  %6836 = vmatprep.subr.mxu0 0.0
  %6837 = vmatpush1.msra.mxu0 0.0
  %6838 = vmatprep.subr.mxu0 0.0
  %6839 = vmatpush1.msra.mxu0 0.0
  %6840 = vmatprep.subr.mxu0 0.0
  %6841 = vmatpush1.msra.mxu0 0.0
  %6842 = vmatprep.subr.mxu0 0.0
  %6843 = vmatpush1.msra.mxu0 0.0
  %6844 = vmatprep.subr.mxu0 0.0
  %6845 = vmatpush1.msra.mxu0 0.0
  %6846 = vmatprep.subr.mxu0 0.0
  %6847 = vmatpush1.msra.mxu0 0.0
  %6848 = vmatprep.subr.mxu0 0.0
  %6849 = vmatpush1.msra.mxu0 0.0
  %6850 = vmatprep.subr.mxu0 0.0
  %6851 = vmatpush1.msra.mxu0 0.0
  %6852 = vmatprep.subr.mxu0 0.0
  %6853 = vmatpush1.msra.mxu0 0.0
  %6854 = vmatprep.subr.mxu0 0.0
  %6855 = vmatpush1.msra.mxu0 0.0
  %6856 = vmatprep.subr.mxu0 0.0
  %6857 = vmatpush1.msra.mxu0 0.0
  %6858 = vmatprep.subr.mxu0 0.0
  %6859 = vmatpush1.msra.mxu0 0.0
  %6860 = vmatprep.subr.mxu0 0.0
  %6861 = vmatpush1.msra.mxu0 0.0
  %6862 = vmatprep.subr.mxu0 0.0
  %6863 = vmatpush1.msra.mxu0 0.0
  %6864 = vmatprep.subr.mxu0 0.0
  %6865 = vmatpush1.msra.mxu0 0.0
  %6866 = vmatprep.subr.mxu0 0.0
  %6867 = vmatpush1.msra.mxu0 0.0
  %6868 = vmatprep.subr.mxu0 0.0
  %6869 = vmatpush1.msra.mxu0 0.0
  %6870 = vmatprep.subr.mxu0 0.0
  %6871 = vmatpush1.msra.mxu0 0.0
  %6872 = vmatprep.subr.mxu0 0.0
  %6873 = vmatpush1.msra.mxu0 0.0
  %6874 = vmatprep.subr.mxu0 0.0
  %6875 = vmatpush1.msra.mxu0 0.0
  %6876 = vmatprep.subr.mxu0 0.0
  %6877 = vmatpush1.msra.mxu0 0.0
  %6878 = vmatprep.subr.mxu0 0.0
  %6879 = vmatpush1.msra.mxu0 0.0
  %6880 = vmatprep.subr.mxu0 0.0
  %6881 = vmatpush1.msra.mxu0 0.0
  %6882 = vmatprep.subr.mxu0 0.0
  %6883 = vmatpush1.msra.mxu0 0.0
  %6884 = vmatprep.mubr.f32.mxu0 0.0
  %6885 = vmatmul.mubr.f32.gmra.mrb[0].mxu0 %v6818
  %v6886 = vpop.f32.mrb[0].mxu0
  %v6887 = vadd.f32 %v6815, %v6886
  %v6888 = vpop.f32.mrb[0].mxu0
  %6889 = vdwg.mxu0
  %v6890 = vmax.f32 %v6887, 0.0
  %v6891 = vcombine.low %v4025, %v4220
  %v6892 = vcombine.low %v4444, %v4664
  %v6893 = vcombine.low %v4859, %v5095
  %v6894 = vcombine.low %v5284, %v5498
  %v6896 = vunpack.c.l.s4 1966171168
  %v6897 = vunpack.c.0.s8 %v6896
  %v6898 = vlaneseq
  %v6899 = vshrl.u32 %v6898, 7
  %v6900 = vsub.s32 %v6897, %v6899
  %v6901 = vrot.slane %v6891, %v6900
  %v6903 = vunpack.c.l.s4 1966171168
  %v6904 = vunpack.c.0.s8 %v6903
  %v6905 = vlaneseq
  %v6906 = vshrl.u32 %v6905, 7
  %v6907 = vsub.s32 %v6904, %v6906
  %v6908 = vrot.slane %v6892, %v6907
  %v6910 = vunpack.c.l.s4 1966171168
  %v6911 = vunpack.c.0.s8 %v6910
  %v6912 = vlaneseq
  %v6913 = vshrl.u32 %v6912, 7
  %v6914 = vsub.s32 %v6911, %v6913
  %v6915 = vrot.slane %v6893, %v6914
  %v6917 = vunpack.c.l.s4 1966171168
  %v6918 = vunpack.c.0.s8 %v6917
  %v6919 = vlaneseq
  %v6920 = vshrl.u32 %v6919, 7
  %v6921 = vsub.s32 %v6918, %v6920
  %v6922 = vrot.slane %v6894, %v6921
  %v6923 = vcombine.low %v6901, %v6908
  %v6924 = vcombine.low %v6915, %v6922
  %v6926 = vunpack.c.l.s4 1966171168
  %v6927 = vunpack.c.0.s8 %v6926
  %v6928 = vlaneseq
  %v6929 = vshrl.u32 %v6928, 7
  %v6930 = vsub.s32 %v6927, %v6929
  %v6931 = vrot.slane %v6923, %v6930
  %v6933 = vunpack.c.l.s4 1966171168
  %v6934 = vunpack.c.0.s8 %v6933
  %v6935 = vlaneseq
  %v6936 = vshrl.u32 %v6935, 7
  %v6937 = vsub.s32 %v6934, %v6936
  %v6938 = vrot.slane %v6924, %v6937
  %v6939 = vcombine.low %v6931, %v6938
  %v6942 = vsel %vm5700, %v6890, 0
  %6944 = vmatprep.subr.mxu0 0.0
  %6945 = vmatpush1.msra.mxu0 %v5646
  %6946 = vmatprep.subr.mxu0 0.0
  %6947 = vmatpush1.msra.mxu0 %v5647
  %6948 = vmatprep.subr.mxu0 0.0
  %6949 = vmatpush1.msra.mxu0 %v5648
  %6950 = vmatprep.subr.mxu0 0.0
  %6951 = vmatpush1.msra.mxu0 %v5649
  %6952 = vmatprep.subr.mxu0 0.0
  %6953 = vmatpush1.msra.mxu0 0.0
  %6954 = vmatprep.subr.mxu0 0.0
  %6955 = vmatpush1.msra.mxu0 0.0
  %6956 = vmatprep.subr.mxu0 0.0
  %6957 = vmatpush1.msra.mxu0 0.0
  %6958 = vmatprep.subr.mxu0 0.0
  %6959 = vmatpush1.msra.mxu0 0.0
  %6960 = vmatprep.subr.mxu0 0.0
  %6961 = vmatpush1.msra.mxu0 0.0
  %6962 = vmatprep.subr.mxu0 0.0
  %6963 = vmatpush1.msra.mxu0 0.0
  %6964 = vmatprep.subr.mxu0 0.0
  %6965 = vmatpush1.msra.mxu0 0.0
  %6966 = vmatprep.subr.mxu0 0.0
  %6967 = vmatpush1.msra.mxu0 0.0
  %6968 = vmatprep.subr.mxu0 0.0
  %6969 = vmatpush1.msra.mxu0 0.0
  %6970 = vmatprep.subr.mxu0 0.0
  %6971 = vmatpush1.msra.mxu0 0.0
  %6972 = vmatprep.subr.mxu0 0.0
  %6973 = vmatpush1.msra.mxu0 0.0
  %6974 = vmatprep.subr.mxu0 0.0
  %6975 = vmatpush1.msra.mxu0 0.0
  %6976 = vmatprep.subr.mxu0 0.0
  %6977 = vmatpush1.msra.mxu0 0.0
  %6978 = vmatprep.subr.mxu0 0.0
  %6979 = vmatpush1.msra.mxu0 0.0
  %6980 = vmatprep.subr.mxu0 0.0
  %6981 = vmatpush1.msra.mxu0 0.0
  %6982 = vmatprep.subr.mxu0 0.0
  %6983 = vmatpush1.msra.mxu0 0.0
  %6984 = vmatprep.subr.mxu0 0.0
  %6985 = vmatpush1.msra.mxu0 0.0
  %6986 = vmatprep.subr.mxu0 0.0
  %6987 = vmatpush1.msra.mxu0 0.0
  %6988 = vmatprep.subr.mxu0 0.0
  %6989 = vmatpush1.msra.mxu0 0.0
  %6990 = vmatprep.subr.mxu0 0.0
  %6991 = vmatpush1.msra.mxu0 0.0
  %6992 = vmatprep.subr.mxu0 0.0
  %6993 = vmatpush1.msra.mxu0 0.0
  %6994 = vmatprep.subr.mxu0 0.0
  %6995 = vmatpush1.msra.mxu0 0.0
  %6996 = vmatprep.subr.mxu0 0.0
  %6997 = vmatpush1.msra.mxu0 0.0
  %6998 = vmatprep.subr.mxu0 0.0
  %6999 = vmatpush1.msra.mxu0 0.0
  %7000 = vmatprep.subr.mxu0 0.0
  %7001 = vmatpush1.msra.mxu0 0.0
  %7002 = vmatprep.subr.mxu0 0.0
  %7003 = vmatpush1.msra.mxu0 0.0
  %7004 = vmatprep.subr.mxu0 0.0
  %7005 = vmatpush1.msra.mxu0 0.0
  %7006 = vmatprep.subr.mxu0 0.0
  %7007 = vmatpush1.msra.mxu0 0.0
  %7008 = vmatprep.mubr.f32.mxu0 0.0
  %7009 = vmatmul.mubr.f32.gmra.mrb[0].mxu0 %v6942
  %v7010 = vpop.f32.mrb[0].mxu0
  %v7011 = vadd.f32 %v6939, %v7010
  %v7012 = vpop.f32.mrb[0].mxu0
  %7013 = vdwg.mxu0
  %v7014 = vmax.f32 %v7011, 0.0
  %v7015 = vcombine.low %v4027, %v4222
  %v7016 = vcombine.low %v4458, %v4647
  %v7017 = vcombine.low %v4861, %v5103
  %v7018 = vcombine.low %v5298, %v5522
  %v7020 = vunpack.c.l.s4 1966171168
  %v7021 = vunpack.c.0.s8 %v7020
  %v7022 = vlaneseq
  %v7023 = vshrl.u32 %v7022, 7
  %v7024 = vsub.s32 %v7021, %v7023
  %v7025 = vrot.slane %v7015, %v7024
  %v7027 = vunpack.c.l.s4 1966171168
  %v7028 = vunpack.c.0.s8 %v7027
  %v7029 = vlaneseq
  %v7030 = vshrl.u32 %v7029, 7
  %v7031 = vsub.s32 %v7028, %v7030
  %v7032 = vrot.slane %v7016, %v7031
  %v7034 = vunpack.c.l.s4 1966171168
  %v7035 = vunpack.c.0.s8 %v7034
  %v7036 = vlaneseq
  %v7037 = vshrl.u32 %v7036, 7
  %v7038 = vsub.s32 %v7035, %v7037
  %v7039 = vrot.slane %v7017, %v7038
  %v7041 = vunpack.c.l.s4 1966171168
  %v7042 = vunpack.c.0.s8 %v7041
  %v7043 = vlaneseq
  %v7044 = vshrl.u32 %v7043, 7
  %v7045 = vsub.s32 %v7042, %v7044
  %v7046 = vrot.slane %v7018, %v7045
  %v7047 = vcombine.low %v7025, %v7032
  %v7048 = vcombine.low %v7039, %v7046
  %v7050 = vunpack.c.l.s4 1966171168
  %v7051 = vunpack.c.0.s8 %v7050
  %v7052 = vlaneseq
  %v7053 = vshrl.u32 %v7052, 7
  %v7054 = vsub.s32 %v7051, %v7053
  %v7055 = vrot.slane %v7047, %v7054
  %v7057 = vunpack.c.l.s4 1966171168
  %v7058 = vunpack.c.0.s8 %v7057
  %v7059 = vlaneseq
  %v7060 = vshrl.u32 %v7059, 7
  %v7061 = vsub.s32 %v7058, %v7060
  %v7062 = vrot.slane %v7048, %v7061
  %v7063 = vcombine.low %v7055, %v7062
  %v7066 = vsel %vm5700, %v7014, 0
  %7068 = vmatprep.subr.mxu0 0.0
  %7069 = vmatpush1.msra.mxu0 %v5646
  %7070 = vmatprep.subr.mxu0 0.0
  %7071 = vmatpush1.msra.mxu0 %v5647
  %7072 = vmatprep.subr.mxu0 0.0
  %7073 = vmatpush1.msra.mxu0 %v5648
  %7074 = vmatprep.subr.mxu0 0.0
  %7075 = vmatpush1.msra.mxu0 %v5649
  %7076 = vmatprep.subr.mxu0 0.0
  %7077 = vmatpush1.msra.mxu0 0.0
  %7078 = vmatprep.subr.mxu0 0.0
  %7079 = vmatpush1.msra.mxu0 0.0
  %7080 = vmatprep.subr.mxu0 0.0
  %7081 = vmatpush1.msra.mxu0 0.0
  %7082 = vmatprep.subr.mxu0 0.0
  %7083 = vmatpush1.msra.mxu0 0.0
  %7084 = vmatprep.subr.mxu0 0.0
  %7085 = vmatpush1.msra.mxu0 0.0
  %7086 = vmatprep.subr.mxu0 0.0
  %7087 = vmatpush1.msra.mxu0 0.0
  %7088 = vmatprep.subr.mxu0 0.0
  %7089 = vmatpush1.msra.mxu0 0.0
  %7090 = vmatprep.subr.mxu0 0.0
  %7091 = vmatpush1.msra.mxu0 0.0
  %7092 = vmatprep.subr.mxu0 0.0
  %7093 = vmatpush1.msra.mxu0 0.0
  %7094 = vmatprep.subr.mxu0 0.0
  %7095 = vmatpush1.msra.mxu0 0.0
  %7096 = vmatprep.subr.mxu0 0.0
  %7097 = vmatpush1.msra.mxu0 0.0
  %7098 = vmatprep.subr.mxu0 0.0
  %7099 = vmatpush1.msra.mxu0 0.0
  %7100 = vmatprep.subr.mxu0 0.0
  %7101 = vmatpush1.msra.mxu0 0.0
  %7102 = vmatprep.subr.mxu0 0.0
  %7103 = vmatpush1.msra.mxu0 0.0
  %7104 = vmatprep.subr.mxu0 0.0
  %7105 = vmatpush1.msra.mxu0 0.0
  %7106 = vmatprep.subr.mxu0 0.0
  %7107 = vmatpush1.msra.mxu0 0.0
  %7108 = vmatprep.subr.mxu0 0.0
  %7109 = vmatpush1.msra.mxu0 0.0
  %7110 = vmatprep.subr.mxu0 0.0
  %7111 = vmatpush1.msra.mxu0 0.0
  %7112 = vmatprep.subr.mxu0 0.0
  %7113 = vmatpush1.msra.mxu0 0.0
  %7114 = vmatprep.subr.mxu0 0.0
  %7115 = vmatpush1.msra.mxu0 0.0
  %7116 = vmatprep.subr.mxu0 0.0
  %7117 = vmatpush1.msra.mxu0 0.0
  %7118 = vmatprep.subr.mxu0 0.0
  %7119 = vmatpush1.msra.mxu0 0.0
  %7120 = vmatprep.subr.mxu0 0.0
  %7121 = vmatpush1.msra.mxu0 0.0
  %7122 = vmatprep.subr.mxu0 0.0
  %7123 = vmatpush1.msra.mxu0 0.0
  %7124 = vmatprep.subr.mxu0 0.0
  %7125 = vmatpush1.msra.mxu0 0.0
  %7126 = vmatprep.subr.mxu0 0.0
  %7127 = vmatpush1.msra.mxu0 0.0
  %7128 = vmatprep.subr.mxu0 0.0
  %7129 = vmatpush1.msra.mxu0 0.0
  %7130 = vmatprep.subr.mxu0 0.0
  %7131 = vmatpush1.msra.mxu0 0.0
  %7132 = vmatprep.mubr.f32.mxu0 0.0
  %7133 = vmatmul.mubr.f32.gmra.mrb[0].mxu0 %v7066
  %v7134 = vpop.f32.mrb[0].mxu0
  %v7135 = vadd.f32 %v7063, %v7134
  %v7136 = vpop.f32.mrb[0].mxu0
  %7137 = vdwg.mxu0
  %v7138 = vmax.f32 %v7135, 0.0
  %v7139 = vcombine.low %v4010, %v4224
  %v7140 = vcombine.low %v4466, %v4661
  %v7141 = vcombine.low %v4885, %v5105
  %v7142 = vcombine.low %v5300, %v5536
  %v7144 = vunpack.c.l.s4 1966171168
  %v7145 = vunpack.c.0.s8 %v7144
  %v7146 = vlaneseq
  %v7147 = vshrl.u32 %v7146, 7
  %v7148 = vsub.s32 %v7145, %v7147
  %v7149 = vrot.slane %v7139, %v7148
  %v7151 = vunpack.c.l.s4 1966171168
  %v7152 = vunpack.c.0.s8 %v7151
  %v7153 = vlaneseq
  %v7154 = vshrl.u32 %v7153, 7
  %v7155 = vsub.s32 %v7152, %v7154
  %v7156 = vrot.slane %v7140, %v7155
  %v7158 = vunpack.c.l.s4 1966171168
  %v7159 = vunpack.c.0.s8 %v7158
  %v7160 = vlaneseq
  %v7161 = vshrl.u32 %v7160, 7
  %v7162 = vsub.s32 %v7159, %v7161
  %v7163 = vrot.slane %v7141, %v7162
  %v7165 = vunpack.c.l.s4 1966171168
  %v7166 = vunpack.c.0.s8 %v7165
  %v7167 = vlaneseq
  %v7168 = vshrl.u32 %v7167, 7
  %v7169 = vsub.s32 %v7166, %v7168
  %v7170 = vrot.slane %v7142, %v7169
  %v7171 = vcombine.low %v7149, %v7156
  %v7172 = vcombine.low %v7163, %v7170
  %v7174 = vunpack.c.l.s4 1966171168
  %v7175 = vunpack.c.0.s8 %v7174
  %v7176 = vlaneseq
  %v7177 = vshrl.u32 %v7176, 7
  %v7178 = vsub.s32 %v7175, %v7177
  %v7179 = vrot.slane %v7171, %v7178
  %v7181 = vunpack.c.l.s4 1966171168
  %v7182 = vunpack.c.0.s8 %v7181
  %v7183 = vlaneseq
  %v7184 = vshrl.u32 %v7183, 7
  %v7185 = vsub.s32 %v7182, %v7184
  %v7186 = vrot.slane %v7172, %v7185
  %v7187 = vcombine.low %v7179, %v7186
  %v7190 = vsel %vm5700, %v7138, 0
  %7192 = vmatprep.subr.mxu0 0.0
  %7193 = vmatpush1.msra.mxu0 %v5646
  %7194 = vmatprep.subr.mxu0 0.0
  %7195 = vmatpush1.msra.mxu0 %v5647
  %7196 = vmatprep.subr.mxu0 0.0
  %7197 = vmatpush1.msra.mxu0 %v5648
  %7198 = vmatprep.subr.mxu0 0.0
  %7199 = vmatpush1.msra.mxu0 %v5649
  %7200 = vmatprep.subr.mxu0 0.0
  %7201 = vmatpush1.msra.mxu0 0.0
  %7202 = vmatprep.subr.mxu0 0.0
  %7203 = vmatpush1.msra.mxu0 0.0
  %7204 = vmatprep.subr.mxu0 0.0
  %7205 = vmatpush1.msra.mxu0 0.0
  %7206 = vmatprep.subr.mxu0 0.0
  %7207 = vmatpush1.msra.mxu0 0.0
  %7208 = vmatprep.subr.mxu0 0.0
  %7209 = vmatpush1.msra.mxu0 0.0
  %7210 = vmatprep.subr.mxu0 0.0
  %7211 = vmatpush1.msra.mxu0 0.0
  %7212 = vmatprep.subr.mxu0 0.0
  %7213 = vmatpush1.msra.mxu0 0.0
  %7214 = vmatprep.subr.mxu0 0.0
  %7215 = vmatpush1.msra.mxu0 0.0
  %7216 = vmatprep.subr.mxu0 0.0
  %7217 = vmatpush1.msra.mxu0 0.0
  %7218 = vmatprep.subr.mxu0 0.0
  %7219 = vmatpush1.msra.mxu0 0.0
  %7220 = vmatprep.subr.mxu0 0.0
  %7221 = vmatpush1.msra.mxu0 0.0
  %7222 = vmatprep.subr.mxu0 0.0
  %7223 = vmatpush1.msra.mxu0 0.0
  %7224 = vmatprep.subr.mxu0 0.0
  %7225 = vmatpush1.msra.mxu0 0.0
  %7226 = vmatprep.subr.mxu0 0.0
  %7227 = vmatpush1.msra.mxu0 0.0
  %7228 = vmatprep.subr.mxu0 0.0
  %7229 = vmatpush1.msra.mxu0 0.0
  %7230 = vmatprep.subr.mxu0 0.0
  %7231 = vmatpush1.msra.mxu0 0.0
  %7232 = vmatprep.subr.mxu0 0.0
  %7233 = vmatpush1.msra.mxu0 0.0
  %7234 = vmatprep.subr.mxu0 0.0
  %7235 = vmatpush1.msra.mxu0 0.0
  %7236 = vmatprep.subr.mxu0 0.0
  %7237 = vmatpush1.msra.mxu0 0.0
  %7238 = vmatprep.subr.mxu0 0.0
  %7239 = vmatpush1.msra.mxu0 0.0
  %7240 = vmatprep.subr.mxu0 0.0
  %7241 = vmatpush1.msra.mxu0 0.0
  %7242 = vmatprep.subr.mxu0 0.0
  %7243 = vmatpush1.msra.mxu0 0.0
  %7244 = vmatprep.subr.mxu0 0.0
  %7245 = vmatpush1.msra.mxu0 0.0
  %7246 = vmatprep.subr.mxu0 0.0
  %7247 = vmatpush1.msra.mxu0 0.0
  %7248 = vmatprep.subr.mxu0 0.0
  %7249 = vmatpush1.msra.mxu0 0.0
  %7250 = vmatprep.subr.mxu0 0.0
  %7251 = vmatpush1.msra.mxu0 0.0
  %7252 = vmatprep.subr.mxu0 0.0
  %7253 = vmatpush1.msra.mxu0 0.0
  %7254 = vmatprep.subr.mxu0 0.0
  %7255 = vmatpush1.msra.mxu0 0.0
  %7256 = vmatprep.mubr.f32.mxu0 0.0
  %7257 = vmatmul.mubr.f32.gmra.mrb[0].mxu0 %v7190
  %v7258 = vpop.f32.mrb[0].mxu0
  %v7259 = vadd.f32 %v7187, %v7258
  %v7260 = vpop.f32.mrb[0].mxu0
  %7261 = vdwg.mxu0
  %v7262 = vmax.f32 %v7259, 0.0
  %v7263 = vcombine.low %v4024, %v4248
  %v7264 = vcombine.low %v4468, %v4663
  %v7265 = vcombine.low %v4899, %v5088
  %v7266 = vcombine.low %v5302, %v5544
  %v7268 = vunpack.c.l.s4 1966171168
  %v7269 = vunpack.c.0.s8 %v7268
  %v7270 = vlaneseq
  %v7271 = vshrl.u32 %v7270, 7
  %v7272 = vsub.s32 %v7269, %v7271
  %v7273 = vrot.slane %v7263, %v7272
  %v7275 = vunpack.c.l.s4 1966171168
  %v7276 = vunpack.c.0.s8 %v7275
  %v7277 = vlaneseq
  %v7278 = vshrl.u32 %v7277, 7
  %v7279 = vsub.s32 %v7276, %v7278
  %v7280 = vrot.slane %v7264, %v7279
  %v7282 = vunpack.c.l.s4 1966171168
  %v7283 = vunpack.c.0.s8 %v7282
  %v7284 = vlaneseq
  %v7285 = vshrl.u32 %v7284, 7
  %v7286 = vsub.s32 %v7283, %v7285
  %v7287 = vrot.slane %v7265, %v7286
  %v7289 = vunpack.c.l.s4 1966171168
  %v7290 = vunpack.c.0.s8 %v7289
  %v7291 = vlaneseq
  %v7292 = vshrl.u32 %v7291, 7
  %v7293 = vsub.s32 %v7290, %v7292
  %v7294 = vrot.slane %v7266, %v7293
  %v7295 = vcombine.low %v7273, %v7280
  %v7296 = vcombine.low %v7287, %v7294
  %v7298 = vunpack.c.l.s4 1966171168
  %v7299 = vunpack.c.0.s8 %v7298
  %v7300 = vlaneseq
  %v7301 = vshrl.u32 %v7300, 7
  %v7302 = vsub.s32 %v7299, %v7301
  %v7303 = vrot.slane %v7295, %v7302
  %v7305 = vunpack.c.l.s4 1966171168
  %v7306 = vunpack.c.0.s8 %v7305
  %v7307 = vlaneseq
  %v7308 = vshrl.u32 %v7307, 7
  %v7309 = vsub.s32 %v7306, %v7308
  %v7310 = vrot.slane %v7296, %v7309
  %v7311 = vcombine.low %v7303, %v7310
  %v7314 = vsel %vm5700, %v7262, 0
  %7316 = vmatprep.subr.mxu0 0.0
  %7317 = vmatpush1.msra.mxu0 %v5646
  %7318 = vmatprep.subr.mxu0 0.0
  %7319 = vmatpush1.msra.mxu0 %v5647
  %7320 = vmatprep.subr.mxu0 0.0
  %7321 = vmatpush1.msra.mxu0 %v5648
  %7322 = vmatprep.subr.mxu0 0.0
  %7323 = vmatpush1.msra.mxu0 %v5649
  %7324 = vmatprep.subr.mxu0 0.0
  %7325 = vmatpush1.msra.mxu0 0.0
  %7326 = vmatprep.subr.mxu0 0.0
  %7327 = vmatpush1.msra.mxu0 0.0
  %7328 = vmatprep.subr.mxu0 0.0
  %7329 = vmatpush1.msra.mxu0 0.0
  %7330 = vmatprep.subr.mxu0 0.0
  %7331 = vmatpush1.msra.mxu0 0.0
  %7332 = vmatprep.subr.mxu0 0.0
  %7333 = vmatpush1.msra.mxu0 0.0
  %7334 = vmatprep.subr.mxu0 0.0
  %7335 = vmatpush1.msra.mxu0 0.0
  %7336 = vmatprep.subr.mxu0 0.0
  %7337 = vmatpush1.msra.mxu0 0.0
  %7338 = vmatprep.subr.mxu0 0.0
  %7339 = vmatpush1.msra.mxu0 0.0
  %7340 = vmatprep.subr.mxu0 0.0
  %7341 = vmatpush1.msra.mxu0 0.0
  %7342 = vmatprep.subr.mxu0 0.0
  %7343 = vmatpush1.msra.mxu0 0.0
  %7344 = vmatprep.subr.mxu0 0.0
  %7345 = vmatpush1.msra.mxu0 0.0
  %7346 = vmatprep.subr.mxu0 0.0
  %7347 = vmatpush1.msra.mxu0 0.0
  %7348 = vmatprep.subr.mxu0 0.0
  %7349 = vmatpush1.msra.mxu0 0.0
  %7350 = vmatprep.subr.mxu0 0.0
  %7351 = vmatpush1.msra.mxu0 0.0
  %7352 = vmatprep.subr.mxu0 0.0
  %7353 = vmatpush1.msra.mxu0 0.0
  %7354 = vmatprep.subr.mxu0 0.0
  %7355 = vmatpush1.msra.mxu0 0.0
  %7356 = vmatprep.subr.mxu0 0.0
  %7357 = vmatpush1.msra.mxu0 0.0
  %7358 = vmatprep.subr.mxu0 0.0
  %7359 = vmatpush1.msra.mxu0 0.0
  %7360 = vmatprep.subr.mxu0 0.0
  %7361 = vmatpush1.msra.mxu0 0.0
  %7362 = vmatprep.subr.mxu0 0.0
  %7363 = vmatpush1.msra.mxu0 0.0
  %7364 = vmatprep.subr.mxu0 0.0
  %7365 = vmatpush1.msra.mxu0 0.0
  %7366 = vmatprep.subr.mxu0 0.0
  %7367 = vmatpush1.msra.mxu0 0.0
  %7368 = vmatprep.subr.mxu0 0.0
  %7369 = vmatpush1.msra.mxu0 0.0
  %7370 = vmatprep.subr.mxu0 0.0
  %7371 = vmatpush1.msra.mxu0 0.0
  %7372 = vmatprep.subr.mxu0 0.0
  %7373 = vmatpush1.msra.mxu0 0.0
  %7374 = vmatprep.subr.mxu0 0.0
  %7375 = vmatpush1.msra.mxu0 0.0
  %7376 = vmatprep.subr.mxu0 0.0
  %7377 = vmatpush1.msra.mxu0 0.0
  %7378 = vmatprep.subr.mxu0 0.0
  %7379 = vmatpush1.msra.mxu0 0.0
  %7380 = vmatprep.mubr.f32.mxu0 0.0
  %7381 = vmatmul.mubr.f32.gmra.mrb[0].mxu0 %v7314
  %v7382 = vpop.f32.mrb[0].mxu0
  %v7383 = vadd.f32 %v7311, %v7382
  %v7384 = vpop.f32.mrb[0].mxu0
  %7385 = vdwg.mxu0
  %v7386 = vmax.f32 %v7383, 0.0
  %v7387 = vcombine.low %v4026, %v4262
  %v7388 = vcombine.low %v4451, %v4665
  %v7389 = vcombine.low %v4907, %v5102
  %v7390 = vcombine.low %v5326, %v5546
  %v7392 = vunpack.c.l.s4 1966171168
  %v7393 = vunpack.c.0.s8 %v7392
  %v7394 = vlaneseq
  %v7395 = vshrl.u32 %v7394, 7
  %v7396 = vsub.s32 %v7393, %v7395
  %v7397 = vrot.slane %v7387, %v7396
  %v7399 = vunpack.c.l.s4 1966171168
  %v7400 = vunpack.c.0.s8 %v7399
  %v7401 = vlaneseq
  %v7402 = vshrl.u32 %v7401, 7
  %v7403 = vsub.s32 %v7400, %v7402
  %v7404 = vrot.slane %v7388, %v7403
  %v7406 = vunpack.c.l.s4 1966171168
  %v7407 = vunpack.c.0.s8 %v7406
  %v7408 = vlaneseq
  %v7409 = vshrl.u32 %v7408, 7
  %v7410 = vsub.s32 %v7407, %v7409
  %v7411 = vrot.slane %v7389, %v7410
  %v7413 = vunpack.c.l.s4 1966171168
  %v7414 = vunpack.c.0.s8 %v7413
  %v7415 = vlaneseq
  %v7416 = vshrl.u32 %v7415, 7
  %v7417 = vsub.s32 %v7414, %v7416
  %v7418 = vrot.slane %v7390, %v7417
  %v7419 = vcombine.low %v7397, %v7404
  %v7420 = vcombine.low %v7411, %v7418
  %v7422 = vunpack.c.l.s4 1966171168
  %v7423 = vunpack.c.0.s8 %v7422
  %v7424 = vlaneseq
  %v7425 = vshrl.u32 %v7424, 7
  %v7426 = vsub.s32 %v7423, %v7425
  %v7427 = vrot.slane %v7419, %v7426
  %v7429 = vunpack.c.l.s4 1966171168
  %v7430 = vunpack.c.0.s8 %v7429
  %v7431 = vlaneseq
  %v7432 = vshrl.u32 %v7431, 7
  %v7433 = vsub.s32 %v7430, %v7432
  %v7434 = vrot.slane %v7420, %v7433
  %v7435 = vcombine.low %v7427, %v7434
  %v7438 = vsel %vm5700, %v7386, 0
  %7440 = vmatprep.subr.mxu0 0.0
  %7441 = vmatpush1.msra.mxu0 %v5646
  %7442 = vmatprep.subr.mxu0 0.0
  %7443 = vmatpush1.msra.mxu0 %v5647
  %7444 = vmatprep.subr.mxu0 0.0
  %7445 = vmatpush1.msra.mxu0 %v5648
  %7446 = vmatprep.subr.mxu0 0.0
  %7447 = vmatpush1.msra.mxu0 %v5649
  %7448 = vmatprep.subr.mxu0 0.0
  %7449 = vmatpush1.msra.mxu0 0.0
  %7450 = vmatprep.subr.mxu0 0.0
  %7451 = vmatpush1.msra.mxu0 0.0
  %7452 = vmatprep.subr.mxu0 0.0
  %7453 = vmatpush1.msra.mxu0 0.0
  %7454 = vmatprep.subr.mxu0 0.0
  %7455 = vmatpush1.msra.mxu0 0.0
  %7456 = vmatprep.subr.mxu0 0.0
  %7457 = vmatpush1.msra.mxu0 0.0
  %7458 = vmatprep.subr.mxu0 0.0
  %7459 = vmatpush1.msra.mxu0 0.0
  %7460 = vmatprep.subr.mxu0 0.0
  %7461 = vmatpush1.msra.mxu0 0.0
  %7462 = vmatprep.subr.mxu0 0.0
  %7463 = vmatpush1.msra.mxu0 0.0
  %7464 = vmatprep.subr.mxu0 0.0
  %7465 = vmatpush1.msra.mxu0 0.0
  %7466 = vmatprep.subr.mxu0 0.0
  %7467 = vmatpush1.msra.mxu0 0.0
  %7468 = vmatprep.subr.mxu0 0.0
  %7469 = vmatpush1.msra.mxu0 0.0
  %7470 = vmatprep.subr.mxu0 0.0
  %7471 = vmatpush1.msra.mxu0 0.0
  %7472 = vmatprep.subr.mxu0 0.0
  %7473 = vmatpush1.msra.mxu0 0.0
  %7474 = vmatprep.subr.mxu0 0.0
  %7475 = vmatpush1.msra.mxu0 0.0
  %7476 = vmatprep.subr.mxu0 0.0
  %7477 = vmatpush1.msra.mxu0 0.0
  %7478 = vmatprep.subr.mxu0 0.0
  %7479 = vmatpush1.msra.mxu0 0.0
  %7480 = vmatprep.subr.mxu0 0.0
  %7481 = vmatpush1.msra.mxu0 0.0
  %7482 = vmatprep.subr.mxu0 0.0
  %7483 = vmatpush1.msra.mxu0 0.0
  %7484 = vmatprep.subr.mxu0 0.0
  %7485 = vmatpush1.msra.mxu0 0.0
  %7486 = vmatprep.subr.mxu0 0.0
  %7487 = vmatpush1.msra.mxu0 0.0
  %7488 = vmatprep.subr.mxu0 0.0
  %7489 = vmatpush1.msra.mxu0 0.0
  %7490 = vmatprep.subr.mxu0 0.0
  %7491 = vmatpush1.msra.mxu0 0.0
  %7492 = vmatprep.subr.mxu0 0.0
  %7493 = vmatpush1.msra.mxu0 0.0
  %7494 = vmatprep.subr.mxu0 0.0
  %7495 = vmatpush1.msra.mxu0 0.0
  %7496 = vmatprep.subr.mxu0 0.0
  %7497 = vmatpush1.msra.mxu0 0.0
  %7498 = vmatprep.subr.mxu0 0.0
  %7499 = vmatpush1.msra.mxu0 0.0
  %7500 = vmatprep.subr.mxu0 0.0
  %7501 = vmatpush1.msra.mxu0 0.0
  %7502 = vmatprep.subr.mxu0 0.0
  %7503 = vmatpush1.msra.mxu0 0.0
  %7504 = vmatprep.mubr.f32.mxu0 0.0
  %7505 = vmatmul.mubr.f32.gmra.mrb[0].mxu0 %v7438
  %v7506 = vpop.f32.mrb[0].mxu0
  %v7507 = vadd.f32 %v7435, %v7506
  %v7508 = vpop.f32.mrb[0].mxu0
  %7509 = vdwg.mxu0
  %v7510 = vmax.f32 %v7507, 0.0
  %v7511 = vcombine.low %v4028, %v4270
  %v7512 = vcombine.low %v4465, %v4689
  %v7513 = vcombine.low %v4909, %v5104
  %v7514 = vcombine.low %v5340, %v5529
  %v7516 = vunpack.c.l.s4 1966171168
  %v7517 = vunpack.c.0.s8 %v7516
  %v7518 = vlaneseq
  %v7519 = vshrl.u32 %v7518, 7
  %v7520 = vsub.s32 %v7517, %v7519
  %v7521 = vrot.slane %v7511, %v7520
  %v7523 = vunpack.c.l.s4 1966171168
  %v7524 = vunpack.c.0.s8 %v7523
  %v7525 = vlaneseq
  %v7526 = vshrl.u32 %v7525, 7
  %v7527 = vsub.s32 %v7524, %v7526
  %v7528 = vrot.slane %v7512, %v7527
  %v7530 = vunpack.c.l.s4 1966171168
  %v7531 = vunpack.c.0.s8 %v7530
  %v7532 = vlaneseq
  %v7533 = vshrl.u32 %v7532, 7
  %v7534 = vsub.s32 %v7531, %v7533
  %v7535 = vrot.slane %v7513, %v7534
  %v7537 = vunpack.c.l.s4 1966171168
  %v7538 = vunpack.c.0.s8 %v7537
  %v7539 = vlaneseq
  %v7540 = vshrl.u32 %v7539, 7
  %v7541 = vsub.s32 %v7538, %v7540
  %v7542 = vrot.slane %v7514, %v7541
  %v7543 = vcombine.low %v7521, %v7528
  %v7544 = vcombine.low %v7535, %v7542
  %v7546 = vunpack.c.l.s4 1966171168
  %v7547 = vunpack.c.0.s8 %v7546
  %v7548 = vlaneseq
  %v7549 = vshrl.u32 %v7548, 7
  %v7550 = vsub.s32 %v7547, %v7549
  %v7551 = vrot.slane %v7543, %v7550
  %v7553 = vunpack.c.l.s4 1966171168
  %v7554 = vunpack.c.0.s8 %v7553
  %v7555 = vlaneseq
  %v7556 = vshrl.u32 %v7555, 7
  %v7557 = vsub.s32 %v7554, %v7556
  %v7558 = vrot.slane %v7544, %v7557
  %v7559 = vcombine.low %v7551, %v7558
  %v7562 = vsel %vm5700, %v7510, 0
  %7564 = vmatprep.subr.mxu0 0.0
  %7565 = vmatpush1.msra.mxu0 %v5646
  %7566 = vmatprep.subr.mxu0 0.0
  %7567 = vmatpush1.msra.mxu0 %v5647
  %7568 = vmatprep.subr.mxu0 0.0
  %7569 = vmatpush1.msra.mxu0 %v5648
  %7570 = vmatprep.subr.mxu0 0.0
  %7571 = vmatpush1.msra.mxu0 %v5649
  %7572 = vmatprep.subr.mxu0 0.0
  %7573 = vmatpush1.msra.mxu0 0.0
  %7574 = vmatprep.subr.mxu0 0.0
  %7575 = vmatpush1.msra.mxu0 0.0
  %7576 = vmatprep.subr.mxu0 0.0
  %7577 = vmatpush1.msra.mxu0 0.0
  %7578 = vmatprep.subr.mxu0 0.0
  %7579 = vmatpush1.msra.mxu0 0.0
  %7580 = vmatprep.subr.mxu0 0.0
  %7581 = vmatpush1.msra.mxu0 0.0
  %7582 = vmatprep.subr.mxu0 0.0
  %7583 = vmatpush1.msra.mxu0 0.0
  %7584 = vmatprep.subr.mxu0 0.0
  %7585 = vmatpush1.msra.mxu0 0.0
  %7586 = vmatprep.subr.mxu0 0.0
  %7587 = vmatpush1.msra.mxu0 0.0
  %7588 = vmatprep.subr.mxu0 0.0
  %7589 = vmatpush1.msra.mxu0 0.0
  %7590 = vmatprep.subr.mxu0 0.0
  %7591 = vmatpush1.msra.mxu0 0.0
  %7592 = vmatprep.subr.mxu0 0.0
  %7593 = vmatpush1.msra.mxu0 0.0
  %7594 = vmatprep.subr.mxu0 0.0
  %7595 = vmatpush1.msra.mxu0 0.0
  %7596 = vmatprep.subr.mxu0 0.0
  %7597 = vmatpush1.msra.mxu0 0.0
  %7598 = vmatprep.subr.mxu0 0.0
  %7599 = vmatpush1.msra.mxu0 0.0
  %7600 = vmatprep.subr.mxu0 0.0
  %7601 = vmatpush1.msra.mxu0 0.0
  %7602 = vmatprep.subr.mxu0 0.0
  %7603 = vmatpush1.msra.mxu0 0.0
  %7604 = vmatprep.subr.mxu0 0.0
  %7605 = vmatpush1.msra.mxu0 0.0
  %7606 = vmatprep.subr.mxu0 0.0
  %7607 = vmatpush1.msra.mxu0 0.0
  %7608 = vmatprep.subr.mxu0 0.0
  %7609 = vmatpush1.msra.mxu0 0.0
  %7610 = vmatprep.subr.mxu0 0.0
  %7611 = vmatpush1.msra.mxu0 0.0
  %7612 = vmatprep.subr.mxu0 0.0
  %7613 = vmatpush1.msra.mxu0 0.0
  %7614 = vmatprep.subr.mxu0 0.0
  %7615 = vmatpush1.msra.mxu0 0.0
  %7616 = vmatprep.subr.mxu0 0.0
  %7617 = vmatpush1.msra.mxu0 0.0
  %7618 = vmatprep.subr.mxu0 0.0
  %7619 = vmatpush1.msra.mxu0 0.0
  %7620 = vmatprep.subr.mxu0 0.0
  %7621 = vmatpush1.msra.mxu0 0.0
  %7622 = vmatprep.subr.mxu0 0.0
  %7623 = vmatpush1.msra.mxu0 0.0
  %7624 = vmatprep.subr.mxu0 0.0
  %7625 = vmatpush1.msra.mxu0 0.0
  %7626 = vmatprep.subr.mxu0 0.0
  %7627 = vmatpush1.msra.mxu0 0.0
  %7628 = vmatprep.mubr.f32.mxu0 0.0
  %7629 = vmatmul.mubr.f32.gmra.mrb[0].mxu0 %v7562
  %v7630 = vpop.f32.mrb[0].mxu0
  %v7631 = vadd.f32 %v7559, %v7630
  %v7632 = vpop.f32.mrb[0].mxu0
  %7633 = vdwg.mxu0
  %v7634 = vmax.f32 %v7631, 0.0
  %v7635 = vcombine.low %v4052, %v4272
  %v7636 = vcombine.low %v4467, %v4703
  %v7637 = vcombine.low %v4892, %v5106
  %v7638 = vcombine.low %v5348, %v5543
  %v7640 = vunpack.c.l.s4 1966171168
  %v7641 = vunpack.c.0.s8 %v7640
  %v7642 = vlaneseq
  %v7643 = vshrl.u32 %v7642, 7
  %v7644 = vsub.s32 %v7641, %v7643
  %v7645 = vrot.slane %v7635, %v7644
  %v7647 = vunpack.c.l.s4 1966171168
  %v7648 = vunpack.c.0.s8 %v7647
  %v7649 = vlaneseq
  %v7650 = vshrl.u32 %v7649, 7
  %v7651 = vsub.s32 %v7648, %v7650
  %v7652 = vrot.slane %v7636, %v7651
  %v7654 = vunpack.c.l.s4 1966171168
  %v7655 = vunpack.c.0.s8 %v7654
  %v7656 = vlaneseq
  %v7657 = vshrl.u32 %v7656, 7
  %v7658 = vsub.s32 %v7655, %v7657
  %v7659 = vrot.slane %v7637, %v7658
  %v7661 = vunpack.c.l.s4 1966171168
  %v7662 = vunpack.c.0.s8 %v7661
  %v7663 = vlaneseq
  %v7664 = vshrl.u32 %v7663, 7
  %v7665 = vsub.s32 %v7662, %v7664
  %v7666 = vrot.slane %v7638, %v7665
  %v7667 = vcombine.low %v7645, %v7652
  %v7668 = vcombine.low %v7659, %v7666
  %v7670 = vunpack.c.l.s4 1966171168
  %v7671 = vunpack.c.0.s8 %v7670
  %v7672 = vlaneseq
  %v7673 = vshrl.u32 %v7672, 7
  %v7674 = vsub.s32 %v7671, %v7673
  %v7675 = vrot.slane %v7667, %v7674
  %v7677 = vunpack.c.l.s4 1966171168
  %v7678 = vunpack.c.0.s8 %v7677
  %v7679 = vlaneseq
  %v7680 = vshrl.u32 %v7679, 7
  %v7681 = vsub.s32 %v7678, %v7680
  %v7682 = vrot.slane %v7668, %v7681
  %v7683 = vcombine.low %v7675, %v7682
  %v7686 = vsel %vm5700, %v7634, 0
  %7688 = vmatprep.subr.mxu0 0.0
  %7689 = vmatpush1.msra.mxu0 %v5646
  %7690 = vmatprep.subr.mxu0 0.0
  %7691 = vmatpush1.msra.mxu0 %v5647
  %7692 = vmatprep.subr.mxu0 0.0
  %7693 = vmatpush1.msra.mxu0 %v5648
  %7694 = vmatprep.subr.mxu0 0.0
  %7695 = vmatpush1.msra.mxu0 %v5649
  %7696 = vmatprep.subr.mxu0 0.0
  %7697 = vmatpush1.msra.mxu0 0.0
  %7698 = vmatprep.subr.mxu0 0.0
  %7699 = vmatpush1.msra.mxu0 0.0
  %7700 = vmatprep.subr.mxu0 0.0
  %7701 = vmatpush1.msra.mxu0 0.0
  %7702 = vmatprep.subr.mxu0 0.0
  %7703 = vmatpush1.msra.mxu0 0.0
  %7704 = vmatprep.subr.mxu0 0.0
  %7705 = vmatpush1.msra.mxu0 0.0
  %7706 = vmatprep.subr.mxu0 0.0
  %7707 = vmatpush1.msra.mxu0 0.0
  %7708 = vmatprep.subr.mxu0 0.0
  %7709 = vmatpush1.msra.mxu0 0.0
  %7710 = vmatprep.subr.mxu0 0.0
  %7711 = vmatpush1.msra.mxu0 0.0
  %7712 = vmatprep.subr.mxu0 0.0
  %7713 = vmatpush1.msra.mxu0 0.0
  %7714 = vmatprep.subr.mxu0 0.0
  %7715 = vmatpush1.msra.mxu0 0.0
  %7716 = vmatprep.subr.mxu0 0.0
  %7717 = vmatpush1.msra.mxu0 0.0
  %7718 = vmatprep.subr.mxu0 0.0
  %7719 = vmatpush1.msra.mxu0 0.0
  %7720 = vmatprep.subr.mxu0 0.0
  %7721 = vmatpush1.msra.mxu0 0.0
  %7722 = vmatprep.subr.mxu0 0.0
  %7723 = vmatpush1.msra.mxu0 0.0
  %7724 = vmatprep.subr.mxu0 0.0
  %7725 = vmatpush1.msra.mxu0 0.0
  %7726 = vmatprep.subr.mxu0 0.0
  %7727 = vmatpush1.msra.mxu0 0.0
  %7728 = vmatprep.subr.mxu0 0.0
  %7729 = vmatpush1.msra.mxu0 0.0
  %7730 = vmatprep.subr.mxu0 0.0
  %7731 = vmatpush1.msra.mxu0 0.0
  %7732 = vmatprep.subr.mxu0 0.0
  %7733 = vmatpush1.msra.mxu0 0.0
  %7734 = vmatprep.subr.mxu0 0.0
  %7735 = vmatpush1.msra.mxu0 0.0
  %7736 = vmatprep.subr.mxu0 0.0
  %7737 = vmatpush1.msra.mxu0 0.0
  %7738 = vmatprep.subr.mxu0 0.0
  %7739 = vmatpush1.msra.mxu0 0.0
  %7740 = vmatprep.subr.mxu0 0.0
  %7741 = vmatpush1.msra.mxu0 0.0
  %7742 = vmatprep.subr.mxu0 0.0
  %7743 = vmatpush1.msra.mxu0 0.0
  %7744 = vmatprep.subr.mxu0 0.0
  %7745 = vmatpush1.msra.mxu0 0.0
  %7746 = vmatprep.subr.mxu0 0.0
  %7747 = vmatpush1.msra.mxu0 0.0
  %7748 = vmatprep.subr.mxu0 0.0
  %7749 = vmatpush1.msra.mxu0 0.0
  %7750 = vmatprep.subr.mxu0 0.0
  %7751 = vmatpush1.msra.mxu0 0.0
  %7752 = vmatprep.mubr.f32.mxu0 0.0
  %7753 = vmatmul.mubr.f32.gmra.mrb[0].mxu0 %v7686
  %v7754 = vpop.f32.mrb[0].mxu0
  %v7755 = vadd.f32 %v7683, %v7754
  %v7756 = vpop.f32.mrb[0].mxu0
  %7757 = vdwg.mxu0
  %v7758 = vmax.f32 %v7755, 0.0
  %v7759 = vcombine.low %v4066, %v4255
  %v7760 = vcombine.low %v4469, %v4711
  %v7761 = vcombine.low %v4906, %v5130
  %v7762 = vcombine.low %v5350, %v5545
  %v7764 = vunpack.c.l.s4 1966171168
  %v7765 = vunpack.c.0.s8 %v7764
  %v7766 = vlaneseq
  %v7767 = vshrl.u32 %v7766, 7
  %v7768 = vsub.s32 %v7765, %v7767
  %v7769 = vrot.slane %v7759, %v7768
  %v7771 = vunpack.c.l.s4 1966171168
  %v7772 = vunpack.c.0.s8 %v7771
  %v7773 = vlaneseq
  %v7774 = vshrl.u32 %v7773, 7
  %v7775 = vsub.s32 %v7772, %v7774
  %v7776 = vrot.slane %v7760, %v7775
  %v7778 = vunpack.c.l.s4 1966171168
  %v7779 = vunpack.c.0.s8 %v7778
  %v7780 = vlaneseq
  %v7781 = vshrl.u32 %v7780, 7
  %v7782 = vsub.s32 %v7779, %v7781
  %v7783 = vrot.slane %v7761, %v7782
  %v7785 = vunpack.c.l.s4 1966171168
  %v7786 = vunpack.c.0.s8 %v7785
  %v7787 = vlaneseq
  %v7788 = vshrl.u32 %v7787, 7
  %v7789 = vsub.s32 %v7786, %v7788
  %v7790 = vrot.slane %v7762, %v7789
  %v7791 = vcombine.low %v7769, %v7776
  %v7792 = vcombine.low %v7783, %v7790
  %v7794 = vunpack.c.l.s4 1966171168
  %v7795 = vunpack.c.0.s8 %v7794
  %v7796 = vlaneseq
  %v7797 = vshrl.u32 %v7796, 7
  %v7798 = vsub.s32 %v7795, %v7797
  %v7799 = vrot.slane %v7791, %v7798
  %v7801 = vunpack.c.l.s4 1966171168
  %v7802 = vunpack.c.0.s8 %v7801
  %v7803 = vlaneseq
  %v7804 = vshrl.u32 %v7803, 7
  %v7805 = vsub.s32 %v7802, %v7804
  %v7806 = vrot.slane %v7792, %v7805
  %v7807 = vcombine.low %v7799, %v7806
  %v7810 = vsel %vm5700, %v7758, 0
  %7812 = vmatprep.subr.mxu0 0.0
  %7813 = vmatpush1.msra.mxu0 %v5646
  %7814 = vmatprep.subr.mxu0 0.0
  %7815 = vmatpush1.msra.mxu0 %v5647
  %7816 = vmatprep.subr.mxu0 0.0
  %7817 = vmatpush1.msra.mxu0 %v5648
  %7818 = vmatprep.subr.mxu0 0.0
  %7819 = vmatpush1.msra.mxu0 %v5649
  %7820 = vmatprep.subr.mxu0 0.0
  %7821 = vmatpush1.msra.mxu0 0.0
  %7822 = vmatprep.subr.mxu0 0.0
  %7823 = vmatpush1.msra.mxu0 0.0
  %7824 = vmatprep.subr.mxu0 0.0
  %7825 = vmatpush1.msra.mxu0 0.0
  %7826 = vmatprep.subr.mxu0 0.0
  %7827 = vmatpush1.msra.mxu0 0.0
  %7828 = vmatprep.subr.mxu0 0.0
  %7829 = vmatpush1.msra.mxu0 0.0
  %7830 = vmatprep.subr.mxu0 0.0
  %7831 = vmatpush1.msra.mxu0 0.0
  %7832 = vmatprep.subr.mxu0 0.0
  %7833 = vmatpush1.msra.mxu0 0.0
  %7834 = vmatprep.subr.mxu0 0.0
  %7835 = vmatpush1.msra.mxu0 0.0
  %7836 = vmatprep.subr.mxu0 0.0
  %7837 = vmatpush1.msra.mxu0 0.0
  %7838 = vmatprep.subr.mxu0 0.0
  %7839 = vmatpush1.msra.mxu0 0.0
  %7840 = vmatprep.subr.mxu0 0.0
  %7841 = vmatpush1.msra.mxu0 0.0
  %7842 = vmatprep.subr.mxu0 0.0
  %7843 = vmatpush1.msra.mxu0 0.0
  %7844 = vmatprep.subr.mxu0 0.0
  %7845 = vmatpush1.msra.mxu0 0.0
  %7846 = vmatprep.subr.mxu0 0.0
  %7847 = vmatpush1.msra.mxu0 0.0
  %7848 = vmatprep.subr.mxu0 0.0
  %7849 = vmatpush1.msra.mxu0 0.0
  %7850 = vmatprep.subr.mxu0 0.0
  %7851 = vmatpush1.msra.mxu0 0.0
  %7852 = vmatprep.subr.mxu0 0.0
  %7853 = vmatpush1.msra.mxu0 0.0
  %7854 = vmatprep.subr.mxu0 0.0
  %7855 = vmatpush1.msra.mxu0 0.0
  %7856 = vmatprep.subr.mxu0 0.0
  %7857 = vmatpush1.msra.mxu0 0.0
  %7858 = vmatprep.subr.mxu0 0.0
  %7859 = vmatpush1.msra.mxu0 0.0
  %7860 = vmatprep.subr.mxu0 0.0
  %7861 = vmatpush1.msra.mxu0 0.0
  %7862 = vmatprep.subr.mxu0 0.0
  %7863 = vmatpush1.msra.mxu0 0.0
  %7864 = vmatprep.subr.mxu0 0.0
  %7865 = vmatpush1.msra.mxu0 0.0
  %7866 = vmatprep.subr.mxu0 0.0
  %7867 = vmatpush1.msra.mxu0 0.0
  %7868 = vmatprep.subr.mxu0 0.0
  %7869 = vmatpush1.msra.mxu0 0.0
  %7870 = vmatprep.subr.mxu0 0.0
  %7871 = vmatpush1.msra.mxu0 0.0
  %7872 = vmatprep.subr.mxu0 0.0
  %7873 = vmatpush1.msra.mxu0 0.0
  %7874 = vmatprep.subr.mxu0 0.0
  %7875 = vmatpush1.msra.mxu0 0.0
  %7876 = vmatprep.mubr.f32.mxu0 0.0
  %7877 = vmatmul.mubr.f32.gmra.mrb[0].mxu0 %v7810
  %v7878 = vpop.f32.mrb[0].mxu0
  %v7879 = vadd.f32 %v7807, %v7878
  %v7880 = vpop.f32.mrb[0].mxu0
  %7881 = vdwg.mxu0
  %v7882 = vmax.f32 %v7879, 0.0
  %v7883 = vcombine.low %v4074, %v4269
  %v7884 = vcombine.low %v4493, %v4713
  %v7885 = vcombine.low %v4908, %v5144
  %v7886 = vcombine.low %v5333, %v5547
  %v7888 = vunpack.c.l.s4 1966171168
  %v7889 = vunpack.c.0.s8 %v7888
  %v7890 = vlaneseq
  %v7891 = vshrl.u32 %v7890, 7
  %v7892 = vsub.s32 %v7889, %v7891
  %v7893 = vrot.slane %v7883, %v7892
  %v7895 = vunpack.c.l.s4 1966171168
  %v7896 = vunpack.c.0.s8 %v7895
  %v7897 = vlaneseq
  %v7898 = vshrl.u32 %v7897, 7
  %v7899 = vsub.s32 %v7896, %v7898
  %v7900 = vrot.slane %v7884, %v7899
  %v7902 = vunpack.c.l.s4 1966171168
  %v7903 = vunpack.c.0.s8 %v7902
  %v7904 = vlaneseq
  %v7905 = vshrl.u32 %v7904, 7
  %v7906 = vsub.s32 %v7903, %v7905
  %v7907 = vrot.slane %v7885, %v7906
  %v7909 = vunpack.c.l.s4 1966171168
  %v7910 = vunpack.c.0.s8 %v7909
  %v7911 = vlaneseq
  %v7912 = vshrl.u32 %v7911, 7
  %v7913 = vsub.s32 %v7910, %v7912
  %v7914 = vrot.slane %v7886, %v7913
  %v7915 = vcombine.low %v7893, %v7900
  %v7916 = vcombine.low %v7907, %v7914
  %v7918 = vunpack.c.l.s4 1966171168
  %v7919 = vunpack.c.0.s8 %v7918
  %v7920 = vlaneseq
  %v7921 = vshrl.u32 %v7920, 7
  %v7922 = vsub.s32 %v7919, %v7921
  %v7923 = vrot.slane %v7915, %v7922
  %v7925 = vunpack.c.l.s4 1966171168
  %v7926 = vunpack.c.0.s8 %v7925
  %v7927 = vlaneseq
  %v7928 = vshrl.u32 %v7927, 7
  %v7929 = vsub.s32 %v7926, %v7928
  %v7930 = vrot.slane %v7916, %v7929
  %v7931 = vcombine.low %v7923, %v7930
  %v7934 = vsel %vm5700, %v7882, 0
  %7936 = vmatprep.subr.mxu0 0.0
  %7937 = vmatpush1.msra.mxu0 %v5646
  %7938 = vmatprep.subr.mxu0 0.0
  %7939 = vmatpush1.msra.mxu0 %v5647
  %7940 = vmatprep.subr.mxu0 0.0
  %7941 = vmatpush1.msra.mxu0 %v5648
  %7942 = vmatprep.subr.mxu0 0.0
  %7943 = vmatpush1.msra.mxu0 %v5649
  %7944 = vmatprep.subr.mxu0 0.0
  %7945 = vmatpush1.msra.mxu0 0.0
  %7946 = vmatprep.subr.mxu0 0.0
  %7947 = vmatpush1.msra.mxu0 0.0
  %7948 = vmatprep.subr.mxu0 0.0
  %7949 = vmatpush1.msra.mxu0 0.0
  %7950 = vmatprep.subr.mxu0 0.0
  %7951 = vmatpush1.msra.mxu0 0.0
  %7952 = vmatprep.subr.mxu0 0.0
  %7953 = vmatpush1.msra.mxu0 0.0
  %7954 = vmatprep.subr.mxu0 0.0
  %7955 = vmatpush1.msra.mxu0 0.0
  %7956 = vmatprep.subr.mxu0 0.0
  %7957 = vmatpush1.msra.mxu0 0.0
  %7958 = vmatprep.subr.mxu0 0.0
  %7959 = vmatpush1.msra.mxu0 0.0
  %7960 = vmatprep.subr.mxu0 0.0
  %7961 = vmatpush1.msra.mxu0 0.0
  %7962 = vmatprep.subr.mxu0 0.0
  %7963 = vmatpush1.msra.mxu0 0.0
  %7964 = vmatprep.subr.mxu0 0.0
  %7965 = vmatpush1.msra.mxu0 0.0
  %7966 = vmatprep.subr.mxu0 0.0
  %7967 = vmatpush1.msra.mxu0 0.0
  %7968 = vmatprep.subr.mxu0 0.0
  %7969 = vmatpush1.msra.mxu0 0.0
  %7970 = vmatprep.subr.mxu0 0.0
  %7971 = vmatpush1.msra.mxu0 0.0
  %7972 = vmatprep.subr.mxu0 0.0
  %7973 = vmatpush1.msra.mxu0 0.0
  %7974 = vmatprep.subr.mxu0 0.0
  %7975 = vmatpush1.msra.mxu0 0.0
  %7976 = vmatprep.subr.mxu0 0.0
  %7977 = vmatpush1.msra.mxu0 0.0
  %7978 = vmatprep.subr.mxu0 0.0
  %7979 = vmatpush1.msra.mxu0 0.0
  %7980 = vmatprep.subr.mxu0 0.0
  %7981 = vmatpush1.msra.mxu0 0.0
  %7982 = vmatprep.subr.mxu0 0.0
  %7983 = vmatpush1.msra.mxu0 0.0
  %7984 = vmatprep.subr.mxu0 0.0
  %7985 = vmatpush1.msra.mxu0 0.0
  %7986 = vmatprep.subr.mxu0 0.0
  %7987 = vmatpush1.msra.mxu0 0.0
  %7988 = vmatprep.subr.mxu0 0.0
  %7989 = vmatpush1.msra.mxu0 0.0
  %7990 = vmatprep.subr.mxu0 0.0
  %7991 = vmatpush1.msra.mxu0 0.0
  %7992 = vmatprep.subr.mxu0 0.0
  %7993 = vmatpush1.msra.mxu0 0.0
  %7994 = vmatprep.subr.mxu0 0.0
  %7995 = vmatpush1.msra.mxu0 0.0
  %7996 = vmatprep.subr.mxu0 0.0
  %7997 = vmatpush1.msra.mxu0 0.0
  %7998 = vmatprep.subr.mxu0 0.0
  %7999 = vmatpush1.msra.mxu0 0.0
  %8000 = vmatprep.mubr.f32.mxu0 0.0
  %8001 = vmatmul.mubr.f32.gmra.mrb[0].mxu0 %v7934
  %v8002 = vpop.f32.mrb[0].mxu0
  %v8003 = vadd.f32 %v7931, %v8002
  %v8004 = vpop.f32.mrb[0].mxu0
  %8005 = vdwg.mxu0
  %v8006 = vmax.f32 %v8003, 0.0
  %v8007 = vcombine.low %v4076, %v4271
  %v8008 = vcombine.low %v4507, %v4696
  %v8009 = vcombine.low %v4910, %v5152
  %v8010 = vcombine.low %v5347, %v5571
  %v8012 = vunpack.c.l.s4 1966171168
  %v8013 = vunpack.c.0.s8 %v8012
  %v8014 = vlaneseq
  %v8015 = vshrl.u32 %v8014, 7
  %v8016 = vsub.s32 %v8013, %v8015
  %v8017 = vrot.slane %v8007, %v8016
  %v8019 = vunpack.c.l.s4 1966171168
  %v8020 = vunpack.c.0.s8 %v8019
  %v8021 = vlaneseq
  %v8022 = vshrl.u32 %v8021, 7
  %v8023 = vsub.s32 %v8020, %v8022
  %v8024 = vrot.slane %v8008, %v8023
  %v8026 = vunpack.c.l.s4 1966171168
  %v8027 = vunpack.c.0.s8 %v8026
  %v8028 = vlaneseq
  %v8029 = vshrl.u32 %v8028, 7
  %v8030 = vsub.s32 %v8027, %v8029
  %v8031 = vrot.slane %v8009, %v8030
  %v8033 = vunpack.c.l.s4 1966171168
  %v8034 = vunpack.c.0.s8 %v8033
  %v8035 = vlaneseq
  %v8036 = vshrl.u32 %v8035, 7
  %v8037 = vsub.s32 %v8034, %v8036
  %v8038 = vrot.slane %v8010, %v8037
  %v8039 = vcombine.low %v8017, %v8024
  %v8040 = vcombine.low %v8031, %v8038
  %v8042 = vunpack.c.l.s4 1966171168
  %v8043 = vunpack.c.0.s8 %v8042
  %v8044 = vlaneseq
  %v8045 = vshrl.u32 %v8044, 7
  %v8046 = vsub.s32 %v8043, %v8045
  %v8047 = vrot.slane %v8039, %v8046
  %v8049 = vunpack.c.l.s4 1966171168
  %v8050 = vunpack.c.0.s8 %v8049
  %v8051 = vlaneseq
  %v8052 = vshrl.u32 %v8051, 7
  %v8053 = vsub.s32 %v8050, %v8052
  %v8054 = vrot.slane %v8040, %v8053
  %v8055 = vcombine.low %v8047, %v8054
  %v8058 = vsel %vm5700, %v8006, 0
  %8060 = vmatprep.subr.mxu0 0.0
  %8061 = vmatpush1.msra.mxu0 %v5646
  %8062 = vmatprep.subr.mxu0 0.0
  %8063 = vmatpush1.msra.mxu0 %v5647
  %8064 = vmatprep.subr.mxu0 0.0
  %8065 = vmatpush1.msra.mxu0 %v5648
  %8066 = vmatprep.subr.mxu0 0.0
  %8067 = vmatpush1.msra.mxu0 %v5649
  %8068 = vmatprep.subr.mxu0 0.0
  %8069 = vmatpush1.msra.mxu0 0.0
  %8070 = vmatprep.subr.mxu0 0.0
  %8071 = vmatpush1.msra.mxu0 0.0
  %8072 = vmatprep.subr.mxu0 0.0
  %8073 = vmatpush1.msra.mxu0 0.0
  %8074 = vmatprep.subr.mxu0 0.0
  %8075 = vmatpush1.msra.mxu0 0.0
  %8076 = vmatprep.subr.mxu0 0.0
  %8077 = vmatpush1.msra.mxu0 0.0
  %8078 = vmatprep.subr.mxu0 0.0
  %8079 = vmatpush1.msra.mxu0 0.0
  %8080 = vmatprep.subr.mxu0 0.0
  %8081 = vmatpush1.msra.mxu0 0.0
  %8082 = vmatprep.subr.mxu0 0.0
  %8083 = vmatpush1.msra.mxu0 0.0
  %8084 = vmatprep.subr.mxu0 0.0
  %8085 = vmatpush1.msra.mxu0 0.0
  %8086 = vmatprep.subr.mxu0 0.0
  %8087 = vmatpush1.msra.mxu0 0.0
  %8088 = vmatprep.subr.mxu0 0.0
  %8089 = vmatpush1.msra.mxu0 0.0
  %8090 = vmatprep.subr.mxu0 0.0
  %8091 = vmatpush1.msra.mxu0 0.0
  %8092 = vmatprep.subr.mxu0 0.0
  %8093 = vmatpush1.msra.mxu0 0.0
  %8094 = vmatprep.subr.mxu0 0.0
  %8095 = vmatpush1.msra.mxu0 0.0
  %8096 = vmatprep.subr.mxu0 0.0
  %8097 = vmatpush1.msra.mxu0 0.0
  %8098 = vmatprep.subr.mxu0 0.0
  %8099 = vmatpush1.msra.mxu0 0.0
  %8100 = vmatprep.subr.mxu0 0.0
  %8101 = vmatpush1.msra.mxu0 0.0
  %8102 = vmatprep.subr.mxu0 0.0
  %8103 = vmatpush1.msra.mxu0 0.0
  %8104 = vmatprep.subr.mxu0 0.0
  %8105 = vmatpush1.msra.mxu0 0.0
  %8106 = vmatprep.subr.mxu0 0.0
  %8107 = vmatpush1.msra.mxu0 0.0
  %8108 = vmatprep.subr.mxu0 0.0
  %8109 = vmatpush1.msra.mxu0 0.0
  %8110 = vmatprep.subr.mxu0 0.0
  %8111 = vmatpush1.msra.mxu0 0.0
  %8112 = vmatprep.subr.mxu0 0.0
  %8113 = vmatpush1.msra.mxu0 0.0
  %8114 = vmatprep.subr.mxu0 0.0
  %8115 = vmatpush1.msra.mxu0 0.0
  %8116 = vmatprep.subr.mxu0 0.0
  %8117 = vmatpush1.msra.mxu0 0.0
  %8118 = vmatprep.subr.mxu0 0.0
  %8119 = vmatpush1.msra.mxu0 0.0
  %8120 = vmatprep.subr.mxu0 0.0
  %8121 = vmatpush1.msra.mxu0 0.0
  %8122 = vmatprep.subr.mxu0 0.0
  %8123 = vmatpush1.msra.mxu0 0.0
  %8124 = vmatprep.mubr.f32.mxu0 0.0
  %8125 = vmatmul.mubr.f32.gmra.mrb[0].mxu0 %v8058
  %v8126 = vpop.f32.mrb[0].mxu0
  %v8127 = vadd.f32 %v8055, %v8126
  %v8128 = vpop.f32.mrb[0].mxu0
  %8129 = vdwg.mxu0
  %v8130 = vmax.f32 %v8127, 0.0
  %v8131 = vcombine.low %v4059, %v4273
  %v8132 = vcombine.low %v4515, %v4710
  %v8133 = vcombine.low %v4934, %v5154
  %v8134 = vcombine.low %v5349, %v5585
  %v8136 = vunpack.c.l.s4 1966171168
  %v8137 = vunpack.c.0.s8 %v8136
  %v8138 = vlaneseq
  %v8139 = vshrl.u32 %v8138, 7
  %v8140 = vsub.s32 %v8137, %v8139
  %v8141 = vrot.slane %v8131, %v8140
  %v8143 = vunpack.c.l.s4 1966171168
  %v8144 = vunpack.c.0.s8 %v8143
  %v8145 = vlaneseq
  %v8146 = vshrl.u32 %v8145, 7
  %v8147 = vsub.s32 %v8144, %v8146
  %v8148 = vrot.slane %v8132, %v8147
  %v8150 = vunpack.c.l.s4 1966171168
  %v8151 = vunpack.c.0.s8 %v8150
  %v8152 = vlaneseq
  %v8153 = vshrl.u32 %v8152, 7
  %v8154 = vsub.s32 %v8151, %v8153
  %v8155 = vrot.slane %v8133, %v8154
  %v8157 = vunpack.c.l.s4 1966171168
  %v8158 = vunpack.c.0.s8 %v8157
  %v8159 = vlaneseq
  %v8160 = vshrl.u32 %v8159, 7
  %v8161 = vsub.s32 %v8158, %v8160
  %v8162 = vrot.slane %v8134, %v8161
  %v8163 = vcombine.low %v8141, %v8148
  %v8164 = vcombine.low %v8155, %v8162
  %v8166 = vunpack.c.l.s4 1966171168
  %v8167 = vunpack.c.0.s8 %v8166
  %v8168 = vlaneseq
  %v8169 = vshrl.u32 %v8168, 7
  %v8170 = vsub.s32 %v8167, %v8169
  %v8171 = vrot.slane %v8163, %v8170
  %v8173 = vunpack.c.l.s4 1966171168
  %v8174 = vunpack.c.0.s8 %v8173
  %v8175 = vlaneseq
  %v8176 = vshrl.u32 %v8175, 7
  %v8177 = vsub.s32 %v8174, %v8176
  %v8178 = vrot.slane %v8164, %v8177
  %v8179 = vcombine.low %v8171, %v8178
  %v8182 = vsel %vm5700, %v8130, 0
  %8184 = vmatprep.subr.mxu0 0.0
  %8185 = vmatpush1.msra.mxu0 %v5646
  %8186 = vmatprep.subr.mxu0 0.0
  %8187 = vmatpush1.msra.mxu0 %v5647
  %8188 = vmatprep.subr.mxu0 0.0
  %8189 = vmatpush1.msra.mxu0 %v5648
  %8190 = vmatprep.subr.mxu0 0.0
  %8191 = vmatpush1.msra.mxu0 %v5649
  %8192 = vmatprep.subr.mxu0 0.0
  %8193 = vmatpush1.msra.mxu0 0.0
  %8194 = vmatprep.subr.mxu0 0.0
  %8195 = vmatpush1.msra.mxu0 0.0
  %8196 = vmatprep.subr.mxu0 0.0
  %8197 = vmatpush1.msra.mxu0 0.0
  %8198 = vmatprep.subr.mxu0 0.0
  %8199 = vmatpush1.msra.mxu0 0.0
  %8200 = vmatprep.subr.mxu0 0.0
  %8201 = vmatpush1.msra.mxu0 0.0
  %8202 = vmatprep.subr.mxu0 0.0
  %8203 = vmatpush1.msra.mxu0 0.0
  %8204 = vmatprep.subr.mxu0 0.0
  %8205 = vmatpush1.msra.mxu0 0.0
  %8206 = vmatprep.subr.mxu0 0.0
  %8207 = vmatpush1.msra.mxu0 0.0
  %8208 = vmatprep.subr.mxu0 0.0
  %8209 = vmatpush1.msra.mxu0 0.0
  %8210 = vmatprep.subr.mxu0 0.0
  %8211 = vmatpush1.msra.mxu0 0.0
  %8212 = vmatprep.subr.mxu0 0.0
  %8213 = vmatpush1.msra.mxu0 0.0
  %8214 = vmatprep.subr.mxu0 0.0
  %8215 = vmatpush1.msra.mxu0 0.0
  %8216 = vmatprep.subr.mxu0 0.0
  %8217 = vmatpush1.msra.mxu0 0.0
  %8218 = vmatprep.subr.mxu0 0.0
  %8219 = vmatpush1.msra.mxu0 0.0
  %8220 = vmatprep.subr.mxu0 0.0
  %8221 = vmatpush1.msra.mxu0 0.0
  %8222 = vmatprep.subr.mxu0 0.0
  %8223 = vmatpush1.msra.mxu0 0.0
  %8224 = vmatprep.subr.mxu0 0.0
  %8225 = vmatpush1.msra.mxu0 0.0
  %8226 = vmatprep.subr.mxu0 0.0
  %8227 = vmatpush1.msra.mxu0 0.0
  %8228 = vmatprep.subr.mxu0 0.0
  %8229 = vmatpush1.msra.mxu0 0.0
  %8230 = vmatprep.subr.mxu0 0.0
  %8231 = vmatpush1.msra.mxu0 0.0
  %8232 = vmatprep.subr.mxu0 0.0
  %8233 = vmatpush1.msra.mxu0 0.0
  %8234 = vmatprep.subr.mxu0 0.0
  %8235 = vmatpush1.msra.mxu0 0.0
  %8236 = vmatprep.subr.mxu0 0.0
  %8237 = vmatpush1.msra.mxu0 0.0
  %8238 = vmatprep.subr.mxu0 0.0
  %8239 = vmatpush1.msra.mxu0 0.0
  %8240 = vmatprep.subr.mxu0 0.0
  %8241 = vmatpush1.msra.mxu0 0.0
  %8242 = vmatprep.subr.mxu0 0.0
  %8243 = vmatpush1.msra.mxu0 0.0
  %8244 = vmatprep.subr.mxu0 0.0
  %8245 = vmatpush1.msra.mxu0 0.0
  %8246 = vmatprep.subr.mxu0 0.0
  %8247 = vmatpush1.msra.mxu0 0.0
  %8248 = vmatprep.mubr.f32.mxu0 0.0
  %8249 = vmatmul.mubr.f32.gmra.mrb[0].mxu0 %v8182
  %v8250 = vpop.f32.mrb[0].mxu0
  %v8251 = vadd.f32 %v8179, %v8250
  %v8252 = vpop.f32.mrb[0].mxu0
  %8253 = vdwg.mxu0
  %v8254 = vmax.f32 %v8251, 0.0
  %v8255 = vcombine.low %v4073, %v4297
  %v8256 = vcombine.low %v4517, %v4712
  %v8257 = vcombine.low %v4948, %v5137
  %v8258 = vcombine.low %v5351, %v5593
  %v8260 = vunpack.c.l.s4 1966171168
  %v8261 = vunpack.c.0.s8 %v8260
  %v8262 = vlaneseq
  %v8263 = vshrl.u32 %v8262, 7
  %v8264 = vsub.s32 %v8261, %v8263
  %v8265 = vrot.slane %v8255, %v8264
  %v8267 = vunpack.c.l.s4 1966171168
  %v8268 = vunpack.c.0.s8 %v8267
  %v8269 = vlaneseq
  %v8270 = vshrl.u32 %v8269, 7
  %v8271 = vsub.s32 %v8268, %v8270
  %v8272 = vrot.slane %v8256, %v8271
  %v8274 = vunpack.c.l.s4 1966171168
  %v8275 = vunpack.c.0.s8 %v8274
  %v8276 = vlaneseq
  %v8277 = vshrl.u32 %v8276, 7
  %v8278 = vsub.s32 %v8275, %v8277
  %v8279 = vrot.slane %v8257, %v8278
  %v8281 = vunpack.c.l.s4 1966171168
  %v8282 = vunpack.c.0.s8 %v8281
  %v8283 = vlaneseq
  %v8284 = vshrl.u32 %v8283, 7
  %v8285 = vsub.s32 %v8282, %v8284
  %v8286 = vrot.slane %v8258, %v8285
  %v8287 = vcombine.low %v8265, %v8272
  %v8288 = vcombine.low %v8279, %v8286
  %v8290 = vunpack.c.l.s4 1966171168
  %v8291 = vunpack.c.0.s8 %v8290
  %v8292 = vlaneseq
  %v8293 = vshrl.u32 %v8292, 7
  %v8294 = vsub.s32 %v8291, %v8293
  %v8295 = vrot.slane %v8287, %v8294
  %v8297 = vunpack.c.l.s4 1966171168
  %v8298 = vunpack.c.0.s8 %v8297
  %v8299 = vlaneseq
  %v8300 = vshrl.u32 %v8299, 7
  %v8301 = vsub.s32 %v8298, %v8300
  %v8302 = vrot.slane %v8288, %v8301
  %v8303 = vcombine.low %v8295, %v8302
  %v8306 = vsel %vm5700, %v8254, 0
  %8308 = vmatprep.subr.mxu0 0.0
  %8309 = vmatpush1.msra.mxu0 %v5646
  %8310 = vmatprep.subr.mxu0 0.0
  %8311 = vmatpush1.msra.mxu0 %v5647
  %8312 = vmatprep.subr.mxu0 0.0
  %8313 = vmatpush1.msra.mxu0 %v5648
  %8314 = vmatprep.subr.mxu0 0.0
  %8315 = vmatpush1.msra.mxu0 %v5649
  %8316 = vmatprep.subr.mxu0 0.0
  %8317 = vmatpush1.msra.mxu0 0.0
  %8318 = vmatprep.subr.mxu0 0.0
  %8319 = vmatpush1.msra.mxu0 0.0
  %8320 = vmatprep.subr.mxu0 0.0
  %8321 = vmatpush1.msra.mxu0 0.0
  %8322 = vmatprep.subr.mxu0 0.0
  %8323 = vmatpush1.msra.mxu0 0.0
  %8324 = vmatprep.subr.mxu0 0.0
  %8325 = vmatpush1.msra.mxu0 0.0
  %8326 = vmatprep.subr.mxu0 0.0
  %8327 = vmatpush1.msra.mxu0 0.0
  %8328 = vmatprep.subr.mxu0 0.0
  %8329 = vmatpush1.msra.mxu0 0.0
  %8330 = vmatprep.subr.mxu0 0.0
  %8331 = vmatpush1.msra.mxu0 0.0
  %8332 = vmatprep.subr.mxu0 0.0
  %8333 = vmatpush1.msra.mxu0 0.0
  %8334 = vmatprep.subr.mxu0 0.0
  %8335 = vmatpush1.msra.mxu0 0.0
  %8336 = vmatprep.subr.mxu0 0.0
  %8337 = vmatpush1.msra.mxu0 0.0
  %8338 = vmatprep.subr.mxu0 0.0
  %8339 = vmatpush1.msra.mxu0 0.0
  %8340 = vmatprep.subr.mxu0 0.0
  %8341 = vmatpush1.msra.mxu0 0.0
  %8342 = vmatprep.subr.mxu0 0.0
  %8343 = vmatpush1.msra.mxu0 0.0
  %8344 = vmatprep.subr.mxu0 0.0
  %8345 = vmatpush1.msra.mxu0 0.0
  %8346 = vmatprep.subr.mxu0 0.0
  %8347 = vmatpush1.msra.mxu0 0.0
  %8348 = vmatprep.subr.mxu0 0.0
  %8349 = vmatpush1.msra.mxu0 0.0
  %8350 = vmatprep.subr.mxu0 0.0
  %8351 = vmatpush1.msra.mxu0 0.0
  %8352 = vmatprep.subr.mxu0 0.0
  %8353 = vmatpush1.msra.mxu0 0.0
  %8354 = vmatprep.subr.mxu0 0.0
  %8355 = vmatpush1.msra.mxu0 0.0
  %8356 = vmatprep.subr.mxu0 0.0
  %8357 = vmatpush1.msra.mxu0 0.0
  %8358 = vmatprep.subr.mxu0 0.0
  %8359 = vmatpush1.msra.mxu0 0.0
  %8360 = vmatprep.subr.mxu0 0.0
  %8361 = vmatpush1.msra.mxu0 0.0
  %8362 = vmatprep.subr.mxu0 0.0
  %8363 = vmatpush1.msra.mxu0 0.0
  %8364 = vmatprep.subr.mxu0 0.0
  %8365 = vmatpush1.msra.mxu0 0.0
  %8366 = vmatprep.subr.mxu0 0.0
  %8367 = vmatpush1.msra.mxu0 0.0
  %8368 = vmatprep.subr.mxu0 0.0
  %8369 = vmatpush1.msra.mxu0 0.0
  %8370 = vmatprep.subr.mxu0 0.0
  %8371 = vmatpush1.msra.mxu0 0.0
  %8372 = vmatprep.mubr.f32.mxu0 0.0
  %8373 = vmatmul.mubr.f32.gmra.mrb[0].mxu0 %v8306
  %v8374 = vpop.f32.mrb[0].mxu0
  %v8375 = vadd.f32 %v8303, %v8374
  %v8376 = vpop.f32.mrb[0].mxu0
  %8377 = vdwg.mxu0
  %v8378 = vmax.f32 %v8375, 0.0
  %v8379 = vcombine.low %v4075, %v4311
  %v8380 = vcombine.low %v4500, %v4714
  %v8381 = vcombine.low %v4956, %v5151
  %v8382 = vcombine.low %v5375, %v5595
  %v8384 = vunpack.c.l.s4 1966171168
  %v8385 = vunpack.c.0.s8 %v8384
  %v8386 = vlaneseq
  %v8387 = vshrl.u32 %v8386, 7
  %v8388 = vsub.s32 %v8385, %v8387
  %v8389 = vrot.slane %v8379, %v8388
  %v8391 = vunpack.c.l.s4 1966171168
  %v8392 = vunpack.c.0.s8 %v8391
  %v8393 = vlaneseq
  %v8394 = vshrl.u32 %v8393, 7
  %v8395 = vsub.s32 %v8392, %v8394
  %v8396 = vrot.slane %v8380, %v8395
  %v8398 = vunpack.c.l.s4 1966171168
  %v8399 = vunpack.c.0.s8 %v8398
  %v8400 = vlaneseq
  %v8401 = vshrl.u32 %v8400, 7
  %v8402 = vsub.s32 %v8399, %v8401
  %v8403 = vrot.slane %v8381, %v8402
  %v8405 = vunpack.c.l.s4 1966171168
  %v8406 = vunpack.c.0.s8 %v8405
  %v8407 = vlaneseq
  %v8408 = vshrl.u32 %v8407, 7
  %v8409 = vsub.s32 %v8406, %v8408
  %v8410 = vrot.slane %v8382, %v8409
  %v8411 = vcombine.low %v8389, %v8396
  %v8412 = vcombine.low %v8403, %v8410
  %v8414 = vunpack.c.l.s4 1966171168
  %v8415 = vunpack.c.0.s8 %v8414
  %v8416 = vlaneseq
  %v8417 = vshrl.u32 %v8416, 7
  %v8418 = vsub.s32 %v8415, %v8417
  %v8419 = vrot.slane %v8411, %v8418
  %v8421 = vunpack.c.l.s4 1966171168
  %v8422 = vunpack.c.0.s8 %v8421
  %v8423 = vlaneseq
  %v8424 = vshrl.u32 %v8423, 7
  %v8425 = vsub.s32 %v8422, %v8424
  %v8426 = vrot.slane %v8412, %v8425
  %v8427 = vcombine.low %v8419, %v8426
  %v8430 = vsel %vm5700, %v8378, 0
  %8432 = vmatprep.subr.mxu0 0.0
  %8433 = vmatpush1.msra.mxu0 %v5646
  %8434 = vmatprep.subr.mxu0 0.0
  %8435 = vmatpush1.msra.mxu0 %v5647
  %8436 = vmatprep.subr.mxu0 0.0
  %8437 = vmatpush1.msra.mxu0 %v5648
  %8438 = vmatprep.subr.mxu0 0.0
  %8439 = vmatpush1.msra.mxu0 %v5649
  %8440 = vmatprep.subr.mxu0 0.0
  %8441 = vmatpush1.msra.mxu0 0.0
  %8442 = vmatprep.subr.mxu0 0.0
  %8443 = vmatpush1.msra.mxu0 0.0
  %8444 = vmatprep.subr.mxu0 0.0
  %8445 = vmatpush1.msra.mxu0 0.0
  %8446 = vmatprep.subr.mxu0 0.0
  %8447 = vmatpush1.msra.mxu0 0.0
  %8448 = vmatprep.subr.mxu0 0.0
  %8449 = vmatpush1.msra.mxu0 0.0
  %8450 = vmatprep.subr.mxu0 0.0
  %8451 = vmatpush1.msra.mxu0 0.0
  %8452 = vmatprep.subr.mxu0 0.0
  %8453 = vmatpush1.msra.mxu0 0.0
  %8454 = vmatprep.subr.mxu0 0.0
  %8455 = vmatpush1.msra.mxu0 0.0
  %8456 = vmatprep.subr.mxu0 0.0
  %8457 = vmatpush1.msra.mxu0 0.0
  %8458 = vmatprep.subr.mxu0 0.0
  %8459 = vmatpush1.msra.mxu0 0.0
  %8460 = vmatprep.subr.mxu0 0.0
  %8461 = vmatpush1.msra.mxu0 0.0
  %8462 = vmatprep.subr.mxu0 0.0
  %8463 = vmatpush1.msra.mxu0 0.0
  %8464 = vmatprep.subr.mxu0 0.0
  %8465 = vmatpush1.msra.mxu0 0.0
  %8466 = vmatprep.subr.mxu0 0.0
  %8467 = vmatpush1.msra.mxu0 0.0
  %8468 = vmatprep.subr.mxu0 0.0
  %8469 = vmatpush1.msra.mxu0 0.0
  %8470 = vmatprep.subr.mxu0 0.0
  %8471 = vmatpush1.msra.mxu0 0.0
  %8472 = vmatprep.subr.mxu0 0.0
  %8473 = vmatpush1.msra.mxu0 0.0
  %8474 = vmatprep.subr.mxu0 0.0
  %8475 = vmatpush1.msra.mxu0 0.0
  %8476 = vmatprep.subr.mxu0 0.0
  %8477 = vmatpush1.msra.mxu0 0.0
  %8478 = vmatprep.subr.mxu0 0.0
  %8479 = vmatpush1.msra.mxu0 0.0
  %8480 = vmatprep.subr.mxu0 0.0
  %8481 = vmatpush1.msra.mxu0 0.0
  %8482 = vmatprep.subr.mxu0 0.0
  %8483 = vmatpush1.msra.mxu0 0.0
  %8484 = vmatprep.subr.mxu0 0.0
  %8485 = vmatpush1.msra.mxu0 0.0
  %8486 = vmatprep.subr.mxu0 0.0
  %8487 = vmatpush1.msra.mxu0 0.0
  %8488 = vmatprep.subr.mxu0 0.0
  %8489 = vmatpush1.msra.mxu0 0.0
  %8490 = vmatprep.subr.mxu0 0.0
  %8491 = vmatpush1.msra.mxu0 0.0
  %8492 = vmatprep.subr.mxu0 0.0
  %8493 = vmatpush1.msra.mxu0 0.0
  %8494 = vmatprep.subr.mxu0 0.0
  %8495 = vmatpush1.msra.mxu0 0.0
  %8496 = vmatprep.mubr.f32.mxu0 0.0
  %8497 = vmatmul.mubr.f32.gmra.mrb[0].mxu0 %v8430
  %v8498 = vpop.f32.mrb[0].mxu0
  %v8499 = vadd.f32 %v8427, %v8498
  %v8500 = vpop.f32.mrb[0].mxu0
  %8501 = vdwg.mxu0
  %v8502 = vmax.f32 %v8499, 0.0
  %v8503 = vcombine.low %v4077, %v4319
  %v8504 = vcombine.low %v4514, %v4738
  %v8505 = vcombine.low %v4958, %v5153
  %v8506 = vcombine.low %v5389, %v5578
  %v8508 = vunpack.c.l.s4 1966171168
  %v8509 = vunpack.c.0.s8 %v8508
  %v8510 = vlaneseq
  %v8511 = vshrl.u32 %v8510, 7
  %v8512 = vsub.s32 %v8509, %v8511
  %v8513 = vrot.slane %v8503, %v8512
  %v8515 = vunpack.c.l.s4 1966171168
  %v8516 = vunpack.c.0.s8 %v8515
  %v8517 = vlaneseq
  %v8518 = vshrl.u32 %v8517, 7
  %v8519 = vsub.s32 %v8516, %v8518
  %v8520 = vrot.slane %v8504, %v8519
  %v8522 = vunpack.c.l.s4 1966171168
  %v8523 = vunpack.c.0.s8 %v8522
  %v8524 = vlaneseq
  %v8525 = vshrl.u32 %v8524, 7
  %v8526 = vsub.s32 %v8523, %v8525
  %v8527 = vrot.slane %v8505, %v8526
  %v8529 = vunpack.c.l.s4 1966171168
  %v8530 = vunpack.c.0.s8 %v8529
  %v8531 = vlaneseq
  %v8532 = vshrl.u32 %v8531, 7
  %v8533 = vsub.s32 %v8530, %v8532
  %v8534 = vrot.slane %v8506, %v8533
  %v8535 = vcombine.low %v8513, %v8520
  %v8536 = vcombine.low %v8527, %v8534
  %v8538 = vunpack.c.l.s4 1966171168
  %v8539 = vunpack.c.0.s8 %v8538
  %v8540 = vlaneseq
  %v8541 = vshrl.u32 %v8540, 7
  %v8542 = vsub.s32 %v8539, %v8541
  %v8543 = vrot.slane %v8535, %v8542
  %v8545 = vunpack.c.l.s4 1966171168
  %v8546 = vunpack.c.0.s8 %v8545
  %v8547 = vlaneseq
  %v8548 = vshrl.u32 %v8547, 7
  %v8549 = vsub.s32 %v8546, %v8548
  %v8550 = vrot.slane %v8536, %v8549
  %v8551 = vcombine.low %v8543, %v8550
  %v8554 = vsel %vm5700, %v8502, 0
  %8556 = vmatprep.subr.mxu0 0.0
  %8557 = vmatpush1.msra.mxu0 %v5646
  %8558 = vmatprep.subr.mxu0 0.0
  %8559 = vmatpush1.msra.mxu0 %v5647
  %8560 = vmatprep.subr.mxu0 0.0
  %8561 = vmatpush1.msra.mxu0 %v5648
  %8562 = vmatprep.subr.mxu0 0.0
  %8563 = vmatpush1.msra.mxu0 %v5649
  %8564 = vmatprep.subr.mxu0 0.0
  %8565 = vmatpush1.msra.mxu0 0.0
  %8566 = vmatprep.subr.mxu0 0.0
  %8567 = vmatpush1.msra.mxu0 0.0
  %8568 = vmatprep.subr.mxu0 0.0
  %8569 = vmatpush1.msra.mxu0 0.0
  %8570 = vmatprep.subr.mxu0 0.0
  %8571 = vmatpush1.msra.mxu0 0.0
  %8572 = vmatprep.subr.mxu0 0.0
  %8573 = vmatpush1.msra.mxu0 0.0
  %8574 = vmatprep.subr.mxu0 0.0
  %8575 = vmatpush1.msra.mxu0 0.0
  %8576 = vmatprep.subr.mxu0 0.0
  %8577 = vmatpush1.msra.mxu0 0.0
  %8578 = vmatprep.subr.mxu0 0.0
  %8579 = vmatpush1.msra.mxu0 0.0
  %8580 = vmatprep.subr.mxu0 0.0
  %8581 = vmatpush1.msra.mxu0 0.0
  %8582 = vmatprep.subr.mxu0 0.0
  %8583 = vmatpush1.msra.mxu0 0.0
  %8584 = vmatprep.subr.mxu0 0.0
  %8585 = vmatpush1.msra.mxu0 0.0
  %8586 = vmatprep.subr.mxu0 0.0
  %8587 = vmatpush1.msra.mxu0 0.0
  %8588 = vmatprep.subr.mxu0 0.0
  %8589 = vmatpush1.msra.mxu0 0.0
  %8590 = vmatprep.subr.mxu0 0.0
  %8591 = vmatpush1.msra.mxu0 0.0
  %8592 = vmatprep.subr.mxu0 0.0
  %8593 = vmatpush1.msra.mxu0 0.0
  %8594 = vmatprep.subr.mxu0 0.0
  %8595 = vmatpush1.msra.mxu0 0.0
  %8596 = vmatprep.subr.mxu0 0.0
  %8597 = vmatpush1.msra.mxu0 0.0
  %8598 = vmatprep.subr.mxu0 0.0
  %8599 = vmatpush1.msra.mxu0 0.0
  %8600 = vmatprep.subr.mxu0 0.0
  %8601 = vmatpush1.msra.mxu0 0.0
  %8602 = vmatprep.subr.mxu0 0.0
  %8603 = vmatpush1.msra.mxu0 0.0
  %8604 = vmatprep.subr.mxu0 0.0
  %8605 = vmatpush1.msra.mxu0 0.0
  %8606 = vmatprep.subr.mxu0 0.0
  %8607 = vmatpush1.msra.mxu0 0.0
  %8608 = vmatprep.subr.mxu0 0.0
  %8609 = vmatpush1.msra.mxu0 0.0
  %8610 = vmatprep.subr.mxu0 0.0
  %8611 = vmatpush1.msra.mxu0 0.0
  %8612 = vmatprep.subr.mxu0 0.0
  %8613 = vmatpush1.msra.mxu0 0.0
  %8614 = vmatprep.subr.mxu0 0.0
  %8615 = vmatpush1.msra.mxu0 0.0
  %8616 = vmatprep.subr.mxu0 0.0
  %8617 = vmatpush1.msra.mxu0 0.0
  %8618 = vmatprep.subr.mxu0 0.0
  %8619 = vmatpush1.msra.mxu0 0.0
  %8620 = vmatprep.mubr.f32.mxu0 0.0
  %8621 = vmatmul.mubr.f32.gmra.mrb[0].mxu0 %v8554
  %v8622 = vpop.f32.mrb[0].mxu0
  %v8623 = vadd.f32 %v8551, %v8622
  %v8624 = vpop.f32.mrb[0].mxu0
  %8625 = vdwg.mxu0
  %v8626 = vmax.f32 %v8623, 0.0
  %v8627 = vcombine.low %v4101, %v4321
  %v8628 = vcombine.low %v4516, %v4752
  %v8629 = vcombine.low %v4941, %v5155
  %v8630 = vcombine.low %v5397, %v5592
  %v8632 = vunpack.c.l.s4 1966171168
  %v8633 = vunpack.c.0.s8 %v8632
  %v8634 = vlaneseq
  %v8635 = vshrl.u32 %v8634, 7
  %v8636 = vsub.s32 %v8633, %v8635
  %v8637 = vrot.slane %v8627, %v8636
  %v8639 = vunpack.c.l.s4 1966171168
  %v8640 = vunpack.c.0.s8 %v8639
  %v8641 = vlaneseq
  %v8642 = vshrl.u32 %v8641, 7
  %v8643 = vsub.s32 %v8640, %v8642
  %v8644 = vrot.slane %v8628, %v8643
  %v8646 = vunpack.c.l.s4 1966171168
  %v8647 = vunpack.c.0.s8 %v8646
  %v8648 = vlaneseq
  %v8649 = vshrl.u32 %v8648, 7
  %v8650 = vsub.s32 %v8647, %v8649
  %v8651 = vrot.slane %v8629, %v8650
  %v8653 = vunpack.c.l.s4 1966171168
  %v8654 = vunpack.c.0.s8 %v8653
  %v8655 = vlaneseq
  %v8656 = vshrl.u32 %v8655, 7
  %v8657 = vsub.s32 %v8654, %v8656
  %v8658 = vrot.slane %v8630, %v8657
  %v8659 = vcombine.low %v8637, %v8644
  %v8660 = vcombine.low %v8651, %v8658
  %v8662 = vunpack.c.l.s4 1966171168
  %v8663 = vunpack.c.0.s8 %v8662
  %v8664 = vlaneseq
  %v8665 = vshrl.u32 %v8664, 7
  %v8666 = vsub.s32 %v8663, %v8665
  %v8667 = vrot.slane %v8659, %v8666
  %v8669 = vunpack.c.l.s4 1966171168
  %v8670 = vunpack.c.0.s8 %v8669
  %v8671 = vlaneseq
  %v8672 = vshrl.u32 %v8671, 7
  %v8673 = vsub.s32 %v8670, %v8672
  %v8674 = vrot.slane %v8660, %v8673
  %v8675 = vcombine.low %v8667, %v8674
  %v8678 = vsel %vm5700, %v8626, 0
  %8680 = vmatprep.subr.mxu0 0.0
  %8681 = vmatpush1.msra.mxu0 %v5646
  %8682 = vmatprep.subr.mxu0 0.0
  %8683 = vmatpush1.msra.mxu0 %v5647
  %8684 = vmatprep.subr.mxu0 0.0
  %8685 = vmatpush1.msra.mxu0 %v5648
  %8686 = vmatprep.subr.mxu0 0.0
  %8687 = vmatpush1.msra.mxu0 %v5649
  %8688 = vmatprep.subr.mxu0 0.0
  %8689 = vmatpush1.msra.mxu0 0.0
  %8690 = vmatprep.subr.mxu0 0.0
  %8691 = vmatpush1.msra.mxu0 0.0
  %8692 = vmatprep.subr.mxu0 0.0
  %8693 = vmatpush1.msra.mxu0 0.0
  %8694 = vmatprep.subr.mxu0 0.0
  %8695 = vmatpush1.msra.mxu0 0.0
  %8696 = vmatprep.subr.mxu0 0.0
  %8697 = vmatpush1.msra.mxu0 0.0
  %8698 = vmatprep.subr.mxu0 0.0
  %8699 = vmatpush1.msra.mxu0 0.0
  %8700 = vmatprep.subr.mxu0 0.0
  %8701 = vmatpush1.msra.mxu0 0.0
  %8702 = vmatprep.subr.mxu0 0.0
  %8703 = vmatpush1.msra.mxu0 0.0
  %8704 = vmatprep.subr.mxu0 0.0
  %8705 = vmatpush1.msra.mxu0 0.0
  %8706 = vmatprep.subr.mxu0 0.0
  %8707 = vmatpush1.msra.mxu0 0.0
  %8708 = vmatprep.subr.mxu0 0.0
  %8709 = vmatpush1.msra.mxu0 0.0
  %8710 = vmatprep.subr.mxu0 0.0
  %8711 = vmatpush1.msra.mxu0 0.0
  %8712 = vmatprep.subr.mxu0 0.0
  %8713 = vmatpush1.msra.mxu0 0.0
  %8714 = vmatprep.subr.mxu0 0.0
  %8715 = vmatpush1.msra.mxu0 0.0
  %8716 = vmatprep.subr.mxu0 0.0
  %8717 = vmatpush1.msra.mxu0 0.0
  %8718 = vmatprep.subr.mxu0 0.0
  %8719 = vmatpush1.msra.mxu0 0.0
  %8720 = vmatprep.subr.mxu0 0.0
  %8721 = vmatpush1.msra.mxu0 0.0
  %8722 = vmatprep.subr.mxu0 0.0
  %8723 = vmatpush1.msra.mxu0 0.0
  %8724 = vmatprep.subr.mxu0 0.0
  %8725 = vmatpush1.msra.mxu0 0.0
  %8726 = vmatprep.subr.mxu0 0.0
  %8727 = vmatpush1.msra.mxu0 0.0
  %8728 = vmatprep.subr.mxu0 0.0
  %8729 = vmatpush1.msra.mxu0 0.0
  %8730 = vmatprep.subr.mxu0 0.0
  %8731 = vmatpush1.msra.mxu0 0.0
  %8732 = vmatprep.subr.mxu0 0.0
  %8733 = vmatpush1.msra.mxu0 0.0
  %8734 = vmatprep.subr.mxu0 0.0
  %8735 = vmatpush1.msra.mxu0 0.0
  %8736 = vmatprep.subr.mxu0 0.0
  %8737 = vmatpush1.msra.mxu0 0.0
  %8738 = vmatprep.subr.mxu0 0.0
  %8739 = vmatpush1.msra.mxu0 0.0
  %8740 = vmatprep.subr.mxu0 0.0
  %8741 = vmatpush1.msra.mxu0 0.0
  %8742 = vmatprep.subr.mxu0 0.0
  %8743 = vmatpush1.msra.mxu0 0.0
  %8744 = vmatprep.mubr.f32.mxu0 0.0
  %8745 = vmatmul.mubr.f32.gmra.mrb[0].mxu0 %v8678
  %v8746 = vpop.f32.mrb[0].mxu0
  %v8747 = vadd.f32 %v8675, %v8746
  %v8748 = vpop.f32.mrb[0].mxu0
  %8749 = vdwg.mxu0
  %v8750 = vmax.f32 %v8747, 0.0
  %v8751 = vcombine.low %v4115, %v4304
  %v8752 = vcombine.low %v4518, %v4760
  %v8753 = vcombine.low %v4955, %v5179
  %v8754 = vcombine.low %v5399, %v5594
  %v8756 = vunpack.c.l.s4 1966171168
  %v8757 = vunpack.c.0.s8 %v8756
  %v8758 = vlaneseq
  %v8759 = vshrl.u32 %v8758, 7
  %v8760 = vsub.s32 %v8757, %v8759
  %v8761 = vrot.slane %v8751, %v8760
  %v8763 = vunpack.c.l.s4 1966171168
  %v8764 = vunpack.c.0.s8 %v8763
  %v8765 = vlaneseq
  %v8766 = vshrl.u32 %v8765, 7
  %v8767 = vsub.s32 %v8764, %v8766
  %v8768 = vrot.slane %v8752, %v8767
  %v8770 = vunpack.c.l.s4 1966171168
  %v8771 = vunpack.c.0.s8 %v8770
  %v8772 = vlaneseq
  %v8773 = vshrl.u32 %v8772, 7
  %v8774 = vsub.s32 %v8771, %v8773
  %v8775 = vrot.slane %v8753, %v8774
  %v8777 = vunpack.c.l.s4 1966171168
  %v8778 = vunpack.c.0.s8 %v8777
  %v8779 = vlaneseq
  %v8780 = vshrl.u32 %v8779, 7
  %v8781 = vsub.s32 %v8778, %v8780
  %v8782 = vrot.slane %v8754, %v8781
  %v8783 = vcombine.low %v8761, %v8768
  %v8784 = vcombine.low %v8775, %v8782
  %v8786 = vunpack.c.l.s4 1966171168
  %v8787 = vunpack.c.0.s8 %v8786
  %v8788 = vlaneseq
  %v8789 = vshrl.u32 %v8788, 7
  %v8790 = vsub.s32 %v8787, %v8789
  %v8791 = vrot.slane %v8783, %v8790
  %v8793 = vunpack.c.l.s4 1966171168
  %v8794 = vunpack.c.0.s8 %v8793
  %v8795 = vlaneseq
  %v8796 = vshrl.u32 %v8795, 7
  %v8797 = vsub.s32 %v8794, %v8796
  %v8798 = vrot.slane %v8784, %v8797
  %v8799 = vcombine.low %v8791, %v8798
  %v8802 = vsel %vm5700, %v8750, 0
  %8804 = vmatprep.subr.mxu0 0.0
  %8805 = vmatpush1.msra.mxu0 %v5646
  %8806 = vmatprep.subr.mxu0 0.0
  %8807 = vmatpush1.msra.mxu0 %v5647
  %8808 = vmatprep.subr.mxu0 0.0
  %8809 = vmatpush1.msra.mxu0 %v5648
  %8810 = vmatprep.subr.mxu0 0.0
  %8811 = vmatpush1.msra.mxu0 %v5649
  %8812 = vmatprep.subr.mxu0 0.0
  %8813 = vmatpush1.msra.mxu0 0.0
  %8814 = vmatprep.subr.mxu0 0.0
  %8815 = vmatpush1.msra.mxu0 0.0
  %8816 = vmatprep.subr.mxu0 0.0
  %8817 = vmatpush1.msra.mxu0 0.0
  %8818 = vmatprep.subr.mxu0 0.0
  %8819 = vmatpush1.msra.mxu0 0.0
  %8820 = vmatprep.subr.mxu0 0.0
  %8821 = vmatpush1.msra.mxu0 0.0
  %8822 = vmatprep.subr.mxu0 0.0
  %8823 = vmatpush1.msra.mxu0 0.0
  %8824 = vmatprep.subr.mxu0 0.0
  %8825 = vmatpush1.msra.mxu0 0.0
  %8826 = vmatprep.subr.mxu0 0.0
  %8827 = vmatpush1.msra.mxu0 0.0
  %8828 = vmatprep.subr.mxu0 0.0
  %8829 = vmatpush1.msra.mxu0 0.0
  %8830 = vmatprep.subr.mxu0 0.0
  %8831 = vmatpush1.msra.mxu0 0.0
  %8832 = vmatprep.subr.mxu0 0.0
  %8833 = vmatpush1.msra.mxu0 0.0
  %8834 = vmatprep.subr.mxu0 0.0
  %8835 = vmatpush1.msra.mxu0 0.0
  %8836 = vmatprep.subr.mxu0 0.0
  %8837 = vmatpush1.msra.mxu0 0.0
  %8838 = vmatprep.subr.mxu0 0.0
  %8839 = vmatpush1.msra.mxu0 0.0
  %8840 = vmatprep.subr.mxu0 0.0
  %8841 = vmatpush1.msra.mxu0 0.0
  %8842 = vmatprep.subr.mxu0 0.0
  %8843 = vmatpush1.msra.mxu0 0.0
  %8844 = vmatprep.subr.mxu0 0.0
  %8845 = vmatpush1.msra.mxu0 0.0
  %8846 = vmatprep.subr.mxu0 0.0
  %8847 = vmatpush1.msra.mxu0 0.0
  %8848 = vmatprep.subr.mxu0 0.0
  %8849 = vmatpush1.msra.mxu0 0.0
  %8850 = vmatprep.subr.mxu0 0.0
  %8851 = vmatpush1.msra.mxu0 0.0
  %8852 = vmatprep.subr.mxu0 0.0
  %8853 = vmatpush1.msra.mxu0 0.0
  %8854 = vmatprep.subr.mxu0 0.0
  %8855 = vmatpush1.msra.mxu0 0.0
  %8856 = vmatprep.subr.mxu0 0.0
  %8857 = vmatpush1.msra.mxu0 0.0
  %8858 = vmatprep.subr.mxu0 0.0
  %8859 = vmatpush1.msra.mxu0 0.0
  %8860 = vmatprep.subr.mxu0 0.0
  %8861 = vmatpush1.msra.mxu0 0.0
  %8862 = vmatprep.subr.mxu0 0.0
  %8863 = vmatpush1.msra.mxu0 0.0
  %8864 = vmatprep.subr.mxu0 0.0
  %8865 = vmatpush1.msra.mxu0 0.0
  %8866 = vmatprep.subr.mxu0 0.0
  %8867 = vmatpush1.msra.mxu0 0.0
  %8868 = vmatprep.mubr.f32.mxu0 0.0
  %8869 = vmatmul.mubr.f32.gmra.mrb[0].mxu0 %v8802
  %v8870 = vpop.f32.mrb[0].mxu0
  %v8871 = vadd.f32 %v8799, %v8870
  %v8872 = vpop.f32.mrb[0].mxu0
  %8873 = vdwg.mxu0
  %v8874 = vmax.f32 %v8871, 0.0
  %v8875 = vcombine.low %v4123, %v4318
  %v8876 = vcombine.low %v4542, %v4762
  %v8877 = vcombine.low %v4957, %v5193
  %v8878 = vcombine.low %v5382, %v5596
  %v8880 = vunpack.c.l.s4 1966171168
  %v8881 = vunpack.c.0.s8 %v8880
  %v8882 = vlaneseq
  %v8883 = vshrl.u32 %v8882, 7
  %v8884 = vsub.s32 %v8881, %v8883
  %v8885 = vrot.slane %v8875, %v8884
  %v8887 = vunpack.c.l.s4 1966171168
  %v8888 = vunpack.c.0.s8 %v8887
  %v8889 = vlaneseq
  %v8890 = vshrl.u32 %v8889, 7
  %v8891 = vsub.s32 %v8888, %v8890
  %v8892 = vrot.slane %v8876, %v8891
  %v8894 = vunpack.c.l.s4 1966171168
  %v8895 = vunpack.c.0.s8 %v8894
  %v8896 = vlaneseq
  %v8897 = vshrl.u32 %v8896, 7
  %v8898 = vsub.s32 %v8895, %v8897
  %v8899 = vrot.slane %v8877, %v8898
  %v8901 = vunpack.c.l.s4 1966171168
  %v8902 = vunpack.c.0.s8 %v8901
  %v8903 = vlaneseq
  %v8904 = vshrl.u32 %v8903, 7
  %v8905 = vsub.s32 %v8902, %v8904
  %v8906 = vrot.slane %v8878, %v8905
  %v8907 = vcombine.low %v8885, %v8892
  %v8908 = vcombine.low %v8899, %v8906
  %v8910 = vunpack.c.l.s4 1966171168
  %v8911 = vunpack.c.0.s8 %v8910
  %v8912 = vlaneseq
  %v8913 = vshrl.u32 %v8912, 7
  %v8914 = vsub.s32 %v8911, %v8913
  %v8915 = vrot.slane %v8907, %v8914
  %v8917 = vunpack.c.l.s4 1966171168
  %v8918 = vunpack.c.0.s8 %v8917
  %v8919 = vlaneseq
  %v8920 = vshrl.u32 %v8919, 7
  %v8921 = vsub.s32 %v8918, %v8920
  %v8922 = vrot.slane %v8908, %v8921
  %v8923 = vcombine.low %v8915, %v8922
  %v8926 = vsel %vm5700, %v8874, 0
  %8928 = vmatprep.subr.mxu0 0.0
  %8929 = vmatpush1.msra.mxu0 %v5646
  %8930 = vmatprep.subr.mxu0 0.0
  %8931 = vmatpush1.msra.mxu0 %v5647
  %8932 = vmatprep.subr.mxu0 0.0
  %8933 = vmatpush1.msra.mxu0 %v5648
  %8934 = vmatprep.subr.mxu0 0.0
  %8935 = vmatpush1.msra.mxu0 %v5649
  %8936 = vmatprep.subr.mxu0 0.0
  %8937 = vmatpush1.msra.mxu0 0.0
  %8938 = vmatprep.subr.mxu0 0.0
  %8939 = vmatpush1.msra.mxu0 0.0
  %8940 = vmatprep.subr.mxu0 0.0
  %8941 = vmatpush1.msra.mxu0 0.0
  %8942 = vmatprep.subr.mxu0 0.0
  %8943 = vmatpush1.msra.mxu0 0.0
  %8944 = vmatprep.subr.mxu0 0.0
  %8945 = vmatpush1.msra.mxu0 0.0
  %8946 = vmatprep.subr.mxu0 0.0
  %8947 = vmatpush1.msra.mxu0 0.0
  %8948 = vmatprep.subr.mxu0 0.0
  %8949 = vmatpush1.msra.mxu0 0.0
  %8950 = vmatprep.subr.mxu0 0.0
  %8951 = vmatpush1.msra.mxu0 0.0
  %8952 = vmatprep.subr.mxu0 0.0
  %8953 = vmatpush1.msra.mxu0 0.0
  %8954 = vmatprep.subr.mxu0 0.0
  %8955 = vmatpush1.msra.mxu0 0.0
  %8956 = vmatprep.subr.mxu0 0.0
  %8957 = vmatpush1.msra.mxu0 0.0
  %8958 = vmatprep.subr.mxu0 0.0
  %8959 = vmatpush1.msra.mxu0 0.0
  %8960 = vmatprep.subr.mxu0 0.0
  %8961 = vmatpush1.msra.mxu0 0.0
  %8962 = vmatprep.subr.mxu0 0.0
  %8963 = vmatpush1.msra.mxu0 0.0
  %8964 = vmatprep.subr.mxu0 0.0
  %8965 = vmatpush1.msra.mxu0 0.0
  %8966 = vmatprep.subr.mxu0 0.0
  %8967 = vmatpush1.msra.mxu0 0.0
  %8968 = vmatprep.subr.mxu0 0.0
  %8969 = vmatpush1.msra.mxu0 0.0
  %8970 = vmatprep.subr.mxu0 0.0
  %8971 = vmatpush1.msra.mxu0 0.0
  %8972 = vmatprep.subr.mxu0 0.0
  %8973 = vmatpush1.msra.mxu0 0.0
  %8974 = vmatprep.subr.mxu0 0.0
  %8975 = vmatpush1.msra.mxu0 0.0
  %8976 = vmatprep.subr.mxu0 0.0
  %8977 = vmatpush1.msra.mxu0 0.0
  %8978 = vmatprep.subr.mxu0 0.0
  %8979 = vmatpush1.msra.mxu0 0.0
  %8980 = vmatprep.subr.mxu0 0.0
  %8981 = vmatpush1.msra.mxu0 0.0
  %8982 = vmatprep.subr.mxu0 0.0
  %8983 = vmatpush1.msra.mxu0 0.0
  %8984 = vmatprep.subr.mxu0 0.0
  %8985 = vmatpush1.msra.mxu0 0.0
  %8986 = vmatprep.subr.mxu0 0.0
  %8987 = vmatpush1.msra.mxu0 0.0
  %8988 = vmatprep.subr.mxu0 0.0
  %8989 = vmatpush1.msra.mxu0 0.0
  %8990 = vmatprep.subr.mxu0 0.0
  %8991 = vmatpush1.msra.mxu0 0.0
  %8992 = vmatprep.mubr.f32.mxu0 0.0
  %8993 = vmatmul.mubr.f32.gmra.mrb[0].mxu0 %v8926
  %v8994 = vpop.f32.mrb[0].mxu0
  %v8995 = vadd.f32 %v8923, %v8994
  %v8996 = vpop.f32.mrb[0].mxu0
  %8997 = vdwg.mxu0
  %v8998 = vmax.f32 %v8995, 0.0
  %v8999 = vcombine.low %v4125, %v4320
  %v9000 = vcombine.low %v4556, %v4745
  %v9001 = vcombine.low %v4959, %v5201
  %v9002 = vcombine.low %v5396, %v5620
  %v9004 = vunpack.c.l.s4 1966171168
  %v9005 = vunpack.c.0.s8 %v9004
  %v9006 = vlaneseq
  %v9007 = vshrl.u32 %v9006, 7
  %v9008 = vsub.s32 %v9005, %v9007
  %v9009 = vrot.slane %v8999, %v9008
  %v9011 = vunpack.c.l.s4 1966171168
  %v9012 = vunpack.c.0.s8 %v9011
  %v9013 = vlaneseq
  %v9014 = vshrl.u32 %v9013, 7
  %v9015 = vsub.s32 %v9012, %v9014
  %v9016 = vrot.slane %v9000, %v9015
  %v9018 = vunpack.c.l.s4 1966171168
  %v9019 = vunpack.c.0.s8 %v9018
  %v9020 = vlaneseq
  %v9021 = vshrl.u32 %v9020, 7
  %v9022 = vsub.s32 %v9019, %v9021
  %v9023 = vrot.slane %v9001, %v9022
  %v9025 = vunpack.c.l.s4 1966171168
  %v9026 = vunpack.c.0.s8 %v9025
  %v9027 = vlaneseq
  %v9028 = vshrl.u32 %v9027, 7
  %v9029 = vsub.s32 %v9026, %v9028
  %v9030 = vrot.slane %v9002, %v9029
  %v9031 = vcombine.low %v9009, %v9016
  %v9032 = vcombine.low %v9023, %v9030
  %v9034 = vunpack.c.l.s4 1966171168
  %v9035 = vunpack.c.0.s8 %v9034
  %v9036 = vlaneseq
  %v9037 = vshrl.u32 %v9036, 7
  %v9038 = vsub.s32 %v9035, %v9037
  %v9039 = vrot.slane %v9031, %v9038
  %v9041 = vunpack.c.l.s4 1966171168
  %v9042 = vunpack.c.0.s8 %v9041
  %v9043 = vlaneseq
  %v9044 = vshrl.u32 %v9043, 7
  %v9045 = vsub.s32 %v9042, %v9044
  %v9046 = vrot.slane %v9032, %v9045
  %v9047 = vcombine.low %v9039, %v9046
  %v9050 = vsel %vm5700, %v8998, 0
  %9052 = vmatprep.subr.mxu0 0.0
  %9053 = vmatpush1.msra.mxu0 %v5646
  %9054 = vmatprep.subr.mxu0 0.0
  %9055 = vmatpush1.msra.mxu0 %v5647
  %9056 = vmatprep.subr.mxu0 0.0
  %9057 = vmatpush1.msra.mxu0 %v5648
  %9058 = vmatprep.subr.mxu0 0.0
  %9059 = vmatpush1.msra.mxu0 %v5649
  %9060 = vmatprep.subr.mxu0 0.0
  %9061 = vmatpush1.msra.mxu0 0.0
  %9062 = vmatprep.subr.mxu0 0.0
  %9063 = vmatpush1.msra.mxu0 0.0
  %9064 = vmatprep.subr.mxu0 0.0
  %9065 = vmatpush1.msra.mxu0 0.0
  %9066 = vmatprep.subr.mxu0 0.0
  %9067 = vmatpush1.msra.mxu0 0.0
  %9068 = vmatprep.subr.mxu0 0.0
  %9069 = vmatpush1.msra.mxu0 0.0
  %9070 = vmatprep.subr.mxu0 0.0
  %9071 = vmatpush1.msra.mxu0 0.0
  %9072 = vmatprep.subr.mxu0 0.0
  %9073 = vmatpush1.msra.mxu0 0.0
  %9074 = vmatprep.subr.mxu0 0.0
  %9075 = vmatpush1.msra.mxu0 0.0
  %9076 = vmatprep.subr.mxu0 0.0
  %9077 = vmatpush1.msra.mxu0 0.0
  %9078 = vmatprep.subr.mxu0 0.0
  %9079 = vmatpush1.msra.mxu0 0.0
  %9080 = vmatprep.subr.mxu0 0.0
  %9081 = vmatpush1.msra.mxu0 0.0
  %9082 = vmatprep.subr.mxu0 0.0
  %9083 = vmatpush1.msra.mxu0 0.0
  %9084 = vmatprep.subr.mxu0 0.0
  %9085 = vmatpush1.msra.mxu0 0.0
  %9086 = vmatprep.subr.mxu0 0.0
  %9087 = vmatpush1.msra.mxu0 0.0
  %9088 = vmatprep.subr.mxu0 0.0
  %9089 = vmatpush1.msra.mxu0 0.0
  %9090 = vmatprep.subr.mxu0 0.0
  %9091 = vmatpush1.msra.mxu0 0.0
  %9092 = vmatprep.subr.mxu0 0.0
  %9093 = vmatpush1.msra.mxu0 0.0
  %9094 = vmatprep.subr.mxu0 0.0
  %9095 = vmatpush1.msra.mxu0 0.0
  %9096 = vmatprep.subr.mxu0 0.0
  %9097 = vmatpush1.msra.mxu0 0.0
  %9098 = vmatprep.subr.mxu0 0.0
  %9099 = vmatpush1.msra.mxu0 0.0
  %9100 = vmatprep.subr.mxu0 0.0
  %9101 = vmatpush1.msra.mxu0 0.0
  %9102 = vmatprep.subr.mxu0 0.0
  %9103 = vmatpush1.msra.mxu0 0.0
  %9104 = vmatprep.subr.mxu0 0.0
  %9105 = vmatpush1.msra.mxu0 0.0
  %9106 = vmatprep.subr.mxu0 0.0
  %9107 = vmatpush1.msra.mxu0 0.0
  %9108 = vmatprep.subr.mxu0 0.0
  %9109 = vmatpush1.msra.mxu0 0.0
  %9110 = vmatprep.subr.mxu0 0.0
  %9111 = vmatpush1.msra.mxu0 0.0
  %9112 = vmatprep.subr.mxu0 0.0
  %9113 = vmatpush1.msra.mxu0 0.0
  %9114 = vmatprep.subr.mxu0 0.0
  %9115 = vmatpush1.msra.mxu0 0.0
  %9116 = vmatprep.mubr.f32.mxu0 0.0
  %9117 = vmatmul.mubr.f32.gmra.mrb[0].mxu0 %v9050
  %v9118 = vpop.f32.mrb[0].mxu0
  %v9119 = vadd.f32 %v9047, %v9118
  %v9120 = vpop.f32.mrb[0].mxu0
  %9121 = vdwg.mxu0
  %v9122 = vmax.f32 %v9119, 0.0
  %v9123 = vcombine.low %v4108, %v4322
  %v9124 = vcombine.low %v4564, %v4759
  %v9125 = vcombine.low %v4983, %v5203
  %v9126 = vcombine.low %v5398, %v5634
  %v9128 = vunpack.c.l.s4 1966171168
  %v9129 = vunpack.c.0.s8 %v9128
  %v9130 = vlaneseq
  %v9131 = vshrl.u32 %v9130, 7
  %v9132 = vsub.s32 %v9129, %v9131
  %v9133 = vrot.slane %v9123, %v9132
  %v9135 = vunpack.c.l.s4 1966171168
  %v9136 = vunpack.c.0.s8 %v9135
  %v9137 = vlaneseq
  %v9138 = vshrl.u32 %v9137, 7
  %v9139 = vsub.s32 %v9136, %v9138
  %v9140 = vrot.slane %v9124, %v9139
  %v9142 = vunpack.c.l.s4 1966171168
  %v9143 = vunpack.c.0.s8 %v9142
  %v9144 = vlaneseq
  %v9145 = vshrl.u32 %v9144, 7
  %v9146 = vsub.s32 %v9143, %v9145
  %v9147 = vrot.slane %v9125, %v9146
  %v9149 = vunpack.c.l.s4 1966171168
  %v9150 = vunpack.c.0.s8 %v9149
  %v9151 = vlaneseq
  %v9152 = vshrl.u32 %v9151, 7
  %v9153 = vsub.s32 %v9150, %v9152
  %v9154 = vrot.slane %v9126, %v9153
  %v9155 = vcombine.low %v9133, %v9140
  %v9156 = vcombine.low %v9147, %v9154
  %v9158 = vunpack.c.l.s4 1966171168
  %v9159 = vunpack.c.0.s8 %v9158
  %v9160 = vlaneseq
  %v9161 = vshrl.u32 %v9160, 7
  %v9162 = vsub.s32 %v9159, %v9161
  %v9163 = vrot.slane %v9155, %v9162
  %v9165 = vunpack.c.l.s4 1966171168
  %v9166 = vunpack.c.0.s8 %v9165
  %v9167 = vlaneseq
  %v9168 = vshrl.u32 %v9167, 7
  %v9169 = vsub.s32 %v9166, %v9168
  %v9170 = vrot.slane %v9156, %v9169
  %v9171 = vcombine.low %v9163, %v9170
  %v9174 = vsel %vm5700, %v9122, 0
  %9176 = vmatprep.subr.mxu0 0.0
  %9177 = vmatpush1.msra.mxu0 %v5646
  %9178 = vmatprep.subr.mxu0 0.0
  %9179 = vmatpush1.msra.mxu0 %v5647
  %9180 = vmatprep.subr.mxu0 0.0
  %9181 = vmatpush1.msra.mxu0 %v5648
  %9182 = vmatprep.subr.mxu0 0.0
  %9183 = vmatpush1.msra.mxu0 %v5649
  %9184 = vmatprep.subr.mxu0 0.0
  %9185 = vmatpush1.msra.mxu0 0.0
  %9186 = vmatprep.subr.mxu0 0.0
  %9187 = vmatpush1.msra.mxu0 0.0
  %9188 = vmatprep.subr.mxu0 0.0
  %9189 = vmatpush1.msra.mxu0 0.0
  %9190 = vmatprep.subr.mxu0 0.0
  %9191 = vmatpush1.msra.mxu0 0.0
  %9192 = vmatprep.subr.mxu0 0.0
  %9193 = vmatpush1.msra.mxu0 0.0
  %9194 = vmatprep.subr.mxu0 0.0
  %9195 = vmatpush1.msra.mxu0 0.0
  %9196 = vmatprep.subr.mxu0 0.0
  %9197 = vmatpush1.msra.mxu0 0.0
  %9198 = vmatprep.subr.mxu0 0.0
  %9199 = vmatpush1.msra.mxu0 0.0
  %9200 = vmatprep.subr.mxu0 0.0
  %9201 = vmatpush1.msra.mxu0 0.0
  %9202 = vmatprep.subr.mxu0 0.0
  %9203 = vmatpush1.msra.mxu0 0.0
  %9204 = vmatprep.subr.mxu0 0.0
  %9205 = vmatpush1.msra.mxu0 0.0
  %9206 = vmatprep.subr.mxu0 0.0
  %9207 = vmatpush1.msra.mxu0 0.0
  %9208 = vmatprep.subr.mxu0 0.0
  %9209 = vmatpush1.msra.mxu0 0.0
  %9210 = vmatprep.subr.mxu0 0.0
  %9211 = vmatpush1.msra.mxu0 0.0
  %9212 = vmatprep.subr.mxu0 0.0
  %9213 = vmatpush1.msra.mxu0 0.0
  %9214 = vmatprep.subr.mxu0 0.0
  %9215 = vmatpush1.msra.mxu0 0.0
  %9216 = vmatprep.subr.mxu0 0.0
  %9217 = vmatpush1.msra.mxu0 0.0
  %9218 = vmatprep.subr.mxu0 0.0
  %9219 = vmatpush1.msra.mxu0 0.0
  %9220 = vmatprep.subr.mxu0 0.0
  %9221 = vmatpush1.msra.mxu0 0.0
  %9222 = vmatprep.subr.mxu0 0.0
  %9223 = vmatpush1.msra.mxu0 0.0
  %9224 = vmatprep.subr.mxu0 0.0
  %9225 = vmatpush1.msra.mxu0 0.0
  %9226 = vmatprep.subr.mxu0 0.0
  %9227 = vmatpush1.msra.mxu0 0.0
  %9228 = vmatprep.subr.mxu0 0.0
  %9229 = vmatpush1.msra.mxu0 0.0
  %9230 = vmatprep.subr.mxu0 0.0
  %9231 = vmatpush1.msra.mxu0 0.0
  %9232 = vmatprep.subr.mxu0 0.0
  %9233 = vmatpush1.msra.mxu0 0.0
  %9234 = vmatprep.subr.mxu0 0.0
  %9235 = vmatpush1.msra.mxu0 0.0
  %9236 = vmatprep.subr.mxu0 0.0
  %9237 = vmatpush1.msra.mxu0 0.0
  %9238 = vmatprep.subr.mxu0 0.0
  %9239 = vmatpush1.msra.mxu0 0.0
  %9240 = vmatprep.mubr.f32.mxu0 0.0
  %9241 = vmatmul.mubr.f32.gmra.mrb[0].mxu0 %v9174
  %v9242 = vpop.f32.mrb[0].mxu0
  %v9243 = vadd.f32 %v9171, %v9242
  %v9244 = vpop.f32.mrb[0].mxu0
  %9245 = vdwg.mxu0
  %v9246 = vmax.f32 %v9243, 0.0
  %v9247 = vcombine.low %v4122, %v4346
  %v9248 = vcombine.low %v4566, %v4761
  %v9249 = vcombine.low %v4997, %v5186
  %v9250 = vcombine.low %v5400, %v5642
  %v9252 = vunpack.c.l.s4 1966171168
  %v9253 = vunpack.c.0.s8 %v9252
  %v9254 = vlaneseq
  %v9255 = vshrl.u32 %v9254, 7
  %v9256 = vsub.s32 %v9253, %v9255
  %v9257 = vrot.slane %v9247, %v9256
  %v9259 = vunpack.c.l.s4 1966171168
  %v9260 = vunpack.c.0.s8 %v9259
  %v9261 = vlaneseq
  %v9262 = vshrl.u32 %v9261, 7
  %v9263 = vsub.s32 %v9260, %v9262
  %v9264 = vrot.slane %v9248, %v9263
  %v9266 = vunpack.c.l.s4 1966171168
  %v9267 = vunpack.c.0.s8 %v9266
  %v9268 = vlaneseq
  %v9269 = vshrl.u32 %v9268, 7
  %v9270 = vsub.s32 %v9267, %v9269
  %v9271 = vrot.slane %v9249, %v9270
  %v9273 = vunpack.c.l.s4 1966171168
  %v9274 = vunpack.c.0.s8 %v9273
  %v9275 = vlaneseq
  %v9276 = vshrl.u32 %v9275, 7
  %v9277 = vsub.s32 %v9274, %v9276
  %v9278 = vrot.slane %v9250, %v9277
  %v9279 = vcombine.low %v9257, %v9264
  %v9280 = vcombine.low %v9271, %v9278
  %v9282 = vunpack.c.l.s4 1966171168
  %v9283 = vunpack.c.0.s8 %v9282
  %v9284 = vlaneseq
  %v9285 = vshrl.u32 %v9284, 7
  %v9286 = vsub.s32 %v9283, %v9285
  %v9287 = vrot.slane %v9279, %v9286
  %v9289 = vunpack.c.l.s4 1966171168
  %v9290 = vunpack.c.0.s8 %v9289
  %v9291 = vlaneseq
  %v9292 = vshrl.u32 %v9291, 7
  %v9293 = vsub.s32 %v9290, %v9292
  %v9294 = vrot.slane %v9280, %v9293
  %v9295 = vcombine.low %v9287, %v9294
  %v9298 = vsel %vm5700, %v9246, 0
  %9300 = vmatprep.subr.mxu0 0.0
  %9301 = vmatpush1.msra.mxu0 %v5646
  %9302 = vmatprep.subr.mxu0 0.0
  %9303 = vmatpush1.msra.mxu0 %v5647
  %9304 = vmatprep.subr.mxu0 0.0
  %9305 = vmatpush1.msra.mxu0 %v5648
  %9306 = vmatprep.subr.mxu0 0.0
  %9307 = vmatpush1.msra.mxu0 %v5649
  %9308 = vmatprep.subr.mxu0 0.0
  %9309 = vmatpush1.msra.mxu0 0.0
  %9310 = vmatprep.subr.mxu0 0.0
  %9311 = vmatpush1.msra.mxu0 0.0
  %9312 = vmatprep.subr.mxu0 0.0
  %9313 = vmatpush1.msra.mxu0 0.0
  %9314 = vmatprep.subr.mxu0 0.0
  %9315 = vmatpush1.msra.mxu0 0.0
  %9316 = vmatprep.subr.mxu0 0.0
  %9317 = vmatpush1.msra.mxu0 0.0
  %9318 = vmatprep.subr.mxu0 0.0
  %9319 = vmatpush1.msra.mxu0 0.0
  %9320 = vmatprep.subr.mxu0 0.0
  %9321 = vmatpush1.msra.mxu0 0.0
  %9322 = vmatprep.subr.mxu0 0.0
  %9323 = vmatpush1.msra.mxu0 0.0
  %9324 = vmatprep.subr.mxu0 0.0
  %9325 = vmatpush1.msra.mxu0 0.0
  %9326 = vmatprep.subr.mxu0 0.0
  %9327 = vmatpush1.msra.mxu0 0.0
  %9328 = vmatprep.subr.mxu0 0.0
  %9329 = vmatpush1.msra.mxu0 0.0
  %9330 = vmatprep.subr.mxu0 0.0
  %9331 = vmatpush1.msra.mxu0 0.0
  %9332 = vmatprep.subr.mxu0 0.0
  %9333 = vmatpush1.msra.mxu0 0.0
  %9334 = vmatprep.subr.mxu0 0.0
  %9335 = vmatpush1.msra.mxu0 0.0
  %9336 = vmatprep.subr.mxu0 0.0
  %9337 = vmatpush1.msra.mxu0 0.0
  %9338 = vmatprep.subr.mxu0 0.0
  %9339 = vmatpush1.msra.mxu0 0.0
  %9340 = vmatprep.subr.mxu0 0.0
  %9341 = vmatpush1.msra.mxu0 0.0
  %9342 = vmatprep.subr.mxu0 0.0
  %9343 = vmatpush1.msra.mxu0 0.0
  %9344 = vmatprep.subr.mxu0 0.0
  %9345 = vmatpush1.msra.mxu0 0.0
  %9346 = vmatprep.subr.mxu0 0.0
  %9347 = vmatpush1.msra.mxu0 0.0
  %9348 = vmatprep.subr.mxu0 0.0
  %9349 = vmatpush1.msra.mxu0 0.0
  %9350 = vmatprep.subr.mxu0 0.0
  %9351 = vmatpush1.msra.mxu0 0.0
  %9352 = vmatprep.subr.mxu0 0.0
  %9353 = vmatpush1.msra.mxu0 0.0
  %9354 = vmatprep.subr.mxu0 0.0
  %9355 = vmatpush1.msra.mxu0 0.0
  %9356 = vmatprep.subr.mxu0 0.0
  %9357 = vmatpush1.msra.mxu0 0.0
  %9358 = vmatprep.subr.mxu0 0.0
  %9359 = vmatpush1.msra.mxu0 0.0
  %9360 = vmatprep.subr.mxu0 0.0
  %9361 = vmatpush1.msra.mxu0 0.0
  %9362 = vmatprep.subr.mxu0 0.0
  %9363 = vmatpush1.msra.mxu0 0.0
  %9364 = vmatprep.mubr.f32.mxu0 0.0
  %9365 = vmatmul.mubr.f32.gmra.mrb[0].mxu0 %v9298
  %v9366 = vpop.f32.mrb[0].mxu0
  %v9367 = vadd.f32 %v9295, %v9366
  %v9368 = vpop.f32.mrb[0].mxu0
  %9369 = vdwg.mxu0
  %v9370 = vmax.f32 %v9367, 0.0
  %v9371 = vcombine.low %v4124, %v4360
  %v9372 = vcombine.low %v4549, %v4763
  %v9373 = vcombine.low %v5005, %v5200
  %v9374 = vcombine.low %v5424, %v5644
  %v9376 = vunpack.c.l.s4 1966171168
  %v9377 = vunpack.c.0.s8 %v9376
  %v9378 = vlaneseq
  %v9379 = vshrl.u32 %v9378, 7
  %v9380 = vsub.s32 %v9377, %v9379
  %v9381 = vrot.slane %v9371, %v9380
  %v9383 = vunpack.c.l.s4 1966171168
  %v9384 = vunpack.c.0.s8 %v9383
  %v9385 = vlaneseq
  %v9386 = vshrl.u32 %v9385, 7
  %v9387 = vsub.s32 %v9384, %v9386
  %v9388 = vrot.slane %v9372, %v9387
  %v9390 = vunpack.c.l.s4 1966171168
  %v9391 = vunpack.c.0.s8 %v9390
  %v9392 = vlaneseq
  %v9393 = vshrl.u32 %v9392, 7
  %v9394 = vsub.s32 %v9391, %v9393
  %v9395 = vrot.slane %v9373, %v9394
  %v9397 = vunpack.c.l.s4 1966171168
  %v9398 = vunpack.c.0.s8 %v9397
  %v9399 = vlaneseq
  %v9400 = vshrl.u32 %v9399, 7
  %v9401 = vsub.s32 %v9398, %v9400
  %v9402 = vrot.slane %v9374, %v9401
  %v9403 = vcombine.low %v9381, %v9388
  %v9404 = vcombine.low %v9395, %v9402
  %v9406 = vunpack.c.l.s4 1966171168
  %v9407 = vunpack.c.0.s8 %v9406
  %v9408 = vlaneseq
  %v9409 = vshrl.u32 %v9408, 7
  %v9410 = vsub.s32 %v9407, %v9409
  %v9411 = vrot.slane %v9403, %v9410
  %v9413 = vunpack.c.l.s4 1966171168
  %v9414 = vunpack.c.0.s8 %v9413
  %v9415 = vlaneseq
  %v9416 = vshrl.u32 %v9415, 7
  %v9417 = vsub.s32 %v9414, %v9416
  %v9418 = vrot.slane %v9404, %v9417
  %v9419 = vcombine.low %v9411, %v9418
  %v9422 = vsel %vm5700, %v9370, 0
  %9424 = vmatprep.subr.mxu0 0.0
  %9425 = vmatpush1.msra.mxu0 %v5646
  %9426 = vmatprep.subr.mxu0 0.0
  %9427 = vmatpush1.msra.mxu0 %v5647
  %9428 = vmatprep.subr.mxu0 0.0
  %9429 = vmatpush1.msra.mxu0 %v5648
  %9430 = vmatprep.subr.mxu0 0.0
  %9431 = vmatpush1.msra.mxu0 %v5649
  %9432 = vmatprep.subr.mxu0 0.0
  %9433 = vmatpush1.msra.mxu0 0.0
  %9434 = vmatprep.subr.mxu0 0.0
  %9435 = vmatpush1.msra.mxu0 0.0
  %9436 = vmatprep.subr.mxu0 0.0
  %9437 = vmatpush1.msra.mxu0 0.0
  %9438 = vmatprep.subr.mxu0 0.0
  %9439 = vmatpush1.msra.mxu0 0.0
  %9440 = vmatprep.subr.mxu0 0.0
  %9441 = vmatpush1.msra.mxu0 0.0
  %9442 = vmatprep.subr.mxu0 0.0
  %9443 = vmatpush1.msra.mxu0 0.0
  %9444 = vmatprep.subr.mxu0 0.0
  %9445 = vmatpush1.msra.mxu0 0.0
  %9446 = vmatprep.subr.mxu0 0.0
  %9447 = vmatpush1.msra.mxu0 0.0
  %9448 = vmatprep.subr.mxu0 0.0
  %9449 = vmatpush1.msra.mxu0 0.0
  %9450 = vmatprep.subr.mxu0 0.0
  %9451 = vmatpush1.msra.mxu0 0.0
  %9452 = vmatprep.subr.mxu0 0.0
  %9453 = vmatpush1.msra.mxu0 0.0
  %9454 = vmatprep.subr.mxu0 0.0
  %9455 = vmatpush1.msra.mxu0 0.0
  %9456 = vmatprep.subr.mxu0 0.0
  %9457 = vmatpush1.msra.mxu0 0.0
  %9458 = vmatprep.subr.mxu0 0.0
  %9459 = vmatpush1.msra.mxu0 0.0
  %9460 = vmatprep.subr.mxu0 0.0
  %9461 = vmatpush1.msra.mxu0 0.0
  %9462 = vmatprep.subr.mxu0 0.0
  %9463 = vmatpush1.msra.mxu0 0.0
  %9464 = vmatprep.subr.mxu0 0.0
  %9465 = vmatpush1.msra.mxu0 0.0
  %9466 = vmatprep.subr.mxu0 0.0
  %9467 = vmatpush1.msra.mxu0 0.0
  %9468 = vmatprep.subr.mxu0 0.0
  %9469 = vmatpush1.msra.mxu0 0.0
  %9470 = vmatprep.subr.mxu0 0.0
  %9471 = vmatpush1.msra.mxu0 0.0
  %9472 = vmatprep.subr.mxu0 0.0
  %9473 = vmatpush1.msra.mxu0 0.0
  %9474 = vmatprep.subr.mxu0 0.0
  %9475 = vmatpush1.msra.mxu0 0.0
  %9476 = vmatprep.subr.mxu0 0.0
  %9477 = vmatpush1.msra.mxu0 0.0
  %9478 = vmatprep.subr.mxu0 0.0
  %9479 = vmatpush1.msra.mxu0 0.0
  %9480 = vmatprep.subr.mxu0 0.0
  %9481 = vmatpush1.msra.mxu0 0.0
  %9482 = vmatprep.subr.mxu0 0.0
  %9483 = vmatpush1.msra.mxu0 0.0
  %9484 = vmatprep.subr.mxu0 0.0
  %9485 = vmatpush1.msra.mxu0 0.0
  %9486 = vmatprep.subr.mxu0 0.0
  %9487 = vmatpush1.msra.mxu0 0.0
  %9488 = vmatprep.mubr.f32.mxu0 0.0
  %9489 = vmatmul.mubr.f32.gmra.mrb[0].mxu0 %v9422
  %v9490 = vpop.f32.mrb[0].mxu0
  %v9491 = vadd.f32 %v9419, %v9490
  %v9492 = vpop.f32.mrb[0].mxu0
  %9493 = vdwg.mxu0
  %v9494 = vmax.f32 %v9491, 0.0
  %v9495 = vcombine.low %v4126, %v4368
  %v9496 = vcombine.low %v4563, %v4787
  %v9497 = vcombine.low %v5007, %v5202
  %v9498 = vcombine.low %v5438, %v5627
  %v9500 = vunpack.c.l.s4 1966171168
  %v9501 = vunpack.c.0.s8 %v9500
  %v9502 = vlaneseq
  %v9503 = vshrl.u32 %v9502, 7
  %v9504 = vsub.s32 %v9501, %v9503
  %v9505 = vrot.slane %v9495, %v9504
  %v9507 = vunpack.c.l.s4 1966171168
  %v9508 = vunpack.c.0.s8 %v9507
  %v9509 = vlaneseq
  %v9510 = vshrl.u32 %v9509, 7
  %v9511 = vsub.s32 %v9508, %v9510
  %v9512 = vrot.slane %v9496, %v9511
  %v9514 = vunpack.c.l.s4 1966171168
  %v9515 = vunpack.c.0.s8 %v9514
  %v9516 = vlaneseq
  %v9517 = vshrl.u32 %v9516, 7
  %v9518 = vsub.s32 %v9515, %v9517
  %v9519 = vrot.slane %v9497, %v9518
  %v9521 = vunpack.c.l.s4 1966171168
  %v9522 = vunpack.c.0.s8 %v9521
  %v9523 = vlaneseq
  %v9524 = vshrl.u32 %v9523, 7
  %v9525 = vsub.s32 %v9522, %v9524
  %v9526 = vrot.slane %v9498, %v9525
  %v9527 = vcombine.low %v9505, %v9512
  %v9528 = vcombine.low %v9519, %v9526
  %v9530 = vunpack.c.l.s4 1966171168
  %v9531 = vunpack.c.0.s8 %v9530
  %v9532 = vlaneseq
  %v9533 = vshrl.u32 %v9532, 7
  %v9534 = vsub.s32 %v9531, %v9533
  %v9535 = vrot.slane %v9527, %v9534
  %v9537 = vunpack.c.l.s4 1966171168
  %v9538 = vunpack.c.0.s8 %v9537
  %v9539 = vlaneseq
  %v9540 = vshrl.u32 %v9539, 7
  %v9541 = vsub.s32 %v9538, %v9540
  %v9542 = vrot.slane %v9528, %v9541
  %v9543 = vcombine.low %v9535, %v9542
  %v9546 = vsel %vm5700, %v9494, 0
  %9548 = vmatprep.subr.mxu0 0.0
  %9549 = vmatpush1.msra.mxu0 %v5646
  %9550 = vmatprep.subr.mxu0 0.0
  %9551 = vmatpush1.msra.mxu0 %v5647
  %9552 = vmatprep.subr.mxu0 0.0
  %9553 = vmatpush1.msra.mxu0 %v5648
  %9554 = vmatprep.subr.mxu0 0.0
  %9555 = vmatpush1.msra.mxu0 %v5649
  %9556 = vmatprep.subr.mxu0 0.0
  %9557 = vmatpush1.msra.mxu0 0.0
  %9558 = vmatprep.subr.mxu0 0.0
  %9559 = vmatpush1.msra.mxu0 0.0
  %9560 = vmatprep.subr.mxu0 0.0
  %9561 = vmatpush1.msra.mxu0 0.0
  %9562 = vmatprep.subr.mxu0 0.0
  %9563 = vmatpush1.msra.mxu0 0.0
  %9564 = vmatprep.subr.mxu0 0.0
  %9565 = vmatpush1.msra.mxu0 0.0
  %9566 = vmatprep.subr.mxu0 0.0
  %9567 = vmatpush1.msra.mxu0 0.0
  %9568 = vmatprep.subr.mxu0 0.0
  %9569 = vmatpush1.msra.mxu0 0.0
  %9570 = vmatprep.subr.mxu0 0.0
  %9571 = vmatpush1.msra.mxu0 0.0
  %9572 = vmatprep.subr.mxu0 0.0
  %9573 = vmatpush1.msra.mxu0 0.0
  %9574 = vmatprep.subr.mxu0 0.0
  %9575 = vmatpush1.msra.mxu0 0.0
  %9576 = vmatprep.subr.mxu0 0.0
  %9577 = vmatpush1.msra.mxu0 0.0
  %9578 = vmatprep.subr.mxu0 0.0
  %9579 = vmatpush1.msra.mxu0 0.0
  %9580 = vmatprep.subr.mxu0 0.0
  %9581 = vmatpush1.msra.mxu0 0.0
  %9582 = vmatprep.subr.mxu0 0.0
  %9583 = vmatpush1.msra.mxu0 0.0
  %9584 = vmatprep.subr.mxu0 0.0
  %9585 = vmatpush1.msra.mxu0 0.0
  %9586 = vmatprep.subr.mxu0 0.0
  %9587 = vmatpush1.msra.mxu0 0.0
  %9588 = vmatprep.subr.mxu0 0.0
  %9589 = vmatpush1.msra.mxu0 0.0
  %9590 = vmatprep.subr.mxu0 0.0
  %9591 = vmatpush1.msra.mxu0 0.0
  %9592 = vmatprep.subr.mxu0 0.0
  %9593 = vmatpush1.msra.mxu0 0.0
  %9594 = vmatprep.subr.mxu0 0.0
  %9595 = vmatpush1.msra.mxu0 0.0
  %9596 = vmatprep.subr.mxu0 0.0
  %9597 = vmatpush1.msra.mxu0 0.0
  %9598 = vmatprep.subr.mxu0 0.0
  %9599 = vmatpush1.msra.mxu0 0.0
  %9600 = vmatprep.subr.mxu0 0.0
  %9601 = vmatpush1.msra.mxu0 0.0
  %9602 = vmatprep.subr.mxu0 0.0
  %9603 = vmatpush1.msra.mxu0 0.0
  %9604 = vmatprep.subr.mxu0 0.0
  %9605 = vmatpush1.msra.mxu0 0.0
  %9606 = vmatprep.subr.mxu0 0.0
  %9607 = vmatpush1.msra.mxu0 0.0
  %9608 = vmatprep.subr.mxu0 0.0
  %9609 = vmatpush1.msra.mxu0 0.0
  %9610 = vmatprep.subr.mxu0 0.0
  %9611 = vmatpush1.msra.mxu0 0.0
  %9612 = vmatprep.mubr.f32.mxu0 0.0
  %9613 = vmatmul.mubr.f32.gmra.mrb[0].mxu0 %v9546
  %v9614 = vpop.f32.mrb[0].mxu0
  %v9615 = vadd.f32 %v9543, %v9614
  %v9616 = vpop.f32.mrb[0].mxu0
  %9617 = vdwg.mxu0
  %v9618 = vmax.f32 %v9615, 0.0
  %v9619 = vcombine.low %v4150, %v4370
  %v9620 = vcombine.low %v4565, %v4801
  %v9621 = vcombine.low %v4990, %v5204
  %v9622 = vcombine.low %v5446, %v5641
  %v9624 = vunpack.c.l.s4 1966171168
  %v9625 = vunpack.c.0.s8 %v9624
  %v9626 = vlaneseq
  %v9627 = vshrl.u32 %v9626, 7
  %v9628 = vsub.s32 %v9625, %v9627
  %v9629 = vrot.slane %v9619, %v9628
  %v9631 = vunpack.c.l.s4 1966171168
  %v9632 = vunpack.c.0.s8 %v9631
  %v9633 = vlaneseq
  %v9634 = vshrl.u32 %v9633, 7
  %v9635 = vsub.s32 %v9632, %v9634
  %v9636 = vrot.slane %v9620, %v9635
  %v9638 = vunpack.c.l.s4 1966171168
  %v9639 = vunpack.c.0.s8 %v9638
  %v9640 = vlaneseq
  %v9641 = vshrl.u32 %v9640, 7
  %v9642 = vsub.s32 %v9639, %v9641
  %v9643 = vrot.slane %v9621, %v9642
  %v9645 = vunpack.c.l.s4 1966171168
  %v9646 = vunpack.c.0.s8 %v9645
  %v9647 = vlaneseq
  %v9648 = vshrl.u32 %v9647, 7
  %v9649 = vsub.s32 %v9646, %v9648
  %v9650 = vrot.slane %v9622, %v9649
  %v9651 = vcombine.low %v9629, %v9636
  %v9652 = vcombine.low %v9643, %v9650
  %v9654 = vunpack.c.l.s4 1966171168
  %v9655 = vunpack.c.0.s8 %v9654
  %v9656 = vlaneseq
  %v9657 = vshrl.u32 %v9656, 7
  %v9658 = vsub.s32 %v9655, %v9657
  %v9659 = vrot.slane %v9651, %v9658
  %v9661 = vunpack.c.l.s4 1966171168
  %v9662 = vunpack.c.0.s8 %v9661
  %v9663 = vlaneseq
  %v9664 = vshrl.u32 %v9663, 7
  %v9665 = vsub.s32 %v9662, %v9664
  %v9666 = vrot.slane %v9652, %v9665
  %v9667 = vcombine.low %v9659, %v9666
  %v9670 = vsel %vm5700, %v9618, 0
  %9672 = vmatprep.subr.mxu0 0.0
  %9673 = vmatpush1.msra.mxu0 %v5646
  %9674 = vmatprep.subr.mxu0 0.0
  %9675 = vmatpush1.msra.mxu0 %v5647
  %9676 = vmatprep.subr.mxu0 0.0
  %9677 = vmatpush1.msra.mxu0 %v5648
  %9678 = vmatprep.subr.mxu0 0.0
  %9679 = vmatpush1.msra.mxu0 %v5649
  %9680 = vmatprep.subr.mxu0 0.0
  %9681 = vmatpush1.msra.mxu0 0.0
  %9682 = vmatprep.subr.mxu0 0.0
  %9683 = vmatpush1.msra.mxu0 0.0
  %9684 = vmatprep.subr.mxu0 0.0
  %9685 = vmatpush1.msra.mxu0 0.0
  %9686 = vmatprep.subr.mxu0 0.0
  %9687 = vmatpush1.msra.mxu0 0.0
  %9688 = vmatprep.subr.mxu0 0.0
  %9689 = vmatpush1.msra.mxu0 0.0
  %9690 = vmatprep.subr.mxu0 0.0
  %9691 = vmatpush1.msra.mxu0 0.0
  %9692 = vmatprep.subr.mxu0 0.0
  %9693 = vmatpush1.msra.mxu0 0.0
  %9694 = vmatprep.subr.mxu0 0.0
  %9695 = vmatpush1.msra.mxu0 0.0
  %9696 = vmatprep.subr.mxu0 0.0
  %9697 = vmatpush1.msra.mxu0 0.0
  %9698 = vmatprep.subr.mxu0 0.0
  %9699 = vmatpush1.msra.mxu0 0.0
  %9700 = vmatprep.subr.mxu0 0.0
  %9701 = vmatpush1.msra.mxu0 0.0
  %9702 = vmatprep.subr.mxu0 0.0
  %9703 = vmatpush1.msra.mxu0 0.0
  %9704 = vmatprep.subr.mxu0 0.0
  %9705 = vmatpush1.msra.mxu0 0.0
  %9706 = vmatprep.subr.mxu0 0.0
  %9707 = vmatpush1.msra.mxu0 0.0
  %9708 = vmatprep.subr.mxu0 0.0
  %9709 = vmatpush1.msra.mxu0 0.0
  %9710 = vmatprep.subr.mxu0 0.0
  %9711 = vmatpush1.msra.mxu0 0.0
  %9712 = vmatprep.subr.mxu0 0.0
  %9713 = vmatpush1.msra.mxu0 0.0
  %9714 = vmatprep.subr.mxu0 0.0
  %9715 = vmatpush1.msra.mxu0 0.0
  %9716 = vmatprep.subr.mxu0 0.0
  %9717 = vmatpush1.msra.mxu0 0.0
  %9718 = vmatprep.subr.mxu0 0.0
  %9719 = vmatpush1.msra.mxu0 0.0
  %9720 = vmatprep.subr.mxu0 0.0
  %9721 = vmatpush1.msra.mxu0 0.0
  %9722 = vmatprep.subr.mxu0 0.0
  %9723 = vmatpush1.msra.mxu0 0.0
  %9724 = vmatprep.subr.mxu0 0.0
  %9725 = vmatpush1.msra.mxu0 0.0
  %9726 = vmatprep.subr.mxu0 0.0
  %9727 = vmatpush1.msra.mxu0 0.0
  %9728 = vmatprep.subr.mxu0 0.0
  %9729 = vmatpush1.msra.mxu0 0.0
  %9730 = vmatprep.subr.mxu0 0.0
  %9731 = vmatpush1.msra.mxu0 0.0
  %9732 = vmatprep.subr.mxu0 0.0
  %9733 = vmatpush1.msra.mxu0 0.0
  %9734 = vmatprep.subr.mxu0 0.0
  %9735 = vmatpush1.msra.mxu0 0.0
  %9736 = vmatprep.mubr.f32.mxu0 0.0
  %9737 = vmatmul.mubr.f32.gmra.mrb[0].mxu0 %v9670
  %v9738 = vpop.f32.mrb[0].mxu0
  %v9739 = vadd.f32 %v9667, %v9738
  %v9740 = vpop.f32.mrb[0].mxu0
  %9741 = vdwg.mxu0
  %v9742 = vmax.f32 %v9739, 0.0
  %v9743 = vcombine.low %v4164, %v4353
  %v9744 = vcombine.low %v4567, %v4809
  %v9745 = vcombine.low %v5004, %v5228
  %v9746 = vcombine.low %v5448, %v5643
  %v9748 = vunpack.c.l.s4 1966171168
  %v9749 = vunpack.c.0.s8 %v9748
  %v9750 = vlaneseq
  %v9751 = vshrl.u32 %v9750, 7
  %v9752 = vsub.s32 %v9749, %v9751
  %v9753 = vrot.slane %v9743, %v9752
  %v9755 = vunpack.c.l.s4 1966171168
  %v9756 = vunpack.c.0.s8 %v9755
  %v9757 = vlaneseq
  %v9758 = vshrl.u32 %v9757, 7
  %v9759 = vsub.s32 %v9756, %v9758
  %v9760 = vrot.slane %v9744, %v9759
  %v9762 = vunpack.c.l.s4 1966171168
  %v9763 = vunpack.c.0.s8 %v9762
  %v9764 = vlaneseq
  %v9765 = vshrl.u32 %v9764, 7
  %v9766 = vsub.s32 %v9763, %v9765
  %v9767 = vrot.slane %v9745, %v9766
  %v9769 = vunpack.c.l.s4 1966171168
  %v9770 = vunpack.c.0.s8 %v9769
  %v9771 = vlaneseq
  %v9772 = vshrl.u32 %v9771, 7
  %v9773 = vsub.s32 %v9770, %v9772
  %v9774 = vrot.slane %v9746, %v9773
  %v9775 = vcombine.low %v9753, %v9760
  %v9776 = vcombine.low %v9767, %v9774
  %v9778 = vunpack.c.l.s4 1966171168
  %v9779 = vunpack.c.0.s8 %v9778
  %v9780 = vlaneseq
  %v9781 = vshrl.u32 %v9780, 7
  %v9782 = vsub.s32 %v9779, %v9781
  %v9783 = vrot.slane %v9775, %v9782
  %v9785 = vunpack.c.l.s4 1966171168
  %v9786 = vunpack.c.0.s8 %v9785
  %v9787 = vlaneseq
  %v9788 = vshrl.u32 %v9787, 7
  %v9789 = vsub.s32 %v9786, %v9788
  %v9790 = vrot.slane %v9776, %v9789
  %v9791 = vcombine.low %v9783, %v9790
  %v9794 = vsel %vm5700, %v9742, 0
  %9796 = vmatprep.subr.mxu0 0.0
  %9797 = vmatpush1.msra.mxu0 %v5646
  %9798 = vmatprep.subr.mxu0 0.0
  %9799 = vmatpush1.msra.mxu0 %v5647
  %9800 = vmatprep.subr.mxu0 0.0
  %9801 = vmatpush1.msra.mxu0 %v5648
  %9802 = vmatprep.subr.mxu0 0.0
  %9803 = vmatpush1.msra.mxu0 %v5649
  %9804 = vmatprep.subr.mxu0 0.0
  %9805 = vmatpush1.msra.mxu0 0.0
  %9806 = vmatprep.subr.mxu0 0.0
  %9807 = vmatpush1.msra.mxu0 0.0
  %9808 = vmatprep.subr.mxu0 0.0
  %9809 = vmatpush1.msra.mxu0 0.0
  %9810 = vmatprep.subr.mxu0 0.0
  %9811 = vmatpush1.msra.mxu0 0.0
  %9812 = vmatprep.subr.mxu0 0.0
  %9813 = vmatpush1.msra.mxu0 0.0
  %9814 = vmatprep.subr.mxu0 0.0
  %9815 = vmatpush1.msra.mxu0 0.0
  %9816 = vmatprep.subr.mxu0 0.0
  %9817 = vmatpush1.msra.mxu0 0.0
  %9818 = vmatprep.subr.mxu0 0.0
  %9819 = vmatpush1.msra.mxu0 0.0
  %9820 = vmatprep.subr.mxu0 0.0
  %9821 = vmatpush1.msra.mxu0 0.0
  %9822 = vmatprep.subr.mxu0 0.0
  %9823 = vmatpush1.msra.mxu0 0.0
  %9824 = vmatprep.subr.mxu0 0.0
  %9825 = vmatpush1.msra.mxu0 0.0
  %9826 = vmatprep.subr.mxu0 0.0
  %9827 = vmatpush1.msra.mxu0 0.0
  %9828 = vmatprep.subr.mxu0 0.0
  %9829 = vmatpush1.msra.mxu0 0.0
  %9830 = vmatprep.subr.mxu0 0.0
  %9831 = vmatpush1.msra.mxu0 0.0
  %9832 = vmatprep.subr.mxu0 0.0
  %9833 = vmatpush1.msra.mxu0 0.0
  %9834 = vmatprep.subr.mxu0 0.0
  %9835 = vmatpush1.msra.mxu0 0.0
  %9836 = vmatprep.subr.mxu0 0.0
  %9837 = vmatpush1.msra.mxu0 0.0
  %9838 = vmatprep.subr.mxu0 0.0
  %9839 = vmatpush1.msra.mxu0 0.0
  %9840 = vmatprep.subr.mxu0 0.0
  %9841 = vmatpush1.msra.mxu0 0.0
  %9842 = vmatprep.subr.mxu0 0.0
  %9843 = vmatpush1.msra.mxu0 0.0
  %9844 = vmatprep.subr.mxu0 0.0
  %9845 = vmatpush1.msra.mxu0 0.0
  %9846 = vmatprep.subr.mxu0 0.0
  %9847 = vmatpush1.msra.mxu0 0.0
  %9848 = vmatprep.subr.mxu0 0.0
  %9849 = vmatpush1.msra.mxu0 0.0
  %9850 = vmatprep.subr.mxu0 0.0
  %9851 = vmatpush1.msra.mxu0 0.0
  %9852 = vmatprep.subr.mxu0 0.0
  %9853 = vmatpush1.msra.mxu0 0.0
  %9854 = vmatprep.subr.mxu0 0.0
  %9855 = vmatpush1.msra.mxu0 0.0
  %9856 = vmatprep.subr.mxu0 0.0
  %9857 = vmatpush1.msra.mxu0 0.0
  %9858 = vmatprep.subr.mxu0 0.0
  %9859 = vmatpush1.msra.mxu0 0.0
  %9860 = vmatprep.mubr.f32.mxu0 0.0
  %9861 = vmatmul.mubr.f32.gmra.mrb[0].mxu0 %v9794
  %v9862 = vpop.f32.mrb[0].mxu0
  %v9863 = vadd.f32 %v9791, %v9862
  %v9864 = vpop.f32.mrb[0].mxu0
  %9865 = vdwg.mxu0
  %v9866 = vmax.f32 %v9863, 0.0
  %v9867 = vcombine.low %v4172, %v4367
  %v9868 = vcombine.low %v4591, %v4811
  %v9869 = vcombine.low %v5006, %v5242
  %v9870 = vcombine.low %v5431, %v5645
  %v9872 = vunpack.c.l.s4 1966171168
  %v9873 = vunpack.c.0.s8 %v9872
  %v9874 = vlaneseq
  %v9875 = vshrl.u32 %v9874, 7
  %v9876 = vsub.s32 %v9873, %v9875
  %v9877 = vrot.slane %v9867, %v9876
  %v9879 = vunpack.c.l.s4 1966171168
  %v9880 = vunpack.c.0.s8 %v9879
  %v9881 = vlaneseq
  %v9882 = vshrl.u32 %v9881, 7
  %v9883 = vsub.s32 %v9880, %v9882
  %v9884 = vrot.slane %v9868, %v9883
  %v9886 = vunpack.c.l.s4 1966171168
  %v9887 = vunpack.c.0.s8 %v9886
  %v9888 = vlaneseq
  %v9889 = vshrl.u32 %v9888, 7
  %v9890 = vsub.s32 %v9887, %v9889
  %v9891 = vrot.slane %v9869, %v9890
  %v9893 = vunpack.c.l.s4 1966171168
  %v9894 = vunpack.c.0.s8 %v9893
  %v9895 = vlaneseq
  %v9896 = vshrl.u32 %v9895, 7
  %v9897 = vsub.s32 %v9894, %v9896
  %v9898 = vrot.slane %v9870, %v9897
  %v9899 = vcombine.low %v9877, %v9884
  %v9900 = vcombine.low %v9891, %v9898
  %v9902 = vunpack.c.l.s4 1966171168
  %v9903 = vunpack.c.0.s8 %v9902
  %v9904 = vlaneseq
  %v9905 = vshrl.u32 %v9904, 7
  %v9906 = vsub.s32 %v9903, %v9905
  %v9907 = vrot.slane %v9899, %v9906
  %v9909 = vunpack.c.l.s4 1966171168
  %v9910 = vunpack.c.0.s8 %v9909
  %v9911 = vlaneseq
  %v9912 = vshrl.u32 %v9911, 7
  %v9913 = vsub.s32 %v9910, %v9912
  %v9914 = vrot.slane %v9900, %v9913
  %v9915 = vcombine.low %v9907, %v9914
  %v9918 = vsel %vm5700, %v9866, 0
  %9920 = vmatprep.subr.mxu0 0.0
  %9921 = vmatpush1.msra.mxu0 %v5646
  %9922 = vmatprep.subr.mxu0 0.0
  %9923 = vmatpush1.msra.mxu0 %v5647
  %9924 = vmatprep.subr.mxu0 0.0
  %9925 = vmatpush1.msra.mxu0 %v5648
  %9926 = vmatprep.subr.mxu0 0.0
  %9927 = vmatpush1.msra.mxu0 %v5649
  %9928 = vmatprep.subr.mxu0 0.0
  %9929 = vmatpush1.msra.mxu0 0.0
  %9930 = vmatprep.subr.mxu0 0.0
  %9931 = vmatpush1.msra.mxu0 0.0
  %9932 = vmatprep.subr.mxu0 0.0
  %9933 = vmatpush1.msra.mxu0 0.0
  %9934 = vmatprep.subr.mxu0 0.0
  %9935 = vmatpush1.msra.mxu0 0.0
  %9936 = vmatprep.subr.mxu0 0.0
  %9937 = vmatpush1.msra.mxu0 0.0
  %9938 = vmatprep.subr.mxu0 0.0
  %9939 = vmatpush1.msra.mxu0 0.0
  %9940 = vmatprep.subr.mxu0 0.0
  %9941 = vmatpush1.msra.mxu0 0.0
  %9942 = vmatprep.subr.mxu0 0.0
  %9943 = vmatpush1.msra.mxu0 0.0
  %9944 = vmatprep.subr.mxu0 0.0
  %9945 = vmatpush1.msra.mxu0 0.0
  %9946 = vmatprep.subr.mxu0 0.0
  %9947 = vmatpush1.msra.mxu0 0.0
  %9948 = vmatprep.subr.mxu0 0.0
  %9949 = vmatpush1.msra.mxu0 0.0
  %9950 = vmatprep.subr.mxu0 0.0
  %9951 = vmatpush1.msra.mxu0 0.0
  %9952 = vmatprep.subr.mxu0 0.0
  %9953 = vmatpush1.msra.mxu0 0.0
  %9954 = vmatprep.subr.mxu0 0.0
  %9955 = vmatpush1.msra.mxu0 0.0
  %9956 = vmatprep.subr.mxu0 0.0
  %9957 = vmatpush1.msra.mxu0 0.0
  %9958 = vmatprep.subr.mxu0 0.0
  %9959 = vmatpush1.msra.mxu0 0.0
  %9960 = vmatprep.subr.mxu0 0.0
  %9961 = vmatpush1.msra.mxu0 0.0
  %9962 = vmatprep.subr.mxu0 0.0
  %9963 = vmatpush1.msra.mxu0 0.0
  %9964 = vmatprep.subr.mxu0 0.0
  %9965 = vmatpush1.msra.mxu0 0.0
  %9966 = vmatprep.subr.mxu0 0.0
  %9967 = vmatpush1.msra.mxu0 0.0
  %9968 = vmatprep.subr.mxu0 0.0
  %9969 = vmatpush1.msra.mxu0 0.0
  %9970 = vmatprep.subr.mxu0 0.0
  %9971 = vmatpush1.msra.mxu0 0.0
  %9972 = vmatprep.subr.mxu0 0.0
  %9973 = vmatpush1.msra.mxu0 0.0
  %9974 = vmatprep.subr.mxu0 0.0
  %9975 = vmatpush1.msra.mxu0 0.0
  %9976 = vmatprep.subr.mxu0 0.0
  %9977 = vmatpush1.msra.mxu0 0.0
  %9978 = vmatprep.subr.mxu0 0.0
  %9979 = vmatpush1.msra.mxu0 0.0
  %9980 = vmatprep.subr.mxu0 0.0
  %9981 = vmatpush1.msra.mxu0 0.0
  %9982 = vmatprep.subr.mxu0 0.0
  %9983 = vmatpush1.msra.mxu0 0.0
  %9984 = vmatprep.mubr.f32.mxu0 0.0
  %9985 = vmatmul.mubr.f32.gmra.mrb[0].mxu0 %v9918
  %v9986 = vpop.f32.mrb[0].mxu0
  %v9987 = vadd.f32 %v9915, %v9986
  %v9988 = vpop.f32.mrb[0].mxu0
  %9989 = vdwg.mxu0
  %v9990 = vmax.f32 %v9987, 0.0
  %v9991 = vld [vmem:[%s4] sm:$0xff]
  %v9992 = vld [vmem:[%s4 + $0x8] sm:$0xff]
  %v9993 = vld [vmem:[%s4 + $0x10] sm:$0xff]
  %v9994 = vld [vmem:[%s4 + $0x18] sm:$0xff]
  %v9995 = vld [vmem:[%s5] sm:$0x1]
  %v9997 = vlaneseq
  %v9998 = vshrl.u32 %v9997, 7
  %v9999 = vsub.s32 0, %v9998
  %v10000 = vrot.slane %v9995, %v9999
  %v10003 = vsel %vm5700, %v9990, 0
  %10005 = vmatprep.subr.mxu0 0.0
  %10006 = vmatpush1.msra.mxu0 %v9991
  %10007 = vmatprep.subr.mxu0 0.0
  %10008 = vmatpush1.msra.mxu0 %v9992
  %10009 = vmatprep.subr.mxu0 0.0
  %10010 = vmatpush1.msra.mxu0 %v9993
  %10011 = vmatprep.subr.mxu0 0.0
  %10012 = vmatpush1.msra.mxu0 %v9994
  %10013 = vmatprep.subr.mxu0 0.0
  %10014 = vmatpush1.msra.mxu0 0.0
  %10015 = vmatprep.subr.mxu0 0.0
  %10016 = vmatpush1.msra.mxu0 0.0
  %10017 = vmatprep.subr.mxu0 0.0
  %10018 = vmatpush1.msra.mxu0 0.0
  %10019 = vmatprep.subr.mxu0 0.0
  %10020 = vmatpush1.msra.mxu0 0.0
  %10021 = vmatprep.subr.mxu0 0.0
  %10022 = vmatpush1.msra.mxu0 0.0
  %10023 = vmatprep.subr.mxu0 0.0
  %10024 = vmatpush1.msra.mxu0 0.0
  %10025 = vmatprep.subr.mxu0 0.0
  %10026 = vmatpush1.msra.mxu0 0.0
  %10027 = vmatprep.subr.mxu0 0.0
  %10028 = vmatpush1.msra.mxu0 0.0
  %10029 = vmatprep.subr.mxu0 0.0
  %10030 = vmatpush1.msra.mxu0 0.0
  %10031 = vmatprep.subr.mxu0 0.0
  %10032 = vmatpush1.msra.mxu0 0.0
  %10033 = vmatprep.subr.mxu0 0.0
  %10034 = vmatpush1.msra.mxu0 0.0
  %10035 = vmatprep.subr.mxu0 0.0
  %10036 = vmatpush1.msra.mxu0 0.0
  %10037 = vmatprep.subr.mxu0 0.0
  %10038 = vmatpush1.msra.mxu0 0.0
  %10039 = vmatprep.subr.mxu0 0.0
  %10040 = vmatpush1.msra.mxu0 0.0
  %10041 = vmatprep.subr.mxu0 0.0
  %10042 = vmatpush1.msra.mxu0 0.0
  %10043 = vmatprep.subr.mxu0 0.0
  %10044 = vmatpush1.msra.mxu0 0.0
  %10045 = vmatprep.subr.mxu0 0.0
  %10046 = vmatpush1.msra.mxu0 0.0
  %10047 = vmatprep.subr.mxu0 0.0
  %10048 = vmatpush1.msra.mxu0 0.0
  %10049 = vmatprep.subr.mxu0 0.0
  %10050 = vmatpush1.msra.mxu0 0.0
  %10051 = vmatprep.subr.mxu0 0.0
  %10052 = vmatpush1.msra.mxu0 0.0
  %10053 = vmatprep.subr.mxu0 0.0
  %10054 = vmatpush1.msra.mxu0 0.0
  %10055 = vmatprep.subr.mxu0 0.0
  %10056 = vmatpush1.msra.mxu0 0.0
  %10057 = vmatprep.subr.mxu0 0.0
  %10058 = vmatpush1.msra.mxu0 0.0
  %10059 = vmatprep.subr.mxu0 0.0
  %10060 = vmatpush1.msra.mxu0 0.0
  %10061 = vmatprep.subr.mxu0 0.0
  %10062 = vmatpush1.msra.mxu0 0.0
  %10063 = vmatprep.subr.mxu0 0.0
  %10064 = vmatpush1.msra.mxu0 0.0
  %10065 = vmatprep.subr.mxu0 0.0
  %10066 = vmatpush1.msra.mxu0 0.0
  %10067 = vmatprep.subr.mxu0 0.0
  %10068 = vmatpush1.msra.mxu0 0.0
  %10069 = vmatprep.mubr.f32.mxu0 0.0
  %10070 = vmatmul.mubr.f32.gmra.mrb[0].mxu0 %v10003
  %v10071 = vpop.f32.mrb[0].mxu0
  %v10072 = vadd.f32 %v10000, %v10071
  %v10073 = vpop.f32.mrb[0].mxu0
  %10074 = vdwg.mxu0
  %vm10075 = vcmask 15360
  %10076 = vst.msk [vmem:[%s6] sm:$0xff] %vm10075, %v10072
  // Predicated region
  $region26: #{tpu_custom_call.1} parent=0 // pred_check
    _
  $region27: #{tpu_custom_call.1} parent=0 // pred_check_branch
    %10078 = sbr.rel (0) target = $region29
  $region28: #{tpu_custom_call.1} parent=0 // pred_region
    _
  $region29: #{tpu_custom_call.1} parent=0 // pred_fallthru
    _
  // Predicated region
  $region30: #{tpu_custom_call.1} parent=0 // pred_check
    _
  $region31: #{tpu_custom_call.1} parent=0 // pred_check_branch
    %10080 = sbr.rel (0) target = $region33
  $region32: #{tpu_custom_call.1} parent=0 // pred_region
    _
  $region33: #{tpu_custom_call.1} parent=0 // pred_fallthru
    _

</llo_original>
